<compile_context>
chip_gen: v7x
topology: tpu7x:2x2x1
jax: 0.10.0
libtpu: 0.0.40
codegen_flags: <defaults>
</compile_context>

<pallas_src>
import functools

import jax
import jax.numpy as jnp
from jax.experimental import pallas as pl
from jax.experimental.pallas import tpu as pltpu

HIDDEN_DIM = 1024    # self.hidden_dim in RGBClsModel
MLP_DIM = 2048
BOTTLENECK = 64
NUM_CLASS = 25       # NVGesture: config['setting']['num_class']
LANE = 128
DEFAULT_TILE_N = 1024


def _round_up(x, m):
    return (x + m - 1) // m * m


def rgb_cls_kernel(x_ref, ws_ref, bs_ref, w1_ref, b1_ref, w23_ref, b23_ref,
                   out_ref, acc_ref, *, n_total):
    """Grid = (batch groups, N tiles).  Accumulate the per-channel sum over N
    tiles, then run the classifier head once on the last tile."""
    n_idx = pl.program_id(1)
    n_last = pl.num_programs(1) - 1
    tile_n = x_ref.shape[-1]

    @pl.when(n_idx == 0)
    def _init():
        acc_ref[...] = jnp.zeros_like(acc_ref)

    x = x_ref[...]                                          # [b_tile, C, tile_n] f32
    if n_total % tile_n != 0:                               # static: ragged last tile
        pos = jax.lax.broadcasted_iota(jnp.int32, x.shape, 2) + n_idx * tile_n
        x = jnp.where(pos < n_total, x, 0.0)
    acc_ref[...] += jnp.sum(x, axis=-1)                     # [b_tile, C] running sum

    @pl.when(n_idx == n_last)
    def _head():
        # Global average pool (pool-first reorder of the linear stem).
        mean = acc_ref[...] * (1.0 / n_total)               # [b_tile, C] f32
        ws = ws_ref[...]                                    # [C, 1024] f32
        # Tiny C->1024 projection as C broadcast FMAs on the VPU (C is static, ~3).
        feat = bs_ref[...]                                  # [1, 1024] -> broadcasts
        for c in range(ws.shape[0]):
            feat = feat + mean[:, c:c + 1] * ws[c:c + 1, :]  # [b_tile, 1024]

        # Linear(1024, 2048) + ReLU   (bf16 weights, f32 accumulation / activation)
        h = jnp.dot(feat.astype(jnp.bfloat16), w1_ref[...],
                    preferred_element_type=jnp.float32) + b1_ref[...]
        h = jnp.maximum(h, 0.0)

        # Linear(2048, 64) ∘ Linear(64, K) folded into one [2048, K_pad] matmul.
        out_ref[...] = jnp.dot(h.astype(jnp.bfloat16), w23_ref[...],
                               preferred_element_type=jnp.float32) + b23_ref[...]


def init_params(key, in_channels=3, num_class=NUM_CLASS):
    """Original-module-shaped parameters (f32, unfolded head)."""
    ks = jax.random.split(key, 8)

    def lin(k, fan_in, fan_out):
        scale = 1.0 / jnp.sqrt(jnp.float32(fan_in))
        return jax.random.normal(k, (fan_in, fan_out), jnp.float32) * scale

    return {
        "w_stem": lin(ks[0], in_channels, HIDDEN_DIM),
        "b_stem": jnp.zeros((1, HIDDEN_DIM), jnp.float32),
        "w1": lin(ks[1], HIDDEN_DIM, MLP_DIM),
        "b1": jax.random.normal(ks[2], (1, MLP_DIM), jnp.float32) * 0.01,
        "w2": lin(ks[3], MLP_DIM, BOTTLENECK),
        "b2": jax.random.normal(ks[4], (1, BOTTLENECK), jnp.float32) * 0.01,
        "w3": lin(ks[5], BOTTLENECK, num_class),
        "b3": jax.random.normal(ks[6], (1, num_class), jnp.float32) * 0.01,
    }


def prepare_kernel_params(params):
    """Fold the last two (linear) layers, pad the output dim to a lane-dense
    multiple of 128, and store the large head weights in bf16."""
    num_class = params["w3"].shape[-1]
    out_pad = _round_up(num_class, LANE)
    w23 = params["w2"] @ params["w3"]                       # [2048, K] (exact fold)
    b23 = params["b2"] @ params["w3"] + params["b3"]        # [1, K]
    w23 = jnp.pad(w23, ((0, 0), (0, out_pad - num_class)))
    b23 = jnp.pad(b23, ((0, 0), (0, out_pad - num_class)))
    return {
        "w_stem": params["w_stem"].astype(jnp.float32),
        "b_stem": params["b_stem"].astype(jnp.float32),
        "w1": params["w1"].astype(jnp.bfloat16),
        "b1": params["b1"].astype(jnp.float32),
        "w23": w23.astype(jnp.bfloat16),
        "b23": b23.astype(jnp.float32),
    }


@functools.partial(jax.jit, static_argnames=("num_class",))
def rgb_cls_forward(x_ncdhw, kp, *, num_class):
    """x_ncdhw: [B, C, T, H, W] float32 (PyTorch NCDHW video layout)."""
    B, C, T, H, W = x_ncdhw.shape
    N = T * H * W
    # Free reshape of the contiguous NCDHW tensor; N lands on the lane axis.
    x = x_ncdhw.reshape(B, C, N)

    b_tile = 8 if B % 8 == 0 else B        # full-dim block if B isn't sublane-aligned
    tile_n = min(DEFAULT_TILE_N, _round_up(N, LANE))
    out_pad = kp["b23"].shape[-1]

    def _resident(arr):                    # weight stays VMEM-resident (constant index)
        zero = (0,) * arr.ndim
        return pl.BlockSpec(arr.shape, lambda g, n: zero)

    grid_spec = pltpu.PrefetchScalarGridSpec(
        num_scalar_prefetch=0,
        grid=(pl.cdiv(B, b_tile), pl.cdiv(N, tile_n)),
        in_specs=[
            pl.BlockSpec((b_tile, C, tile_n), lambda g, n: (g, 0, n)),
            _resident(kp["w_stem"]),
            _resident(kp["b_stem"]),
            _resident(kp["w1"]),
            _resident(kp["b1"]),
            _resident(kp["w23"]),
            _resident(kp["b23"]),
        ],
        out_specs=pl.BlockSpec((b_tile, out_pad), lambda g, n: (g, 0)),
        scratch_shapes=[pltpu.VMEM((b_tile, C), jnp.float32)],
    )

    out = pl.pallas_call(
        functools.partial(rgb_cls_kernel, n_total=N),
        out_shape=jax.ShapeDtypeStruct((B, out_pad), jnp.float32),
        grid_spec=grid_spec,
        compiler_params=pltpu.CompilerParams(
            dimension_semantics=("parallel", "arbitrary")),
    )(x, kp["w_stem"], kp["b_stem"], kp["w1"], kp["b1"], kp["w23"], kp["b23"])
    return out[:, :num_class]


def reference_forward_mirror(x_ncdhw, kp, num_class):
    """Pure-JAX mirror of the kernel math (pool-first, folded head, bf16 weights)."""
    B, C, T, H, W = x_ncdhw.shape
    mean = jnp.mean(x_ncdhw.reshape(B, C, T * H * W), axis=-1)
    feat = mean @ kp["w_stem"] + kp["b_stem"]
    h = jnp.dot(feat.astype(jnp.bfloat16), kp["w1"],
                preferred_element_type=jnp.float32) + kp["b1"]
    h = jnp.maximum(h, 0.0)
    out = jnp.dot(h.astype(jnp.bfloat16), kp["w23"],
                  preferred_element_type=jnp.float32) + kp["b23"]
    return out[:, :num_class]


def reference_forward_original(x_ncdhw, params):
    """Original-module math (per-position stem projection, global pool, unfolded
    f32 classifier head) for a looser semantic check."""
    B, C, T, H, W = x_ncdhw.shape
    x = jnp.transpose(x_ncdhw, (0, 2, 3, 4, 1)).reshape(B, T * H * W, C)
    feat = jnp.mean(x @ params["w_stem"], axis=1) + params["b_stem"]
    h = jnp.maximum(feat @ params["w1"] + params["b1"], 0.0)
    h = h @ params["w2"] + params["b2"]
    return h @ params["w3"] + params["b3"]


if __name__ == "__main__":
    key = jax.random.PRNGKey(0)
    k_x, k_p = jax.random.split(key)

    # Small NCDHW video batch: B=2, C=3, T=4, H=8, W=8 (like the PyTorch module).
    x1 = jax.random.normal(k_x, (2, 3, 4, 8, 8), jnp.float32)
    params = init_params(k_p)
    kp = prepare_kernel_params(params)

    out = rgb_cls_forward(x1, kp, num_class=NUM_CLASS)
    out = jax.block_until_ready(out)
    assert out.shape == (2, NUM_CLASS), out.shape

    ref_mirror = reference_forward_mirror(x1, kp, NUM_CLASS)
    assert jnp.allclose(out, ref_mirror, atol=2e-3, rtol=2e-3), \
        "mismatch vs mirror reference"

    ref_orig = reference_forward_original(x1, params)
    assert jnp.allclose(out, ref_orig, atol=5e-3, rtol=5e-2), \
        "mismatch vs original-module (unfolded f32) reference"

    print("KERNEL_OK")
</pallas_src>

<mosaic_0001>
module attributes {stable_mosaic.version = 11 : i64} {
  func.func @rgb_cls_kernel(%arg0: i32, %arg1: i32, %arg2: memref<2x3x256xf32, #tpu.memory_space<vmem>>, %arg3: memref<3x1024xf32, #tpu.memory_space<vmem>>, %arg4: memref<1x1024xf32, #tpu.memory_space<vmem>>, %arg5: memref<1024x2048xbf16, #tpu.memory_space<vmem>>, %arg6: memref<1x2048xf32, #tpu.memory_space<vmem>>, %arg7: memref<2048x128xbf16, #tpu.memory_space<vmem>>, %arg8: memref<1x128xf32, #tpu.memory_space<vmem>>, %arg9: memref<2x128xf32, #tpu.memory_space<vmem>>, %arg10: memref<2x3xf32, #tpu.memory_space<vmem>>) attributes {dimension_semantics = [#tpu.dimension_semantics<parallel>, #tpu.dimension_semantics<arbitrary>], iteration_bounds = array<i64: 1, 1>, scalar_prefetch = 0 : i64, scratch_operands = 1 : i64, tpu.core_type = #tpu.core_type<tc>, window_params = [{transform_indices = @transform_0, window_bounds = array<i64: 2, 3, 256>}, {pipeline_mode = #tpu.pipeline_mode<synchronous>, transform_indices = @transform_1, window_bounds = array<i64: 3, 1024>}, {pipeline_mode = #tpu.pipeline_mode<synchronous>, transform_indices = @transform_2, window_bounds = array<i64: 1, 1024>}, {pipeline_mode = #tpu.pipeline_mode<synchronous>, transform_indices = @transform_3, window_bounds = array<i64: 1024, 2048>}, {pipeline_mode = #tpu.pipeline_mode<synchronous>, transform_indices = @transform_4, window_bounds = array<i64: 1, 2048>}, {pipeline_mode = #tpu.pipeline_mode<synchronous>, transform_indices = @transform_5, window_bounds = array<i64: 2048, 128>}, {pipeline_mode = #tpu.pipeline_mode<synchronous>, transform_indices = @transform_6, window_bounds = array<i64: 1, 128>}, {transform_indices = @transform_7, window_bounds = array<i64: 2, 128>}]} {
    %c0_i32 = arith.constant 0 : i32
    %0 = arith.cmpi eq, %arg1, %c0_i32 : i32
    %1 = arith.extui %0 : i1 to i32
    %c0_i32_0 = arith.constant 0 : i32
    %2 = arith.cmpi ne, %1, %c0_i32_0 : i32
    scf.if %2 {
      %cst_9 = arith.constant 0.000000e+00 : f32
      %11 = vector.broadcast %cst_9 : f32 to vector<2x3xf32>
      %c0_10 = arith.constant 0 : index
      %c0_11 = arith.constant 0 : index
      %12 = vector.load %arg10[%c0_10, %c0_11] : memref<2x3xf32, #tpu.memory_space<vmem>>, vector<2x3xf32>
      tpu.vector_store %arg10[%c0_10, %c0_11], %11 {strides = array<i32>} : memref<2x3xf32, #tpu.memory_space<vmem>>, vector<2x3xf32>,
    } else {
    }
    %c0 = arith.constant 0 : index
    %c0_1 = arith.constant 0 : index
    %c0_2 = arith.constant 0 : index
    %3 = vector.load %arg2[%c0, %c0_1, %c0_2] : memref<2x3x256xf32, #tpu.memory_space<vmem>>, vector<2x3x256xf32>
    %c0_3 = arith.constant 0 : index
    %c0_4 = arith.constant 0 : index
    %4 = vector.load %arg10[%c0_3, %c0_4] : memref<2x3xf32, #tpu.memory_space<vmem>>, vector<2x3xf32>
    %cst = arith.constant dense<0.000000e+00> : vector<2x3xf32>
    %5 = vector.multi_reduction <add>, %3, %cst [2] : vector<2x3x256xf32> to vector<2x3xf32>
    %6 = arith.addf %4, %5 : vector<2x3xf32>
    %c0_5 = arith.constant 0 : index
    %c0_6 = arith.constant 0 : index
    %7 = vector.load %arg10[%c0_5, %c0_6] : memref<2x3xf32, #tpu.memory_space<vmem>>, vector<2x3xf32>
    tpu.vector_store %arg10[%c0_5, %c0_6], %6 {strides = array<i32>} : memref<2x3xf32, #tpu.memory_space<vmem>>, vector<2x3xf32>,
    %c0_i32_7 = arith.constant 0 : i32
    %8 = arith.cmpi eq, %arg1, %c0_i32_7 : i32
    %9 = arith.extui %8 : i1 to i32
    %c0_i32_8 = arith.constant 0 : i32
    %10 = arith.cmpi ne, %9, %c0_i32_8 : i32
    scf.if %10 {
      %c0_9 = arith.constant 0 : index
      %c0_10 = arith.constant 0 : index
      %11 = vector.load %arg10[%c0_9, %c0_10] : memref<2x3xf32, #tpu.memory_space<vmem>>, vector<2x3xf32>
      %cst_11 = arith.constant 3.906250e-03 : f32
      %12 = vector.broadcast %cst_11 : f32 to vector<2x3xf32>
      %13 = arith.mulf %11, %12 : vector<2x3xf32>
      %c0_12 = arith.constant 0 : index
      %c0_13 = arith.constant 0 : index
      %14 = vector.load %arg3[%c0_12, %c0_13] : memref<3x1024xf32, #tpu.memory_space<vmem>>, vector<3x1024xf32>
      %c0_14 = arith.constant 0 : index
      %c0_15 = arith.constant 0 : index
      %15 = vector.load %arg4[%c0_14, %c0_15] : memref<1x1024xf32, #tpu.memory_space<vmem>>, vector<1x1024xf32>
      %16 = vector.extract_strided_slice %13 {offsets = [0, 0], sizes = [2, 1], strides = [1, 1]} : vector<2x3xf32> to vector<2x1xf32>
      %17 = vector.extract_strided_slice %14 {offsets = [0, 0], sizes = [1, 1024], strides = [1, 1]} : vector<3x1024xf32> to vector<1x1024xf32>
      %18 = vector.broadcast %16 : vector<2x1xf32> to vector<2x1024xf32>
      %19 = vector.broadcast %17 : vector<1x1024xf32> to vector<2x1024xf32>
      %20 = arith.mulf %18, %19 : vector<2x1024xf32>
      %21 = vector.broadcast %15 : vector<1x1024xf32> to vector<2x1024xf32>
      %22 = arith.addf %21, %20 : vector<2x1024xf32>
      %23 = vector.extract_strided_slice %13 {offsets = [0, 1], sizes = [2, 1], strides = [1, 1]} : vector<2x3xf32> to vector<2x1xf32>
      %24 = vector.extract_strided_slice %14 {offsets = [1, 0], sizes = [1, 1024], strides = [1, 1]} : vector<3x1024xf32> to vector<1x1024xf32>
      %25 = vector.broadcast %23 : vector<2x1xf32> to vector<2x1024xf32>
      %26 = vector.broadcast %24 : vector<1x1024xf32> to vector<2x1024xf32>
      %27 = arith.mulf %25, %26 : vector<2x1024xf32>
      %28 = arith.addf %22, %27 : vector<2x1024xf32>
      %29 = vector.extract_strided_slice %13 {offsets = [0, 2], sizes = [2, 1], strides = [1, 1]} : vector<2x3xf32> to vector<2x1xf32>
      %30 = vector.extract_strided_slice %14 {offsets = [2, 0], sizes = [1, 1024], strides = [1, 1]} : vector<3x1024xf32> to vector<1x1024xf32>
      %31 = vector.broadcast %29 : vector<2x1xf32> to vector<2x1024xf32>
      %32 = vector.broadcast %30 : vector<1x1024xf32> to vector<2x1024xf32>
      %33 = arith.mulf %31, %32 : vector<2x1024xf32>
      %34 = arith.addf %28, %33 : vector<2x1024xf32>
      %35 = arith.truncf %34 : vector<2x1024xf32> to vector<2x1024xbf16>
      %c0_16 = arith.constant 0 : index
      %c0_17 = arith.constant 0 : index
      %36 = vector.load %arg5[%c0_16, %c0_17] : memref<1024x2048xbf16, #tpu.memory_space<vmem>>, vector<1024x2048xbf16>
      %cst_18 = arith.constant dense<0.000000e+00> : vector<2x2048xf32>
      %37 = tpu.matmul %35, %36, %cst_18 {dimension_numbers = #tpu.dot_dimension_numbers<[1], [0], [0], [1], [0, 0, 1, 1], [], []>} : vector<2x1024xbf16>, vector<1024x2048xbf16>, vector<2x2048xf32> -> vector<2x2048xf32>
      %c0_19 = arith.constant 0 : index
      %c0_20 = arith.constant 0 : index
      %38 = vector.load %arg6[%c0_19, %c0_20] : memref<1x2048xf32, #tpu.memory_space<vmem>>, vector<1x2048xf32>
      %39 = vector.broadcast %38 : vector<1x2048xf32> to vector<2x2048xf32>
      %40 = arith.addf %37, %39 : vector<2x2048xf32>
      %cst_21 = arith.constant 0.000000e+00 : f32
      %41 = vector.broadcast %cst_21 : f32 to vector<2x2048xf32>
      %42 = arith.maximumf %40, %41 : vector<2x2048xf32>
      %43 = arith.truncf %42 : vector<2x2048xf32> to vector<2x2048xbf16>
      %c0_22 = arith.constant 0 : index
      %c0_23 = arith.constant 0 : index
      %44 = vector.load %arg7[%c0_22, %c0_23] : memref<2048x128xbf16, #tpu.memory_space<vmem>>, vector<2048x128xbf16>
      %cst_24 = arith.constant dense<0.000000e+00> : vector<2x128xf32>
      %45 = tpu.matmul %43, %44, %cst_24 {dimension_numbers = #tpu.dot_dimension_numbers<[1], [0], [0], [1], [0, 0, 1, 1], [], []>} : vector<2x2048xbf16>, vector<2048x128xbf16>, vector<2x128xf32> -> vector<2x128xf32>
      %c0_25 = arith.constant 0 : index
      %c0_26 = arith.constant 0 : index
      %46 = vector.load %arg8[%c0_25, %c0_26] : memref<1x128xf32, #tpu.memory_space<vmem>>, vector<1x128xf32>
      %47 = vector.broadcast %46 : vector<1x128xf32> to vector<2x128xf32>
      %48 = arith.addf %45, %47 : vector<2x128xf32>
      %c0_27 = arith.constant 0 : index
      %c0_28 = arith.constant 0 : index
      %49 = vector.load %arg9[%c0_27, %c0_28] : memref<2x128xf32, #tpu.memory_space<vmem>>, vector<2x128xf32>
      tpu.vector_store %arg9[%c0_27, %c0_28], %48 {strides = array<i32>} : memref<2x128xf32, #tpu.memory_space<vmem>>, vector<2x128xf32>,
    } else {
    }
    return
  }
  func.func @transform_0(%arg0: i32, %arg1: i32) -> (i32, i32, i32) {
    %c0_i32 = arith.constant 0 : i32
    %c0_i32_0 = arith.constant 0 : i32
    return %arg0, %c0_i32, %arg1 : i32, i32, i32
  }
  func.func @transform_1(%arg0: i32, %arg1: i32) -> (i32, i32) {
    %c0_i32 = arith.constant 0 : i32
    %c0_i32_0 = arith.constant 0 : i32
    %c0_i32_1 = arith.constant 0 : i32
    return %c0_i32, %c0_i32_0 : i32, i32
  }
  func.func @transform_2(%arg0: i32, %arg1: i32) -> (i32, i32) {
    %c0_i32 = arith.constant 0 : i32
    %c0_i32_0 = arith.constant 0 : i32
    %c0_i32_1 = arith.constant 0 : i32
    return %c0_i32, %c0_i32_0 : i32, i32
  }
  func.func @transform_3(%arg0: i32, %arg1: i32) -> (i32, i32) {
    %c0_i32 = arith.constant 0 : i32
    %c0_i32_0 = arith.constant 0 : i32
    %c0_i32_1 = arith.constant 0 : i32
    return %c0_i32, %c0_i32_0 : i32, i32
  }
  func.func @transform_4(%arg0: i32, %arg1: i32) -> (i32, i32) {
    %c0_i32 = arith.constant 0 : i32
    %c0_i32_0 = arith.constant 0 : i32
    %c0_i32_1 = arith.constant 0 : i32
    return %c0_i32, %c0_i32_0 : i32, i32
  }
  func.func @transform_5(%arg0: i32, %arg1: i32) -> (i32, i32) {
    %c0_i32 = arith.constant 0 : i32
    %c0_i32_0 = arith.constant 0 : i32
    %c0_i32_1 = arith.constant 0 : i32
    return %c0_i32, %c0_i32_0 : i32, i32
  }
  func.func @transform_6(%arg0: i32, %arg1: i32) -> (i32, i32) {
    %c0_i32 = arith.constant 0 : i32
    %c0_i32_0 = arith.constant 0 : i32
    %c0_i32_1 = arith.constant 0 : i32
    return %c0_i32, %c0_i32_0 : i32, i32
  }
  func.func @transform_7(%arg0: i32, %arg1: i32) -> (i32, i32) {
    %c0_i32 = arith.constant 0 : i32
    %c0_i32_0 = arith.constant 0 : i32
    return %arg0, %c0_i32 : i32, i32
  }
}

</mosaic_0001>

<llo_original>
// kernel: rgb_cls_forward.1
$region0: #{rgb_cls_forward.1}
  #allocation0 [shape = 'u32[]', space=smem, size = 0x4, offset = 0x4, fixed_abs, tag = 'smem constant byte address 0x4 - core index']
  #allocation1 [shape = 'u32[144,128]{1,0:T(1,128)}', space=vmem, size = 0x12000, scoped, tag = 'internal scratch']
  #allocation2 [shape = 'f32[2,3]{1,0:T(2,128)}', space=vmem, size = 0x400, scoped, tag = 'scratch operand']
  %s0 = inlined_call_operand.vmem [shape: f32[2,3,256], index: 0, kind: input, shape index: {}]
  %s1 = inlined_call_operand.hbm [shape: f32[3,1024], index: 1, kind: input, shape index: {}]
  %s2 = inlined_call_operand.hbm [shape: f32[1,1024], index: 2, kind: input, shape index: {}]
  %s3 = inlined_call_operand.hbm [shape: bf16[1024,2048], index: 3, kind: input, shape index: {}]
  %s4 = inlined_call_operand.hbm [shape: f32[1,2048], index: 4, kind: input, shape index: {}]
  %s5 = inlined_call_operand.hbm [shape: bf16[2048,128], index: 5, kind: input, shape index: {}]
  %s6 = inlined_call_operand.hbm [shape: f32[1,128], index: 6, kind: input, shape index: {}]
  %s7 = inlined_call_operand.hbm [shape: f32[2,128], index: 7, kind: output, shape index: {}]
  %s8 = sld [smem:[#allocation0]]
  $region70: #{rgb_cls_forward.1} parent=0
    _
  %s10 = ssub.s32 1, %s8
  %s11 = scalar_select 0, %s10, %s8
  $region1: #{rgb_cls_forward.1} parent=0
    #allocation3 [shape = 'u8[16384]{0}', space=vmem, size = 0x4000, scoped, tag = 'input window, operand 1, single buffered']
    #allocation4 [shape = 's32[1]{0}', space=sflag, size = 0x4, scoped, tag = 'scoped memory for rgb_cls_forward.1']
    #allocation5 [shape = 's32[1]{0}', space=sflag, size = 0x4, scoped, tag = 'scoped memory for rgb_cls_forward.1']
    #allocation6 [shape = 'u8[4096]{0}', space=vmem, size = 0x1000, scoped, tag = 'input window, operand 2, single buffered']
    #allocation7 [shape = 's32[1]{0}', space=sflag, size = 0x4, scoped, tag = 'scoped memory for rgb_cls_forward.1']
    #allocation8 [shape = 'u8[4194304]{0}', space=vmem, size = 0x400000, scoped, tag = 'input window, operand 3, single buffered']
    #allocation9 [shape = 'u8[8192]{0}', space=vmem, size = 0x2000, scoped, tag = 'input window, operand 4, single buffered']
    #allocation10 [shape = 's32[1]{0}', space=sflag, size = 0x4, scoped, tag = 'scoped memory for rgb_cls_forward.1']
    #allocation11 [shape = 'u8[524288]{0}', space=vmem, size = 0x80000, scoped, tag = 'input window, operand 5, single buffered']
    #allocation12 [shape = 'u8[512]{0}', space=vmem, size = 0x400, scoped, tag = 'input window, operand 6, single buffered']
    #allocation13 [shape = 's32[1]{0}', space=sflag, size = 0x4, scoped, tag = 'scoped memory for rgb_cls_forward.1']
    #allocation14 [shape = 'u8[1024]{0}', space=vmem, size = 0x400, scoped, tag = 'output window, operand 0, single buffered']
    %12 = vsyncpa [#allocation4], 0
    %13 = vsyncpa [#allocation7], 0
    %14 = vsyncpa [#allocation10], 0
    %15 = vsyncpa [#allocation13], 0
    %16 = vsyncpa [#allocation5], 0
    // Predicated region
    $region2: #{rgb_cls_forward.1} parent=1 // pred_check
      _
    $region3: #{rgb_cls_forward.1} parent=1 // pred_check_branch
      %18 = sbr.rel (0) target = $region5
    $region4: #{rgb_cls_forward.1} parent=1 // pred_region
      _
    $region5: #{rgb_cls_forward.1} parent=1 // pred_fallthru
      _
    // Predicated region
    $region6: #{rgb_cls_forward.1} parent=1 // pred_check
      _
    $region7: #{rgb_cls_forward.1} parent=1 // pred_check_branch
      %20 = sbr.rel (0) target = $region9
    $region8: #{rgb_cls_forward.1} parent=1 // pred_region
      %s22 = ssub.s32 512, 512
      %23 = vsyncadd [#allocation4], %s22
      %s25 = sshll.u32 [#allocation3], 4
      %s26 = int_to_ptr.vmem [resolvable:$true] %s25
      %28 = dma.hbm_to_vmem [thread:$0]  %s1, 512, %s26, [#allocation4]
    $region9: #{rgb_cls_forward.1} parent=1 // pred_fallthru
      _
    // Predicated region
    $region10: #{rgb_cls_forward.1} parent=1 // pred_check
      _
    $region11: #{rgb_cls_forward.1} parent=1 // pred_check_branch
      %30 = sbr.rel (0) target = $region13
    $region12: #{rgb_cls_forward.1} parent=1 // pred_region
      %s32 = ssub.s32 128, 128
      %33 = vsyncadd [#allocation7], %s32
      %s35 = sshll.u32 [#allocation6], 4
      %s36 = int_to_ptr.vmem [resolvable:$true] %s35
      %38 = dma.hbm_to_vmem [thread:$0]  %s2, 128, %s36, [#allocation7]
    $region13: #{rgb_cls_forward.1} parent=1 // pred_fallthru
      _
    // Predicated region
    $region14: #{rgb_cls_forward.1} parent=1 // pred_check
      _
    $region15: #{rgb_cls_forward.1} parent=1 // pred_check_branch
      %40 = sbr.rel (0) target = $region17
    $region16: #{rgb_cls_forward.1} parent=1 // pred_region
      %s42 = ssub.s32 131072, 131072
      %43 = vsyncadd [#allocation7], %s42
      %s44 = sshll.u32 [#allocation8], 4
      %s45 = int_to_ptr.vmem [resolvable:$true] %s44
      %50 = dma.hbm_to_vmem [thread:$0]  %s3, 131072, %s45, [#allocation7], 1024, 1024, 64
    $region17: #{rgb_cls_forward.1} parent=1 // pred_fallthru
      _
    // Predicated region
    $region18: #{rgb_cls_forward.1} parent=1 // pred_check
      _
    $region19: #{rgb_cls_forward.1} parent=1 // pred_check_branch
      %52 = sbr.rel (0) target = $region21
    $region20: #{rgb_cls_forward.1} parent=1 // pred_region
      %s54 = ssub.s32 256, 256
      %55 = vsyncadd [#allocation10], %s54
      %s57 = sshll.u32 [#allocation9], 4
      %s58 = int_to_ptr.vmem [resolvable:$true] %s57
      %60 = dma.hbm_to_vmem [thread:$0]  %s4, 256, %s58, [#allocation10]
    $region21: #{rgb_cls_forward.1} parent=1 // pred_fallthru
      _
    // Predicated region
    $region22: #{rgb_cls_forward.1} parent=1 // pred_check
      _
    $region23: #{rgb_cls_forward.1} parent=1 // pred_check_branch
      %62 = sbr.rel (0) target = $region25
    $region24: #{rgb_cls_forward.1} parent=1 // pred_region
      %s64 = ssub.s32 16384, 16384
      %65 = vsyncadd [#allocation10], %s64
      %s66 = sshll.u32 [#allocation11], 4
      %s67 = int_to_ptr.vmem [resolvable:$true] %s66
      %72 = dma.hbm_to_vmem [thread:$0]  %s5, 16384, %s67, [#allocation10], 64, 64, 4
    $region25: #{rgb_cls_forward.1} parent=1 // pred_fallthru
      _
    // Predicated region
    $region26: #{rgb_cls_forward.1} parent=1 // pred_check
      _
    $region27: #{rgb_cls_forward.1} parent=1 // pred_check_branch
      %74 = sbr.rel (0) target = $region29
    $region28: #{rgb_cls_forward.1} parent=1 // pred_region
      %s76 = ssub.s32 16, 16
      %77 = vsyncadd [#allocation13], %s76
      %s79 = sshll.u32 [#allocation12], 4
      %s80 = int_to_ptr.vmem [resolvable:$true] %s79
      %82 = dma.hbm_to_vmem [thread:$0]  %s6, 16, %s80, [#allocation13]
    $region29: #{rgb_cls_forward.1} parent=1 // pred_fallthru
      _
    // Predicated region
    $region30: #{rgb_cls_forward.1} parent=1 // pred_check
      _
    $region31: #{rgb_cls_forward.1} parent=1 // pred_check_branch
      %84 = sbr.rel (0) target = $region33
    $region32: #{rgb_cls_forward.1} parent=1 // pred_region
      %85 = dma.done [#allocation4], 512
    $region33: #{rgb_cls_forward.1} parent=1 // pred_fallthru
      _
    // Predicated region
    $region34: #{rgb_cls_forward.1} parent=1 // pred_check
      _
    $region35: #{rgb_cls_forward.1} parent=1 // pred_check_branch
      %87 = sbr.rel (0) target = $region37
    $region36: #{rgb_cls_forward.1} parent=1 // pred_region
      %88 = dma.done [#allocation7], 128
    $region37: #{rgb_cls_forward.1} parent=1 // pred_fallthru
      _
    // Predicated region
    $region38: #{rgb_cls_forward.1} parent=1 // pred_check
      _
    $region39: #{rgb_cls_forward.1} parent=1 // pred_check_branch
      %90 = sbr.rel (0) target = $region41
    $region40: #{rgb_cls_forward.1} parent=1 // pred_region
      %91 = dma.done [#allocation7], 131072
    $region41: #{rgb_cls_forward.1} parent=1 // pred_fallthru
      _
    // Predicated region
    $region42: #{rgb_cls_forward.1} parent=1 // pred_check
      _
    $region43: #{rgb_cls_forward.1} parent=1 // pred_check_branch
      %93 = sbr.rel (0) target = $region45
    $region44: #{rgb_cls_forward.1} parent=1 // pred_region
      %94 = dma.done [#allocation10], 256
    $region45: #{rgb_cls_forward.1} parent=1 // pred_fallthru
      _
    // Predicated region
    $region46: #{rgb_cls_forward.1} parent=1 // pred_check
      _
    $region47: #{rgb_cls_forward.1} parent=1 // pred_check_branch
      %96 = sbr.rel (0) target = $region49
    $region48: #{rgb_cls_forward.1} parent=1 // pred_region
      %97 = dma.done [#allocation10], 16384
    $region49: #{rgb_cls_forward.1} parent=1 // pred_fallthru
      _
    // Predicated region
    $region50: #{rgb_cls_forward.1} parent=1 // pred_check
      _
    $region51: #{rgb_cls_forward.1} parent=1 // pred_check_branch
      %99 = sbr.rel (0) target = $region53
    $region52: #{rgb_cls_forward.1} parent=1 // pred_region
      %100 = dma.done [#allocation13], 16
    $region53: #{rgb_cls_forward.1} parent=1 // pred_fallthru
      _
    %p102 = scmp.eq.s32.totalorder 0, 0
    // Predicated region
    $region54: #{rgb_cls_forward.1} parent=1 // pred_check
      %p103 = pneg %p102
    $region55: #{rgb_cls_forward.1} parent=1 // pred_check_branch
      %105 = sbr.rel (%p103) target = $region57
    $region56: #{rgb_cls_forward.1} parent=1 // pred_region
      %vm106 = vcmask 17408
      %107 = vst.msk [vmem:[#allocation2] sm:$0x3] %vm106, 0.0
    $region57: #{rgb_cls_forward.1} parent=1 // pred_fallthru
      _
    %v108 = vld [vmem:[%s0] sm:$0x77]
    %v109 = vld [vmem:[%s0 + $0x8] sm:$0x77]
    %v110 = vld [vmem:[#allocation2] sm:$0x3]
    %v113 = vcombine.high %v108, %v108
    %v114 = vcombine.high %v109, %v109
    %vm117 = vcmask 1042432
    %v118 = vsel %vm117, %v108, 0.0
    %v119 = vsel %vm117, %v113, 0.0
    %v120 = vadd.f32 %v118, %v119
    %121 = vadd.xlane.f32.xlu0 %v120
    %v122 = vpop.xlane.xlu0 %121
    %v123 = vsel %vm117, %v109, 0.0
    %v124 = vsel %vm117, %v114, 0.0
    %v125 = vadd.f32 %v123, %v124
    %126 = vadd.xlane.f32.xlu0 %v125
    %v127 = vpop.xlane.xlu0 %126
    %v130 = vlaneseq
    %v131 = vand.u32 %v130, 127
    %v132 = vlaneseq
    %v133 = vshrl.u32 %v132, 7
    %v134 = vsub.s32 %v131, %v133
    %v135 = vrot.slane %v122, %v134
    %v136 = vlaneseq
    %v137 = vshrl.u32 %v136, 7
    %v138 = vsub.s32 %v131, %v137
    %v139 = vrot.slane %v127, %v138
    %vm140 = vcmask 1041409
    %v141 = vsel %vm140, %v139, %v135
    %v143 = vadd.f32 %v110, %v141
    %vm144 = vcmask 17408
    %145 = vst.msk [vmem:[#allocation2] sm:$0x3] %vm144, %v143
    // Predicated region
    $region58: #{rgb_cls_forward.1} parent=1 // pred_check
      %p146 = pneg %p102
    $region59: #{rgb_cls_forward.1} parent=1 // pred_check_branch
      %148 = sbr.rel (%p146) target = $region61
    $region60: #{rgb_cls_forward.1} parent=1 // pred_region
      %v149 = vld [vmem:[#allocation2] sm:$0x3]
      %v150 = vmul.f32 %v149, 0.00390625
      %v151 = vld [vmem:[#allocation3] sm:$0x77]
      %v152 = vld [vmem:[#allocation3 + $0x8] sm:$0x77]
      %v153 = vld [vmem:[#allocation3 + $0x10] sm:$0x77]
      %v154 = vld [vmem:[#allocation3 + $0x18] sm:$0x77]
      %v155 = vld [vmem:[#allocation6] sm:$0xff]
      %157 = vset.pattern.permute.xlu0 0
      %158 = vperm.xlu0 %157, %v150
      %v159 = vpop.permute.xlu0 %158
      %v165 = vlaneseq
      %v166 = vshrl.u32 %v165, 7
      %v167 = vsub.s32 0, %v166
      %v168 = vrot.slane %v151, %v167
      %v169 = vlaneseq
      %v170 = vshrl.u32 %v169, 7
      %v171 = vsub.s32 4, %v170
      %v172 = vrot.slane %v151, %v171
      %v173 = vlaneseq
      %v174 = vshrl.u32 %v173, 7
      %v175 = vsub.s32 0, %v174
      %v176 = vrot.slane %v152, %v175
      %v177 = vlaneseq
      %v178 = vshrl.u32 %v177, 7
      %v179 = vsub.s32 4, %v178
      %v180 = vrot.slane %v152, %v179
      %v181 = vlaneseq
      %v182 = vshrl.u32 %v181, 7
      %v183 = vsub.s32 0, %v182
      %v184 = vrot.slane %v153, %v183
      %v185 = vlaneseq
      %v186 = vshrl.u32 %v185, 7
      %v187 = vsub.s32 4, %v186
      %v188 = vrot.slane %v153, %v187
      %v189 = vlaneseq
      %v190 = vshrl.u32 %v189, 7
      %v191 = vsub.s32 0, %v190
      %v192 = vrot.slane %v154, %v191
      %v193 = vlaneseq
      %v194 = vshrl.u32 %v193, 7
      %v195 = vsub.s32 4, %v194
      %v196 = vrot.slane %v154, %v195
      %v205 = vlaneseq
      %v206 = vshrl.u32 %v205, 7
      %v207 = vsub.s32 0, %v206
      %v208 = vrot.slane %v168, %v207
      %v209 = vlaneseq
      %v210 = vshrl.u32 %v209, 7
      %v211 = vsub.s32 0, %v210
      %v212 = vrot.slane %v172, %v211
      %v213 = vlaneseq
      %v214 = vshrl.u32 %v213, 7
      %v215 = vsub.s32 0, %v214
      %v216 = vrot.slane %v176, %v215
      %v217 = vlaneseq
      %v218 = vshrl.u32 %v217, 7
      %v219 = vsub.s32 0, %v218
      %v220 = vrot.slane %v180, %v219
      %v221 = vlaneseq
      %v222 = vshrl.u32 %v221, 7
      %v223 = vsub.s32 0, %v222
      %v224 = vrot.slane %v184, %v223
      %v225 = vlaneseq
      %v226 = vshrl.u32 %v225, 7
      %v227 = vsub.s32 0, %v226
      %v228 = vrot.slane %v188, %v227
      %v229 = vlaneseq
      %v230 = vshrl.u32 %v229, 7
      %v231 = vsub.s32 0, %v230
      %v232 = vrot.slane %v192, %v231
      %v233 = vlaneseq
      %v234 = vshrl.u32 %v233, 7
      %v235 = vsub.s32 0, %v234
      %v236 = vrot.slane %v196, %v235
      %v237 = vmul.f32 %v159, %v208
      %v238 = vmul.f32 %v159, %v212
      %v239 = vmul.f32 %v159, %v216
      %v240 = vmul.f32 %v159, %v220
      %v241 = vmul.f32 %v159, %v224
      %v242 = vmul.f32 %v159, %v228
      %v243 = vmul.f32 %v159, %v232
      %v244 = vmul.f32 %v159, %v236
      %v246 = vlaneseq
      %v247 = vshrl.u32 %v246, 7
      %v248 = vsub.s32 0, %v247
      %v249 = vrot.slane %v155, %v248
      %v250 = vlaneseq
      %v251 = vshrl.u32 %v250, 7
      %v252 = vsub.s32 1, %v251
      %v253 = vrot.slane %v155, %v252
      %v254 = vlaneseq
      %v255 = vshrl.u32 %v254, 7
      %v256 = vsub.s32 2, %v255
      %v257 = vrot.slane %v155, %v256
      %v258 = vlaneseq
      %v259 = vshrl.u32 %v258, 7
      %v260 = vsub.s32 3, %v259
      %v261 = vrot.slane %v155, %v260
      %v262 = vlaneseq
      %v263 = vshrl.u32 %v262, 7
      %v264 = vsub.s32 4, %v263
      %v265 = vrot.slane %v155, %v264
      %v266 = vlaneseq
      %v267 = vshrl.u32 %v266, 7
      %v268 = vsub.s32 5, %v267
      %v269 = vrot.slane %v155, %v268
      %v270 = vlaneseq
      %v271 = vshrl.u32 %v270, 7
      %v272 = vsub.s32 6, %v271
      %v273 = vrot.slane %v155, %v272
      %v274 = vlaneseq
      %v275 = vshrl.u32 %v274, 7
      %v276 = vsub.s32 7, %v275
      %v277 = vrot.slane %v155, %v276
      %v286 = vadd.f32 %v249, %v237
      %v287 = vadd.f32 %v253, %v238
      %v288 = vadd.f32 %v257, %v239
      %v289 = vadd.f32 %v261, %v240
      %v290 = vadd.f32 %v265, %v241
      %v291 = vadd.f32 %v269, %v242
      %v292 = vadd.f32 %v273, %v243
      %v293 = vadd.f32 %v277, %v244
      %294 = vset.pattern.permute.xlu0 1
      %295 = vperm.xlu0 %294, %v150
      %v296 = vpop.permute.xlu0 %295
      %v298 = vlaneseq
      %v299 = vshrl.u32 %v298, 7
      %v300 = vsub.s32 1, %v299
      %v301 = vrot.slane %v151, %v300
      %v302 = vlaneseq
      %v303 = vshrl.u32 %v302, 7
      %v304 = vsub.s32 5, %v303
      %v305 = vrot.slane %v151, %v304
      %v306 = vlaneseq
      %v307 = vshrl.u32 %v306, 7
      %v308 = vsub.s32 1, %v307
      %v309 = vrot.slane %v152, %v308
      %v310 = vlaneseq
      %v311 = vshrl.u32 %v310, 7
      %v312 = vsub.s32 5, %v311
      %v313 = vrot.slane %v152, %v312
      %v314 = vlaneseq
      %v315 = vshrl.u32 %v314, 7
      %v316 = vsub.s32 1, %v315
      %v317 = vrot.slane %v153, %v316
      %v318 = vlaneseq
      %v319 = vshrl.u32 %v318, 7
      %v320 = vsub.s32 5, %v319
      %v321 = vrot.slane %v153, %v320
      %v322 = vlaneseq
      %v323 = vshrl.u32 %v322, 7
      %v324 = vsub.s32 1, %v323
      %v325 = vrot.slane %v154, %v324
      %v326 = vlaneseq
      %v327 = vshrl.u32 %v326, 7
      %v328 = vsub.s32 5, %v327
      %v329 = vrot.slane %v154, %v328
      %v338 = vlaneseq
      %v339 = vshrl.u32 %v338, 7
      %v340 = vsub.s32 1, %v339
      %v341 = vrot.slane %v301, %v340
      %v342 = vlaneseq
      %v343 = vshrl.u32 %v342, 7
      %v344 = vsub.s32 1, %v343
      %v345 = vrot.slane %v305, %v344
      %v346 = vlaneseq
      %v347 = vshrl.u32 %v346, 7
      %v348 = vsub.s32 1, %v347
      %v349 = vrot.slane %v309, %v348
      %v350 = vlaneseq
      %v351 = vshrl.u32 %v350, 7
      %v352 = vsub.s32 1, %v351
      %v353 = vrot.slane %v313, %v352
      %v354 = vlaneseq
      %v355 = vshrl.u32 %v354, 7
      %v356 = vsub.s32 1, %v355
      %v357 = vrot.slane %v317, %v356
      %v358 = vlaneseq
      %v359 = vshrl.u32 %v358, 7
      %v360 = vsub.s32 1, %v359
      %v361 = vrot.slane %v321, %v360
      %v362 = vlaneseq
      %v363 = vshrl.u32 %v362, 7
      %v364 = vsub.s32 1, %v363
      %v365 = vrot.slane %v325, %v364
      %v366 = vlaneseq
      %v367 = vshrl.u32 %v366, 7
      %v368 = vsub.s32 1, %v367
      %v369 = vrot.slane %v329, %v368
      %v370 = vmul.f32 %v296, %v341
      %v371 = vmul.f32 %v296, %v345
      %v372 = vmul.f32 %v296, %v349
      %v373 = vmul.f32 %v296, %v353
      %v374 = vmul.f32 %v296, %v357
      %v375 = vmul.f32 %v296, %v361
      %v376 = vmul.f32 %v296, %v365
      %v377 = vmul.f32 %v296, %v369
      %v378 = vadd.f32 %v286, %v370
      %v379 = vadd.f32 %v287, %v371
      %v380 = vadd.f32 %v288, %v372
      %v381 = vadd.f32 %v289, %v373
      %v382 = vadd.f32 %v290, %v374
      %v383 = vadd.f32 %v291, %v375
      %v384 = vadd.f32 %v292, %v376
      %v385 = vadd.f32 %v293, %v377
      %386 = vset.pattern.permute.xlu0 2
      %387 = vperm.xlu0 %386, %v150
      %v388 = vpop.permute.xlu0 %387
      %v390 = vlaneseq
      %v391 = vshrl.u32 %v390, 7
      %v392 = vsub.s32 2, %v391
      %v393 = vrot.slane %v151, %v392
      %v394 = vlaneseq
      %v395 = vshrl.u32 %v394, 7
      %v396 = vsub.s32 6, %v395
      %v397 = vrot.slane %v151, %v396
      %v398 = vlaneseq
      %v399 = vshrl.u32 %v398, 7
      %v400 = vsub.s32 2, %v399
      %v401 = vrot.slane %v152, %v400
      %v402 = vlaneseq
      %v403 = vshrl.u32 %v402, 7
      %v404 = vsub.s32 6, %v403
      %v405 = vrot.slane %v152, %v404
      %v406 = vlaneseq
      %v407 = vshrl.u32 %v406, 7
      %v408 = vsub.s32 2, %v407
      %v409 = vrot.slane %v153, %v408
      %v410 = vlaneseq
      %v411 = vshrl.u32 %v410, 7
      %v412 = vsub.s32 6, %v411
      %v413 = vrot.slane %v153, %v412
      %v414 = vlaneseq
      %v415 = vshrl.u32 %v414, 7
      %v416 = vsub.s32 2, %v415
      %v417 = vrot.slane %v154, %v416
      %v418 = vlaneseq
      %v419 = vshrl.u32 %v418, 7
      %v420 = vsub.s32 6, %v419
      %v421 = vrot.slane %v154, %v420
      %v430 = vlaneseq
      %v431 = vshrl.u32 %v430, 7
      %v432 = vsub.s32 2, %v431
      %v433 = vrot.slane %v393, %v432
      %v434 = vlaneseq
      %v435 = vshrl.u32 %v434, 7
      %v436 = vsub.s32 2, %v435
      %v437 = vrot.slane %v397, %v436
      %v438 = vlaneseq
      %v439 = vshrl.u32 %v438, 7
      %v440 = vsub.s32 2, %v439
      %v441 = vrot.slane %v401, %v440
      %v442 = vlaneseq
      %v443 = vshrl.u32 %v442, 7
      %v444 = vsub.s32 2, %v443
      %v445 = vrot.slane %v405, %v444
      %v446 = vlaneseq
      %v447 = vshrl.u32 %v446, 7
      %v448 = vsub.s32 2, %v447
      %v449 = vrot.slane %v409, %v448
      %v450 = vlaneseq
      %v451 = vshrl.u32 %v450, 7
      %v452 = vsub.s32 2, %v451
      %v453 = vrot.slane %v413, %v452
      %v454 = vlaneseq
      %v455 = vshrl.u32 %v454, 7
      %v456 = vsub.s32 2, %v455
      %v457 = vrot.slane %v417, %v456
      %v458 = vlaneseq
      %v459 = vshrl.u32 %v458, 7
      %v460 = vsub.s32 2, %v459
      %v461 = vrot.slane %v421, %v460
      %v462 = vmul.f32 %v388, %v433
      %v463 = vmul.f32 %v388, %v437
      %v464 = vmul.f32 %v388, %v441
      %v465 = vmul.f32 %v388, %v445
      %v466 = vmul.f32 %v388, %v449
      %v467 = vmul.f32 %v388, %v453
      %v468 = vmul.f32 %v388, %v457
      %v469 = vmul.f32 %v388, %v461
      %v470 = vadd.f32 %v378, %v462
      %v471 = vadd.f32 %v379, %v463
      %v472 = vadd.f32 %v380, %v464
      %v473 = vadd.f32 %v381, %v465
      %v474 = vadd.f32 %v382, %v466
      %v475 = vadd.f32 %v383, %v467
      %v476 = vadd.f32 %v384, %v468
      %v477 = vadd.f32 %v385, %v469
      %v478 = vpack.c.bf16 %v470, %v470
      %v479 = vpack.c.bf16 %v471, %v471
      %v480 = vpack.c.bf16 %v472, %v472
      %v481 = vpack.c.bf16 %v473, %v473
      %v482 = vpack.c.bf16 %v474, %v474
      %v483 = vpack.c.bf16 %v475, %v475
      %v484 = vpack.c.bf16 %v476, %v476
      %v485 = vpack.c.bf16 %v477, %v477
      %v486 = vld [vmem:[#allocation8] sm:$0xff]
      %v487 = vld [vmem:[#allocation8 + $0x8] sm:$0xff]
      %v488 = vld [vmem:[#allocation8 + $0x10] sm:$0xff]
      %v489 = vld [vmem:[#allocation8 + $0x18] sm:$0xff]
      %v490 = vld [vmem:[#allocation8 + $0x20] sm:$0xff]
      %v491 = vld [vmem:[#allocation8 + $0x28] sm:$0xff]
      %v492 = vld [vmem:[#allocation8 + $0x30] sm:$0xff]
      %v493 = vld [vmem:[#allocation8 + $0x38] sm:$0xff]
      %v494 = vld [vmem:[#allocation8 + $0x40] sm:$0xff]
      %v495 = vld [vmem:[#allocation8 + $0x48] sm:$0xff]
      %v496 = vld [vmem:[#allocation8 + $0x50] sm:$0xff]
      %v497 = vld [vmem:[#allocation8 + $0x58] sm:$0xff]
      %v498 = vld [vmem:[#allocation8 + $0x60] sm:$0xff]
      %v499 = vld [vmem:[#allocation8 + $0x68] sm:$0xff]
      %v500 = vld [vmem:[#allocation8 + $0x70] sm:$0xff]
      %v501 = vld [vmem:[#allocation8 + $0x78] sm:$0xff]
      %v502 = vld [vmem:[#allocation8 + $0x80] sm:$0xff]
      %v503 = vld [vmem:[#allocation8 + $0x88] sm:$0xff]
      %v504 = vld [vmem:[#allocation8 + $0x90] sm:$0xff]
      %v505 = vld [vmem:[#allocation8 + $0x98] sm:$0xff]
      %v506 = vld [vmem:[#allocation8 + $0xa0] sm:$0xff]
      %v507 = vld [vmem:[#allocation8 + $0xa8] sm:$0xff]
      %v508 = vld [vmem:[#allocation8 + $0xb0] sm:$0xff]
      %v509 = vld [vmem:[#allocation8 + $0xb8] sm:$0xff]
      %v510 = vld [vmem:[#allocation8 + $0xc0] sm:$0xff]
      %v511 = vld [vmem:[#allocation8 + $0xc8] sm:$0xff]
      %v512 = vld [vmem:[#allocation8 + $0xd0] sm:$0xff]
      %v513 = vld [vmem:[#allocation8 + $0xd8] sm:$0xff]
      %v514 = vld [vmem:[#allocation8 + $0xe0] sm:$0xff]
      %v515 = vld [vmem:[#allocation8 + $0xe8] sm:$0xff]
      %v516 = vld [vmem:[#allocation8 + $0xf0] sm:$0xff]
      %v517 = vld [vmem:[#allocation8 + $0xf8] sm:$0xff]
      %v518 = vld [vmem:[#allocation8 + $0x100] sm:$0xff]
      %v519 = vld [vmem:[#allocation8 + $0x108] sm:$0xff]
      %v520 = vld [vmem:[#allocation8 + $0x110] sm:$0xff]
      %v521 = vld [vmem:[#allocation8 + $0x118] sm:$0xff]
      %v522 = vld [vmem:[#allocation8 + $0x120] sm:$0xff]
      %v523 = vld [vmem:[#allocation8 + $0x128] sm:$0xff]
      %v524 = vld [vmem:[#allocation8 + $0x130] sm:$0xff]
      %v525 = vld [vmem:[#allocation8 + $0x138] sm:$0xff]
      %v526 = vld [vmem:[#allocation8 + $0x140] sm:$0xff]
      %v527 = vld [vmem:[#allocation8 + $0x148] sm:$0xff]
      %v528 = vld [vmem:[#allocation8 + $0x150] sm:$0xff]
      %v529 = vld [vmem:[#allocation8 + $0x158] sm:$0xff]
      %v530 = vld [vmem:[#allocation8 + $0x160] sm:$0xff]
      %v531 = vld [vmem:[#allocation8 + $0x168] sm:$0xff]
      %v532 = vld [vmem:[#allocation8 + $0x170] sm:$0xff]
      %v533 = vld [vmem:[#allocation8 + $0x178] sm:$0xff]
      %v534 = vld [vmem:[#allocation8 + $0x180] sm:$0xff]
      %v535 = vld [vmem:[#allocation8 + $0x188] sm:$0xff]
      %v536 = vld [vmem:[#allocation8 + $0x190] sm:$0xff]
      %v537 = vld [vmem:[#allocation8 + $0x198] sm:$0xff]
      %v538 = vld [vmem:[#allocation8 + $0x1a0] sm:$0xff]
      %v539 = vld [vmem:[#allocation8 + $0x1a8] sm:$0xff]
      %v540 = vld [vmem:[#allocation8 + $0x1b0] sm:$0xff]
      %v541 = vld [vmem:[#allocation8 + $0x1b8] sm:$0xff]
      %v542 = vld [vmem:[#allocation8 + $0x1c0] sm:$0xff]
      %v543 = vld [vmem:[#allocation8 + $0x1c8] sm:$0xff]
      %v544 = vld [vmem:[#allocation8 + $0x1d0] sm:$0xff]
      %v545 = vld [vmem:[#allocation8 + $0x1d8] sm:$0xff]
      %v546 = vld [vmem:[#allocation8 + $0x1e0] sm:$0xff]
      %v547 = vld [vmem:[#allocation8 + $0x1e8] sm:$0xff]
      %v548 = vld [vmem:[#allocation8 + $0x1f0] sm:$0xff]
      %v549 = vld [vmem:[#allocation8 + $0x1f8] sm:$0xff]
      %v550 = vld [vmem:[#allocation8 + $0x200] sm:$0xff]
      %v551 = vld [vmem:[#allocation8 + $0x208] sm:$0xff]
      %v552 = vld [vmem:[#allocation8 + $0x210] sm:$0xff]
      %v553 = vld [vmem:[#allocation8 + $0x218] sm:$0xff]
      %v554 = vld [vmem:[#allocation8 + $0x220] sm:$0xff]
      %v555 = vld [vmem:[#allocation8 + $0x228] sm:$0xff]
      %v556 = vld [vmem:[#allocation8 + $0x230] sm:$0xff]
      %v557 = vld [vmem:[#allocation8 + $0x238] sm:$0xff]
      %v558 = vld [vmem:[#allocation8 + $0x240] sm:$0xff]
      %v559 = vld [vmem:[#allocation8 + $0x248] sm:$0xff]
      %v560 = vld [vmem:[#allocation8 + $0x250] sm:$0xff]
      %v561 = vld [vmem:[#allocation8 + $0x258] sm:$0xff]
      %v562 = vld [vmem:[#allocation8 + $0x260] sm:$0xff]
      %v563 = vld [vmem:[#allocation8 + $0x268] sm:$0xff]
      %v564 = vld [vmem:[#allocation8 + $0x270] sm:$0xff]
      %v565 = vld [vmem:[#allocation8 + $0x278] sm:$0xff]
      %v566 = vld [vmem:[#allocation8 + $0x280] sm:$0xff]
      %v567 = vld [vmem:[#allocation8 + $0x288] sm:$0xff]
      %v568 = vld [vmem:[#allocation8 + $0x290] sm:$0xff]
      %v569 = vld [vmem:[#allocation8 + $0x298] sm:$0xff]
      %v570 = vld [vmem:[#allocation8 + $0x2a0] sm:$0xff]
      %v571 = vld [vmem:[#allocation8 + $0x2a8] sm:$0xff]
      %v572 = vld [vmem:[#allocation8 + $0x2b0] sm:$0xff]
      %v573 = vld [vmem:[#allocation8 + $0x2b8] sm:$0xff]
      %v574 = vld [vmem:[#allocation8 + $0x2c0] sm:$0xff]
      %v575 = vld [vmem:[#allocation8 + $0x2c8] sm:$0xff]
      %v576 = vld [vmem:[#allocation8 + $0x2d0] sm:$0xff]
      %v577 = vld [vmem:[#allocation8 + $0x2d8] sm:$0xff]
      %v578 = vld [vmem:[#allocation8 + $0x2e0] sm:$0xff]
      %v579 = vld [vmem:[#allocation8 + $0x2e8] sm:$0xff]
      %v580 = vld [vmem:[#allocation8 + $0x2f0] sm:$0xff]
      %v581 = vld [vmem:[#allocation8 + $0x2f8] sm:$0xff]
      %v582 = vld [vmem:[#allocation8 + $0x300] sm:$0xff]
      %v583 = vld [vmem:[#allocation8 + $0x308] sm:$0xff]
      %v584 = vld [vmem:[#allocation8 + $0x310] sm:$0xff]
      %v585 = vld [vmem:[#allocation8 + $0x318] sm:$0xff]
      %v586 = vld [vmem:[#allocation8 + $0x320] sm:$0xff]
      %v587 = vld [vmem:[#allocation8 + $0x328] sm:$0xff]
      %v588 = vld [vmem:[#allocation8 + $0x330] sm:$0xff]
      %v589 = vld [vmem:[#allocation8 + $0x338] sm:$0xff]
      %v590 = vld [vmem:[#allocation8 + $0x340] sm:$0xff]
      %v591 = vld [vmem:[#allocation8 + $0x348] sm:$0xff]
      %v592 = vld [vmem:[#allocation8 + $0x350] sm:$0xff]
      %v593 = vld [vmem:[#allocation8 + $0x358] sm:$0xff]
      %v594 = vld [vmem:[#allocation8 + $0x360] sm:$0xff]
      %v595 = vld [vmem:[#allocation8 + $0x368] sm:$0xff]
      %v596 = vld [vmem:[#allocation8 + $0x370] sm:$0xff]
      %v597 = vld [vmem:[#allocation8 + $0x378] sm:$0xff]
      %v598 = vld [vmem:[#allocation8 + $0x380] sm:$0xff]
      %v599 = vld [vmem:[#allocation8 + $0x388] sm:$0xff]
      %v600 = vld [vmem:[#allocation8 + $0x390] sm:$0xff]
      %v601 = vld [vmem:[#allocation8 + $0x398] sm:$0xff]
      %v602 = vld [vmem:[#allocation8 + $0x3a0] sm:$0xff]
      %v603 = vld [vmem:[#allocation8 + $0x3a8] sm:$0xff]
      %v604 = vld [vmem:[#allocation8 + $0x3b0] sm:$0xff]
      %v605 = vld [vmem:[#allocation8 + $0x3b8] sm:$0xff]
      %v606 = vld [vmem:[#allocation8 + $0x3c0] sm:$0xff]
      %v607 = vld [vmem:[#allocation8 + $0x3c8] sm:$0xff]
      %v608 = vld [vmem:[#allocation8 + $0x3d0] sm:$0xff]
      %v609 = vld [vmem:[#allocation8 + $0x3d8] sm:$0xff]
      %v610 = vld [vmem:[#allocation8 + $0x3e0] sm:$0xff]
      %v611 = vld [vmem:[#allocation8 + $0x3e8] sm:$0xff]
      %v612 = vld [vmem:[#allocation8 + $0x3f0] sm:$0xff]
      %v613 = vld [vmem:[#allocation8 + $0x3f8] sm:$0xff]
      %v614 = vld [vmem:[#allocation8 + $0x400] sm:$0xff]
      %v615 = vld [vmem:[#allocation8 + $0x408] sm:$0xff]
      %v616 = vld [vmem:[#allocation8 + $0x410] sm:$0xff]
      %v617 = vld [vmem:[#allocation8 + $0x418] sm:$0xff]
      %v618 = vld [vmem:[#allocation8 + $0x420] sm:$0xff]
      %v619 = vld [vmem:[#allocation8 + $0x428] sm:$0xff]
      %v620 = vld [vmem:[#allocation8 + $0x430] sm:$0xff]
      %v621 = vld [vmem:[#allocation8 + $0x438] sm:$0xff]
      %v622 = vld [vmem:[#allocation8 + $0x440] sm:$0xff]
      %v623 = vld [vmem:[#allocation8 + $0x448] sm:$0xff]
      %v624 = vld [vmem:[#allocation8 + $0x450] sm:$0xff]
      %v625 = vld [vmem:[#allocation8 + $0x458] sm:$0xff]
      %v626 = vld [vmem:[#allocation8 + $0x460] sm:$0xff]
      %v627 = vld [vmem:[#allocation8 + $0x468] sm:$0xff]
      %v628 = vld [vmem:[#allocation8 + $0x470] sm:$0xff]
      %v629 = vld [vmem:[#allocation8 + $0x478] sm:$0xff]
      %v630 = vld [vmem:[#allocation8 + $0x480] sm:$0xff]
      %v631 = vld [vmem:[#allocation8 + $0x488] sm:$0xff]
      %v632 = vld [vmem:[#allocation8 + $0x490] sm:$0xff]
      %v633 = vld [vmem:[#allocation8 + $0x498] sm:$0xff]
      %v634 = vld [vmem:[#allocation8 + $0x4a0] sm:$0xff]
      %v635 = vld [vmem:[#allocation8 + $0x4a8] sm:$0xff]
      %v636 = vld [vmem:[#allocation8 + $0x4b0] sm:$0xff]
      %v637 = vld [vmem:[#allocation8 + $0x4b8] sm:$0xff]
      %v638 = vld [vmem:[#allocation8 + $0x4c0] sm:$0xff]
      %v639 = vld [vmem:[#allocation8 + $0x4c8] sm:$0xff]
      %v640 = vld [vmem:[#allocation8 + $0x4d0] sm:$0xff]
      %v641 = vld [vmem:[#allocation8 + $0x4d8] sm:$0xff]
      %v642 = vld [vmem:[#allocation8 + $0x4e0] sm:$0xff]
      %v643 = vld [vmem:[#allocation8 + $0x4e8] sm:$0xff]
      %v644 = vld [vmem:[#allocation8 + $0x4f0] sm:$0xff]
      %v645 = vld [vmem:[#allocation8 + $0x4f8] sm:$0xff]
      %v646 = vld [vmem:[#allocation8 + $0x500] sm:$0xff]
      %v647 = vld [vmem:[#allocation8 + $0x508] sm:$0xff]
      %v648 = vld [vmem:[#allocation8 + $0x510] sm:$0xff]
      %v649 = vld [vmem:[#allocation8 + $0x518] sm:$0xff]
      %v650 = vld [vmem:[#allocation8 + $0x520] sm:$0xff]
      %v651 = vld [vmem:[#allocation8 + $0x528] sm:$0xff]
      %v652 = vld [vmem:[#allocation8 + $0x530] sm:$0xff]
      %v653 = vld [vmem:[#allocation8 + $0x538] sm:$0xff]
      %v654 = vld [vmem:[#allocation8 + $0x540] sm:$0xff]
      %v655 = vld [vmem:[#allocation8 + $0x548] sm:$0xff]
      %v656 = vld [vmem:[#allocation8 + $0x550] sm:$0xff]
      %v657 = vld [vmem:[#allocation8 + $0x558] sm:$0xff]
      %v658 = vld [vmem:[#allocation8 + $0x560] sm:$0xff]
      %v659 = vld [vmem:[#allocation8 + $0x568] sm:$0xff]
      %v660 = vld [vmem:[#allocation8 + $0x570] sm:$0xff]
      %v661 = vld [vmem:[#allocation8 + $0x578] sm:$0xff]
      %v662 = vld [vmem:[#allocation8 + $0x580] sm:$0xff]
      %v663 = vld [vmem:[#allocation8 + $0x588] sm:$0xff]
      %v664 = vld [vmem:[#allocation8 + $0x590] sm:$0xff]
      %v665 = vld [vmem:[#allocation8 + $0x598] sm:$0xff]
      %v666 = vld [vmem:[#allocation8 + $0x5a0] sm:$0xff]
      %v667 = vld [vmem:[#allocation8 + $0x5a8] sm:$0xff]
      %v668 = vld [vmem:[#allocation8 + $0x5b0] sm:$0xff]
      %v669 = vld [vmem:[#allocation8 + $0x5b8] sm:$0xff]
      %v670 = vld [vmem:[#allocation8 + $0x5c0] sm:$0xff]
      %v671 = vld [vmem:[#allocation8 + $0x5c8] sm:$0xff]
      %v672 = vld [vmem:[#allocation8 + $0x5d0] sm:$0xff]
      %v673 = vld [vmem:[#allocation8 + $0x5d8] sm:$0xff]
      %v674 = vld [vmem:[#allocation8 + $0x5e0] sm:$0xff]
      %v675 = vld [vmem:[#allocation8 + $0x5e8] sm:$0xff]
      %v676 = vld [vmem:[#allocation8 + $0x5f0] sm:$0xff]
      %v677 = vld [vmem:[#allocation8 + $0x5f8] sm:$0xff]
      %v678 = vld [vmem:[#allocation8 + $0x600] sm:$0xff]
      %v679 = vld [vmem:[#allocation8 + $0x608] sm:$0xff]
      %v680 = vld [vmem:[#allocation8 + $0x610] sm:$0xff]
      %v681 = vld [vmem:[#allocation8 + $0x618] sm:$0xff]
      %v682 = vld [vmem:[#allocation8 + $0x620] sm:$0xff]
      %v683 = vld [vmem:[#allocation8 + $0x628] sm:$0xff]
      %v684 = vld [vmem:[#allocation8 + $0x630] sm:$0xff]
      %v685 = vld [vmem:[#allocation8 + $0x638] sm:$0xff]
      %v686 = vld [vmem:[#allocation8 + $0x640] sm:$0xff]
      %v687 = vld [vmem:[#allocation8 + $0x648] sm:$0xff]
      %v688 = vld [vmem:[#allocation8 + $0x650] sm:$0xff]
      %v689 = vld [vmem:[#allocation8 + $0x658] sm:$0xff]
      %v690 = vld [vmem:[#allocation8 + $0x660] sm:$0xff]
      %v691 = vld [vmem:[#allocation8 + $0x668] sm:$0xff]
      %v692 = vld [vmem:[#allocation8 + $0x670] sm:$0xff]
      %v693 = vld [vmem:[#allocation8 + $0x678] sm:$0xff]
      %v694 = vld [vmem:[#allocation8 + $0x680] sm:$0xff]
      %v695 = vld [vmem:[#allocation8 + $0x688] sm:$0xff]
      %v696 = vld [vmem:[#allocation8 + $0x690] sm:$0xff]
      %v697 = vld [vmem:[#allocation8 + $0x698] sm:$0xff]
      %v698 = vld [vmem:[#allocation8 + $0x6a0] sm:$0xff]
      %v699 = vld [vmem:[#allocation8 + $0x6a8] sm:$0xff]
      %v700 = vld [vmem:[#allocation8 + $0x6b0] sm:$0xff]
      %v701 = vld [vmem:[#allocation8 + $0x6b8] sm:$0xff]
      %v702 = vld [vmem:[#allocation8 + $0x6c0] sm:$0xff]
      %v703 = vld [vmem:[#allocation8 + $0x6c8] sm:$0xff]
      %v704 = vld [vmem:[#allocation8 + $0x6d0] sm:$0xff]
      %v705 = vld [vmem:[#allocation8 + $0x6d8] sm:$0xff]
      %v706 = vld [vmem:[#allocation8 + $0x6e0] sm:$0xff]
      %v707 = vld [vmem:[#allocation8 + $0x6e8] sm:$0xff]
      %v708 = vld [vmem:[#allocation8 + $0x6f0] sm:$0xff]
      %v709 = vld [vmem:[#allocation8 + $0x6f8] sm:$0xff]
      %v710 = vld [vmem:[#allocation8 + $0x700] sm:$0xff]
      %v711 = vld [vmem:[#allocation8 + $0x708] sm:$0xff]
      %v712 = vld [vmem:[#allocation8 + $0x710] sm:$0xff]
      %v713 = vld [vmem:[#allocation8 + $0x718] sm:$0xff]
      %v714 = vld [vmem:[#allocation8 + $0x720] sm:$0xff]
      %v715 = vld [vmem:[#allocation8 + $0x728] sm:$0xff]
      %v716 = vld [vmem:[#allocation8 + $0x730] sm:$0xff]
      %v717 = vld [vmem:[#allocation8 + $0x738] sm:$0xff]
      %v718 = vld [vmem:[#allocation8 + $0x740] sm:$0xff]
      %v719 = vld [vmem:[#allocation8 + $0x748] sm:$0xff]
      %v720 = vld [vmem:[#allocation8 + $0x750] sm:$0xff]
      %v721 = vld [vmem:[#allocation8 + $0x758] sm:$0xff]
      %v722 = vld [vmem:[#allocation8 + $0x760] sm:$0xff]
      %v723 = vld [vmem:[#allocation8 + $0x768] sm:$0xff]
      %v724 = vld [vmem:[#allocation8 + $0x770] sm:$0xff]
      %v725 = vld [vmem:[#allocation8 + $0x778] sm:$0xff]
      %v726 = vld [vmem:[#allocation8 + $0x780] sm:$0xff]
      %v727 = vld [vmem:[#allocation8 + $0x788] sm:$0xff]
      %v728 = vld [vmem:[#allocation8 + $0x790] sm:$0xff]
      %v729 = vld [vmem:[#allocation8 + $0x798] sm:$0xff]
      %v730 = vld [vmem:[#allocation8 + $0x7a0] sm:$0xff]
      %v731 = vld [vmem:[#allocation8 + $0x7a8] sm:$0xff]
      %v732 = vld [vmem:[#allocation8 + $0x7b0] sm:$0xff]
      %v733 = vld [vmem:[#allocation8 + $0x7b8] sm:$0xff]
      %v734 = vld [vmem:[#allocation8 + $0x7c0] sm:$0xff]
      %v735 = vld [vmem:[#allocation8 + $0x7c8] sm:$0xff]
      %v736 = vld [vmem:[#allocation8 + $0x7d0] sm:$0xff]
      %v737 = vld [vmem:[#allocation8 + $0x7d8] sm:$0xff]
      %v738 = vld [vmem:[#allocation8 + $0x7e0] sm:$0xff]
      %v739 = vld [vmem:[#allocation8 + $0x7e8] sm:$0xff]
      %v740 = vld [vmem:[#allocation8 + $0x7f0] sm:$0xff]
      %v741 = vld [vmem:[#allocation8 + $0x7f8] sm:$0xff]
      %v742 = vld [vmem:[#allocation8 + $0x800] sm:$0xff]
      %v743 = vld [vmem:[#allocation8 + $0x808] sm:$0xff]
      %v744 = vld [vmem:[#allocation8 + $0x810] sm:$0xff]
      %v745 = vld [vmem:[#allocation8 + $0x818] sm:$0xff]
      %v746 = vld [vmem:[#allocation8 + $0x820] sm:$0xff]
      %v747 = vld [vmem:[#allocation8 + $0x828] sm:$0xff]
      %v748 = vld [vmem:[#allocation8 + $0x830] sm:$0xff]
      %v749 = vld [vmem:[#allocation8 + $0x838] sm:$0xff]
      %v750 = vld [vmem:[#allocation8 + $0x840] sm:$0xff]
      %v751 = vld [vmem:[#allocation8 + $0x848] sm:$0xff]
      %v752 = vld [vmem:[#allocation8 + $0x850] sm:$0xff]
      %v753 = vld [vmem:[#allocation8 + $0x858] sm:$0xff]
      %v754 = vld [vmem:[#allocation8 + $0x860] sm:$0xff]
      %v755 = vld [vmem:[#allocation8 + $0x868] sm:$0xff]
      %v756 = vld [vmem:[#allocation8 + $0x870] sm:$0xff]
      %v757 = vld [vmem:[#allocation8 + $0x878] sm:$0xff]
      %v758 = vld [vmem:[#allocation8 + $0x880] sm:$0xff]
      %v759 = vld [vmem:[#allocation8 + $0x888] sm:$0xff]
      %v760 = vld [vmem:[#allocation8 + $0x890] sm:$0xff]
      %v761 = vld [vmem:[#allocation8 + $0x898] sm:$0xff]
      %v762 = vld [vmem:[#allocation8 + $0x8a0] sm:$0xff]
      %v763 = vld [vmem:[#allocation8 + $0x8a8] sm:$0xff]
      %v764 = vld [vmem:[#allocation8 + $0x8b0] sm:$0xff]
      %v765 = vld [vmem:[#allocation8 + $0x8b8] sm:$0xff]
      %v766 = vld [vmem:[#allocation8 + $0x8c0] sm:$0xff]
      %v767 = vld [vmem:[#allocation8 + $0x8c8] sm:$0xff]
      %v768 = vld [vmem:[#allocation8 + $0x8d0] sm:$0xff]
      %v769 = vld [vmem:[#allocation8 + $0x8d8] sm:$0xff]
      %v770 = vld [vmem:[#allocation8 + $0x8e0] sm:$0xff]
      %v771 = vld [vmem:[#allocation8 + $0x8e8] sm:$0xff]
      %v772 = vld [vmem:[#allocation8 + $0x8f0] sm:$0xff]
      %v773 = vld [vmem:[#allocation8 + $0x8f8] sm:$0xff]
      %v774 = vld [vmem:[#allocation8 + $0x900] sm:$0xff]
      %v775 = vld [vmem:[#allocation8 + $0x908] sm:$0xff]
      %v776 = vld [vmem:[#allocation8 + $0x910] sm:$0xff]
      %v777 = vld [vmem:[#allocation8 + $0x918] sm:$0xff]
      %v778 = vld [vmem:[#allocation8 + $0x920] sm:$0xff]
      %v779 = vld [vmem:[#allocation8 + $0x928] sm:$0xff]
      %v780 = vld [vmem:[#allocation8 + $0x930] sm:$0xff]
      %v781 = vld [vmem:[#allocation8 + $0x938] sm:$0xff]
      %v782 = vld [vmem:[#allocation8 + $0x940] sm:$0xff]
      %v783 = vld [vmem:[#allocation8 + $0x948] sm:$0xff]
      %v784 = vld [vmem:[#allocation8 + $0x950] sm:$0xff]
      %v785 = vld [vmem:[#allocation8 + $0x958] sm:$0xff]
      %v786 = vld [vmem:[#allocation8 + $0x960] sm:$0xff]
      %v787 = vld [vmem:[#allocation8 + $0x968] sm:$0xff]
      %v788 = vld [vmem:[#allocation8 + $0x970] sm:$0xff]
      %v789 = vld [vmem:[#allocation8 + $0x978] sm:$0xff]
      %v790 = vld [vmem:[#allocation8 + $0x980] sm:$0xff]
      %v791 = vld [vmem:[#allocation8 + $0x988] sm:$0xff]
      %v792 = vld [vmem:[#allocation8 + $0x990] sm:$0xff]
      %v793 = vld [vmem:[#allocation8 + $0x998] sm:$0xff]
      %v794 = vld [vmem:[#allocation8 + $0x9a0] sm:$0xff]
      %v795 = vld [vmem:[#allocation8 + $0x9a8] sm:$0xff]
      %v796 = vld [vmem:[#allocation8 + $0x9b0] sm:$0xff]
      %v797 = vld [vmem:[#allocation8 + $0x9b8] sm:$0xff]
      %v798 = vld [vmem:[#allocation8 + $0x9c0] sm:$0xff]
      %v799 = vld [vmem:[#allocation8 + $0x9c8] sm:$0xff]
      %v800 = vld [vmem:[#allocation8 + $0x9d0] sm:$0xff]
      %v801 = vld [vmem:[#allocation8 + $0x9d8] sm:$0xff]
      %v802 = vld [vmem:[#allocation8 + $0x9e0] sm:$0xff]
      %v803 = vld [vmem:[#allocation8 + $0x9e8] sm:$0xff]
      %v804 = vld [vmem:[#allocation8 + $0x9f0] sm:$0xff]
      %v805 = vld [vmem:[#allocation8 + $0x9f8] sm:$0xff]
      %v806 = vld [vmem:[#allocation8 + $0xa00] sm:$0xff]
      %v807 = vld [vmem:[#allocation8 + $0xa08] sm:$0xff]
      %v808 = vld [vmem:[#allocation8 + $0xa10] sm:$0xff]
      %v809 = vld [vmem:[#allocation8 + $0xa18] sm:$0xff]
      %v810 = vld [vmem:[#allocation8 + $0xa20] sm:$0xff]
      %v811 = vld [vmem:[#allocation8 + $0xa28] sm:$0xff]
      %v812 = vld [vmem:[#allocation8 + $0xa30] sm:$0xff]
      %v813 = vld [vmem:[#allocation8 + $0xa38] sm:$0xff]
      %v814 = vld [vmem:[#allocation8 + $0xa40] sm:$0xff]
      %v815 = vld [vmem:[#allocation8 + $0xa48] sm:$0xff]
      %v816 = vld [vmem:[#allocation8 + $0xa50] sm:$0xff]
      %v817 = vld [vmem:[#allocation8 + $0xa58] sm:$0xff]
      %v818 = vld [vmem:[#allocation8 + $0xa60] sm:$0xff]
      %v819 = vld [vmem:[#allocation8 + $0xa68] sm:$0xff]
      %v820 = vld [vmem:[#allocation8 + $0xa70] sm:$0xff]
      %v821 = vld [vmem:[#allocation8 + $0xa78] sm:$0xff]
      %v822 = vld [vmem:[#allocation8 + $0xa80] sm:$0xff]
      %v823 = vld [vmem:[#allocation8 + $0xa88] sm:$0xff]
      %v824 = vld [vmem:[#allocation8 + $0xa90] sm:$0xff]
      %v825 = vld [vmem:[#allocation8 + $0xa98] sm:$0xff]
      %v826 = vld [vmem:[#allocation8 + $0xaa0] sm:$0xff]
      %v827 = vld [vmem:[#allocation8 + $0xaa8] sm:$0xff]
      %v828 = vld [vmem:[#allocation8 + $0xab0] sm:$0xff]
      %v829 = vld [vmem:[#allocation8 + $0xab8] sm:$0xff]
      %v830 = vld [vmem:[#allocation8 + $0xac0] sm:$0xff]
      %v831 = vld [vmem:[#allocation8 + $0xac8] sm:$0xff]
      %v832 = vld [vmem:[#allocation8 + $0xad0] sm:$0xff]
      %v833 = vld [vmem:[#allocation8 + $0xad8] sm:$0xff]
      %v834 = vld [vmem:[#allocation8 + $0xae0] sm:$0xff]
      %v835 = vld [vmem:[#allocation8 + $0xae8] sm:$0xff]
      %v836 = vld [vmem:[#allocation8 + $0xaf0] sm:$0xff]
      %v837 = vld [vmem:[#allocation8 + $0xaf8] sm:$0xff]
      %v838 = vld [vmem:[#allocation8 + $0xb00] sm:$0xff]
      %v839 = vld [vmem:[#allocation8 + $0xb08] sm:$0xff]
      %v840 = vld [vmem:[#allocation8 + $0xb10] sm:$0xff]
      %v841 = vld [vmem:[#allocation8 + $0xb18] sm:$0xff]
      %v842 = vld [vmem:[#allocation8 + $0xb20] sm:$0xff]
      %v843 = vld [vmem:[#allocation8 + $0xb28] sm:$0xff]
      %v844 = vld [vmem:[#allocation8 + $0xb30] sm:$0xff]
      %v845 = vld [vmem:[#allocation8 + $0xb38] sm:$0xff]
      %v846 = vld [vmem:[#allocation8 + $0xb40] sm:$0xff]
      %v847 = vld [vmem:[#allocation8 + $0xb48] sm:$0xff]
      %v848 = vld [vmem:[#allocation8 + $0xb50] sm:$0xff]
      %v849 = vld [vmem:[#allocation8 + $0xb58] sm:$0xff]
      %v850 = vld [vmem:[#allocation8 + $0xb60] sm:$0xff]
      %v851 = vld [vmem:[#allocation8 + $0xb68] sm:$0xff]
      %v852 = vld [vmem:[#allocation8 + $0xb70] sm:$0xff]
      %v853 = vld [vmem:[#allocation8 + $0xb78] sm:$0xff]
      %v854 = vld [vmem:[#allocation8 + $0xb80] sm:$0xff]
      %v855 = vld [vmem:[#allocation8 + $0xb88] sm:$0xff]
      %v856 = vld [vmem:[#allocation8 + $0xb90] sm:$0xff]
      %v857 = vld [vmem:[#allocation8 + $0xb98] sm:$0xff]
      %v858 = vld [vmem:[#allocation8 + $0xba0] sm:$0xff]
      %v859 = vld [vmem:[#allocation8 + $0xba8] sm:$0xff]
      %v860 = vld [vmem:[#allocation8 + $0xbb0] sm:$0xff]
      %v861 = vld [vmem:[#allocation8 + $0xbb8] sm:$0xff]
      %v862 = vld [vmem:[#allocation8 + $0xbc0] sm:$0xff]
      %v863 = vld [vmem:[#allocation8 + $0xbc8] sm:$0xff]
      %v864 = vld [vmem:[#allocation8 + $0xbd0] sm:$0xff]
      %v865 = vld [vmem:[#allocation8 + $0xbd8] sm:$0xff]
      %v866 = vld [vmem:[#allocation8 + $0xbe0] sm:$0xff]
      %v867 = vld [vmem:[#allocation8 + $0xbe8] sm:$0xff]
      %v868 = vld [vmem:[#allocation8 + $0xbf0] sm:$0xff]
      %v869 = vld [vmem:[#allocation8 + $0xbf8] sm:$0xff]
      %v870 = vld [vmem:[#allocation8 + $0xc00] sm:$0xff]
      %v871 = vld [vmem:[#allocation8 + $0xc08] sm:$0xff]
      %v872 = vld [vmem:[#allocation8 + $0xc10] sm:$0xff]
      %v873 = vld [vmem:[#allocation8 + $0xc18] sm:$0xff]
      %v874 = vld [vmem:[#allocation8 + $0xc20] sm:$0xff]
      %v875 = vld [vmem:[#allocation8 + $0xc28] sm:$0xff]
      %v876 = vld [vmem:[#allocation8 + $0xc30] sm:$0xff]
      %v877 = vld [vmem:[#allocation8 + $0xc38] sm:$0xff]
      %v878 = vld [vmem:[#allocation8 + $0xc40] sm:$0xff]
      %v879 = vld [vmem:[#allocation8 + $0xc48] sm:$0xff]
      %v880 = vld [vmem:[#allocation8 + $0xc50] sm:$0xff]
      %v881 = vld [vmem:[#allocation8 + $0xc58] sm:$0xff]
      %v882 = vld [vmem:[#allocation8 + $0xc60] sm:$0xff]
      %v883 = vld [vmem:[#allocation8 + $0xc68] sm:$0xff]
      %v884 = vld [vmem:[#allocation8 + $0xc70] sm:$0xff]
      %v885 = vld [vmem:[#allocation8 + $0xc78] sm:$0xff]
      %v886 = vld [vmem:[#allocation8 + $0xc80] sm:$0xff]
      %v887 = vld [vmem:[#allocation8 + $0xc88] sm:$0xff]
      %v888 = vld [vmem:[#allocation8 + $0xc90] sm:$0xff]
      %v889 = vld [vmem:[#allocation8 + $0xc98] sm:$0xff]
      %v890 = vld [vmem:[#allocation8 + $0xca0] sm:$0xff]
      %v891 = vld [vmem:[#allocation8 + $0xca8] sm:$0xff]
      %v892 = vld [vmem:[#allocation8 + $0xcb0] sm:$0xff]
      %v893 = vld [vmem:[#allocation8 + $0xcb8] sm:$0xff]
      %v894 = vld [vmem:[#allocation8 + $0xcc0] sm:$0xff]
      %v895 = vld [vmem:[#allocation8 + $0xcc8] sm:$0xff]
      %v896 = vld [vmem:[#allocation8 + $0xcd0] sm:$0xff]
      %v897 = vld [vmem:[#allocation8 + $0xcd8] sm:$0xff]
      %v898 = vld [vmem:[#allocation8 + $0xce0] sm:$0xff]
      %v899 = vld [vmem:[#allocation8 + $0xce8] sm:$0xff]
      %v900 = vld [vmem:[#allocation8 + $0xcf0] sm:$0xff]
      %v901 = vld [vmem:[#allocation8 + $0xcf8] sm:$0xff]
      %v902 = vld [vmem:[#allocation8 + $0xd00] sm:$0xff]
      %v903 = vld [vmem:[#allocation8 + $0xd08] sm:$0xff]
      %v904 = vld [vmem:[#allocation8 + $0xd10] sm:$0xff]
      %v905 = vld [vmem:[#allocation8 + $0xd18] sm:$0xff]
      %v906 = vld [vmem:[#allocation8 + $0xd20] sm:$0xff]
      %v907 = vld [vmem:[#allocation8 + $0xd28] sm:$0xff]
      %v908 = vld [vmem:[#allocation8 + $0xd30] sm:$0xff]
      %v909 = vld [vmem:[#allocation8 + $0xd38] sm:$0xff]
      %v910 = vld [vmem:[#allocation8 + $0xd40] sm:$0xff]
      %v911 = vld [vmem:[#allocation8 + $0xd48] sm:$0xff]
      %v912 = vld [vmem:[#allocation8 + $0xd50] sm:$0xff]
      %v913 = vld [vmem:[#allocation8 + $0xd58] sm:$0xff]
      %v914 = vld [vmem:[#allocation8 + $0xd60] sm:$0xff]
      %v915 = vld [vmem:[#allocation8 + $0xd68] sm:$0xff]
      %v916 = vld [vmem:[#allocation8 + $0xd70] sm:$0xff]
      %v917 = vld [vmem:[#allocation8 + $0xd78] sm:$0xff]
      %v918 = vld [vmem:[#allocation8 + $0xd80] sm:$0xff]
      %v919 = vld [vmem:[#allocation8 + $0xd88] sm:$0xff]
      %v920 = vld [vmem:[#allocation8 + $0xd90] sm:$0xff]
      %v921 = vld [vmem:[#allocation8 + $0xd98] sm:$0xff]
      %v922 = vld [vmem:[#allocation8 + $0xda0] sm:$0xff]
      %v923 = vld [vmem:[#allocation8 + $0xda8] sm:$0xff]
      %v924 = vld [vmem:[#allocation8 + $0xdb0] sm:$0xff]
      %v925 = vld [vmem:[#allocation8 + $0xdb8] sm:$0xff]
      %v926 = vld [vmem:[#allocation8 + $0xdc0] sm:$0xff]
      %v927 = vld [vmem:[#allocation8 + $0xdc8] sm:$0xff]
      %v928 = vld [vmem:[#allocation8 + $0xdd0] sm:$0xff]
      %v929 = vld [vmem:[#allocation8 + $0xdd8] sm:$0xff]
      %v930 = vld [vmem:[#allocation8 + $0xde0] sm:$0xff]
      %v931 = vld [vmem:[#allocation8 + $0xde8] sm:$0xff]
      %v932 = vld [vmem:[#allocation8 + $0xdf0] sm:$0xff]
      %v933 = vld [vmem:[#allocation8 + $0xdf8] sm:$0xff]
      %v934 = vld [vmem:[#allocation8 + $0xe00] sm:$0xff]
      %v935 = vld [vmem:[#allocation8 + $0xe08] sm:$0xff]
      %v936 = vld [vmem:[#allocation8 + $0xe10] sm:$0xff]
      %v937 = vld [vmem:[#allocation8 + $0xe18] sm:$0xff]
      %v938 = vld [vmem:[#allocation8 + $0xe20] sm:$0xff]
      %v939 = vld [vmem:[#allocation8 + $0xe28] sm:$0xff]
      %v940 = vld [vmem:[#allocation8 + $0xe30] sm:$0xff]
      %v941 = vld [vmem:[#allocation8 + $0xe38] sm:$0xff]
      %v942 = vld [vmem:[#allocation8 + $0xe40] sm:$0xff]
      %v943 = vld [vmem:[#allocation8 + $0xe48] sm:$0xff]
      %v944 = vld [vmem:[#allocation8 + $0xe50] sm:$0xff]
      %v945 = vld [vmem:[#allocation8 + $0xe58] sm:$0xff]
      %v946 = vld [vmem:[#allocation8 + $0xe60] sm:$0xff]
      %v947 = vld [vmem:[#allocation8 + $0xe68] sm:$0xff]
      %v948 = vld [vmem:[#allocation8 + $0xe70] sm:$0xff]
      %v949 = vld [vmem:[#allocation8 + $0xe78] sm:$0xff]
      %v950 = vld [vmem:[#allocation8 + $0xe80] sm:$0xff]
      %v951 = vld [vmem:[#allocation8 + $0xe88] sm:$0xff]
      %v952 = vld [vmem:[#allocation8 + $0xe90] sm:$0xff]
      %v953 = vld [vmem:[#allocation8 + $0xe98] sm:$0xff]
      %v954 = vld [vmem:[#allocation8 + $0xea0] sm:$0xff]
      %v955 = vld [vmem:[#allocation8 + $0xea8] sm:$0xff]
      %v956 = vld [vmem:[#allocation8 + $0xeb0] sm:$0xff]
      %v957 = vld [vmem:[#allocation8 + $0xeb8] sm:$0xff]
      %v958 = vld [vmem:[#allocation8 + $0xec0] sm:$0xff]
      %v959 = vld [vmem:[#allocation8 + $0xec8] sm:$0xff]
      %v960 = vld [vmem:[#allocation8 + $0xed0] sm:$0xff]
      %v961 = vld [vmem:[#allocation8 + $0xed8] sm:$0xff]
      %v962 = vld [vmem:[#allocation8 + $0xee0] sm:$0xff]
      %v963 = vld [vmem:[#allocation8 + $0xee8] sm:$0xff]
      %v964 = vld [vmem:[#allocation8 + $0xef0] sm:$0xff]
      %v965 = vld [vmem:[#allocation8 + $0xef8] sm:$0xff]
      %v966 = vld [vmem:[#allocation8 + $0xf00] sm:$0xff]
      %v967 = vld [vmem:[#allocation8 + $0xf08] sm:$0xff]
      %v968 = vld [vmem:[#allocation8 + $0xf10] sm:$0xff]
      %v969 = vld [vmem:[#allocation8 + $0xf18] sm:$0xff]
      %v970 = vld [vmem:[#allocation8 + $0xf20] sm:$0xff]
      %v971 = vld [vmem:[#allocation8 + $0xf28] sm:$0xff]
      %v972 = vld [vmem:[#allocation8 + $0xf30] sm:$0xff]
      %v973 = vld [vmem:[#allocation8 + $0xf38] sm:$0xff]
      %v974 = vld [vmem:[#allocation8 + $0xf40] sm:$0xff]
      %v975 = vld [vmem:[#allocation8 + $0xf48] sm:$0xff]
      %v976 = vld [vmem:[#allocation8 + $0xf50] sm:$0xff]
      %v977 = vld [vmem:[#allocation8 + $0xf58] sm:$0xff]
      %v978 = vld [vmem:[#allocation8 + $0xf60] sm:$0xff]
      %v979 = vld [vmem:[#allocation8 + $0xf68] sm:$0xff]
      %v980 = vld [vmem:[#allocation8 + $0xf70] sm:$0xff]
      %v981 = vld [vmem:[#allocation8 + $0xf78] sm:$0xff]
      %v982 = vld [vmem:[#allocation8 + $0xf80] sm:$0xff]
      %v983 = vld [vmem:[#allocation8 + $0xf88] sm:$0xff]
      %v984 = vld [vmem:[#allocation8 + $0xf90] sm:$0xff]
      %v985 = vld [vmem:[#allocation8 + $0xf98] sm:$0xff]
      %v986 = vld [vmem:[#allocation8 + $0xfa0] sm:$0xff]
      %v987 = vld [vmem:[#allocation8 + $0xfa8] sm:$0xff]
      %v988 = vld [vmem:[#allocation8 + $0xfb0] sm:$0xff]
      %v989 = vld [vmem:[#allocation8 + $0xfb8] sm:$0xff]
      %v990 = vld [vmem:[#allocation8 + $0xfc0] sm:$0xff]
      %v991 = vld [vmem:[#allocation8 + $0xfc8] sm:$0xff]
      %v992 = vld [vmem:[#allocation8 + $0xfd0] sm:$0xff]
      %v993 = vld [vmem:[#allocation8 + $0xfd8] sm:$0xff]
      %v994 = vld [vmem:[#allocation8 + $0xfe0] sm:$0xff]
      %v995 = vld [vmem:[#allocation8 + $0xfe8] sm:$0xff]
      %v996 = vld [vmem:[#allocation8 + $0xff0] sm:$0xff]
      %v997 = vld [vmem:[#allocation8 + $0xff8] sm:$0xff]
      %v998 = vld [vmem:[#allocation8 + $0x1000] sm:$0xff]
      %v999 = vld [vmem:[#allocation8 + $0x1008] sm:$0xff]
      %v1000 = vld [vmem:[#allocation8 + $0x1010] sm:$0xff]
      %v1001 = vld [vmem:[#allocation8 + $0x1018] sm:$0xff]
      %v1002 = vld [vmem:[#allocation8 + $0x1020] sm:$0xff]
      %v1003 = vld [vmem:[#allocation8 + $0x1028] sm:$0xff]
      %v1004 = vld [vmem:[#allocation8 + $0x1030] sm:$0xff]
      %v1005 = vld [vmem:[#allocation8 + $0x1038] sm:$0xff]
      %v1006 = vld [vmem:[#allocation8 + $0x1040] sm:$0xff]
      %v1007 = vld [vmem:[#allocation8 + $0x1048] sm:$0xff]
      %v1008 = vld [vmem:[#allocation8 + $0x1050] sm:$0xff]
      %v1009 = vld [vmem:[#allocation8 + $0x1058] sm:$0xff]
      %v1010 = vld [vmem:[#allocation8 + $0x1060] sm:$0xff]
      %v1011 = vld [vmem:[#allocation8 + $0x1068] sm:$0xff]
      %v1012 = vld [vmem:[#allocation8 + $0x1070] sm:$0xff]
      %v1013 = vld [vmem:[#allocation8 + $0x1078] sm:$0xff]
      %v1014 = vld [vmem:[#allocation8 + $0x1080] sm:$0xff]
      %v1015 = vld [vmem:[#allocation8 + $0x1088] sm:$0xff]
      %v1016 = vld [vmem:[#allocation8 + $0x1090] sm:$0xff]
      %v1017 = vld [vmem:[#allocation8 + $0x1098] sm:$0xff]
      %v1018 = vld [vmem:[#allocation8 + $0x10a0] sm:$0xff]
      %v1019 = vld [vmem:[#allocation8 + $0x10a8] sm:$0xff]
      %v1020 = vld [vmem:[#allocation8 + $0x10b0] sm:$0xff]
      %v1021 = vld [vmem:[#allocation8 + $0x10b8] sm:$0xff]
      %v1022 = vld [vmem:[#allocation8 + $0x10c0] sm:$0xff]
      %v1023 = vld [vmem:[#allocation8 + $0x10c8] sm:$0xff]
      %v1024 = vld [vmem:[#allocation8 + $0x10d0] sm:$0xff]
      %v1025 = vld [vmem:[#allocation8 + $0x10d8] sm:$0xff]
      %v1026 = vld [vmem:[#allocation8 + $0x10e0] sm:$0xff]
      %v1027 = vld [vmem:[#allocation8 + $0x10e8] sm:$0xff]
      %v1028 = vld [vmem:[#allocation8 + $0x10f0] sm:$0xff]
      %v1029 = vld [vmem:[#allocation8 + $0x10f8] sm:$0xff]
      %v1030 = vld [vmem:[#allocation8 + $0x1100] sm:$0xff]
      %v1031 = vld [vmem:[#allocation8 + $0x1108] sm:$0xff]
      %v1032 = vld [vmem:[#allocation8 + $0x1110] sm:$0xff]
      %v1033 = vld [vmem:[#allocation8 + $0x1118] sm:$0xff]
      %v1034 = vld [vmem:[#allocation8 + $0x1120] sm:$0xff]
      %v1035 = vld [vmem:[#allocation8 + $0x1128] sm:$0xff]
      %v1036 = vld [vmem:[#allocation8 + $0x1130] sm:$0xff]
      %v1037 = vld [vmem:[#allocation8 + $0x1138] sm:$0xff]
      %v1038 = vld [vmem:[#allocation8 + $0x1140] sm:$0xff]
      %v1039 = vld [vmem:[#allocation8 + $0x1148] sm:$0xff]
      %v1040 = vld [vmem:[#allocation8 + $0x1150] sm:$0xff]
      %v1041 = vld [vmem:[#allocation8 + $0x1158] sm:$0xff]
      %v1042 = vld [vmem:[#allocation8 + $0x1160] sm:$0xff]
      %v1043 = vld [vmem:[#allocation8 + $0x1168] sm:$0xff]
      %v1044 = vld [vmem:[#allocation8 + $0x1170] sm:$0xff]
      %v1045 = vld [vmem:[#allocation8 + $0x1178] sm:$0xff]
      %v1046 = vld [vmem:[#allocation8 + $0x1180] sm:$0xff]
      %v1047 = vld [vmem:[#allocation8 + $0x1188] sm:$0xff]
      %v1048 = vld [vmem:[#allocation8 + $0x1190] sm:$0xff]
      %v1049 = vld [vmem:[#allocation8 + $0x1198] sm:$0xff]
      %v1050 = vld [vmem:[#allocation8 + $0x11a0] sm:$0xff]
      %v1051 = vld [vmem:[#allocation8 + $0x11a8] sm:$0xff]
      %v1052 = vld [vmem:[#allocation8 + $0x11b0] sm:$0xff]
      %v1053 = vld [vmem:[#allocation8 + $0x11b8] sm:$0xff]
      %v1054 = vld [vmem:[#allocation8 + $0x11c0] sm:$0xff]
      %v1055 = vld [vmem:[#allocation8 + $0x11c8] sm:$0xff]
      %v1056 = vld [vmem:[#allocation8 + $0x11d0] sm:$0xff]
      %v1057 = vld [vmem:[#allocation8 + $0x11d8] sm:$0xff]
      %v1058 = vld [vmem:[#allocation8 + $0x11e0] sm:$0xff]
      %v1059 = vld [vmem:[#allocation8 + $0x11e8] sm:$0xff]
      %v1060 = vld [vmem:[#allocation8 + $0x11f0] sm:$0xff]
      %v1061 = vld [vmem:[#allocation8 + $0x11f8] sm:$0xff]
      %v1062 = vld [vmem:[#allocation8 + $0x1200] sm:$0xff]
      %v1063 = vld [vmem:[#allocation8 + $0x1208] sm:$0xff]
      %v1064 = vld [vmem:[#allocation8 + $0x1210] sm:$0xff]
      %v1065 = vld [vmem:[#allocation8 + $0x1218] sm:$0xff]
      %v1066 = vld [vmem:[#allocation8 + $0x1220] sm:$0xff]
      %v1067 = vld [vmem:[#allocation8 + $0x1228] sm:$0xff]
      %v1068 = vld [vmem:[#allocation8 + $0x1230] sm:$0xff]
      %v1069 = vld [vmem:[#allocation8 + $0x1238] sm:$0xff]
      %v1070 = vld [vmem:[#allocation8 + $0x1240] sm:$0xff]
      %v1071 = vld [vmem:[#allocation8 + $0x1248] sm:$0xff]
      %v1072 = vld [vmem:[#allocation8 + $0x1250] sm:$0xff]
      %v1073 = vld [vmem:[#allocation8 + $0x1258] sm:$0xff]
      %v1074 = vld [vmem:[#allocation8 + $0x1260] sm:$0xff]
      %v1075 = vld [vmem:[#allocation8 + $0x1268] sm:$0xff]
      %v1076 = vld [vmem:[#allocation8 + $0x1270] sm:$0xff]
      %v1077 = vld [vmem:[#allocation8 + $0x1278] sm:$0xff]
      %v1078 = vld [vmem:[#allocation8 + $0x1280] sm:$0xff]
      %v1079 = vld [vmem:[#allocation8 + $0x1288] sm:$0xff]
      %v1080 = vld [vmem:[#allocation8 + $0x1290] sm:$0xff]
      %v1081 = vld [vmem:[#allocation8 + $0x1298] sm:$0xff]
      %v1082 = vld [vmem:[#allocation8 + $0x12a0] sm:$0xff]
      %v1083 = vld [vmem:[#allocation8 + $0x12a8] sm:$0xff]
      %v1084 = vld [vmem:[#allocation8 + $0x12b0] sm:$0xff]
      %v1085 = vld [vmem:[#allocation8 + $0x12b8] sm:$0xff]
      %v1086 = vld [vmem:[#allocation8 + $0x12c0] sm:$0xff]
      %v1087 = vld [vmem:[#allocation8 + $0x12c8] sm:$0xff]
      %v1088 = vld [vmem:[#allocation8 + $0x12d0] sm:$0xff]
      %v1089 = vld [vmem:[#allocation8 + $0x12d8] sm:$0xff]
      %v1090 = vld [vmem:[#allocation8 + $0x12e0] sm:$0xff]
      %v1091 = vld [vmem:[#allocation8 + $0x12e8] sm:$0xff]
      %v1092 = vld [vmem:[#allocation8 + $0x12f0] sm:$0xff]
      %v1093 = vld [vmem:[#allocation8 + $0x12f8] sm:$0xff]
      %v1094 = vld [vmem:[#allocation8 + $0x1300] sm:$0xff]
      %v1095 = vld [vmem:[#allocation8 + $0x1308] sm:$0xff]
      %v1096 = vld [vmem:[#allocation8 + $0x1310] sm:$0xff]
      %v1097 = vld [vmem:[#allocation8 + $0x1318] sm:$0xff]
      %v1098 = vld [vmem:[#allocation8 + $0x1320] sm:$0xff]
      %v1099 = vld [vmem:[#allocation8 + $0x1328] sm:$0xff]
      %v1100 = vld [vmem:[#allocation8 + $0x1330] sm:$0xff]
      %v1101 = vld [vmem:[#allocation8 + $0x1338] sm:$0xff]
      %v1102 = vld [vmem:[#allocation8 + $0x1340] sm:$0xff]
      %v1103 = vld [vmem:[#allocation8 + $0x1348] sm:$0xff]
      %v1104 = vld [vmem:[#allocation8 + $0x1350] sm:$0xff]
      %v1105 = vld [vmem:[#allocation8 + $0x1358] sm:$0xff]
      %v1106 = vld [vmem:[#allocation8 + $0x1360] sm:$0xff]
      %v1107 = vld [vmem:[#allocation8 + $0x1368] sm:$0xff]
      %v1108 = vld [vmem:[#allocation8 + $0x1370] sm:$0xff]
      %v1109 = vld [vmem:[#allocation8 + $0x1378] sm:$0xff]
      %v1110 = vld [vmem:[#allocation8 + $0x1380] sm:$0xff]
      %v1111 = vld [vmem:[#allocation8 + $0x1388] sm:$0xff]
      %v1112 = vld [vmem:[#allocation8 + $0x1390] sm:$0xff]
      %v1113 = vld [vmem:[#allocation8 + $0x1398] sm:$0xff]
      %v1114 = vld [vmem:[#allocation8 + $0x13a0] sm:$0xff]
      %v1115 = vld [vmem:[#allocation8 + $0x13a8] sm:$0xff]
      %v1116 = vld [vmem:[#allocation8 + $0x13b0] sm:$0xff]
      %v1117 = vld [vmem:[#allocation8 + $0x13b8] sm:$0xff]
      %v1118 = vld [vmem:[#allocation8 + $0x13c0] sm:$0xff]
      %v1119 = vld [vmem:[#allocation8 + $0x13c8] sm:$0xff]
      %v1120 = vld [vmem:[#allocation8 + $0x13d0] sm:$0xff]
      %v1121 = vld [vmem:[#allocation8 + $0x13d8] sm:$0xff]
      %v1122 = vld [vmem:[#allocation8 + $0x13e0] sm:$0xff]
      %v1123 = vld [vmem:[#allocation8 + $0x13e8] sm:$0xff]
      %v1124 = vld [vmem:[#allocation8 + $0x13f0] sm:$0xff]
      %v1125 = vld [vmem:[#allocation8 + $0x13f8] sm:$0xff]
      %v1126 = vld [vmem:[#allocation8 + $0x1400] sm:$0xff]
      %v1127 = vld [vmem:[#allocation8 + $0x1408] sm:$0xff]
      %v1128 = vld [vmem:[#allocation8 + $0x1410] sm:$0xff]
      %v1129 = vld [vmem:[#allocation8 + $0x1418] sm:$0xff]
      %v1130 = vld [vmem:[#allocation8 + $0x1420] sm:$0xff]
      %v1131 = vld [vmem:[#allocation8 + $0x1428] sm:$0xff]
      %v1132 = vld [vmem:[#allocation8 + $0x1430] sm:$0xff]
      %v1133 = vld [vmem:[#allocation8 + $0x1438] sm:$0xff]
      %v1134 = vld [vmem:[#allocation8 + $0x1440] sm:$0xff]
      %v1135 = vld [vmem:[#allocation8 + $0x1448] sm:$0xff]
      %v1136 = vld [vmem:[#allocation8 + $0x1450] sm:$0xff]
      %v1137 = vld [vmem:[#allocation8 + $0x1458] sm:$0xff]
      %v1138 = vld [vmem:[#allocation8 + $0x1460] sm:$0xff]
      %v1139 = vld [vmem:[#allocation8 + $0x1468] sm:$0xff]
      %v1140 = vld [vmem:[#allocation8 + $0x1470] sm:$0xff]
      %v1141 = vld [vmem:[#allocation8 + $0x1478] sm:$0xff]
      %v1142 = vld [vmem:[#allocation8 + $0x1480] sm:$0xff]
      %v1143 = vld [vmem:[#allocation8 + $0x1488] sm:$0xff]
      %v1144 = vld [vmem:[#allocation8 + $0x1490] sm:$0xff]
      %v1145 = vld [vmem:[#allocation8 + $0x1498] sm:$0xff]
      %v1146 = vld [vmem:[#allocation8 + $0x14a0] sm:$0xff]
      %v1147 = vld [vmem:[#allocation8 + $0x14a8] sm:$0xff]
      %v1148 = vld [vmem:[#allocation8 + $0x14b0] sm:$0xff]
      %v1149 = vld [vmem:[#allocation8 + $0x14b8] sm:$0xff]
      %v1150 = vld [vmem:[#allocation8 + $0x14c0] sm:$0xff]
      %v1151 = vld [vmem:[#allocation8 + $0x14c8] sm:$0xff]
      %v1152 = vld [vmem:[#allocation8 + $0x14d0] sm:$0xff]
      %v1153 = vld [vmem:[#allocation8 + $0x14d8] sm:$0xff]
      %v1154 = vld [vmem:[#allocation8 + $0x14e0] sm:$0xff]
      %v1155 = vld [vmem:[#allocation8 + $0x14e8] sm:$0xff]
      %v1156 = vld [vmem:[#allocation8 + $0x14f0] sm:$0xff]
      %v1157 = vld [vmem:[#allocation8 + $0x14f8] sm:$0xff]
      %v1158 = vld [vmem:[#allocation8 + $0x1500] sm:$0xff]
      %v1159 = vld [vmem:[#allocation8 + $0x1508] sm:$0xff]
      %v1160 = vld [vmem:[#allocation8 + $0x1510] sm:$0xff]
      %v1161 = vld [vmem:[#allocation8 + $0x1518] sm:$0xff]
      %v1162 = vld [vmem:[#allocation8 + $0x1520] sm:$0xff]
      %v1163 = vld [vmem:[#allocation8 + $0x1528] sm:$0xff]
      %v1164 = vld [vmem:[#allocation8 + $0x1530] sm:$0xff]
      %v1165 = vld [vmem:[#allocation8 + $0x1538] sm:$0xff]
      %v1166 = vld [vmem:[#allocation8 + $0x1540] sm:$0xff]
      %v1167 = vld [vmem:[#allocation8 + $0x1548] sm:$0xff]
      %v1168 = vld [vmem:[#allocation8 + $0x1550] sm:$0xff]
      %v1169 = vld [vmem:[#allocation8 + $0x1558] sm:$0xff]
      %v1170 = vld [vmem:[#allocation8 + $0x1560] sm:$0xff]
      %v1171 = vld [vmem:[#allocation8 + $0x1568] sm:$0xff]
      %v1172 = vld [vmem:[#allocation8 + $0x1570] sm:$0xff]
      %v1173 = vld [vmem:[#allocation8 + $0x1578] sm:$0xff]
      %v1174 = vld [vmem:[#allocation8 + $0x1580] sm:$0xff]
      %v1175 = vld [vmem:[#allocation8 + $0x1588] sm:$0xff]
      %v1176 = vld [vmem:[#allocation8 + $0x1590] sm:$0xff]
      %v1177 = vld [vmem:[#allocation8 + $0x1598] sm:$0xff]
      %v1178 = vld [vmem:[#allocation8 + $0x15a0] sm:$0xff]
      %v1179 = vld [vmem:[#allocation8 + $0x15a8] sm:$0xff]
      %v1180 = vld [vmem:[#allocation8 + $0x15b0] sm:$0xff]
      %v1181 = vld [vmem:[#allocation8 + $0x15b8] sm:$0xff]
      %v1182 = vld [vmem:[#allocation8 + $0x15c0] sm:$0xff]
      %v1183 = vld [vmem:[#allocation8 + $0x15c8] sm:$0xff]
      %v1184 = vld [vmem:[#allocation8 + $0x15d0] sm:$0xff]
      %v1185 = vld [vmem:[#allocation8 + $0x15d8] sm:$0xff]
      %v1186 = vld [vmem:[#allocation8 + $0x15e0] sm:$0xff]
      %v1187 = vld [vmem:[#allocation8 + $0x15e8] sm:$0xff]
      %v1188 = vld [vmem:[#allocation8 + $0x15f0] sm:$0xff]
      %v1189 = vld [vmem:[#allocation8 + $0x15f8] sm:$0xff]
      %v1190 = vld [vmem:[#allocation8 + $0x1600] sm:$0xff]
      %v1191 = vld [vmem:[#allocation8 + $0x1608] sm:$0xff]
      %v1192 = vld [vmem:[#allocation8 + $0x1610] sm:$0xff]
      %v1193 = vld [vmem:[#allocation8 + $0x1618] sm:$0xff]
      %v1194 = vld [vmem:[#allocation8 + $0x1620] sm:$0xff]
      %v1195 = vld [vmem:[#allocation8 + $0x1628] sm:$0xff]
      %v1196 = vld [vmem:[#allocation8 + $0x1630] sm:$0xff]
      %v1197 = vld [vmem:[#allocation8 + $0x1638] sm:$0xff]
      %v1198 = vld [vmem:[#allocation8 + $0x1640] sm:$0xff]
      %v1199 = vld [vmem:[#allocation8 + $0x1648] sm:$0xff]
      %v1200 = vld [vmem:[#allocation8 + $0x1650] sm:$0xff]
      %v1201 = vld [vmem:[#allocation8 + $0x1658] sm:$0xff]
      %v1202 = vld [vmem:[#allocation8 + $0x1660] sm:$0xff]
      %v1203 = vld [vmem:[#allocation8 + $0x1668] sm:$0xff]
      %v1204 = vld [vmem:[#allocation8 + $0x1670] sm:$0xff]
      %v1205 = vld [vmem:[#allocation8 + $0x1678] sm:$0xff]
      %v1206 = vld [vmem:[#allocation8 + $0x1680] sm:$0xff]
      %v1207 = vld [vmem:[#allocation8 + $0x1688] sm:$0xff]
      %v1208 = vld [vmem:[#allocation8 + $0x1690] sm:$0xff]
      %v1209 = vld [vmem:[#allocation8 + $0x1698] sm:$0xff]
      %v1210 = vld [vmem:[#allocation8 + $0x16a0] sm:$0xff]
      %v1211 = vld [vmem:[#allocation8 + $0x16a8] sm:$0xff]
      %v1212 = vld [vmem:[#allocation8 + $0x16b0] sm:$0xff]
      %v1213 = vld [vmem:[#allocation8 + $0x16b8] sm:$0xff]
      %v1214 = vld [vmem:[#allocation8 + $0x16c0] sm:$0xff]
      %v1215 = vld [vmem:[#allocation8 + $0x16c8] sm:$0xff]
      %v1216 = vld [vmem:[#allocation8 + $0x16d0] sm:$0xff]
      %v1217 = vld [vmem:[#allocation8 + $0x16d8] sm:$0xff]
      %v1218 = vld [vmem:[#allocation8 + $0x16e0] sm:$0xff]
      %v1219 = vld [vmem:[#allocation8 + $0x16e8] sm:$0xff]
      %v1220 = vld [vmem:[#allocation8 + $0x16f0] sm:$0xff]
      %v1221 = vld [vmem:[#allocation8 + $0x16f8] sm:$0xff]
      %v1222 = vld [vmem:[#allocation8 + $0x1700] sm:$0xff]
      %v1223 = vld [vmem:[#allocation8 + $0x1708] sm:$0xff]
      %v1224 = vld [vmem:[#allocation8 + $0x1710] sm:$0xff]
      %v1225 = vld [vmem:[#allocation8 + $0x1718] sm:$0xff]
      %v1226 = vld [vmem:[#allocation8 + $0x1720] sm:$0xff]
      %v1227 = vld [vmem:[#allocation8 + $0x1728] sm:$0xff]
      %v1228 = vld [vmem:[#allocation8 + $0x1730] sm:$0xff]
      %v1229 = vld [vmem:[#allocation8 + $0x1738] sm:$0xff]
      %v1230 = vld [vmem:[#allocation8 + $0x1740] sm:$0xff]
      %v1231 = vld [vmem:[#allocation8 + $0x1748] sm:$0xff]
      %v1232 = vld [vmem:[#allocation8 + $0x1750] sm:$0xff]
      %v1233 = vld [vmem:[#allocation8 + $0x1758] sm:$0xff]
      %v1234 = vld [vmem:[#allocation8 + $0x1760] sm:$0xff]
      %v1235 = vld [vmem:[#allocation8 + $0x1768] sm:$0xff]
      %v1236 = vld [vmem:[#allocation8 + $0x1770] sm:$0xff]
      %v1237 = vld [vmem:[#allocation8 + $0x1778] sm:$0xff]
      %v1238 = vld [vmem:[#allocation8 + $0x1780] sm:$0xff]
      %v1239 = vld [vmem:[#allocation8 + $0x1788] sm:$0xff]
      %v1240 = vld [vmem:[#allocation8 + $0x1790] sm:$0xff]
      %v1241 = vld [vmem:[#allocation8 + $0x1798] sm:$0xff]
      %v1242 = vld [vmem:[#allocation8 + $0x17a0] sm:$0xff]
      %v1243 = vld [vmem:[#allocation8 + $0x17a8] sm:$0xff]
      %v1244 = vld [vmem:[#allocation8 + $0x17b0] sm:$0xff]
      %v1245 = vld [vmem:[#allocation8 + $0x17b8] sm:$0xff]
      %v1246 = vld [vmem:[#allocation8 + $0x17c0] sm:$0xff]
      %v1247 = vld [vmem:[#allocation8 + $0x17c8] sm:$0xff]
      %v1248 = vld [vmem:[#allocation8 + $0x17d0] sm:$0xff]
      %v1249 = vld [vmem:[#allocation8 + $0x17d8] sm:$0xff]
      %v1250 = vld [vmem:[#allocation8 + $0x17e0] sm:$0xff]
      %v1251 = vld [vmem:[#allocation8 + $0x17e8] sm:$0xff]
      %v1252 = vld [vmem:[#allocation8 + $0x17f0] sm:$0xff]
      %v1253 = vld [vmem:[#allocation8 + $0x17f8] sm:$0xff]
      %v1254 = vld [vmem:[#allocation8 + $0x1800] sm:$0xff]
      %v1255 = vld [vmem:[#allocation8 + $0x1808] sm:$0xff]
      %v1256 = vld [vmem:[#allocation8 + $0x1810] sm:$0xff]
      %v1257 = vld [vmem:[#allocation8 + $0x1818] sm:$0xff]
      %v1258 = vld [vmem:[#allocation8 + $0x1820] sm:$0xff]
      %v1259 = vld [vmem:[#allocation8 + $0x1828] sm:$0xff]
      %v1260 = vld [vmem:[#allocation8 + $0x1830] sm:$0xff]
      %v1261 = vld [vmem:[#allocation8 + $0x1838] sm:$0xff]
      %v1262 = vld [vmem:[#allocation8 + $0x1840] sm:$0xff]
      %v1263 = vld [vmem:[#allocation8 + $0x1848] sm:$0xff]
      %v1264 = vld [vmem:[#allocation8 + $0x1850] sm:$0xff]
      %v1265 = vld [vmem:[#allocation8 + $0x1858] sm:$0xff]
      %v1266 = vld [vmem:[#allocation8 + $0x1860] sm:$0xff]
      %v1267 = vld [vmem:[#allocation8 + $0x1868] sm:$0xff]
      %v1268 = vld [vmem:[#allocation8 + $0x1870] sm:$0xff]
      %v1269 = vld [vmem:[#allocation8 + $0x1878] sm:$0xff]
      %v1270 = vld [vmem:[#allocation8 + $0x1880] sm:$0xff]
      %v1271 = vld [vmem:[#allocation8 + $0x1888] sm:$0xff]
      %v1272 = vld [vmem:[#allocation8 + $0x1890] sm:$0xff]
      %v1273 = vld [vmem:[#allocation8 + $0x1898] sm:$0xff]
      %v1274 = vld [vmem:[#allocation8 + $0x18a0] sm:$0xff]
      %v1275 = vld [vmem:[#allocation8 + $0x18a8] sm:$0xff]
      %v1276 = vld [vmem:[#allocation8 + $0x18b0] sm:$0xff]
      %v1277 = vld [vmem:[#allocation8 + $0x18b8] sm:$0xff]
      %v1278 = vld [vmem:[#allocation8 + $0x18c0] sm:$0xff]
      %v1279 = vld [vmem:[#allocation8 + $0x18c8] sm:$0xff]
      %v1280 = vld [vmem:[#allocation8 + $0x18d0] sm:$0xff]
      %v1281 = vld [vmem:[#allocation8 + $0x18d8] sm:$0xff]
      %v1282 = vld [vmem:[#allocation8 + $0x18e0] sm:$0xff]
      %v1283 = vld [vmem:[#allocation8 + $0x18e8] sm:$0xff]
      %v1284 = vld [vmem:[#allocation8 + $0x18f0] sm:$0xff]
      %v1285 = vld [vmem:[#allocation8 + $0x18f8] sm:$0xff]
      %v1286 = vld [vmem:[#allocation8 + $0x1900] sm:$0xff]
      %v1287 = vld [vmem:[#allocation8 + $0x1908] sm:$0xff]
      %v1288 = vld [vmem:[#allocation8 + $0x1910] sm:$0xff]
      %v1289 = vld [vmem:[#allocation8 + $0x1918] sm:$0xff]
      %v1290 = vld [vmem:[#allocation8 + $0x1920] sm:$0xff]
      %v1291 = vld [vmem:[#allocation8 + $0x1928] sm:$0xff]
      %v1292 = vld [vmem:[#allocation8 + $0x1930] sm:$0xff]
      %v1293 = vld [vmem:[#allocation8 + $0x1938] sm:$0xff]
      %v1294 = vld [vmem:[#allocation8 + $0x1940] sm:$0xff]
      %v1295 = vld [vmem:[#allocation8 + $0x1948] sm:$0xff]
      %v1296 = vld [vmem:[#allocation8 + $0x1950] sm:$0xff]
      %v1297 = vld [vmem:[#allocation8 + $0x1958] sm:$0xff]
      %v1298 = vld [vmem:[#allocation8 + $0x1960] sm:$0xff]
      %v1299 = vld [vmem:[#allocation8 + $0x1968] sm:$0xff]
      %v1300 = vld [vmem:[#allocation8 + $0x1970] sm:$0xff]
      %v1301 = vld [vmem:[#allocation8 + $0x1978] sm:$0xff]
      %v1302 = vld [vmem:[#allocation8 + $0x1980] sm:$0xff]
      %v1303 = vld [vmem:[#allocation8 + $0x1988] sm:$0xff]
      %v1304 = vld [vmem:[#allocation8 + $0x1990] sm:$0xff]
      %v1305 = vld [vmem:[#allocation8 + $0x1998] sm:$0xff]
      %v1306 = vld [vmem:[#allocation8 + $0x19a0] sm:$0xff]
      %v1307 = vld [vmem:[#allocation8 + $0x19a8] sm:$0xff]
      %v1308 = vld [vmem:[#allocation8 + $0x19b0] sm:$0xff]
      %v1309 = vld [vmem:[#allocation8 + $0x19b8] sm:$0xff]
      %v1310 = vld [vmem:[#allocation8 + $0x19c0] sm:$0xff]
      %v1311 = vld [vmem:[#allocation8 + $0x19c8] sm:$0xff]
      %v1312 = vld [vmem:[#allocation8 + $0x19d0] sm:$0xff]
      %v1313 = vld [vmem:[#allocation8 + $0x19d8] sm:$0xff]
      %v1314 = vld [vmem:[#allocation8 + $0x19e0] sm:$0xff]
      %v1315 = vld [vmem:[#allocation8 + $0x19e8] sm:$0xff]
      %v1316 = vld [vmem:[#allocation8 + $0x19f0] sm:$0xff]
      %v1317 = vld [vmem:[#allocation8 + $0x19f8] sm:$0xff]
      %v1318 = vld [vmem:[#allocation8 + $0x1a00] sm:$0xff]
      %v1319 = vld [vmem:[#allocation8 + $0x1a08] sm:$0xff]
      %v1320 = vld [vmem:[#allocation8 + $0x1a10] sm:$0xff]
      %v1321 = vld [vmem:[#allocation8 + $0x1a18] sm:$0xff]
      %v1322 = vld [vmem:[#allocation8 + $0x1a20] sm:$0xff]
      %v1323 = vld [vmem:[#allocation8 + $0x1a28] sm:$0xff]
      %v1324 = vld [vmem:[#allocation8 + $0x1a30] sm:$0xff]
      %v1325 = vld [vmem:[#allocation8 + $0x1a38] sm:$0xff]
      %v1326 = vld [vmem:[#allocation8 + $0x1a40] sm:$0xff]
      %v1327 = vld [vmem:[#allocation8 + $0x1a48] sm:$0xff]
      %v1328 = vld [vmem:[#allocation8 + $0x1a50] sm:$0xff]
      %v1329 = vld [vmem:[#allocation8 + $0x1a58] sm:$0xff]
      %v1330 = vld [vmem:[#allocation8 + $0x1a60] sm:$0xff]
      %v1331 = vld [vmem:[#allocation8 + $0x1a68] sm:$0xff]
      %v1332 = vld [vmem:[#allocation8 + $0x1a70] sm:$0xff]
      %v1333 = vld [vmem:[#allocation8 + $0x1a78] sm:$0xff]
      %v1334 = vld [vmem:[#allocation8 + $0x1a80] sm:$0xff]
      %v1335 = vld [vmem:[#allocation8 + $0x1a88] sm:$0xff]
      %v1336 = vld [vmem:[#allocation8 + $0x1a90] sm:$0xff]
      %v1337 = vld [vmem:[#allocation8 + $0x1a98] sm:$0xff]
      %v1338 = vld [vmem:[#allocation8 + $0x1aa0] sm:$0xff]
      %v1339 = vld [vmem:[#allocation8 + $0x1aa8] sm:$0xff]
      %v1340 = vld [vmem:[#allocation8 + $0x1ab0] sm:$0xff]
      %v1341 = vld [vmem:[#allocation8 + $0x1ab8] sm:$0xff]
      %v1342 = vld [vmem:[#allocation8 + $0x1ac0] sm:$0xff]
      %v1343 = vld [vmem:[#allocation8 + $0x1ac8] sm:$0xff]
      %v1344 = vld [vmem:[#allocation8 + $0x1ad0] sm:$0xff]
      %v1345 = vld [vmem:[#allocation8 + $0x1ad8] sm:$0xff]
      %v1346 = vld [vmem:[#allocation8 + $0x1ae0] sm:$0xff]
      %v1347 = vld [vmem:[#allocation8 + $0x1ae8] sm:$0xff]
      %v1348 = vld [vmem:[#allocation8 + $0x1af0] sm:$0xff]
      %v1349 = vld [vmem:[#allocation8 + $0x1af8] sm:$0xff]
      %v1350 = vld [vmem:[#allocation8 + $0x1b00] sm:$0xff]
      %v1351 = vld [vmem:[#allocation8 + $0x1b08] sm:$0xff]
      %v1352 = vld [vmem:[#allocation8 + $0x1b10] sm:$0xff]
      %v1353 = vld [vmem:[#allocation8 + $0x1b18] sm:$0xff]
      %v1354 = vld [vmem:[#allocation8 + $0x1b20] sm:$0xff]
      %v1355 = vld [vmem:[#allocation8 + $0x1b28] sm:$0xff]
      %v1356 = vld [vmem:[#allocation8 + $0x1b30] sm:$0xff]
      %v1357 = vld [vmem:[#allocation8 + $0x1b38] sm:$0xff]
      %v1358 = vld [vmem:[#allocation8 + $0x1b40] sm:$0xff]
      %v1359 = vld [vmem:[#allocation8 + $0x1b48] sm:$0xff]
      %v1360 = vld [vmem:[#allocation8 + $0x1b50] sm:$0xff]
      %v1361 = vld [vmem:[#allocation8 + $0x1b58] sm:$0xff]
      %v1362 = vld [vmem:[#allocation8 + $0x1b60] sm:$0xff]
      %v1363 = vld [vmem:[#allocation8 + $0x1b68] sm:$0xff]
      %v1364 = vld [vmem:[#allocation8 + $0x1b70] sm:$0xff]
      %v1365 = vld [vmem:[#allocation8 + $0x1b78] sm:$0xff]
      %v1366 = vld [vmem:[#allocation8 + $0x1b80] sm:$0xff]
      %v1367 = vld [vmem:[#allocation8 + $0x1b88] sm:$0xff]
      %v1368 = vld [vmem:[#allocation8 + $0x1b90] sm:$0xff]
      %v1369 = vld [vmem:[#allocation8 + $0x1b98] sm:$0xff]
      %v1370 = vld [vmem:[#allocation8 + $0x1ba0] sm:$0xff]
      %v1371 = vld [vmem:[#allocation8 + $0x1ba8] sm:$0xff]
      %v1372 = vld [vmem:[#allocation8 + $0x1bb0] sm:$0xff]
      %v1373 = vld [vmem:[#allocation8 + $0x1bb8] sm:$0xff]
      %v1374 = vld [vmem:[#allocation8 + $0x1bc0] sm:$0xff]
      %v1375 = vld [vmem:[#allocation8 + $0x1bc8] sm:$0xff]
      %v1376 = vld [vmem:[#allocation8 + $0x1bd0] sm:$0xff]
      %v1377 = vld [vmem:[#allocation8 + $0x1bd8] sm:$0xff]
      %v1378 = vld [vmem:[#allocation8 + $0x1be0] sm:$0xff]
      %v1379 = vld [vmem:[#allocation8 + $0x1be8] sm:$0xff]
      %v1380 = vld [vmem:[#allocation8 + $0x1bf0] sm:$0xff]
      %v1381 = vld [vmem:[#allocation8 + $0x1bf8] sm:$0xff]
      %v1382 = vld [vmem:[#allocation8 + $0x1c00] sm:$0xff]
      %v1383 = vld [vmem:[#allocation8 + $0x1c08] sm:$0xff]
      %v1384 = vld [vmem:[#allocation8 + $0x1c10] sm:$0xff]
      %v1385 = vld [vmem:[#allocation8 + $0x1c18] sm:$0xff]
      %v1386 = vld [vmem:[#allocation8 + $0x1c20] sm:$0xff]
      %v1387 = vld [vmem:[#allocation8 + $0x1c28] sm:$0xff]
      %v1388 = vld [vmem:[#allocation8 + $0x1c30] sm:$0xff]
      %v1389 = vld [vmem:[#allocation8 + $0x1c38] sm:$0xff]
      %v1390 = vld [vmem:[#allocation8 + $0x1c40] sm:$0xff]
      %v1391 = vld [vmem:[#allocation8 + $0x1c48] sm:$0xff]
      %v1392 = vld [vmem:[#allocation8 + $0x1c50] sm:$0xff]
      %v1393 = vld [vmem:[#allocation8 + $0x1c58] sm:$0xff]
      %v1394 = vld [vmem:[#allocation8 + $0x1c60] sm:$0xff]
      %v1395 = vld [vmem:[#allocation8 + $0x1c68] sm:$0xff]
      %v1396 = vld [vmem:[#allocation8 + $0x1c70] sm:$0xff]
      %v1397 = vld [vmem:[#allocation8 + $0x1c78] sm:$0xff]
      %v1398 = vld [vmem:[#allocation8 + $0x1c80] sm:$0xff]
      %v1399 = vld [vmem:[#allocation8 + $0x1c88] sm:$0xff]
      %v1400 = vld [vmem:[#allocation8 + $0x1c90] sm:$0xff]
      %v1401 = vld [vmem:[#allocation8 + $0x1c98] sm:$0xff]
      %v1402 = vld [vmem:[#allocation8 + $0x1ca0] sm:$0xff]
      %v1403 = vld [vmem:[#allocation8 + $0x1ca8] sm:$0xff]
      %v1404 = vld [vmem:[#allocation8 + $0x1cb0] sm:$0xff]
      %v1405 = vld [vmem:[#allocation8 + $0x1cb8] sm:$0xff]
      %v1406 = vld [vmem:[#allocation8 + $0x1cc0] sm:$0xff]
      %v1407 = vld [vmem:[#allocation8 + $0x1cc8] sm:$0xff]
      %v1408 = vld [vmem:[#allocation8 + $0x1cd0] sm:$0xff]
      %v1409 = vld [vmem:[#allocation8 + $0x1cd8] sm:$0xff]
      %v1410 = vld [vmem:[#allocation8 + $0x1ce0] sm:$0xff]
      %v1411 = vld [vmem:[#allocation8 + $0x1ce8] sm:$0xff]
      %v1412 = vld [vmem:[#allocation8 + $0x1cf0] sm:$0xff]
      %v1413 = vld [vmem:[#allocation8 + $0x1cf8] sm:$0xff]
      %v1414 = vld [vmem:[#allocation8 + $0x1d00] sm:$0xff]
      %v1415 = vld [vmem:[#allocation8 + $0x1d08] sm:$0xff]
      %v1416 = vld [vmem:[#allocation8 + $0x1d10] sm:$0xff]
      %v1417 = vld [vmem:[#allocation8 + $0x1d18] sm:$0xff]
      %v1418 = vld [vmem:[#allocation8 + $0x1d20] sm:$0xff]
      %v1419 = vld [vmem:[#allocation8 + $0x1d28] sm:$0xff]
      %v1420 = vld [vmem:[#allocation8 + $0x1d30] sm:$0xff]
      %v1421 = vld [vmem:[#allocation8 + $0x1d38] sm:$0xff]
      %v1422 = vld [vmem:[#allocation8 + $0x1d40] sm:$0xff]
      %v1423 = vld [vmem:[#allocation8 + $0x1d48] sm:$0xff]
      %v1424 = vld [vmem:[#allocation8 + $0x1d50] sm:$0xff]
      %v1425 = vld [vmem:[#allocation8 + $0x1d58] sm:$0xff]
      %v1426 = vld [vmem:[#allocation8 + $0x1d60] sm:$0xff]
      %v1427 = vld [vmem:[#allocation8 + $0x1d68] sm:$0xff]
      %v1428 = vld [vmem:[#allocation8 + $0x1d70] sm:$0xff]
      %v1429 = vld [vmem:[#allocation8 + $0x1d78] sm:$0xff]
      %v1430 = vld [vmem:[#allocation8 + $0x1d80] sm:$0xff]
      %v1431 = vld [vmem:[#allocation8 + $0x1d88] sm:$0xff]
      %v1432 = vld [vmem:[#allocation8 + $0x1d90] sm:$0xff]
      %v1433 = vld [vmem:[#allocation8 + $0x1d98] sm:$0xff]
      %v1434 = vld [vmem:[#allocation8 + $0x1da0] sm:$0xff]
      %v1435 = vld [vmem:[#allocation8 + $0x1da8] sm:$0xff]
      %v1436 = vld [vmem:[#allocation8 + $0x1db0] sm:$0xff]
      %v1437 = vld [vmem:[#allocation8 + $0x1db8] sm:$0xff]
      %v1438 = vld [vmem:[#allocation8 + $0x1dc0] sm:$0xff]
      %v1439 = vld [vmem:[#allocation8 + $0x1dc8] sm:$0xff]
      %v1440 = vld [vmem:[#allocation8 + $0x1dd0] sm:$0xff]
      %v1441 = vld [vmem:[#allocation8 + $0x1dd8] sm:$0xff]
      %v1442 = vld [vmem:[#allocation8 + $0x1de0] sm:$0xff]
      %v1443 = vld [vmem:[#allocation8 + $0x1de8] sm:$0xff]
      %v1444 = vld [vmem:[#allocation8 + $0x1df0] sm:$0xff]
      %v1445 = vld [vmem:[#allocation8 + $0x1df8] sm:$0xff]
      %v1446 = vld [vmem:[#allocation8 + $0x1e00] sm:$0xff]
      %v1447 = vld [vmem:[#allocation8 + $0x1e08] sm:$0xff]
      %v1448 = vld [vmem:[#allocation8 + $0x1e10] sm:$0xff]
      %v1449 = vld [vmem:[#allocation8 + $0x1e18] sm:$0xff]
      %v1450 = vld [vmem:[#allocation8 + $0x1e20] sm:$0xff]
      %v1451 = vld [vmem:[#allocation8 + $0x1e28] sm:$0xff]
      %v1452 = vld [vmem:[#allocation8 + $0x1e30] sm:$0xff]
      %v1453 = vld [vmem:[#allocation8 + $0x1e38] sm:$0xff]
      %v1454 = vld [vmem:[#allocation8 + $0x1e40] sm:$0xff]
      %v1455 = vld [vmem:[#allocation8 + $0x1e48] sm:$0xff]
      %v1456 = vld [vmem:[#allocation8 + $0x1e50] sm:$0xff]
      %v1457 = vld [vmem:[#allocation8 + $0x1e58] sm:$0xff]
      %v1458 = vld [vmem:[#allocation8 + $0x1e60] sm:$0xff]
      %v1459 = vld [vmem:[#allocation8 + $0x1e68] sm:$0xff]
      %v1460 = vld [vmem:[#allocation8 + $0x1e70] sm:$0xff]
      %v1461 = vld [vmem:[#allocation8 + $0x1e78] sm:$0xff]
      %v1462 = vld [vmem:[#allocation8 + $0x1e80] sm:$0xff]
      %v1463 = vld [vmem:[#allocation8 + $0x1e88] sm:$0xff]
      %v1464 = vld [vmem:[#allocation8 + $0x1e90] sm:$0xff]
      %v1465 = vld [vmem:[#allocation8 + $0x1e98] sm:$0xff]
      %v1466 = vld [vmem:[#allocation8 + $0x1ea0] sm:$0xff]
      %v1467 = vld [vmem:[#allocation8 + $0x1ea8] sm:$0xff]
      %v1468 = vld [vmem:[#allocation8 + $0x1eb0] sm:$0xff]
      %v1469 = vld [vmem:[#allocation8 + $0x1eb8] sm:$0xff]
      %v1470 = vld [vmem:[#allocation8 + $0x1ec0] sm:$0xff]
      %v1471 = vld [vmem:[#allocation8 + $0x1ec8] sm:$0xff]
      %v1472 = vld [vmem:[#allocation8 + $0x1ed0] sm:$0xff]
      %v1473 = vld [vmem:[#allocation8 + $0x1ed8] sm:$0xff]
      %v1474 = vld [vmem:[#allocation8 + $0x1ee0] sm:$0xff]
      %v1475 = vld [vmem:[#allocation8 + $0x1ee8] sm:$0xff]
      %v1476 = vld [vmem:[#allocation8 + $0x1ef0] sm:$0xff]
      %v1477 = vld [vmem:[#allocation8 + $0x1ef8] sm:$0xff]
      %v1478 = vld [vmem:[#allocation8 + $0x1f00] sm:$0xff]
      %v1479 = vld [vmem:[#allocation8 + $0x1f08] sm:$0xff]
      %v1480 = vld [vmem:[#allocation8 + $0x1f10] sm:$0xff]
      %v1481 = vld [vmem:[#allocation8 + $0x1f18] sm:$0xff]
      %v1482 = vld [vmem:[#allocation8 + $0x1f20] sm:$0xff]
      %v1483 = vld [vmem:[#allocation8 + $0x1f28] sm:$0xff]
      %v1484 = vld [vmem:[#allocation8 + $0x1f30] sm:$0xff]
      %v1485 = vld [vmem:[#allocation8 + $0x1f38] sm:$0xff]
      %v1486 = vld [vmem:[#allocation8 + $0x1f40] sm:$0xff]
      %v1487 = vld [vmem:[#allocation8 + $0x1f48] sm:$0xff]
      %v1488 = vld [vmem:[#allocation8 + $0x1f50] sm:$0xff]
      %v1489 = vld [vmem:[#allocation8 + $0x1f58] sm:$0xff]
      %v1490 = vld [vmem:[#allocation8 + $0x1f60] sm:$0xff]
      %v1491 = vld [vmem:[#allocation8 + $0x1f68] sm:$0xff]
      %v1492 = vld [vmem:[#allocation8 + $0x1f70] sm:$0xff]
      %v1493 = vld [vmem:[#allocation8 + $0x1f78] sm:$0xff]
      %v1494 = vld [vmem:[#allocation8 + $0x1f80] sm:$0xff]
      %v1495 = vld [vmem:[#allocation8 + $0x1f88] sm:$0xff]
      %v1496 = vld [vmem:[#allocation8 + $0x1f90] sm:$0xff]
      %v1497 = vld [vmem:[#allocation8 + $0x1f98] sm:$0xff]
      %v1498 = vld [vmem:[#allocation8 + $0x1fa0] sm:$0xff]
      %v1499 = vld [vmem:[#allocation8 + $0x1fa8] sm:$0xff]
      %v1500 = vld [vmem:[#allocation8 + $0x1fb0] sm:$0xff]
      %v1501 = vld [vmem:[#allocation8 + $0x1fb8] sm:$0xff]
      %v1502 = vld [vmem:[#allocation8 + $0x1fc0] sm:$0xff]
      %v1503 = vld [vmem:[#allocation8 + $0x1fc8] sm:$0xff]
      %v1504 = vld [vmem:[#allocation8 + $0x1fd0] sm:$0xff]
      %v1505 = vld [vmem:[#allocation8 + $0x1fd8] sm:$0xff]
      %v1506 = vld [vmem:[#allocation8 + $0x1fe0] sm:$0xff]
      %v1507 = vld [vmem:[#allocation8 + $0x1fe8] sm:$0xff]
      %v1508 = vld [vmem:[#allocation8 + $0x1ff0] sm:$0xff]
      %v1509 = vld [vmem:[#allocation8 + $0x1ff8] sm:$0xff]
      %v1510 = vld [vmem:[#allocation9] sm:$0xff]
      %v1511 = vld [vmem:[#allocation9 + $0x8] sm:$0xff]
      %v1514 = vlaneseq
      %v1515 = vshrl.u32 %v1514, 7
      %v1516 = vsub.s32 0, %v1515
      %v1517 = vrot.slane %v1510, %v1516
      %v1518 = vlaneseq
      %v1519 = vshrl.u32 %v1518, 7
      %v1520 = vsub.s32 1, %v1519
      %v1521 = vrot.slane %v1510, %v1520
      %v1522 = vlaneseq
      %v1523 = vshrl.u32 %v1522, 7
      %v1524 = vsub.s32 2, %v1523
      %v1525 = vrot.slane %v1510, %v1524
      %v1526 = vlaneseq
      %v1527 = vshrl.u32 %v1526, 7
      %v1528 = vsub.s32 3, %v1527
      %v1529 = vrot.slane %v1510, %v1528
      %v1530 = vlaneseq
      %v1531 = vshrl.u32 %v1530, 7
      %v1532 = vsub.s32 4, %v1531
      %v1533 = vrot.slane %v1510, %v1532
      %v1534 = vlaneseq
      %v1535 = vshrl.u32 %v1534, 7
      %v1536 = vsub.s32 5, %v1535
      %v1537 = vrot.slane %v1510, %v1536
      %v1538 = vlaneseq
      %v1539 = vshrl.u32 %v1538, 7
      %v1540 = vsub.s32 6, %v1539
      %v1541 = vrot.slane %v1510, %v1540
      %v1542 = vlaneseq
      %v1543 = vshrl.u32 %v1542, 7
      %v1544 = vsub.s32 7, %v1543
      %v1545 = vrot.slane %v1510, %v1544
      %v1546 = vlaneseq
      %v1547 = vshrl.u32 %v1546, 7
      %v1548 = vsub.s32 0, %v1547
      %v1549 = vrot.slane %v1511, %v1548
      %v1550 = vlaneseq
      %v1551 = vshrl.u32 %v1550, 7
      %v1552 = vsub.s32 1, %v1551
      %v1553 = vrot.slane %v1511, %v1552
      %v1554 = vlaneseq
      %v1555 = vshrl.u32 %v1554, 7
      %v1556 = vsub.s32 2, %v1555
      %v1557 = vrot.slane %v1511, %v1556
      %v1558 = vlaneseq
      %v1559 = vshrl.u32 %v1558, 7
      %v1560 = vsub.s32 3, %v1559
      %v1561 = vrot.slane %v1511, %v1560
      %v1562 = vlaneseq
      %v1563 = vshrl.u32 %v1562, 7
      %v1564 = vsub.s32 4, %v1563
      %v1565 = vrot.slane %v1511, %v1564
      %v1566 = vlaneseq
      %v1567 = vshrl.u32 %v1566, 7
      %v1568 = vsub.s32 5, %v1567
      %v1569 = vrot.slane %v1511, %v1568
      %v1570 = vlaneseq
      %v1571 = vshrl.u32 %v1570, 7
      %v1572 = vsub.s32 6, %v1571
      %v1573 = vrot.slane %v1511, %v1572
      %v1574 = vlaneseq
      %v1575 = vshrl.u32 %v1574, 7
      %v1576 = vsub.s32 7, %v1575
      %v1577 = vrot.slane %v1511, %v1576
      %v2618 = vunpack.c.l.b16 %v486
      %v2619 = vunpack.c.h.b16 %v486
      %v2620 = vunpack.c.l.b16 %v487
      %v2621 = vunpack.c.h.b16 %v487
      %v2622 = vunpack.c.l.b16 %v488
      %v2623 = vunpack.c.h.b16 %v488
      %v2624 = vunpack.c.l.b16 %v489
      %v2625 = vunpack.c.h.b16 %v489
      %v2626 = vunpack.c.l.b16 %v490
      %v2627 = vunpack.c.h.b16 %v490
      %v2628 = vunpack.c.l.b16 %v491
      %v2629 = vunpack.c.h.b16 %v491
      %v2630 = vunpack.c.l.b16 %v492
      %v2631 = vunpack.c.h.b16 %v492
      %v2632 = vunpack.c.l.b16 %v493
      %v2633 = vunpack.c.h.b16 %v493
      %v2634 = vunpack.c.l.b16 %v494
      %v2635 = vunpack.c.h.b16 %v494
      %v2636 = vunpack.c.l.b16 %v495
      %v2637 = vunpack.c.h.b16 %v495
      %v2638 = vunpack.c.l.b16 %v496
      %v2639 = vunpack.c.h.b16 %v496
      %v2640 = vunpack.c.l.b16 %v497
      %v2641 = vunpack.c.h.b16 %v497
      %v2642 = vunpack.c.l.b16 %v498
      %v2643 = vunpack.c.h.b16 %v498
      %v2644 = vunpack.c.l.b16 %v499
      %v2645 = vunpack.c.h.b16 %v499
      %v2646 = vunpack.c.l.b16 %v500
      %v2647 = vunpack.c.h.b16 %v500
      %v2648 = vunpack.c.l.b16 %v501
      %v2649 = vunpack.c.h.b16 %v501
      %v2650 = vunpack.c.l.b16 %v502
      %v2651 = vunpack.c.h.b16 %v502
      %v2652 = vunpack.c.l.b16 %v503
      %v2653 = vunpack.c.h.b16 %v503
      %v2654 = vunpack.c.l.b16 %v504
      %v2655 = vunpack.c.h.b16 %v504
      %v2656 = vunpack.c.l.b16 %v505
      %v2657 = vunpack.c.h.b16 %v505
      %v2658 = vunpack.c.l.b16 %v506
      %v2659 = vunpack.c.h.b16 %v506
      %v2660 = vunpack.c.l.b16 %v507
      %v2661 = vunpack.c.h.b16 %v507
      %v2662 = vunpack.c.l.b16 %v508
      %v2663 = vunpack.c.h.b16 %v508
      %v2664 = vunpack.c.l.b16 %v509
      %v2665 = vunpack.c.h.b16 %v509
      %v2666 = vunpack.c.l.b16 %v510
      %v2667 = vunpack.c.h.b16 %v510
      %v2668 = vunpack.c.l.b16 %v511
      %v2669 = vunpack.c.h.b16 %v511
      %v2670 = vunpack.c.l.b16 %v512
      %v2671 = vunpack.c.h.b16 %v512
      %v2672 = vunpack.c.l.b16 %v513
      %v2673 = vunpack.c.h.b16 %v513
      %v2674 = vunpack.c.l.b16 %v514
      %v2675 = vunpack.c.h.b16 %v514
      %v2676 = vunpack.c.l.b16 %v515
      %v2677 = vunpack.c.h.b16 %v515
      %v2678 = vunpack.c.l.b16 %v516
      %v2679 = vunpack.c.h.b16 %v516
      %v2680 = vunpack.c.l.b16 %v517
      %v2681 = vunpack.c.h.b16 %v517
      %v2682 = vunpack.c.l.b16 %v518
      %v2683 = vunpack.c.h.b16 %v518
      %v2684 = vunpack.c.l.b16 %v519
      %v2685 = vunpack.c.h.b16 %v519
      %v2686 = vunpack.c.l.b16 %v520
      %v2687 = vunpack.c.h.b16 %v520
      %v2688 = vunpack.c.l.b16 %v521
      %v2689 = vunpack.c.h.b16 %v521
      %v2690 = vunpack.c.l.b16 %v522
      %v2691 = vunpack.c.h.b16 %v522
      %v2692 = vunpack.c.l.b16 %v523
      %v2693 = vunpack.c.h.b16 %v523
      %v2694 = vunpack.c.l.b16 %v524
      %v2695 = vunpack.c.h.b16 %v524
      %v2696 = vunpack.c.l.b16 %v525
      %v2697 = vunpack.c.h.b16 %v525
      %v2698 = vunpack.c.l.b16 %v526
      %v2699 = vunpack.c.h.b16 %v526
      %v2700 = vunpack.c.l.b16 %v527
      %v2701 = vunpack.c.h.b16 %v527
      %v2702 = vunpack.c.l.b16 %v528
      %v2703 = vunpack.c.h.b16 %v528
      %v2704 = vunpack.c.l.b16 %v529
      %v2705 = vunpack.c.h.b16 %v529
      %v2706 = vunpack.c.l.b16 %v530
      %v2707 = vunpack.c.h.b16 %v530
      %v2708 = vunpack.c.l.b16 %v531
      %v2709 = vunpack.c.h.b16 %v531
      %v2710 = vunpack.c.l.b16 %v532
      %v2711 = vunpack.c.h.b16 %v532
      %v2712 = vunpack.c.l.b16 %v533
      %v2713 = vunpack.c.h.b16 %v533
      %v2714 = vunpack.c.l.b16 %v534
      %v2715 = vunpack.c.h.b16 %v534
      %v2716 = vunpack.c.l.b16 %v535
      %v2717 = vunpack.c.h.b16 %v535
      %v2718 = vunpack.c.l.b16 %v536
      %v2719 = vunpack.c.h.b16 %v536
      %v2720 = vunpack.c.l.b16 %v537
      %v2721 = vunpack.c.h.b16 %v537
      %v2722 = vunpack.c.l.b16 %v538
      %v2723 = vunpack.c.h.b16 %v538
      %v2724 = vunpack.c.l.b16 %v539
      %v2725 = vunpack.c.h.b16 %v539
      %v2726 = vunpack.c.l.b16 %v540
      %v2727 = vunpack.c.h.b16 %v540
      %v2728 = vunpack.c.l.b16 %v541
      %v2729 = vunpack.c.h.b16 %v541
      %v2730 = vunpack.c.l.b16 %v542
      %v2731 = vunpack.c.h.b16 %v542
      %v2732 = vunpack.c.l.b16 %v543
      %v2733 = vunpack.c.h.b16 %v543
      %v2734 = vunpack.c.l.b16 %v544
      %v2735 = vunpack.c.h.b16 %v544
      %v2736 = vunpack.c.l.b16 %v545
      %v2737 = vunpack.c.h.b16 %v545
      %v2738 = vunpack.c.l.b16 %v546
      %v2739 = vunpack.c.h.b16 %v546
      %v2740 = vunpack.c.l.b16 %v547
      %v2741 = vunpack.c.h.b16 %v547
      %v2742 = vunpack.c.l.b16 %v548
      %v2743 = vunpack.c.h.b16 %v548
      %v2744 = vunpack.c.l.b16 %v549
      %v2745 = vunpack.c.h.b16 %v549
      %v2746 = vunpack.c.l.b16 %v550
      %v2747 = vunpack.c.h.b16 %v550
      %v2748 = vunpack.c.l.b16 %v551
      %v2749 = vunpack.c.h.b16 %v551
      %v2750 = vunpack.c.l.b16 %v552
      %v2751 = vunpack.c.h.b16 %v552
      %v2752 = vunpack.c.l.b16 %v553
      %v2753 = vunpack.c.h.b16 %v553
      %v2754 = vunpack.c.l.b16 %v554
      %v2755 = vunpack.c.h.b16 %v554
      %v2756 = vunpack.c.l.b16 %v555
      %v2757 = vunpack.c.h.b16 %v555
      %v2758 = vunpack.c.l.b16 %v556
      %v2759 = vunpack.c.h.b16 %v556
      %v2760 = vunpack.c.l.b16 %v557
      %v2761 = vunpack.c.h.b16 %v557
      %v2762 = vunpack.c.l.b16 %v558
      %v2763 = vunpack.c.h.b16 %v558
      %v2764 = vunpack.c.l.b16 %v559
      %v2765 = vunpack.c.h.b16 %v559
      %v2766 = vunpack.c.l.b16 %v560
      %v2767 = vunpack.c.h.b16 %v560
      %v2768 = vunpack.c.l.b16 %v561
      %v2769 = vunpack.c.h.b16 %v561
      %v2770 = vunpack.c.l.b16 %v562
      %v2771 = vunpack.c.h.b16 %v562
      %v2772 = vunpack.c.l.b16 %v563
      %v2773 = vunpack.c.h.b16 %v563
      %v2774 = vunpack.c.l.b16 %v564
      %v2775 = vunpack.c.h.b16 %v564
      %v2776 = vunpack.c.l.b16 %v565
      %v2777 = vunpack.c.h.b16 %v565
      %v2778 = vunpack.c.l.b16 %v566
      %v2779 = vunpack.c.h.b16 %v566
      %v2780 = vunpack.c.l.b16 %v567
      %v2781 = vunpack.c.h.b16 %v567
      %v2782 = vunpack.c.l.b16 %v568
      %v2783 = vunpack.c.h.b16 %v568
      %v2784 = vunpack.c.l.b16 %v569
      %v2785 = vunpack.c.h.b16 %v569
      %v2786 = vunpack.c.l.b16 %v570
      %v2787 = vunpack.c.h.b16 %v570
      %v2788 = vunpack.c.l.b16 %v571
      %v2789 = vunpack.c.h.b16 %v571
      %v2790 = vunpack.c.l.b16 %v572
      %v2791 = vunpack.c.h.b16 %v572
      %v2792 = vunpack.c.l.b16 %v573
      %v2793 = vunpack.c.h.b16 %v573
      %v2794 = vunpack.c.l.b16 %v574
      %v2795 = vunpack.c.h.b16 %v574
      %v2796 = vunpack.c.l.b16 %v575
      %v2797 = vunpack.c.h.b16 %v575
      %v2798 = vunpack.c.l.b16 %v576
      %v2799 = vunpack.c.h.b16 %v576
      %v2800 = vunpack.c.l.b16 %v577
      %v2801 = vunpack.c.h.b16 %v577
      %v2802 = vunpack.c.l.b16 %v578
      %v2803 = vunpack.c.h.b16 %v578
      %v2804 = vunpack.c.l.b16 %v579
      %v2805 = vunpack.c.h.b16 %v579
      %v2806 = vunpack.c.l.b16 %v580
      %v2807 = vunpack.c.h.b16 %v580
      %v2808 = vunpack.c.l.b16 %v581
      %v2809 = vunpack.c.h.b16 %v581
      %v2810 = vunpack.c.l.b16 %v582
      %v2811 = vunpack.c.h.b16 %v582
      %v2812 = vunpack.c.l.b16 %v583
      %v2813 = vunpack.c.h.b16 %v583
      %v2814 = vunpack.c.l.b16 %v584
      %v2815 = vunpack.c.h.b16 %v584
      %v2816 = vunpack.c.l.b16 %v585
      %v2817 = vunpack.c.h.b16 %v585
      %v2818 = vunpack.c.l.b16 %v586
      %v2819 = vunpack.c.h.b16 %v586
      %v2820 = vunpack.c.l.b16 %v587
      %v2821 = vunpack.c.h.b16 %v587
      %v2822 = vunpack.c.l.b16 %v588
      %v2823 = vunpack.c.h.b16 %v588
      %v2824 = vunpack.c.l.b16 %v589
      %v2825 = vunpack.c.h.b16 %v589
      %v2826 = vunpack.c.l.b16 %v590
      %v2827 = vunpack.c.h.b16 %v590
      %v2828 = vunpack.c.l.b16 %v591
      %v2829 = vunpack.c.h.b16 %v591
      %v2830 = vunpack.c.l.b16 %v592
      %v2831 = vunpack.c.h.b16 %v592
      %v2832 = vunpack.c.l.b16 %v593
      %v2833 = vunpack.c.h.b16 %v593
      %v2834 = vunpack.c.l.b16 %v594
      %v2835 = vunpack.c.h.b16 %v594
      %v2836 = vunpack.c.l.b16 %v595
      %v2837 = vunpack.c.h.b16 %v595
      %v2838 = vunpack.c.l.b16 %v596
      %v2839 = vunpack.c.h.b16 %v596
      %v2840 = vunpack.c.l.b16 %v597
      %v2841 = vunpack.c.h.b16 %v597
      %v2842 = vunpack.c.l.b16 %v598
      %v2843 = vunpack.c.h.b16 %v598
      %v2844 = vunpack.c.l.b16 %v599
      %v2845 = vunpack.c.h.b16 %v599
      %v2846 = vunpack.c.l.b16 %v600
      %v2847 = vunpack.c.h.b16 %v600
      %v2848 = vunpack.c.l.b16 %v601
      %v2849 = vunpack.c.h.b16 %v601
      %v2850 = vunpack.c.l.b16 %v602
      %v2851 = vunpack.c.h.b16 %v602
      %v2852 = vunpack.c.l.b16 %v603
      %v2853 = vunpack.c.h.b16 %v603
      %v2854 = vunpack.c.l.b16 %v604
      %v2855 = vunpack.c.h.b16 %v604
      %v2856 = vunpack.c.l.b16 %v605
      %v2857 = vunpack.c.h.b16 %v605
      %v2858 = vunpack.c.l.b16 %v606
      %v2859 = vunpack.c.h.b16 %v606
      %v2860 = vunpack.c.l.b16 %v607
      %v2861 = vunpack.c.h.b16 %v607
      %v2862 = vunpack.c.l.b16 %v608
      %v2863 = vunpack.c.h.b16 %v608
      %v2864 = vunpack.c.l.b16 %v609
      %v2865 = vunpack.c.h.b16 %v609
      %v2866 = vunpack.c.l.b16 %v610
      %v2867 = vunpack.c.h.b16 %v610
      %v2868 = vunpack.c.l.b16 %v611
      %v2869 = vunpack.c.h.b16 %v611
      %v2870 = vunpack.c.l.b16 %v612
      %v2871 = vunpack.c.h.b16 %v612
      %v2872 = vunpack.c.l.b16 %v613
      %v2873 = vunpack.c.h.b16 %v613
      %v2874 = vunpack.c.l.b16 %v614
      %v2875 = vunpack.c.h.b16 %v614
      %v2876 = vunpack.c.l.b16 %v615
      %v2877 = vunpack.c.h.b16 %v615
      %v2878 = vunpack.c.l.b16 %v616
      %v2879 = vunpack.c.h.b16 %v616
      %v2880 = vunpack.c.l.b16 %v617
      %v2881 = vunpack.c.h.b16 %v617
      %v2882 = vunpack.c.l.b16 %v618
      %v2883 = vunpack.c.h.b16 %v618
      %v2884 = vunpack.c.l.b16 %v619
      %v2885 = vunpack.c.h.b16 %v619
      %v2886 = vunpack.c.l.b16 %v620
      %v2887 = vunpack.c.h.b16 %v620
      %v2888 = vunpack.c.l.b16 %v621
      %v2889 = vunpack.c.h.b16 %v621
      %v2890 = vunpack.c.l.b16 %v622
      %v2891 = vunpack.c.h.b16 %v622
      %v2892 = vunpack.c.l.b16 %v623
      %v2893 = vunpack.c.h.b16 %v623
      %v2894 = vunpack.c.l.b16 %v624
      %v2895 = vunpack.c.h.b16 %v624
      %v2896 = vunpack.c.l.b16 %v625
      %v2897 = vunpack.c.h.b16 %v625
      %v2898 = vunpack.c.l.b16 %v626
      %v2899 = vunpack.c.h.b16 %v626
      %v2900 = vunpack.c.l.b16 %v627
      %v2901 = vunpack.c.h.b16 %v627
      %v2902 = vunpack.c.l.b16 %v628
      %v2903 = vunpack.c.h.b16 %v628
      %v2904 = vunpack.c.l.b16 %v629
      %v2905 = vunpack.c.h.b16 %v629
      %v2906 = vunpack.c.l.b16 %v630
      %v2907 = vunpack.c.h.b16 %v630
      %v2908 = vunpack.c.l.b16 %v631
      %v2909 = vunpack.c.h.b16 %v631
      %v2910 = vunpack.c.l.b16 %v632
      %v2911 = vunpack.c.h.b16 %v632
      %v2912 = vunpack.c.l.b16 %v633
      %v2913 = vunpack.c.h.b16 %v633
      %v2914 = vunpack.c.l.b16 %v634
      %v2915 = vunpack.c.h.b16 %v634
      %v2916 = vunpack.c.l.b16 %v635
      %v2917 = vunpack.c.h.b16 %v635
      %v2918 = vunpack.c.l.b16 %v636
      %v2919 = vunpack.c.h.b16 %v636
      %v2920 = vunpack.c.l.b16 %v637
      %v2921 = vunpack.c.h.b16 %v637
      %v2922 = vunpack.c.l.b16 %v638
      %v2923 = vunpack.c.h.b16 %v638
      %v2924 = vunpack.c.l.b16 %v639
      %v2925 = vunpack.c.h.b16 %v639
      %v2926 = vunpack.c.l.b16 %v640
      %v2927 = vunpack.c.h.b16 %v640
      %v2928 = vunpack.c.l.b16 %v641
      %v2929 = vunpack.c.h.b16 %v641
      %v2930 = vunpack.c.l.b16 %v642
      %v2931 = vunpack.c.h.b16 %v642
      %v2932 = vunpack.c.l.b16 %v643
      %v2933 = vunpack.c.h.b16 %v643
      %v2934 = vunpack.c.l.b16 %v644
      %v2935 = vunpack.c.h.b16 %v644
      %v2936 = vunpack.c.l.b16 %v645
      %v2937 = vunpack.c.h.b16 %v645
      %v2938 = vunpack.c.l.b16 %v646
      %v2939 = vunpack.c.h.b16 %v646
      %v2940 = vunpack.c.l.b16 %v647
      %v2941 = vunpack.c.h.b16 %v647
      %v2942 = vunpack.c.l.b16 %v648
      %v2943 = vunpack.c.h.b16 %v648
      %v2944 = vunpack.c.l.b16 %v649
      %v2945 = vunpack.c.h.b16 %v649
      %v2946 = vunpack.c.l.b16 %v650
      %v2947 = vunpack.c.h.b16 %v650
      %v2948 = vunpack.c.l.b16 %v651
      %v2949 = vunpack.c.h.b16 %v651
      %v2950 = vunpack.c.l.b16 %v652
      %v2951 = vunpack.c.h.b16 %v652
      %v2952 = vunpack.c.l.b16 %v653
      %v2953 = vunpack.c.h.b16 %v653
      %v2954 = vunpack.c.l.b16 %v654
      %v2955 = vunpack.c.h.b16 %v654
      %v2956 = vunpack.c.l.b16 %v655
      %v2957 = vunpack.c.h.b16 %v655
      %v2958 = vunpack.c.l.b16 %v656
      %v2959 = vunpack.c.h.b16 %v656
      %v2960 = vunpack.c.l.b16 %v657
      %v2961 = vunpack.c.h.b16 %v657
      %v2962 = vunpack.c.l.b16 %v658
      %v2963 = vunpack.c.h.b16 %v658
      %v2964 = vunpack.c.l.b16 %v659
      %v2965 = vunpack.c.h.b16 %v659
      %v2966 = vunpack.c.l.b16 %v660
      %v2967 = vunpack.c.h.b16 %v660
      %v2968 = vunpack.c.l.b16 %v661
      %v2969 = vunpack.c.h.b16 %v661
      %v2970 = vunpack.c.l.b16 %v662
      %v2971 = vunpack.c.h.b16 %v662
      %v2972 = vunpack.c.l.b16 %v663
      %v2973 = vunpack.c.h.b16 %v663
      %v2974 = vunpack.c.l.b16 %v664
      %v2975 = vunpack.c.h.b16 %v664
      %v2976 = vunpack.c.l.b16 %v665
      %v2977 = vunpack.c.h.b16 %v665
      %v2978 = vunpack.c.l.b16 %v666
      %v2979 = vunpack.c.h.b16 %v666
      %v2980 = vunpack.c.l.b16 %v667
      %v2981 = vunpack.c.h.b16 %v667
      %v2982 = vunpack.c.l.b16 %v668
      %v2983 = vunpack.c.h.b16 %v668
      %v2984 = vunpack.c.l.b16 %v669
      %v2985 = vunpack.c.h.b16 %v669
      %v2986 = vunpack.c.l.b16 %v670
      %v2987 = vunpack.c.h.b16 %v670
      %v2988 = vunpack.c.l.b16 %v671
      %v2989 = vunpack.c.h.b16 %v671
      %v2990 = vunpack.c.l.b16 %v672
      %v2991 = vunpack.c.h.b16 %v672
      %v2992 = vunpack.c.l.b16 %v673
      %v2993 = vunpack.c.h.b16 %v673
      %v2994 = vunpack.c.l.b16 %v674
      %v2995 = vunpack.c.h.b16 %v674
      %v2996 = vunpack.c.l.b16 %v675
      %v2997 = vunpack.c.h.b16 %v675
      %v2998 = vunpack.c.l.b16 %v676
      %v2999 = vunpack.c.h.b16 %v676
      %v3000 = vunpack.c.l.b16 %v677
      %v3001 = vunpack.c.h.b16 %v677
      %v3002 = vunpack.c.l.b16 %v678
      %v3003 = vunpack.c.h.b16 %v678
      %v3004 = vunpack.c.l.b16 %v679
      %v3005 = vunpack.c.h.b16 %v679
      %v3006 = vunpack.c.l.b16 %v680
      %v3007 = vunpack.c.h.b16 %v680
      %v3008 = vunpack.c.l.b16 %v681
      %v3009 = vunpack.c.h.b16 %v681
      %v3010 = vunpack.c.l.b16 %v682
      %v3011 = vunpack.c.h.b16 %v682
      %v3012 = vunpack.c.l.b16 %v683
      %v3013 = vunpack.c.h.b16 %v683
      %v3014 = vunpack.c.l.b16 %v684
      %v3015 = vunpack.c.h.b16 %v684
      %v3016 = vunpack.c.l.b16 %v685
      %v3017 = vunpack.c.h.b16 %v685
      %v3018 = vunpack.c.l.b16 %v686
      %v3019 = vunpack.c.h.b16 %v686
      %v3020 = vunpack.c.l.b16 %v687
      %v3021 = vunpack.c.h.b16 %v687
      %v3022 = vunpack.c.l.b16 %v688
      %v3023 = vunpack.c.h.b16 %v688
      %v3024 = vunpack.c.l.b16 %v689
      %v3025 = vunpack.c.h.b16 %v689
      %v3026 = vunpack.c.l.b16 %v690
      %v3027 = vunpack.c.h.b16 %v690
      %v3028 = vunpack.c.l.b16 %v691
      %v3029 = vunpack.c.h.b16 %v691
      %v3030 = vunpack.c.l.b16 %v692
      %v3031 = vunpack.c.h.b16 %v692
      %v3032 = vunpack.c.l.b16 %v693
      %v3033 = vunpack.c.h.b16 %v693
      %v3034 = vunpack.c.l.b16 %v694
      %v3035 = vunpack.c.h.b16 %v694
      %v3036 = vunpack.c.l.b16 %v695
      %v3037 = vunpack.c.h.b16 %v695
      %v3038 = vunpack.c.l.b16 %v696
      %v3039 = vunpack.c.h.b16 %v696
      %v3040 = vunpack.c.l.b16 %v697
      %v3041 = vunpack.c.h.b16 %v697
      %v3042 = vunpack.c.l.b16 %v698
      %v3043 = vunpack.c.h.b16 %v698
      %v3044 = vunpack.c.l.b16 %v699
      %v3045 = vunpack.c.h.b16 %v699
      %v3046 = vunpack.c.l.b16 %v700
      %v3047 = vunpack.c.h.b16 %v700
      %v3048 = vunpack.c.l.b16 %v701
      %v3049 = vunpack.c.h.b16 %v701
      %v3050 = vunpack.c.l.b16 %v702
      %v3051 = vunpack.c.h.b16 %v702
      %v3052 = vunpack.c.l.b16 %v703
      %v3053 = vunpack.c.h.b16 %v703
      %v3054 = vunpack.c.l.b16 %v704
      %v3055 = vunpack.c.h.b16 %v704
      %v3056 = vunpack.c.l.b16 %v705
      %v3057 = vunpack.c.h.b16 %v705
      %v3058 = vunpack.c.l.b16 %v706
      %v3059 = vunpack.c.h.b16 %v706
      %v3060 = vunpack.c.l.b16 %v707
      %v3061 = vunpack.c.h.b16 %v707
      %v3062 = vunpack.c.l.b16 %v708
      %v3063 = vunpack.c.h.b16 %v708
      %v3064 = vunpack.c.l.b16 %v709
      %v3065 = vunpack.c.h.b16 %v709
      %v3066 = vunpack.c.l.b16 %v710
      %v3067 = vunpack.c.h.b16 %v710
      %v3068 = vunpack.c.l.b16 %v711
      %v3069 = vunpack.c.h.b16 %v711
      %v3070 = vunpack.c.l.b16 %v712
      %v3071 = vunpack.c.h.b16 %v712
      %v3072 = vunpack.c.l.b16 %v713
      %v3073 = vunpack.c.h.b16 %v713
      %v3074 = vunpack.c.l.b16 %v714
      %v3075 = vunpack.c.h.b16 %v714
      %v3076 = vunpack.c.l.b16 %v715
      %v3077 = vunpack.c.h.b16 %v715
      %v3078 = vunpack.c.l.b16 %v716
      %v3079 = vunpack.c.h.b16 %v716
      %v3080 = vunpack.c.l.b16 %v717
      %v3081 = vunpack.c.h.b16 %v717
      %v3082 = vunpack.c.l.b16 %v718
      %v3083 = vunpack.c.h.b16 %v718
      %v3084 = vunpack.c.l.b16 %v719
      %v3085 = vunpack.c.h.b16 %v719
      %v3086 = vunpack.c.l.b16 %v720
      %v3087 = vunpack.c.h.b16 %v720
      %v3088 = vunpack.c.l.b16 %v721
      %v3089 = vunpack.c.h.b16 %v721
      %v3090 = vunpack.c.l.b16 %v722
      %v3091 = vunpack.c.h.b16 %v722
      %v3092 = vunpack.c.l.b16 %v723
      %v3093 = vunpack.c.h.b16 %v723
      %v3094 = vunpack.c.l.b16 %v724
      %v3095 = vunpack.c.h.b16 %v724
      %v3096 = vunpack.c.l.b16 %v725
      %v3097 = vunpack.c.h.b16 %v725
      %v3098 = vunpack.c.l.b16 %v726
      %v3099 = vunpack.c.h.b16 %v726
      %v3100 = vunpack.c.l.b16 %v727
      %v3101 = vunpack.c.h.b16 %v727
      %v3102 = vunpack.c.l.b16 %v728
      %v3103 = vunpack.c.h.b16 %v728
      %v3104 = vunpack.c.l.b16 %v729
      %v3105 = vunpack.c.h.b16 %v729
      %v3106 = vunpack.c.l.b16 %v730
      %v3107 = vunpack.c.h.b16 %v730
      %v3108 = vunpack.c.l.b16 %v731
      %v3109 = vunpack.c.h.b16 %v731
      %v3110 = vunpack.c.l.b16 %v732
      %v3111 = vunpack.c.h.b16 %v732
      %v3112 = vunpack.c.l.b16 %v733
      %v3113 = vunpack.c.h.b16 %v733
      %v3114 = vunpack.c.l.b16 %v734
      %v3115 = vunpack.c.h.b16 %v734
      %v3116 = vunpack.c.l.b16 %v735
      %v3117 = vunpack.c.h.b16 %v735
      %v3118 = vunpack.c.l.b16 %v736
      %v3119 = vunpack.c.h.b16 %v736
      %v3120 = vunpack.c.l.b16 %v737
      %v3121 = vunpack.c.h.b16 %v737
      %v3122 = vunpack.c.l.b16 %v738
      %v3123 = vunpack.c.h.b16 %v738
      %v3124 = vunpack.c.l.b16 %v739
      %v3125 = vunpack.c.h.b16 %v739
      %v3126 = vunpack.c.l.b16 %v740
      %v3127 = vunpack.c.h.b16 %v740
      %v3128 = vunpack.c.l.b16 %v741
      %v3129 = vunpack.c.h.b16 %v741
      %v3130 = vunpack.c.l.b16 %v742
      %v3131 = vunpack.c.h.b16 %v742
      %v3132 = vunpack.c.l.b16 %v743
      %v3133 = vunpack.c.h.b16 %v743
      %v3134 = vunpack.c.l.b16 %v744
      %v3135 = vunpack.c.h.b16 %v744
      %v3136 = vunpack.c.l.b16 %v745
      %v3137 = vunpack.c.h.b16 %v745
      %v3138 = vunpack.c.l.b16 %v746
      %v3139 = vunpack.c.h.b16 %v746
      %v3140 = vunpack.c.l.b16 %v747
      %v3141 = vunpack.c.h.b16 %v747
      %v3142 = vunpack.c.l.b16 %v748
      %v3143 = vunpack.c.h.b16 %v748
      %v3144 = vunpack.c.l.b16 %v749
      %v3145 = vunpack.c.h.b16 %v749
      %v3146 = vunpack.c.l.b16 %v750
      %v3147 = vunpack.c.h.b16 %v750
      %v3148 = vunpack.c.l.b16 %v751
      %v3149 = vunpack.c.h.b16 %v751
      %v3150 = vunpack.c.l.b16 %v752
      %v3151 = vunpack.c.h.b16 %v752
      %v3152 = vunpack.c.l.b16 %v753
      %v3153 = vunpack.c.h.b16 %v753
      %v3154 = vunpack.c.l.b16 %v754
      %v3155 = vunpack.c.h.b16 %v754
      %v3156 = vunpack.c.l.b16 %v755
      %v3157 = vunpack.c.h.b16 %v755
      %v3158 = vunpack.c.l.b16 %v756
      %v3159 = vunpack.c.h.b16 %v756
      %v3160 = vunpack.c.l.b16 %v757
      %v3161 = vunpack.c.h.b16 %v757
      %v3162 = vunpack.c.l.b16 %v758
      %v3163 = vunpack.c.h.b16 %v758
      %v3164 = vunpack.c.l.b16 %v759
      %v3165 = vunpack.c.h.b16 %v759
      %v3166 = vunpack.c.l.b16 %v760
      %v3167 = vunpack.c.h.b16 %v760
      %v3168 = vunpack.c.l.b16 %v761
      %v3169 = vunpack.c.h.b16 %v761
      %v3170 = vunpack.c.l.b16 %v762
      %v3171 = vunpack.c.h.b16 %v762
      %v3172 = vunpack.c.l.b16 %v763
      %v3173 = vunpack.c.h.b16 %v763
      %v3174 = vunpack.c.l.b16 %v764
      %v3175 = vunpack.c.h.b16 %v764
      %v3176 = vunpack.c.l.b16 %v765
      %v3177 = vunpack.c.h.b16 %v765
      %v3178 = vunpack.c.l.b16 %v766
      %v3179 = vunpack.c.h.b16 %v766
      %v3180 = vunpack.c.l.b16 %v767
      %v3181 = vunpack.c.h.b16 %v767
      %v3182 = vunpack.c.l.b16 %v768
      %v3183 = vunpack.c.h.b16 %v768
      %v3184 = vunpack.c.l.b16 %v769
      %v3185 = vunpack.c.h.b16 %v769
      %v3186 = vunpack.c.l.b16 %v770
      %v3187 = vunpack.c.h.b16 %v770
      %v3188 = vunpack.c.l.b16 %v771
      %v3189 = vunpack.c.h.b16 %v771
      %v3190 = vunpack.c.l.b16 %v772
      %v3191 = vunpack.c.h.b16 %v772
      %v3192 = vunpack.c.l.b16 %v773
      %v3193 = vunpack.c.h.b16 %v773
      %v3194 = vunpack.c.l.b16 %v774
      %v3195 = vunpack.c.h.b16 %v774
      %v3196 = vunpack.c.l.b16 %v775
      %v3197 = vunpack.c.h.b16 %v775
      %v3198 = vunpack.c.l.b16 %v776
      %v3199 = vunpack.c.h.b16 %v776
      %v3200 = vunpack.c.l.b16 %v777
      %v3201 = vunpack.c.h.b16 %v777
      %v3202 = vunpack.c.l.b16 %v778
      %v3203 = vunpack.c.h.b16 %v778
      %v3204 = vunpack.c.l.b16 %v779
      %v3205 = vunpack.c.h.b16 %v779
      %v3206 = vunpack.c.l.b16 %v780
      %v3207 = vunpack.c.h.b16 %v780
      %v3208 = vunpack.c.l.b16 %v781
      %v3209 = vunpack.c.h.b16 %v781
      %v3210 = vunpack.c.l.b16 %v782
      %v3211 = vunpack.c.h.b16 %v782
      %v3212 = vunpack.c.l.b16 %v783
      %v3213 = vunpack.c.h.b16 %v783
      %v3214 = vunpack.c.l.b16 %v784
      %v3215 = vunpack.c.h.b16 %v784
      %v3216 = vunpack.c.l.b16 %v785
      %v3217 = vunpack.c.h.b16 %v785
      %v3218 = vunpack.c.l.b16 %v786
      %v3219 = vunpack.c.h.b16 %v786
      %v3220 = vunpack.c.l.b16 %v787
      %v3221 = vunpack.c.h.b16 %v787
      %v3222 = vunpack.c.l.b16 %v788
      %v3223 = vunpack.c.h.b16 %v788
      %v3224 = vunpack.c.l.b16 %v789
      %v3225 = vunpack.c.h.b16 %v789
      %v3226 = vunpack.c.l.b16 %v790
      %v3227 = vunpack.c.h.b16 %v790
      %v3228 = vunpack.c.l.b16 %v791
      %v3229 = vunpack.c.h.b16 %v791
      %v3230 = vunpack.c.l.b16 %v792
      %v3231 = vunpack.c.h.b16 %v792
      %v3232 = vunpack.c.l.b16 %v793
      %v3233 = vunpack.c.h.b16 %v793
      %v3234 = vunpack.c.l.b16 %v794
      %v3235 = vunpack.c.h.b16 %v794
      %v3236 = vunpack.c.l.b16 %v795
      %v3237 = vunpack.c.h.b16 %v795
      %v3238 = vunpack.c.l.b16 %v796
      %v3239 = vunpack.c.h.b16 %v796
      %v3240 = vunpack.c.l.b16 %v797
      %v3241 = vunpack.c.h.b16 %v797
      %v3242 = vunpack.c.l.b16 %v798
      %v3243 = vunpack.c.h.b16 %v798
      %v3244 = vunpack.c.l.b16 %v799
      %v3245 = vunpack.c.h.b16 %v799
      %v3246 = vunpack.c.l.b16 %v800
      %v3247 = vunpack.c.h.b16 %v800
      %v3248 = vunpack.c.l.b16 %v801
      %v3249 = vunpack.c.h.b16 %v801
      %v3250 = vunpack.c.l.b16 %v802
      %v3251 = vunpack.c.h.b16 %v802
      %v3252 = vunpack.c.l.b16 %v803
      %v3253 = vunpack.c.h.b16 %v803
      %v3254 = vunpack.c.l.b16 %v804
      %v3255 = vunpack.c.h.b16 %v804
      %v3256 = vunpack.c.l.b16 %v805
      %v3257 = vunpack.c.h.b16 %v805
      %v3258 = vunpack.c.l.b16 %v806
      %v3259 = vunpack.c.h.b16 %v806
      %v3260 = vunpack.c.l.b16 %v807
      %v3261 = vunpack.c.h.b16 %v807
      %v3262 = vunpack.c.l.b16 %v808
      %v3263 = vunpack.c.h.b16 %v808
      %v3264 = vunpack.c.l.b16 %v809
      %v3265 = vunpack.c.h.b16 %v809
      %v3266 = vunpack.c.l.b16 %v810
      %v3267 = vunpack.c.h.b16 %v810
      %v3268 = vunpack.c.l.b16 %v811
      %v3269 = vunpack.c.h.b16 %v811
      %v3270 = vunpack.c.l.b16 %v812
      %v3271 = vunpack.c.h.b16 %v812
      %v3272 = vunpack.c.l.b16 %v813
      %v3273 = vunpack.c.h.b16 %v813
      %v3274 = vunpack.c.l.b16 %v814
      %v3275 = vunpack.c.h.b16 %v814
      %v3276 = vunpack.c.l.b16 %v815
      %v3277 = vunpack.c.h.b16 %v815
      %v3278 = vunpack.c.l.b16 %v816
      %v3279 = vunpack.c.h.b16 %v816
      %v3280 = vunpack.c.l.b16 %v817
      %v3281 = vunpack.c.h.b16 %v817
      %v3282 = vunpack.c.l.b16 %v818
      %v3283 = vunpack.c.h.b16 %v818
      %v3284 = vunpack.c.l.b16 %v819
      %v3285 = vunpack.c.h.b16 %v819
      %v3286 = vunpack.c.l.b16 %v820
      %v3287 = vunpack.c.h.b16 %v820
      %v3288 = vunpack.c.l.b16 %v821
      %v3289 = vunpack.c.h.b16 %v821
      %v3290 = vunpack.c.l.b16 %v822
      %v3291 = vunpack.c.h.b16 %v822
      %v3292 = vunpack.c.l.b16 %v823
      %v3293 = vunpack.c.h.b16 %v823
      %v3294 = vunpack.c.l.b16 %v824
      %v3295 = vunpack.c.h.b16 %v824
      %v3296 = vunpack.c.l.b16 %v825
      %v3297 = vunpack.c.h.b16 %v825
      %v3298 = vunpack.c.l.b16 %v826
      %v3299 = vunpack.c.h.b16 %v826
      %v3300 = vunpack.c.l.b16 %v827
      %v3301 = vunpack.c.h.b16 %v827
      %v3302 = vunpack.c.l.b16 %v828
      %v3303 = vunpack.c.h.b16 %v828
      %v3304 = vunpack.c.l.b16 %v829
      %v3305 = vunpack.c.h.b16 %v829
      %v3306 = vunpack.c.l.b16 %v830
      %v3307 = vunpack.c.h.b16 %v830
      %v3308 = vunpack.c.l.b16 %v831
      %v3309 = vunpack.c.h.b16 %v831
      %v3310 = vunpack.c.l.b16 %v832
      %v3311 = vunpack.c.h.b16 %v832
      %v3312 = vunpack.c.l.b16 %v833
      %v3313 = vunpack.c.h.b16 %v833
      %v3314 = vunpack.c.l.b16 %v834
      %v3315 = vunpack.c.h.b16 %v834
      %v3316 = vunpack.c.l.b16 %v835
      %v3317 = vunpack.c.h.b16 %v835
      %v3318 = vunpack.c.l.b16 %v836
      %v3319 = vunpack.c.h.b16 %v836
      %v3320 = vunpack.c.l.b16 %v837
      %v3321 = vunpack.c.h.b16 %v837
      %v3322 = vunpack.c.l.b16 %v838
      %v3323 = vunpack.c.h.b16 %v838
      %v3324 = vunpack.c.l.b16 %v839
      %v3325 = vunpack.c.h.b16 %v839
      %v3326 = vunpack.c.l.b16 %v840
      %v3327 = vunpack.c.h.b16 %v840
      %v3328 = vunpack.c.l.b16 %v841
      %v3329 = vunpack.c.h.b16 %v841
      %v3330 = vunpack.c.l.b16 %v842
      %v3331 = vunpack.c.h.b16 %v842
      %v3332 = vunpack.c.l.b16 %v843
      %v3333 = vunpack.c.h.b16 %v843
      %v3334 = vunpack.c.l.b16 %v844
      %v3335 = vunpack.c.h.b16 %v844
      %v3336 = vunpack.c.l.b16 %v845
      %v3337 = vunpack.c.h.b16 %v845
      %v3338 = vunpack.c.l.b16 %v846
      %v3339 = vunpack.c.h.b16 %v846
      %v3340 = vunpack.c.l.b16 %v847
      %v3341 = vunpack.c.h.b16 %v847
      %v3342 = vunpack.c.l.b16 %v848
      %v3343 = vunpack.c.h.b16 %v848
      %v3344 = vunpack.c.l.b16 %v849
      %v3345 = vunpack.c.h.b16 %v849
      %v3346 = vunpack.c.l.b16 %v850
      %v3347 = vunpack.c.h.b16 %v850
      %v3348 = vunpack.c.l.b16 %v851
      %v3349 = vunpack.c.h.b16 %v851
      %v3350 = vunpack.c.l.b16 %v852
      %v3351 = vunpack.c.h.b16 %v852
      %v3352 = vunpack.c.l.b16 %v853
      %v3353 = vunpack.c.h.b16 %v853
      %v3354 = vunpack.c.l.b16 %v854
      %v3355 = vunpack.c.h.b16 %v854
      %v3356 = vunpack.c.l.b16 %v855
      %v3357 = vunpack.c.h.b16 %v855
      %v3358 = vunpack.c.l.b16 %v856
      %v3359 = vunpack.c.h.b16 %v856
      %v3360 = vunpack.c.l.b16 %v857
      %v3361 = vunpack.c.h.b16 %v857
      %v3362 = vunpack.c.l.b16 %v858
      %v3363 = vunpack.c.h.b16 %v858
      %v3364 = vunpack.c.l.b16 %v859
      %v3365 = vunpack.c.h.b16 %v859
      %v3366 = vunpack.c.l.b16 %v860
      %v3367 = vunpack.c.h.b16 %v860
      %v3368 = vunpack.c.l.b16 %v861
      %v3369 = vunpack.c.h.b16 %v861
      %v3370 = vunpack.c.l.b16 %v862
      %v3371 = vunpack.c.h.b16 %v862
      %v3372 = vunpack.c.l.b16 %v863
      %v3373 = vunpack.c.h.b16 %v863
      %v3374 = vunpack.c.l.b16 %v864
      %v3375 = vunpack.c.h.b16 %v864
      %v3376 = vunpack.c.l.b16 %v865
      %v3377 = vunpack.c.h.b16 %v865
      %v3378 = vunpack.c.l.b16 %v866
      %v3379 = vunpack.c.h.b16 %v866
      %v3380 = vunpack.c.l.b16 %v867
      %v3381 = vunpack.c.h.b16 %v867
      %v3382 = vunpack.c.l.b16 %v868
      %v3383 = vunpack.c.h.b16 %v868
      %v3384 = vunpack.c.l.b16 %v869
      %v3385 = vunpack.c.h.b16 %v869
      %v3386 = vunpack.c.l.b16 %v870
      %v3387 = vunpack.c.h.b16 %v870
      %v3388 = vunpack.c.l.b16 %v871
      %v3389 = vunpack.c.h.b16 %v871
      %v3390 = vunpack.c.l.b16 %v872
      %v3391 = vunpack.c.h.b16 %v872
      %v3392 = vunpack.c.l.b16 %v873
      %v3393 = vunpack.c.h.b16 %v873
      %v3394 = vunpack.c.l.b16 %v874
      %v3395 = vunpack.c.h.b16 %v874
      %v3396 = vunpack.c.l.b16 %v875
      %v3397 = vunpack.c.h.b16 %v875
      %v3398 = vunpack.c.l.b16 %v876
      %v3399 = vunpack.c.h.b16 %v876
      %v3400 = vunpack.c.l.b16 %v877
      %v3401 = vunpack.c.h.b16 %v877
      %v3402 = vunpack.c.l.b16 %v878
      %v3403 = vunpack.c.h.b16 %v878
      %v3404 = vunpack.c.l.b16 %v879
      %v3405 = vunpack.c.h.b16 %v879
      %v3406 = vunpack.c.l.b16 %v880
      %v3407 = vunpack.c.h.b16 %v880
      %v3408 = vunpack.c.l.b16 %v881
      %v3409 = vunpack.c.h.b16 %v881
      %v3410 = vunpack.c.l.b16 %v882
      %v3411 = vunpack.c.h.b16 %v882
      %v3412 = vunpack.c.l.b16 %v883
      %v3413 = vunpack.c.h.b16 %v883
      %v3414 = vunpack.c.l.b16 %v884
      %v3415 = vunpack.c.h.b16 %v884
      %v3416 = vunpack.c.l.b16 %v885
      %v3417 = vunpack.c.h.b16 %v885
      %v3418 = vunpack.c.l.b16 %v886
      %v3419 = vunpack.c.h.b16 %v886
      %v3420 = vunpack.c.l.b16 %v887
      %v3421 = vunpack.c.h.b16 %v887
      %v3422 = vunpack.c.l.b16 %v888
      %v3423 = vunpack.c.h.b16 %v888
      %v3424 = vunpack.c.l.b16 %v889
      %v3425 = vunpack.c.h.b16 %v889
      %v3426 = vunpack.c.l.b16 %v890
      %v3427 = vunpack.c.h.b16 %v890
      %v3428 = vunpack.c.l.b16 %v891
      %v3429 = vunpack.c.h.b16 %v891
      %v3430 = vunpack.c.l.b16 %v892
      %v3431 = vunpack.c.h.b16 %v892
      %v3432 = vunpack.c.l.b16 %v893
      %v3433 = vunpack.c.h.b16 %v893
      %v3434 = vunpack.c.l.b16 %v894
      %v3435 = vunpack.c.h.b16 %v894
      %v3436 = vunpack.c.l.b16 %v895
      %v3437 = vunpack.c.h.b16 %v895
      %v3438 = vunpack.c.l.b16 %v896
      %v3439 = vunpack.c.h.b16 %v896
      %v3440 = vunpack.c.l.b16 %v897
      %v3441 = vunpack.c.h.b16 %v897
      %v3442 = vunpack.c.l.b16 %v898
      %v3443 = vunpack.c.h.b16 %v898
      %v3444 = vunpack.c.l.b16 %v899
      %v3445 = vunpack.c.h.b16 %v899
      %v3446 = vunpack.c.l.b16 %v900
      %v3447 = vunpack.c.h.b16 %v900
      %v3448 = vunpack.c.l.b16 %v901
      %v3449 = vunpack.c.h.b16 %v901
      %v3450 = vunpack.c.l.b16 %v902
      %v3451 = vunpack.c.h.b16 %v902
      %v3452 = vunpack.c.l.b16 %v903
      %v3453 = vunpack.c.h.b16 %v903
      %v3454 = vunpack.c.l.b16 %v904
      %v3455 = vunpack.c.h.b16 %v904
      %v3456 = vunpack.c.l.b16 %v905
      %v3457 = vunpack.c.h.b16 %v905
      %v3458 = vunpack.c.l.b16 %v906
      %v3459 = vunpack.c.h.b16 %v906
      %v3460 = vunpack.c.l.b16 %v907
      %v3461 = vunpack.c.h.b16 %v907
      %v3462 = vunpack.c.l.b16 %v908
      %v3463 = vunpack.c.h.b16 %v908
      %v3464 = vunpack.c.l.b16 %v909
      %v3465 = vunpack.c.h.b16 %v909
      %v3466 = vunpack.c.l.b16 %v910
      %v3467 = vunpack.c.h.b16 %v910
      %v3468 = vunpack.c.l.b16 %v911
      %v3469 = vunpack.c.h.b16 %v911
      %v3470 = vunpack.c.l.b16 %v912
      %v3471 = vunpack.c.h.b16 %v912
      %v3472 = vunpack.c.l.b16 %v913
      %v3473 = vunpack.c.h.b16 %v913
      %v3474 = vunpack.c.l.b16 %v914
      %v3475 = vunpack.c.h.b16 %v914
      %v3476 = vunpack.c.l.b16 %v915
      %v3477 = vunpack.c.h.b16 %v915
      %v3478 = vunpack.c.l.b16 %v916
      %v3479 = vunpack.c.h.b16 %v916
      %v3480 = vunpack.c.l.b16 %v917
      %v3481 = vunpack.c.h.b16 %v917
      %v3482 = vunpack.c.l.b16 %v918
      %v3483 = vunpack.c.h.b16 %v918
      %v3484 = vunpack.c.l.b16 %v919
      %v3485 = vunpack.c.h.b16 %v919
      %v3486 = vunpack.c.l.b16 %v920
      %v3487 = vunpack.c.h.b16 %v920
      %v3488 = vunpack.c.l.b16 %v921
      %v3489 = vunpack.c.h.b16 %v921
      %v3490 = vunpack.c.l.b16 %v922
      %v3491 = vunpack.c.h.b16 %v922
      %v3492 = vunpack.c.l.b16 %v923
      %v3493 = vunpack.c.h.b16 %v923
      %v3494 = vunpack.c.l.b16 %v924
      %v3495 = vunpack.c.h.b16 %v924
      %v3496 = vunpack.c.l.b16 %v925
      %v3497 = vunpack.c.h.b16 %v925
      %v3498 = vunpack.c.l.b16 %v926
      %v3499 = vunpack.c.h.b16 %v926
      %v3500 = vunpack.c.l.b16 %v927
      %v3501 = vunpack.c.h.b16 %v927
      %v3502 = vunpack.c.l.b16 %v928
      %v3503 = vunpack.c.h.b16 %v928
      %v3504 = vunpack.c.l.b16 %v929
      %v3505 = vunpack.c.h.b16 %v929
      %v3506 = vunpack.c.l.b16 %v930
      %v3507 = vunpack.c.h.b16 %v930
      %v3508 = vunpack.c.l.b16 %v931
      %v3509 = vunpack.c.h.b16 %v931
      %v3510 = vunpack.c.l.b16 %v932
      %v3511 = vunpack.c.h.b16 %v932
      %v3512 = vunpack.c.l.b16 %v933
      %v3513 = vunpack.c.h.b16 %v933
      %v3514 = vunpack.c.l.b16 %v934
      %v3515 = vunpack.c.h.b16 %v934
      %v3516 = vunpack.c.l.b16 %v935
      %v3517 = vunpack.c.h.b16 %v935
      %v3518 = vunpack.c.l.b16 %v936
      %v3519 = vunpack.c.h.b16 %v936
      %v3520 = vunpack.c.l.b16 %v937
      %v3521 = vunpack.c.h.b16 %v937
      %v3522 = vunpack.c.l.b16 %v938
      %v3523 = vunpack.c.h.b16 %v938
      %v3524 = vunpack.c.l.b16 %v939
      %v3525 = vunpack.c.h.b16 %v939
      %v3526 = vunpack.c.l.b16 %v940
      %v3527 = vunpack.c.h.b16 %v940
      %v3528 = vunpack.c.l.b16 %v941
      %v3529 = vunpack.c.h.b16 %v941
      %v3530 = vunpack.c.l.b16 %v942
      %v3531 = vunpack.c.h.b16 %v942
      %v3532 = vunpack.c.l.b16 %v943
      %v3533 = vunpack.c.h.b16 %v943
      %v3534 = vunpack.c.l.b16 %v944
      %v3535 = vunpack.c.h.b16 %v944
      %v3536 = vunpack.c.l.b16 %v945
      %v3537 = vunpack.c.h.b16 %v945
      %v3538 = vunpack.c.l.b16 %v946
      %v3539 = vunpack.c.h.b16 %v946
      %v3540 = vunpack.c.l.b16 %v947
      %v3541 = vunpack.c.h.b16 %v947
      %v3542 = vunpack.c.l.b16 %v948
      %v3543 = vunpack.c.h.b16 %v948
      %v3544 = vunpack.c.l.b16 %v949
      %v3545 = vunpack.c.h.b16 %v949
      %v3546 = vunpack.c.l.b16 %v950
      %v3547 = vunpack.c.h.b16 %v950
      %v3548 = vunpack.c.l.b16 %v951
      %v3549 = vunpack.c.h.b16 %v951
      %v3550 = vunpack.c.l.b16 %v952
      %v3551 = vunpack.c.h.b16 %v952
      %v3552 = vunpack.c.l.b16 %v953
      %v3553 = vunpack.c.h.b16 %v953
      %v3554 = vunpack.c.l.b16 %v954
      %v3555 = vunpack.c.h.b16 %v954
      %v3556 = vunpack.c.l.b16 %v955
      %v3557 = vunpack.c.h.b16 %v955
      %v3558 = vunpack.c.l.b16 %v956
      %v3559 = vunpack.c.h.b16 %v956
      %v3560 = vunpack.c.l.b16 %v957
      %v3561 = vunpack.c.h.b16 %v957
      %v3562 = vunpack.c.l.b16 %v958
      %v3563 = vunpack.c.h.b16 %v958
      %v3564 = vunpack.c.l.b16 %v959
      %v3565 = vunpack.c.h.b16 %v959
      %v3566 = vunpack.c.l.b16 %v960
      %v3567 = vunpack.c.h.b16 %v960
      %v3568 = vunpack.c.l.b16 %v961
      %v3569 = vunpack.c.h.b16 %v961
      %v3570 = vunpack.c.l.b16 %v962
      %v3571 = vunpack.c.h.b16 %v962
      %v3572 = vunpack.c.l.b16 %v963
      %v3573 = vunpack.c.h.b16 %v963
      %v3574 = vunpack.c.l.b16 %v964
      %v3575 = vunpack.c.h.b16 %v964
      %v3576 = vunpack.c.l.b16 %v965
      %v3577 = vunpack.c.h.b16 %v965
      %v3578 = vunpack.c.l.b16 %v966
      %v3579 = vunpack.c.h.b16 %v966
      %v3580 = vunpack.c.l.b16 %v967
      %v3581 = vunpack.c.h.b16 %v967
      %v3582 = vunpack.c.l.b16 %v968
      %v3583 = vunpack.c.h.b16 %v968
      %v3584 = vunpack.c.l.b16 %v969
      %v3585 = vunpack.c.h.b16 %v969
      %v3586 = vunpack.c.l.b16 %v970
      %v3587 = vunpack.c.h.b16 %v970
      %v3588 = vunpack.c.l.b16 %v971
      %v3589 = vunpack.c.h.b16 %v971
      %v3590 = vunpack.c.l.b16 %v972
      %v3591 = vunpack.c.h.b16 %v972
      %v3592 = vunpack.c.l.b16 %v973
      %v3593 = vunpack.c.h.b16 %v973
      %v3594 = vunpack.c.l.b16 %v974
      %v3595 = vunpack.c.h.b16 %v974
      %v3596 = vunpack.c.l.b16 %v975
      %v3597 = vunpack.c.h.b16 %v975
      %v3598 = vunpack.c.l.b16 %v976
      %v3599 = vunpack.c.h.b16 %v976
      %v3600 = vunpack.c.l.b16 %v977
      %v3601 = vunpack.c.h.b16 %v977
      %v3602 = vunpack.c.l.b16 %v978
      %v3603 = vunpack.c.h.b16 %v978
      %v3604 = vunpack.c.l.b16 %v979
      %v3605 = vunpack.c.h.b16 %v979
      %v3606 = vunpack.c.l.b16 %v980
      %v3607 = vunpack.c.h.b16 %v980
      %v3608 = vunpack.c.l.b16 %v981
      %v3609 = vunpack.c.h.b16 %v981
      %v3610 = vunpack.c.l.b16 %v982
      %v3611 = vunpack.c.h.b16 %v982
      %v3612 = vunpack.c.l.b16 %v983
      %v3613 = vunpack.c.h.b16 %v983
      %v3614 = vunpack.c.l.b16 %v984
      %v3615 = vunpack.c.h.b16 %v984
      %v3616 = vunpack.c.l.b16 %v985
      %v3617 = vunpack.c.h.b16 %v985
      %v3618 = vunpack.c.l.b16 %v986
      %v3619 = vunpack.c.h.b16 %v986
      %v3620 = vunpack.c.l.b16 %v987
      %v3621 = vunpack.c.h.b16 %v987
      %v3622 = vunpack.c.l.b16 %v988
      %v3623 = vunpack.c.h.b16 %v988
      %v3624 = vunpack.c.l.b16 %v989
      %v3625 = vunpack.c.h.b16 %v989
      %v3626 = vunpack.c.l.b16 %v990
      %v3627 = vunpack.c.h.b16 %v990
      %v3628 = vunpack.c.l.b16 %v991
      %v3629 = vunpack.c.h.b16 %v991
      %v3630 = vunpack.c.l.b16 %v992
      %v3631 = vunpack.c.h.b16 %v992
      %v3632 = vunpack.c.l.b16 %v993
      %v3633 = vunpack.c.h.b16 %v993
      %v3634 = vunpack.c.l.b16 %v994
      %v3635 = vunpack.c.h.b16 %v994
      %v3636 = vunpack.c.l.b16 %v995
      %v3637 = vunpack.c.h.b16 %v995
      %v3638 = vunpack.c.l.b16 %v996
      %v3639 = vunpack.c.h.b16 %v996
      %v3640 = vunpack.c.l.b16 %v997
      %v3641 = vunpack.c.h.b16 %v997
      %v3642 = vunpack.c.l.b16 %v998
      %v3643 = vunpack.c.h.b16 %v998
      %v3644 = vunpack.c.l.b16 %v999
      %v3645 = vunpack.c.h.b16 %v999
      %v3646 = vunpack.c.l.b16 %v1000
      %v3647 = vunpack.c.h.b16 %v1000
      %v3648 = vunpack.c.l.b16 %v1001
      %v3649 = vunpack.c.h.b16 %v1001
      %v3650 = vunpack.c.l.b16 %v1002
      %v3651 = vunpack.c.h.b16 %v1002
      %v3652 = vunpack.c.l.b16 %v1003
      %v3653 = vunpack.c.h.b16 %v1003
      %v3654 = vunpack.c.l.b16 %v1004
      %v3655 = vunpack.c.h.b16 %v1004
      %v3656 = vunpack.c.l.b16 %v1005
      %v3657 = vunpack.c.h.b16 %v1005
      %v3658 = vunpack.c.l.b16 %v1006
      %v3659 = vunpack.c.h.b16 %v1006
      %v3660 = vunpack.c.l.b16 %v1007
      %v3661 = vunpack.c.h.b16 %v1007
      %v3662 = vunpack.c.l.b16 %v1008
      %v3663 = vunpack.c.h.b16 %v1008
      %v3664 = vunpack.c.l.b16 %v1009
      %v3665 = vunpack.c.h.b16 %v1009
      %v3666 = vunpack.c.l.b16 %v1010
      %v3667 = vunpack.c.h.b16 %v1010
      %v3668 = vunpack.c.l.b16 %v1011
      %v3669 = vunpack.c.h.b16 %v1011
      %v3670 = vunpack.c.l.b16 %v1012
      %v3671 = vunpack.c.h.b16 %v1012
      %v3672 = vunpack.c.l.b16 %v1013
      %v3673 = vunpack.c.h.b16 %v1013
      %v3674 = vunpack.c.l.b16 %v1014
      %v3675 = vunpack.c.h.b16 %v1014
      %v3676 = vunpack.c.l.b16 %v1015
      %v3677 = vunpack.c.h.b16 %v1015
      %v3678 = vunpack.c.l.b16 %v1016
      %v3679 = vunpack.c.h.b16 %v1016
      %v3680 = vunpack.c.l.b16 %v1017
      %v3681 = vunpack.c.h.b16 %v1017
      %v3682 = vunpack.c.l.b16 %v1018
      %v3683 = vunpack.c.h.b16 %v1018
      %v3684 = vunpack.c.l.b16 %v1019
      %v3685 = vunpack.c.h.b16 %v1019
      %v3686 = vunpack.c.l.b16 %v1020
      %v3687 = vunpack.c.h.b16 %v1020
      %v3688 = vunpack.c.l.b16 %v1021
      %v3689 = vunpack.c.h.b16 %v1021
      %v3690 = vunpack.c.l.b16 %v1022
      %v3691 = vunpack.c.h.b16 %v1022
      %v3692 = vunpack.c.l.b16 %v1023
      %v3693 = vunpack.c.h.b16 %v1023
      %v3694 = vunpack.c.l.b16 %v1024
      %v3695 = vunpack.c.h.b16 %v1024
      %v3696 = vunpack.c.l.b16 %v1025
      %v3697 = vunpack.c.h.b16 %v1025
      %v3698 = vunpack.c.l.b16 %v1026
      %v3699 = vunpack.c.h.b16 %v1026
      %v3700 = vunpack.c.l.b16 %v1027
      %v3701 = vunpack.c.h.b16 %v1027
      %v3702 = vunpack.c.l.b16 %v1028
      %v3703 = vunpack.c.h.b16 %v1028
      %v3704 = vunpack.c.l.b16 %v1029
      %v3705 = vunpack.c.h.b16 %v1029
      %v3706 = vunpack.c.l.b16 %v1030
      %v3707 = vunpack.c.h.b16 %v1030
      %v3708 = vunpack.c.l.b16 %v1031
      %v3709 = vunpack.c.h.b16 %v1031
      %v3710 = vunpack.c.l.b16 %v1032
      %v3711 = vunpack.c.h.b16 %v1032
      %v3712 = vunpack.c.l.b16 %v1033
      %v3713 = vunpack.c.h.b16 %v1033
      %v3714 = vunpack.c.l.b16 %v1034
      %v3715 = vunpack.c.h.b16 %v1034
      %v3716 = vunpack.c.l.b16 %v1035
      %v3717 = vunpack.c.h.b16 %v1035
      %v3718 = vunpack.c.l.b16 %v1036
      %v3719 = vunpack.c.h.b16 %v1036
      %v3720 = vunpack.c.l.b16 %v1037
      %v3721 = vunpack.c.h.b16 %v1037
      %v3722 = vunpack.c.l.b16 %v1038
      %v3723 = vunpack.c.h.b16 %v1038
      %v3724 = vunpack.c.l.b16 %v1039
      %v3725 = vunpack.c.h.b16 %v1039
      %v3726 = vunpack.c.l.b16 %v1040
      %v3727 = vunpack.c.h.b16 %v1040
      %v3728 = vunpack.c.l.b16 %v1041
      %v3729 = vunpack.c.h.b16 %v1041
      %v3730 = vunpack.c.l.b16 %v1042
      %v3731 = vunpack.c.h.b16 %v1042
      %v3732 = vunpack.c.l.b16 %v1043
      %v3733 = vunpack.c.h.b16 %v1043
      %v3734 = vunpack.c.l.b16 %v1044
      %v3735 = vunpack.c.h.b16 %v1044
      %v3736 = vunpack.c.l.b16 %v1045
      %v3737 = vunpack.c.h.b16 %v1045
      %v3738 = vunpack.c.l.b16 %v1046
      %v3739 = vunpack.c.h.b16 %v1046
      %v3740 = vunpack.c.l.b16 %v1047
      %v3741 = vunpack.c.h.b16 %v1047
      %v3742 = vunpack.c.l.b16 %v1048
      %v3743 = vunpack.c.h.b16 %v1048
      %v3744 = vunpack.c.l.b16 %v1049
      %v3745 = vunpack.c.h.b16 %v1049
      %v3746 = vunpack.c.l.b16 %v1050
      %v3747 = vunpack.c.h.b16 %v1050
      %v3748 = vunpack.c.l.b16 %v1051
      %v3749 = vunpack.c.h.b16 %v1051
      %v3750 = vunpack.c.l.b16 %v1052
      %v3751 = vunpack.c.h.b16 %v1052
      %v3752 = vunpack.c.l.b16 %v1053
      %v3753 = vunpack.c.h.b16 %v1053
      %v3754 = vunpack.c.l.b16 %v1054
      %v3755 = vunpack.c.h.b16 %v1054
      %v3756 = vunpack.c.l.b16 %v1055
      %v3757 = vunpack.c.h.b16 %v1055
      %v3758 = vunpack.c.l.b16 %v1056
      %v3759 = vunpack.c.h.b16 %v1056
      %v3760 = vunpack.c.l.b16 %v1057
      %v3761 = vunpack.c.h.b16 %v1057
      %v3762 = vunpack.c.l.b16 %v1058
      %v3763 = vunpack.c.h.b16 %v1058
      %v3764 = vunpack.c.l.b16 %v1059
      %v3765 = vunpack.c.h.b16 %v1059
      %v3766 = vunpack.c.l.b16 %v1060
      %v3767 = vunpack.c.h.b16 %v1060
      %v3768 = vunpack.c.l.b16 %v1061
      %v3769 = vunpack.c.h.b16 %v1061
      %v3770 = vunpack.c.l.b16 %v1062
      %v3771 = vunpack.c.h.b16 %v1062
      %v3772 = vunpack.c.l.b16 %v1063
      %v3773 = vunpack.c.h.b16 %v1063
      %v3774 = vunpack.c.l.b16 %v1064
      %v3775 = vunpack.c.h.b16 %v1064
      %v3776 = vunpack.c.l.b16 %v1065
      %v3777 = vunpack.c.h.b16 %v1065
      %v3778 = vunpack.c.l.b16 %v1066
      %v3779 = vunpack.c.h.b16 %v1066
      %v3780 = vunpack.c.l.b16 %v1067
      %v3781 = vunpack.c.h.b16 %v1067
      %v3782 = vunpack.c.l.b16 %v1068
      %v3783 = vunpack.c.h.b16 %v1068
      %v3784 = vunpack.c.l.b16 %v1069
      %v3785 = vunpack.c.h.b16 %v1069
      %v3786 = vunpack.c.l.b16 %v1070
      %v3787 = vunpack.c.h.b16 %v1070
      %v3788 = vunpack.c.l.b16 %v1071
      %v3789 = vunpack.c.h.b16 %v1071
      %v3790 = vunpack.c.l.b16 %v1072
      %v3791 = vunpack.c.h.b16 %v1072
      %v3792 = vunpack.c.l.b16 %v1073
      %v3793 = vunpack.c.h.b16 %v1073
      %v3794 = vunpack.c.l.b16 %v1074
      %v3795 = vunpack.c.h.b16 %v1074
      %v3796 = vunpack.c.l.b16 %v1075
      %v3797 = vunpack.c.h.b16 %v1075
      %v3798 = vunpack.c.l.b16 %v1076
      %v3799 = vunpack.c.h.b16 %v1076
      %v3800 = vunpack.c.l.b16 %v1077
      %v3801 = vunpack.c.h.b16 %v1077
      %v3802 = vunpack.c.l.b16 %v1078
      %v3803 = vunpack.c.h.b16 %v1078
      %v3804 = vunpack.c.l.b16 %v1079
      %v3805 = vunpack.c.h.b16 %v1079
      %v3806 = vunpack.c.l.b16 %v1080
      %v3807 = vunpack.c.h.b16 %v1080
      %v3808 = vunpack.c.l.b16 %v1081
      %v3809 = vunpack.c.h.b16 %v1081
      %v3810 = vunpack.c.l.b16 %v1082
      %v3811 = vunpack.c.h.b16 %v1082
      %v3812 = vunpack.c.l.b16 %v1083
      %v3813 = vunpack.c.h.b16 %v1083
      %v3814 = vunpack.c.l.b16 %v1084
      %v3815 = vunpack.c.h.b16 %v1084
      %v3816 = vunpack.c.l.b16 %v1085
      %v3817 = vunpack.c.h.b16 %v1085
      %v3818 = vunpack.c.l.b16 %v1086
      %v3819 = vunpack.c.h.b16 %v1086
      %v3820 = vunpack.c.l.b16 %v1087
      %v3821 = vunpack.c.h.b16 %v1087
      %v3822 = vunpack.c.l.b16 %v1088
      %v3823 = vunpack.c.h.b16 %v1088
      %v3824 = vunpack.c.l.b16 %v1089
      %v3825 = vunpack.c.h.b16 %v1089
      %v3826 = vunpack.c.l.b16 %v1090
      %v3827 = vunpack.c.h.b16 %v1090
      %v3828 = vunpack.c.l.b16 %v1091
      %v3829 = vunpack.c.h.b16 %v1091
      %v3830 = vunpack.c.l.b16 %v1092
      %v3831 = vunpack.c.h.b16 %v1092
      %v3832 = vunpack.c.l.b16 %v1093
      %v3833 = vunpack.c.h.b16 %v1093
      %v3834 = vunpack.c.l.b16 %v1094
      %v3835 = vunpack.c.h.b16 %v1094
      %v3836 = vunpack.c.l.b16 %v1095
      %v3837 = vunpack.c.h.b16 %v1095
      %v3838 = vunpack.c.l.b16 %v1096
      %v3839 = vunpack.c.h.b16 %v1096
      %v3840 = vunpack.c.l.b16 %v1097
      %v3841 = vunpack.c.h.b16 %v1097
      %v3842 = vunpack.c.l.b16 %v1098
      %v3843 = vunpack.c.h.b16 %v1098
      %v3844 = vunpack.c.l.b16 %v1099
      %v3845 = vunpack.c.h.b16 %v1099
      %v3846 = vunpack.c.l.b16 %v1100
      %v3847 = vunpack.c.h.b16 %v1100
      %v3848 = vunpack.c.l.b16 %v1101
      %v3849 = vunpack.c.h.b16 %v1101
      %v3850 = vunpack.c.l.b16 %v1102
      %v3851 = vunpack.c.h.b16 %v1102
      %v3852 = vunpack.c.l.b16 %v1103
      %v3853 = vunpack.c.h.b16 %v1103
      %v3854 = vunpack.c.l.b16 %v1104
      %v3855 = vunpack.c.h.b16 %v1104
      %v3856 = vunpack.c.l.b16 %v1105
      %v3857 = vunpack.c.h.b16 %v1105
      %v3858 = vunpack.c.l.b16 %v1106
      %v3859 = vunpack.c.h.b16 %v1106
      %v3860 = vunpack.c.l.b16 %v1107
      %v3861 = vunpack.c.h.b16 %v1107
      %v3862 = vunpack.c.l.b16 %v1108
      %v3863 = vunpack.c.h.b16 %v1108
      %v3864 = vunpack.c.l.b16 %v1109
      %v3865 = vunpack.c.h.b16 %v1109
      %v3866 = vunpack.c.l.b16 %v1110
      %v3867 = vunpack.c.h.b16 %v1110
      %v3868 = vunpack.c.l.b16 %v1111
      %v3869 = vunpack.c.h.b16 %v1111
      %v3870 = vunpack.c.l.b16 %v1112
      %v3871 = vunpack.c.h.b16 %v1112
      %v3872 = vunpack.c.l.b16 %v1113
      %v3873 = vunpack.c.h.b16 %v1113
      %v3874 = vunpack.c.l.b16 %v1114
      %v3875 = vunpack.c.h.b16 %v1114
      %v3876 = vunpack.c.l.b16 %v1115
      %v3877 = vunpack.c.h.b16 %v1115
      %v3878 = vunpack.c.l.b16 %v1116
      %v3879 = vunpack.c.h.b16 %v1116
      %v3880 = vunpack.c.l.b16 %v1117
      %v3881 = vunpack.c.h.b16 %v1117
      %v3882 = vunpack.c.l.b16 %v1118
      %v3883 = vunpack.c.h.b16 %v1118
      %v3884 = vunpack.c.l.b16 %v1119
      %v3885 = vunpack.c.h.b16 %v1119
      %v3886 = vunpack.c.l.b16 %v1120
      %v3887 = vunpack.c.h.b16 %v1120
      %v3888 = vunpack.c.l.b16 %v1121
      %v3889 = vunpack.c.h.b16 %v1121
      %v3890 = vunpack.c.l.b16 %v1122
      %v3891 = vunpack.c.h.b16 %v1122
      %v3892 = vunpack.c.l.b16 %v1123
      %v3893 = vunpack.c.h.b16 %v1123
      %v3894 = vunpack.c.l.b16 %v1124
      %v3895 = vunpack.c.h.b16 %v1124
      %v3896 = vunpack.c.l.b16 %v1125
      %v3897 = vunpack.c.h.b16 %v1125
      %v3898 = vunpack.c.l.b16 %v1126
      %v3899 = vunpack.c.h.b16 %v1126
      %v3900 = vunpack.c.l.b16 %v1127
      %v3901 = vunpack.c.h.b16 %v1127
      %v3902 = vunpack.c.l.b16 %v1128
      %v3903 = vunpack.c.h.b16 %v1128
      %v3904 = vunpack.c.l.b16 %v1129
      %v3905 = vunpack.c.h.b16 %v1129
      %v3906 = vunpack.c.l.b16 %v1130
      %v3907 = vunpack.c.h.b16 %v1130
      %v3908 = vunpack.c.l.b16 %v1131
      %v3909 = vunpack.c.h.b16 %v1131
      %v3910 = vunpack.c.l.b16 %v1132
      %v3911 = vunpack.c.h.b16 %v1132
      %v3912 = vunpack.c.l.b16 %v1133
      %v3913 = vunpack.c.h.b16 %v1133
      %v3914 = vunpack.c.l.b16 %v1134
      %v3915 = vunpack.c.h.b16 %v1134
      %v3916 = vunpack.c.l.b16 %v1135
      %v3917 = vunpack.c.h.b16 %v1135
      %v3918 = vunpack.c.l.b16 %v1136
      %v3919 = vunpack.c.h.b16 %v1136
      %v3920 = vunpack.c.l.b16 %v1137
      %v3921 = vunpack.c.h.b16 %v1137
      %v3922 = vunpack.c.l.b16 %v1138
      %v3923 = vunpack.c.h.b16 %v1138
      %v3924 = vunpack.c.l.b16 %v1139
      %v3925 = vunpack.c.h.b16 %v1139
      %v3926 = vunpack.c.l.b16 %v1140
      %v3927 = vunpack.c.h.b16 %v1140
      %v3928 = vunpack.c.l.b16 %v1141
      %v3929 = vunpack.c.h.b16 %v1141
      %v3930 = vunpack.c.l.b16 %v1142
      %v3931 = vunpack.c.h.b16 %v1142
      %v3932 = vunpack.c.l.b16 %v1143
      %v3933 = vunpack.c.h.b16 %v1143
      %v3934 = vunpack.c.l.b16 %v1144
      %v3935 = vunpack.c.h.b16 %v1144
      %v3936 = vunpack.c.l.b16 %v1145
      %v3937 = vunpack.c.h.b16 %v1145
      %v3938 = vunpack.c.l.b16 %v1146
      %v3939 = vunpack.c.h.b16 %v1146
      %v3940 = vunpack.c.l.b16 %v1147
      %v3941 = vunpack.c.h.b16 %v1147
      %v3942 = vunpack.c.l.b16 %v1148
      %v3943 = vunpack.c.h.b16 %v1148
      %v3944 = vunpack.c.l.b16 %v1149
      %v3945 = vunpack.c.h.b16 %v1149
      %v3946 = vunpack.c.l.b16 %v1150
      %v3947 = vunpack.c.h.b16 %v1150
      %v3948 = vunpack.c.l.b16 %v1151
      %v3949 = vunpack.c.h.b16 %v1151
      %v3950 = vunpack.c.l.b16 %v1152
      %v3951 = vunpack.c.h.b16 %v1152
      %v3952 = vunpack.c.l.b16 %v1153
      %v3953 = vunpack.c.h.b16 %v1153
      %v3954 = vunpack.c.l.b16 %v1154
      %v3955 = vunpack.c.h.b16 %v1154
      %v3956 = vunpack.c.l.b16 %v1155
      %v3957 = vunpack.c.h.b16 %v1155
      %v3958 = vunpack.c.l.b16 %v1156
      %v3959 = vunpack.c.h.b16 %v1156
      %v3960 = vunpack.c.l.b16 %v1157
      %v3961 = vunpack.c.h.b16 %v1157
      %v3962 = vunpack.c.l.b16 %v1158
      %v3963 = vunpack.c.h.b16 %v1158
      %v3964 = vunpack.c.l.b16 %v1159
      %v3965 = vunpack.c.h.b16 %v1159
      %v3966 = vunpack.c.l.b16 %v1160
      %v3967 = vunpack.c.h.b16 %v1160
      %v3968 = vunpack.c.l.b16 %v1161
      %v3969 = vunpack.c.h.b16 %v1161
      %v3970 = vunpack.c.l.b16 %v1162
      %v3971 = vunpack.c.h.b16 %v1162
      %v3972 = vunpack.c.l.b16 %v1163
      %v3973 = vunpack.c.h.b16 %v1163
      %v3974 = vunpack.c.l.b16 %v1164
      %v3975 = vunpack.c.h.b16 %v1164
      %v3976 = vunpack.c.l.b16 %v1165
      %v3977 = vunpack.c.h.b16 %v1165
      %v3978 = vunpack.c.l.b16 %v1166
      %v3979 = vunpack.c.h.b16 %v1166
      %v3980 = vunpack.c.l.b16 %v1167
      %v3981 = vunpack.c.h.b16 %v1167
      %v3982 = vunpack.c.l.b16 %v1168
      %v3983 = vunpack.c.h.b16 %v1168
      %v3984 = vunpack.c.l.b16 %v1169
      %v3985 = vunpack.c.h.b16 %v1169
      %v3986 = vunpack.c.l.b16 %v1170
      %v3987 = vunpack.c.h.b16 %v1170
      %v3988 = vunpack.c.l.b16 %v1171
      %v3989 = vunpack.c.h.b16 %v1171
      %v3990 = vunpack.c.l.b16 %v1172
      %v3991 = vunpack.c.h.b16 %v1172
      %v3992 = vunpack.c.l.b16 %v1173
      %v3993 = vunpack.c.h.b16 %v1173
      %v3994 = vunpack.c.l.b16 %v1174
      %v3995 = vunpack.c.h.b16 %v1174
      %v3996 = vunpack.c.l.b16 %v1175
      %v3997 = vunpack.c.h.b16 %v1175
      %v3998 = vunpack.c.l.b16 %v1176
      %v3999 = vunpack.c.h.b16 %v1176
      %v4000 = vunpack.c.l.b16 %v1177
      %v4001 = vunpack.c.h.b16 %v1177
      %v4002 = vunpack.c.l.b16 %v1178
      %v4003 = vunpack.c.h.b16 %v1178
      %v4004 = vunpack.c.l.b16 %v1179
      %v4005 = vunpack.c.h.b16 %v1179
      %v4006 = vunpack.c.l.b16 %v1180
      %v4007 = vunpack.c.h.b16 %v1180
      %v4008 = vunpack.c.l.b16 %v1181
      %v4009 = vunpack.c.h.b16 %v1181
      %v4010 = vunpack.c.l.b16 %v1182
      %v4011 = vunpack.c.h.b16 %v1182
      %v4012 = vunpack.c.l.b16 %v1183
      %v4013 = vunpack.c.h.b16 %v1183
      %v4014 = vunpack.c.l.b16 %v1184
      %v4015 = vunpack.c.h.b16 %v1184
      %v4016 = vunpack.c.l.b16 %v1185
      %v4017 = vunpack.c.h.b16 %v1185
      %v4018 = vunpack.c.l.b16 %v1186
      %v4019 = vunpack.c.h.b16 %v1186
      %v4020 = vunpack.c.l.b16 %v1187
      %v4021 = vunpack.c.h.b16 %v1187
      %v4022 = vunpack.c.l.b16 %v1188
      %v4023 = vunpack.c.h.b16 %v1188
      %v4024 = vunpack.c.l.b16 %v1189
      %v4025 = vunpack.c.h.b16 %v1189
      %v4026 = vunpack.c.l.b16 %v1190
      %v4027 = vunpack.c.h.b16 %v1190
      %v4028 = vunpack.c.l.b16 %v1191
      %v4029 = vunpack.c.h.b16 %v1191
      %v4030 = vunpack.c.l.b16 %v1192
      %v4031 = vunpack.c.h.b16 %v1192
      %v4032 = vunpack.c.l.b16 %v1193
      %v4033 = vunpack.c.h.b16 %v1193
      %v4034 = vunpack.c.l.b16 %v1194
      %v4035 = vunpack.c.h.b16 %v1194
      %v4036 = vunpack.c.l.b16 %v1195
      %v4037 = vunpack.c.h.b16 %v1195
      %v4038 = vunpack.c.l.b16 %v1196
      %v4039 = vunpack.c.h.b16 %v1196
      %v4040 = vunpack.c.l.b16 %v1197
      %v4041 = vunpack.c.h.b16 %v1197
      %v4042 = vunpack.c.l.b16 %v1198
      %v4043 = vunpack.c.h.b16 %v1198
      %v4044 = vunpack.c.l.b16 %v1199
      %v4045 = vunpack.c.h.b16 %v1199
      %v4046 = vunpack.c.l.b16 %v1200
      %v4047 = vunpack.c.h.b16 %v1200
      %v4048 = vunpack.c.l.b16 %v1201
      %v4049 = vunpack.c.h.b16 %v1201
      %v4050 = vunpack.c.l.b16 %v1202
      %v4051 = vunpack.c.h.b16 %v1202
      %v4052 = vunpack.c.l.b16 %v1203
      %v4053 = vunpack.c.h.b16 %v1203
      %v4054 = vunpack.c.l.b16 %v1204
      %v4055 = vunpack.c.h.b16 %v1204
      %v4056 = vunpack.c.l.b16 %v1205
      %v4057 = vunpack.c.h.b16 %v1205
      %v4058 = vunpack.c.l.b16 %v1206
      %v4059 = vunpack.c.h.b16 %v1206
      %v4060 = vunpack.c.l.b16 %v1207
      %v4061 = vunpack.c.h.b16 %v1207
      %v4062 = vunpack.c.l.b16 %v1208
      %v4063 = vunpack.c.h.b16 %v1208
      %v4064 = vunpack.c.l.b16 %v1209
      %v4065 = vunpack.c.h.b16 %v1209
      %v4066 = vunpack.c.l.b16 %v1210
      %v4067 = vunpack.c.h.b16 %v1210
      %v4068 = vunpack.c.l.b16 %v1211
      %v4069 = vunpack.c.h.b16 %v1211
      %v4070 = vunpack.c.l.b16 %v1212
      %v4071 = vunpack.c.h.b16 %v1212
      %v4072 = vunpack.c.l.b16 %v1213
      %v4073 = vunpack.c.h.b16 %v1213
      %v4074 = vunpack.c.l.b16 %v1214
      %v4075 = vunpack.c.h.b16 %v1214
      %v4076 = vunpack.c.l.b16 %v1215
      %v4077 = vunpack.c.h.b16 %v1215
      %v4078 = vunpack.c.l.b16 %v1216
      %v4079 = vunpack.c.h.b16 %v1216
      %v4080 = vunpack.c.l.b16 %v1217
      %v4081 = vunpack.c.h.b16 %v1217
      %v4082 = vunpack.c.l.b16 %v1218
      %v4083 = vunpack.c.h.b16 %v1218
      %v4084 = vunpack.c.l.b16 %v1219
      %v4085 = vunpack.c.h.b16 %v1219
      %v4086 = vunpack.c.l.b16 %v1220
      %v4087 = vunpack.c.h.b16 %v1220
      %v4088 = vunpack.c.l.b16 %v1221
      %v4089 = vunpack.c.h.b16 %v1221
      %v4090 = vunpack.c.l.b16 %v1222
      %v4091 = vunpack.c.h.b16 %v1222
      %v4092 = vunpack.c.l.b16 %v1223
      %v4093 = vunpack.c.h.b16 %v1223
      %v4094 = vunpack.c.l.b16 %v1224
      %v4095 = vunpack.c.h.b16 %v1224
      %v4096 = vunpack.c.l.b16 %v1225
      %v4097 = vunpack.c.h.b16 %v1225
      %v4098 = vunpack.c.l.b16 %v1226
      %v4099 = vunpack.c.h.b16 %v1226
      %v4100 = vunpack.c.l.b16 %v1227
      %v4101 = vunpack.c.h.b16 %v1227
      %v4102 = vunpack.c.l.b16 %v1228
      %v4103 = vunpack.c.h.b16 %v1228
      %v4104 = vunpack.c.l.b16 %v1229
      %v4105 = vunpack.c.h.b16 %v1229
      %v4106 = vunpack.c.l.b16 %v1230
      %v4107 = vunpack.c.h.b16 %v1230
      %v4108 = vunpack.c.l.b16 %v1231
      %v4109 = vunpack.c.h.b16 %v1231
      %v4110 = vunpack.c.l.b16 %v1232
      %v4111 = vunpack.c.h.b16 %v1232
      %v4112 = vunpack.c.l.b16 %v1233
      %v4113 = vunpack.c.h.b16 %v1233
      %v4114 = vunpack.c.l.b16 %v1234
      %v4115 = vunpack.c.h.b16 %v1234
      %v4116 = vunpack.c.l.b16 %v1235
      %v4117 = vunpack.c.h.b16 %v1235
      %v4118 = vunpack.c.l.b16 %v1236
      %v4119 = vunpack.c.h.b16 %v1236
      %v4120 = vunpack.c.l.b16 %v1237
      %v4121 = vunpack.c.h.b16 %v1237
      %v4122 = vunpack.c.l.b16 %v1238
      %v4123 = vunpack.c.h.b16 %v1238
      %v4124 = vunpack.c.l.b16 %v1239
      %v4125 = vunpack.c.h.b16 %v1239
      %v4126 = vunpack.c.l.b16 %v1240
      %v4127 = vunpack.c.h.b16 %v1240
      %v4128 = vunpack.c.l.b16 %v1241
      %v4129 = vunpack.c.h.b16 %v1241
      %v4130 = vunpack.c.l.b16 %v1242
      %v4131 = vunpack.c.h.b16 %v1242
      %v4132 = vunpack.c.l.b16 %v1243
      %v4133 = vunpack.c.h.b16 %v1243
      %v4134 = vunpack.c.l.b16 %v1244
      %v4135 = vunpack.c.h.b16 %v1244
      %v4136 = vunpack.c.l.b16 %v1245
      %v4137 = vunpack.c.h.b16 %v1245
      %v4138 = vunpack.c.l.b16 %v1246
      %v4139 = vunpack.c.h.b16 %v1246
      %v4140 = vunpack.c.l.b16 %v1247
      %v4141 = vunpack.c.h.b16 %v1247
      %v4142 = vunpack.c.l.b16 %v1248
      %v4143 = vunpack.c.h.b16 %v1248
      %v4144 = vunpack.c.l.b16 %v1249
      %v4145 = vunpack.c.h.b16 %v1249
      %v4146 = vunpack.c.l.b16 %v1250
      %v4147 = vunpack.c.h.b16 %v1250
      %v4148 = vunpack.c.l.b16 %v1251
      %v4149 = vunpack.c.h.b16 %v1251
      %v4150 = vunpack.c.l.b16 %v1252
      %v4151 = vunpack.c.h.b16 %v1252
      %v4152 = vunpack.c.l.b16 %v1253
      %v4153 = vunpack.c.h.b16 %v1253
      %v4154 = vunpack.c.l.b16 %v1254
      %v4155 = vunpack.c.h.b16 %v1254
      %v4156 = vunpack.c.l.b16 %v1255
      %v4157 = vunpack.c.h.b16 %v1255
      %v4158 = vunpack.c.l.b16 %v1256
      %v4159 = vunpack.c.h.b16 %v1256
      %v4160 = vunpack.c.l.b16 %v1257
      %v4161 = vunpack.c.h.b16 %v1257
      %v4162 = vunpack.c.l.b16 %v1258
      %v4163 = vunpack.c.h.b16 %v1258
      %v4164 = vunpack.c.l.b16 %v1259
      %v4165 = vunpack.c.h.b16 %v1259
      %v4166 = vunpack.c.l.b16 %v1260
      %v4167 = vunpack.c.h.b16 %v1260
      %v4168 = vunpack.c.l.b16 %v1261
      %v4169 = vunpack.c.h.b16 %v1261
      %v4170 = vunpack.c.l.b16 %v1262
      %v4171 = vunpack.c.h.b16 %v1262
      %v4172 = vunpack.c.l.b16 %v1263
      %v4173 = vunpack.c.h.b16 %v1263
      %v4174 = vunpack.c.l.b16 %v1264
      %v4175 = vunpack.c.h.b16 %v1264
      %v4176 = vunpack.c.l.b16 %v1265
      %v4177 = vunpack.c.h.b16 %v1265
      %v4178 = vunpack.c.l.b16 %v1266
      %v4179 = vunpack.c.h.b16 %v1266
      %v4180 = vunpack.c.l.b16 %v1267
      %v4181 = vunpack.c.h.b16 %v1267
      %v4182 = vunpack.c.l.b16 %v1268
      %v4183 = vunpack.c.h.b16 %v1268
      %v4184 = vunpack.c.l.b16 %v1269
      %v4185 = vunpack.c.h.b16 %v1269
      %v4186 = vunpack.c.l.b16 %v1270
      %v4187 = vunpack.c.h.b16 %v1270
      %v4188 = vunpack.c.l.b16 %v1271
      %v4189 = vunpack.c.h.b16 %v1271
      %v4190 = vunpack.c.l.b16 %v1272
      %v4191 = vunpack.c.h.b16 %v1272
      %v4192 = vunpack.c.l.b16 %v1273
      %v4193 = vunpack.c.h.b16 %v1273
      %v4194 = vunpack.c.l.b16 %v1274
      %v4195 = vunpack.c.h.b16 %v1274
      %v4196 = vunpack.c.l.b16 %v1275
      %v4197 = vunpack.c.h.b16 %v1275
      %v4198 = vunpack.c.l.b16 %v1276
      %v4199 = vunpack.c.h.b16 %v1276
      %v4200 = vunpack.c.l.b16 %v1277
      %v4201 = vunpack.c.h.b16 %v1277
      %v4202 = vunpack.c.l.b16 %v1278
      %v4203 = vunpack.c.h.b16 %v1278
      %v4204 = vunpack.c.l.b16 %v1279
      %v4205 = vunpack.c.h.b16 %v1279
      %v4206 = vunpack.c.l.b16 %v1280
      %v4207 = vunpack.c.h.b16 %v1280
      %v4208 = vunpack.c.l.b16 %v1281
      %v4209 = vunpack.c.h.b16 %v1281
      %v4210 = vunpack.c.l.b16 %v1282
      %v4211 = vunpack.c.h.b16 %v1282
      %v4212 = vunpack.c.l.b16 %v1283
      %v4213 = vunpack.c.h.b16 %v1283
      %v4214 = vunpack.c.l.b16 %v1284
      %v4215 = vunpack.c.h.b16 %v1284
      %v4216 = vunpack.c.l.b16 %v1285
      %v4217 = vunpack.c.h.b16 %v1285
      %v4218 = vunpack.c.l.b16 %v1286
      %v4219 = vunpack.c.h.b16 %v1286
      %v4220 = vunpack.c.l.b16 %v1287
      %v4221 = vunpack.c.h.b16 %v1287
      %v4222 = vunpack.c.l.b16 %v1288
      %v4223 = vunpack.c.h.b16 %v1288
      %v4224 = vunpack.c.l.b16 %v1289
      %v4225 = vunpack.c.h.b16 %v1289
      %v4226 = vunpack.c.l.b16 %v1290
      %v4227 = vunpack.c.h.b16 %v1290
      %v4228 = vunpack.c.l.b16 %v1291
      %v4229 = vunpack.c.h.b16 %v1291
      %v4230 = vunpack.c.l.b16 %v1292
      %v4231 = vunpack.c.h.b16 %v1292
      %v4232 = vunpack.c.l.b16 %v1293
      %v4233 = vunpack.c.h.b16 %v1293
      %v4234 = vunpack.c.l.b16 %v1294
      %v4235 = vunpack.c.h.b16 %v1294
      %v4236 = vunpack.c.l.b16 %v1295
      %v4237 = vunpack.c.h.b16 %v1295
      %v4238 = vunpack.c.l.b16 %v1296
      %v4239 = vunpack.c.h.b16 %v1296
      %v4240 = vunpack.c.l.b16 %v1297
      %v4241 = vunpack.c.h.b16 %v1297
      %v4242 = vunpack.c.l.b16 %v1298
      %v4243 = vunpack.c.h.b16 %v1298
      %v4244 = vunpack.c.l.b16 %v1299
      %v4245 = vunpack.c.h.b16 %v1299
      %v4246 = vunpack.c.l.b16 %v1300
      %v4247 = vunpack.c.h.b16 %v1300
      %v4248 = vunpack.c.l.b16 %v1301
      %v4249 = vunpack.c.h.b16 %v1301
      %v4250 = vunpack.c.l.b16 %v1302
      %v4251 = vunpack.c.h.b16 %v1302
      %v4252 = vunpack.c.l.b16 %v1303
      %v4253 = vunpack.c.h.b16 %v1303
      %v4254 = vunpack.c.l.b16 %v1304
      %v4255 = vunpack.c.h.b16 %v1304
      %v4256 = vunpack.c.l.b16 %v1305
      %v4257 = vunpack.c.h.b16 %v1305
      %v4258 = vunpack.c.l.b16 %v1306
      %v4259 = vunpack.c.h.b16 %v1306
      %v4260 = vunpack.c.l.b16 %v1307
      %v4261 = vunpack.c.h.b16 %v1307
      %v4262 = vunpack.c.l.b16 %v1308
      %v4263 = vunpack.c.h.b16 %v1308
      %v4264 = vunpack.c.l.b16 %v1309
      %v4265 = vunpack.c.h.b16 %v1309
      %v4266 = vunpack.c.l.b16 %v1310
      %v4267 = vunpack.c.h.b16 %v1310
      %v4268 = vunpack.c.l.b16 %v1311
      %v4269 = vunpack.c.h.b16 %v1311
      %v4270 = vunpack.c.l.b16 %v1312
      %v4271 = vunpack.c.h.b16 %v1312
      %v4272 = vunpack.c.l.b16 %v1313
      %v4273 = vunpack.c.h.b16 %v1313
      %v4274 = vunpack.c.l.b16 %v1314
      %v4275 = vunpack.c.h.b16 %v1314
      %v4276 = vunpack.c.l.b16 %v1315
      %v4277 = vunpack.c.h.b16 %v1315
      %v4278 = vunpack.c.l.b16 %v1316
      %v4279 = vunpack.c.h.b16 %v1316
      %v4280 = vunpack.c.l.b16 %v1317
      %v4281 = vunpack.c.h.b16 %v1317
      %v4282 = vunpack.c.l.b16 %v1318
      %v4283 = vunpack.c.h.b16 %v1318
      %v4284 = vunpack.c.l.b16 %v1319
      %v4285 = vunpack.c.h.b16 %v1319
      %v4286 = vunpack.c.l.b16 %v1320
      %v4287 = vunpack.c.h.b16 %v1320
      %v4288 = vunpack.c.l.b16 %v1321
      %v4289 = vunpack.c.h.b16 %v1321
      %v4290 = vunpack.c.l.b16 %v1322
      %v4291 = vunpack.c.h.b16 %v1322
      %v4292 = vunpack.c.l.b16 %v1323
      %v4293 = vunpack.c.h.b16 %v1323
      %v4294 = vunpack.c.l.b16 %v1324
      %v4295 = vunpack.c.h.b16 %v1324
      %v4296 = vunpack.c.l.b16 %v1325
      %v4297 = vunpack.c.h.b16 %v1325
      %v4298 = vunpack.c.l.b16 %v1326
      %v4299 = vunpack.c.h.b16 %v1326
      %v4300 = vunpack.c.l.b16 %v1327
      %v4301 = vunpack.c.h.b16 %v1327
      %v4302 = vunpack.c.l.b16 %v1328
      %v4303 = vunpack.c.h.b16 %v1328
      %v4304 = vunpack.c.l.b16 %v1329
      %v4305 = vunpack.c.h.b16 %v1329
      %v4306 = vunpack.c.l.b16 %v1330
      %v4307 = vunpack.c.h.b16 %v1330
      %v4308 = vunpack.c.l.b16 %v1331
      %v4309 = vunpack.c.h.b16 %v1331
      %v4310 = vunpack.c.l.b16 %v1332
      %v4311 = vunpack.c.h.b16 %v1332
      %v4312 = vunpack.c.l.b16 %v1333
      %v4313 = vunpack.c.h.b16 %v1333
      %v4314 = vunpack.c.l.b16 %v1334
      %v4315 = vunpack.c.h.b16 %v1334
      %v4316 = vunpack.c.l.b16 %v1335
      %v4317 = vunpack.c.h.b16 %v1335
      %v4318 = vunpack.c.l.b16 %v1336
      %v4319 = vunpack.c.h.b16 %v1336
      %v4320 = vunpack.c.l.b16 %v1337
      %v4321 = vunpack.c.h.b16 %v1337
      %v4322 = vunpack.c.l.b16 %v1338
      %v4323 = vunpack.c.h.b16 %v1338
      %v4324 = vunpack.c.l.b16 %v1339
      %v4325 = vunpack.c.h.b16 %v1339
      %v4326 = vunpack.c.l.b16 %v1340
      %v4327 = vunpack.c.h.b16 %v1340
      %v4328 = vunpack.c.l.b16 %v1341
      %v4329 = vunpack.c.h.b16 %v1341
      %v4330 = vunpack.c.l.b16 %v1342
      %v4331 = vunpack.c.h.b16 %v1342
      %v4332 = vunpack.c.l.b16 %v1343
      %v4333 = vunpack.c.h.b16 %v1343
      %v4334 = vunpack.c.l.b16 %v1344
      %v4335 = vunpack.c.h.b16 %v1344
      %v4336 = vunpack.c.l.b16 %v1345
      %v4337 = vunpack.c.h.b16 %v1345
      %v4338 = vunpack.c.l.b16 %v1346
      %v4339 = vunpack.c.h.b16 %v1346
      %v4340 = vunpack.c.l.b16 %v1347
      %v4341 = vunpack.c.h.b16 %v1347
      %v4342 = vunpack.c.l.b16 %v1348
      %v4343 = vunpack.c.h.b16 %v1348
      %v4344 = vunpack.c.l.b16 %v1349
      %v4345 = vunpack.c.h.b16 %v1349
      %v4346 = vunpack.c.l.b16 %v1350
      %v4347 = vunpack.c.h.b16 %v1350
      %v4348 = vunpack.c.l.b16 %v1351
      %v4349 = vunpack.c.h.b16 %v1351
      %v4350 = vunpack.c.l.b16 %v1352
      %v4351 = vunpack.c.h.b16 %v1352
      %v4352 = vunpack.c.l.b16 %v1353
      %v4353 = vunpack.c.h.b16 %v1353
      %v4354 = vunpack.c.l.b16 %v1354
      %v4355 = vunpack.c.h.b16 %v1354
      %v4356 = vunpack.c.l.b16 %v1355
      %v4357 = vunpack.c.h.b16 %v1355
      %v4358 = vunpack.c.l.b16 %v1356
      %v4359 = vunpack.c.h.b16 %v1356
      %v4360 = vunpack.c.l.b16 %v1357
      %v4361 = vunpack.c.h.b16 %v1357
      %v4362 = vunpack.c.l.b16 %v1358
      %v4363 = vunpack.c.h.b16 %v1358
      %v4364 = vunpack.c.l.b16 %v1359
      %v4365 = vunpack.c.h.b16 %v1359
      %v4366 = vunpack.c.l.b16 %v1360
      %v4367 = vunpack.c.h.b16 %v1360
      %v4368 = vunpack.c.l.b16 %v1361
      %v4369 = vunpack.c.h.b16 %v1361
      %v4370 = vunpack.c.l.b16 %v1362
      %v4371 = vunpack.c.h.b16 %v1362
      %v4372 = vunpack.c.l.b16 %v1363
      %v4373 = vunpack.c.h.b16 %v1363
      %v4374 = vunpack.c.l.b16 %v1364
      %v4375 = vunpack.c.h.b16 %v1364
      %v4376 = vunpack.c.l.b16 %v1365
      %v4377 = vunpack.c.h.b16 %v1365
      %v4378 = vunpack.c.l.b16 %v1366
      %v4379 = vunpack.c.h.b16 %v1366
      %v4380 = vunpack.c.l.b16 %v1367
      %v4381 = vunpack.c.h.b16 %v1367
      %v4382 = vunpack.c.l.b16 %v1368
      %v4383 = vunpack.c.h.b16 %v1368
      %v4384 = vunpack.c.l.b16 %v1369
      %v4385 = vunpack.c.h.b16 %v1369
      %v4386 = vunpack.c.l.b16 %v1370
      %v4387 = vunpack.c.h.b16 %v1370
      %v4388 = vunpack.c.l.b16 %v1371
      %v4389 = vunpack.c.h.b16 %v1371
      %v4390 = vunpack.c.l.b16 %v1372
      %v4391 = vunpack.c.h.b16 %v1372
      %v4392 = vunpack.c.l.b16 %v1373
      %v4393 = vunpack.c.h.b16 %v1373
      %v4394 = vunpack.c.l.b16 %v1374
      %v4395 = vunpack.c.h.b16 %v1374
      %v4396 = vunpack.c.l.b16 %v1375
      %v4397 = vunpack.c.h.b16 %v1375
      %v4398 = vunpack.c.l.b16 %v1376
      %v4399 = vunpack.c.h.b16 %v1376
      %v4400 = vunpack.c.l.b16 %v1377
      %v4401 = vunpack.c.h.b16 %v1377
      %v4402 = vunpack.c.l.b16 %v1378
      %v4403 = vunpack.c.h.b16 %v1378
      %v4404 = vunpack.c.l.b16 %v1379
      %v4405 = vunpack.c.h.b16 %v1379
      %v4406 = vunpack.c.l.b16 %v1380
      %v4407 = vunpack.c.h.b16 %v1380
      %v4408 = vunpack.c.l.b16 %v1381
      %v4409 = vunpack.c.h.b16 %v1381
      %v4410 = vunpack.c.l.b16 %v1382
      %v4411 = vunpack.c.h.b16 %v1382
      %v4412 = vunpack.c.l.b16 %v1383
      %v4413 = vunpack.c.h.b16 %v1383
      %v4414 = vunpack.c.l.b16 %v1384
      %v4415 = vunpack.c.h.b16 %v1384
      %v4416 = vunpack.c.l.b16 %v1385
      %v4417 = vunpack.c.h.b16 %v1385
      %v4418 = vunpack.c.l.b16 %v1386
      %v4419 = vunpack.c.h.b16 %v1386
      %v4420 = vunpack.c.l.b16 %v1387
      %v4421 = vunpack.c.h.b16 %v1387
      %v4422 = vunpack.c.l.b16 %v1388
      %v4423 = vunpack.c.h.b16 %v1388
      %v4424 = vunpack.c.l.b16 %v1389
      %v4425 = vunpack.c.h.b16 %v1389
      %v4426 = vunpack.c.l.b16 %v1390
      %v4427 = vunpack.c.h.b16 %v1390
      %v4428 = vunpack.c.l.b16 %v1391
      %v4429 = vunpack.c.h.b16 %v1391
      %v4430 = vunpack.c.l.b16 %v1392
      %v4431 = vunpack.c.h.b16 %v1392
      %v4432 = vunpack.c.l.b16 %v1393
      %v4433 = vunpack.c.h.b16 %v1393
      %v4434 = vunpack.c.l.b16 %v1394
      %v4435 = vunpack.c.h.b16 %v1394
      %v4436 = vunpack.c.l.b16 %v1395
      %v4437 = vunpack.c.h.b16 %v1395
      %v4438 = vunpack.c.l.b16 %v1396
      %v4439 = vunpack.c.h.b16 %v1396
      %v4440 = vunpack.c.l.b16 %v1397
      %v4441 = vunpack.c.h.b16 %v1397
      %v4442 = vunpack.c.l.b16 %v1398
      %v4443 = vunpack.c.h.b16 %v1398
      %v4444 = vunpack.c.l.b16 %v1399
      %v4445 = vunpack.c.h.b16 %v1399
      %v4446 = vunpack.c.l.b16 %v1400
      %v4447 = vunpack.c.h.b16 %v1400
      %v4448 = vunpack.c.l.b16 %v1401
      %v4449 = vunpack.c.h.b16 %v1401
      %v4450 = vunpack.c.l.b16 %v1402
      %v4451 = vunpack.c.h.b16 %v1402
      %v4452 = vunpack.c.l.b16 %v1403
      %v4453 = vunpack.c.h.b16 %v1403
      %v4454 = vunpack.c.l.b16 %v1404
      %v4455 = vunpack.c.h.b16 %v1404
      %v4456 = vunpack.c.l.b16 %v1405
      %v4457 = vunpack.c.h.b16 %v1405
      %v4458 = vunpack.c.l.b16 %v1406
      %v4459 = vunpack.c.h.b16 %v1406
      %v4460 = vunpack.c.l.b16 %v1407
      %v4461 = vunpack.c.h.b16 %v1407
      %v4462 = vunpack.c.l.b16 %v1408
      %v4463 = vunpack.c.h.b16 %v1408
      %v4464 = vunpack.c.l.b16 %v1409
      %v4465 = vunpack.c.h.b16 %v1409
      %v4466 = vunpack.c.l.b16 %v1410
      %v4467 = vunpack.c.h.b16 %v1410
      %v4468 = vunpack.c.l.b16 %v1411
      %v4469 = vunpack.c.h.b16 %v1411
      %v4470 = vunpack.c.l.b16 %v1412
      %v4471 = vunpack.c.h.b16 %v1412
      %v4472 = vunpack.c.l.b16 %v1413
      %v4473 = vunpack.c.h.b16 %v1413
      %v4474 = vunpack.c.l.b16 %v1414
      %v4475 = vunpack.c.h.b16 %v1414
      %v4476 = vunpack.c.l.b16 %v1415
      %v4477 = vunpack.c.h.b16 %v1415
      %v4478 = vunpack.c.l.b16 %v1416
      %v4479 = vunpack.c.h.b16 %v1416
      %v4480 = vunpack.c.l.b16 %v1417
      %v4481 = vunpack.c.h.b16 %v1417
      %v4482 = vunpack.c.l.b16 %v1418
      %v4483 = vunpack.c.h.b16 %v1418
      %v4484 = vunpack.c.l.b16 %v1419
      %v4485 = vunpack.c.h.b16 %v1419
      %v4486 = vunpack.c.l.b16 %v1420
      %v4487 = vunpack.c.h.b16 %v1420
      %v4488 = vunpack.c.l.b16 %v1421
      %v4489 = vunpack.c.h.b16 %v1421
      %v4490 = vunpack.c.l.b16 %v1422
      %v4491 = vunpack.c.h.b16 %v1422
      %v4492 = vunpack.c.l.b16 %v1423
      %v4493 = vunpack.c.h.b16 %v1423
      %v4494 = vunpack.c.l.b16 %v1424
      %v4495 = vunpack.c.h.b16 %v1424
      %v4496 = vunpack.c.l.b16 %v1425
      %v4497 = vunpack.c.h.b16 %v1425
      %v4498 = vunpack.c.l.b16 %v1426
      %v4499 = vunpack.c.h.b16 %v1426
      %v4500 = vunpack.c.l.b16 %v1427
      %v4501 = vunpack.c.h.b16 %v1427
      %v4502 = vunpack.c.l.b16 %v1428
      %v4503 = vunpack.c.h.b16 %v1428
      %v4504 = vunpack.c.l.b16 %v1429
      %v4505 = vunpack.c.h.b16 %v1429
      %v4506 = vunpack.c.l.b16 %v1430
      %v4507 = vunpack.c.h.b16 %v1430
      %v4508 = vunpack.c.l.b16 %v1431
      %v4509 = vunpack.c.h.b16 %v1431
      %v4510 = vunpack.c.l.b16 %v1432
      %v4511 = vunpack.c.h.b16 %v1432
      %v4512 = vunpack.c.l.b16 %v1433
      %v4513 = vunpack.c.h.b16 %v1433
      %v4514 = vunpack.c.l.b16 %v1434
      %v4515 = vunpack.c.h.b16 %v1434
      %v4516 = vunpack.c.l.b16 %v1435
      %v4517 = vunpack.c.h.b16 %v1435
      %v4518 = vunpack.c.l.b16 %v1436
      %v4519 = vunpack.c.h.b16 %v1436
      %v4520 = vunpack.c.l.b16 %v1437
      %v4521 = vunpack.c.h.b16 %v1437
      %v4522 = vunpack.c.l.b16 %v1438
      %v4523 = vunpack.c.h.b16 %v1438
      %v4524 = vunpack.c.l.b16 %v1439
      %v4525 = vunpack.c.h.b16 %v1439
      %v4526 = vunpack.c.l.b16 %v1440
      %v4527 = vunpack.c.h.b16 %v1440
      %v4528 = vunpack.c.l.b16 %v1441
      %v4529 = vunpack.c.h.b16 %v1441
      %v4530 = vunpack.c.l.b16 %v1442
      %v4531 = vunpack.c.h.b16 %v1442
      %v4532 = vunpack.c.l.b16 %v1443
      %v4533 = vunpack.c.h.b16 %v1443
      %v4534 = vunpack.c.l.b16 %v1444
      %v4535 = vunpack.c.h.b16 %v1444
      %v4536 = vunpack.c.l.b16 %v1445
      %v4537 = vunpack.c.h.b16 %v1445
      %v4538 = vunpack.c.l.b16 %v1446
      %v4539 = vunpack.c.h.b16 %v1446
      %v4540 = vunpack.c.l.b16 %v1447
      %v4541 = vunpack.c.h.b16 %v1447
      %v4542 = vunpack.c.l.b16 %v1448
      %v4543 = vunpack.c.h.b16 %v1448
      %v4544 = vunpack.c.l.b16 %v1449
      %v4545 = vunpack.c.h.b16 %v1449
      %v4546 = vunpack.c.l.b16 %v1450
      %v4547 = vunpack.c.h.b16 %v1450
      %v4548 = vunpack.c.l.b16 %v1451
      %v4549 = vunpack.c.h.b16 %v1451
      %v4550 = vunpack.c.l.b16 %v1452
      %v4551 = vunpack.c.h.b16 %v1452
      %v4552 = vunpack.c.l.b16 %v1453
      %v4553 = vunpack.c.h.b16 %v1453
      %v4554 = vunpack.c.l.b16 %v1454
      %v4555 = vunpack.c.h.b16 %v1454
      %v4556 = vunpack.c.l.b16 %v1455
      %v4557 = vunpack.c.h.b16 %v1455
      %v4558 = vunpack.c.l.b16 %v1456
      %v4559 = vunpack.c.h.b16 %v1456
      %v4560 = vunpack.c.l.b16 %v1457
      %v4561 = vunpack.c.h.b16 %v1457
      %v4562 = vunpack.c.l.b16 %v1458
      %v4563 = vunpack.c.h.b16 %v1458
      %v4564 = vunpack.c.l.b16 %v1459
      %v4565 = vunpack.c.h.b16 %v1459
      %v4566 = vunpack.c.l.b16 %v1460
      %v4567 = vunpack.c.h.b16 %v1460
      %v4568 = vunpack.c.l.b16 %v1461
      %v4569 = vunpack.c.h.b16 %v1461
      %v4570 = vunpack.c.l.b16 %v1462
      %v4571 = vunpack.c.h.b16 %v1462
      %v4572 = vunpack.c.l.b16 %v1463
      %v4573 = vunpack.c.h.b16 %v1463
      %v4574 = vunpack.c.l.b16 %v1464
      %v4575 = vunpack.c.h.b16 %v1464
      %v4576 = vunpack.c.l.b16 %v1465
      %v4577 = vunpack.c.h.b16 %v1465
      %v4578 = vunpack.c.l.b16 %v1466
      %v4579 = vunpack.c.h.b16 %v1466
      %v4580 = vunpack.c.l.b16 %v1467
      %v4581 = vunpack.c.h.b16 %v1467
      %v4582 = vunpack.c.l.b16 %v1468
      %v4583 = vunpack.c.h.b16 %v1468
      %v4584 = vunpack.c.l.b16 %v1469
      %v4585 = vunpack.c.h.b16 %v1469
      %v4586 = vunpack.c.l.b16 %v1470
      %v4587 = vunpack.c.h.b16 %v1470
      %v4588 = vunpack.c.l.b16 %v1471
      %v4589 = vunpack.c.h.b16 %v1471
      %v4590 = vunpack.c.l.b16 %v1472
      %v4591 = vunpack.c.h.b16 %v1472
      %v4592 = vunpack.c.l.b16 %v1473
      %v4593 = vunpack.c.h.b16 %v1473
      %v4594 = vunpack.c.l.b16 %v1474
      %v4595 = vunpack.c.h.b16 %v1474
      %v4596 = vunpack.c.l.b16 %v1475
      %v4597 = vunpack.c.h.b16 %v1475
      %v4598 = vunpack.c.l.b16 %v1476
      %v4599 = vunpack.c.h.b16 %v1476
      %v4600 = vunpack.c.l.b16 %v1477
      %v4601 = vunpack.c.h.b16 %v1477
      %v4602 = vunpack.c.l.b16 %v1478
      %v4603 = vunpack.c.h.b16 %v1478
      %v4604 = vunpack.c.l.b16 %v1479
      %v4605 = vunpack.c.h.b16 %v1479
      %v4606 = vunpack.c.l.b16 %v1480
      %v4607 = vunpack.c.h.b16 %v1480
      %v4608 = vunpack.c.l.b16 %v1481
      %v4609 = vunpack.c.h.b16 %v1481
      %v4610 = vunpack.c.l.b16 %v1482
      %v4611 = vunpack.c.h.b16 %v1482
      %v4612 = vunpack.c.l.b16 %v1483
      %v4613 = vunpack.c.h.b16 %v1483
      %v4614 = vunpack.c.l.b16 %v1484
      %v4615 = vunpack.c.h.b16 %v1484
      %v4616 = vunpack.c.l.b16 %v1485
      %v4617 = vunpack.c.h.b16 %v1485
      %v4618 = vunpack.c.l.b16 %v1486
      %v4619 = vunpack.c.h.b16 %v1486
      %v4620 = vunpack.c.l.b16 %v1487
      %v4621 = vunpack.c.h.b16 %v1487
      %v4622 = vunpack.c.l.b16 %v1488
      %v4623 = vunpack.c.h.b16 %v1488
      %v4624 = vunpack.c.l.b16 %v1489
      %v4625 = vunpack.c.h.b16 %v1489
      %v4626 = vunpack.c.l.b16 %v1490
      %v4627 = vunpack.c.h.b16 %v1490
      %v4628 = vunpack.c.l.b16 %v1491
      %v4629 = vunpack.c.h.b16 %v1491
      %v4630 = vunpack.c.l.b16 %v1492
      %v4631 = vunpack.c.h.b16 %v1492
      %v4632 = vunpack.c.l.b16 %v1493
      %v4633 = vunpack.c.h.b16 %v1493
      %v4634 = vunpack.c.l.b16 %v1494
      %v4635 = vunpack.c.h.b16 %v1494
      %v4636 = vunpack.c.l.b16 %v1495
      %v4637 = vunpack.c.h.b16 %v1495
      %v4638 = vunpack.c.l.b16 %v1496
      %v4639 = vunpack.c.h.b16 %v1496
      %v4640 = vunpack.c.l.b16 %v1497
      %v4641 = vunpack.c.h.b16 %v1497
      %v4642 = vunpack.c.l.b16 %v1498
      %v4643 = vunpack.c.h.b16 %v1498
      %v4644 = vunpack.c.l.b16 %v1499
      %v4645 = vunpack.c.h.b16 %v1499
      %v4646 = vunpack.c.l.b16 %v1500
      %v4647 = vunpack.c.h.b16 %v1500
      %v4648 = vunpack.c.l.b16 %v1501
      %v4649 = vunpack.c.h.b16 %v1501
      %v4650 = vunpack.c.l.b16 %v1502
      %v4651 = vunpack.c.h.b16 %v1502
      %v4652 = vunpack.c.l.b16 %v1503
      %v4653 = vunpack.c.h.b16 %v1503
      %v4654 = vunpack.c.l.b16 %v1504
      %v4655 = vunpack.c.h.b16 %v1504
      %v4656 = vunpack.c.l.b16 %v1505
      %v4657 = vunpack.c.h.b16 %v1505
      %v4658 = vunpack.c.l.b16 %v1506
      %v4659 = vunpack.c.h.b16 %v1506
      %v4660 = vunpack.c.l.b16 %v1507
      %v4661 = vunpack.c.h.b16 %v1507
      %v4662 = vunpack.c.l.b16 %v1508
      %v4663 = vunpack.c.h.b16 %v1508
      %v4664 = vunpack.c.l.b16 %v1509
      %v4665 = vunpack.c.h.b16 %v1509
      %v4666 = vpack.c.b16 %v2634, %v2618
      %v4667 = vpack.c.b16 %v2635, %v2619
      %v4668 = vpack.c.b16 %v2636, %v2620
      %v4669 = vpack.c.b16 %v2637, %v2621
      %v4670 = vpack.c.b16 %v2638, %v2622
      %v4671 = vpack.c.b16 %v2639, %v2623
      %v4672 = vpack.c.b16 %v2640, %v2624
      %v4673 = vpack.c.b16 %v2641, %v2625
      %v4674 = vpack.c.b16 %v2642, %v2626
      %v4675 = vpack.c.b16 %v2643, %v2627
      %v4676 = vpack.c.b16 %v2644, %v2628
      %v4677 = vpack.c.b16 %v2645, %v2629
      %v4678 = vpack.c.b16 %v2646, %v2630
      %v4679 = vpack.c.b16 %v2647, %v2631
      %v4680 = vpack.c.b16 %v2648, %v2632
      %v4681 = vpack.c.b16 %v2649, %v2633
      %v4682 = vpack.c.b16 %v2666, %v2650
      %v4683 = vpack.c.b16 %v2667, %v2651
      %v4684 = vpack.c.b16 %v2668, %v2652
      %v4685 = vpack.c.b16 %v2669, %v2653
      %v4686 = vpack.c.b16 %v2670, %v2654
      %v4687 = vpack.c.b16 %v2671, %v2655
      %v4688 = vpack.c.b16 %v2672, %v2656
      %v4689 = vpack.c.b16 %v2673, %v2657
      %v4690 = vpack.c.b16 %v2674, %v2658
      %v4691 = vpack.c.b16 %v2675, %v2659
      %v4692 = vpack.c.b16 %v2676, %v2660
      %v4693 = vpack.c.b16 %v2677, %v2661
      %v4694 = vpack.c.b16 %v2678, %v2662
      %v4695 = vpack.c.b16 %v2679, %v2663
      %v4696 = vpack.c.b16 %v2680, %v2664
      %v4697 = vpack.c.b16 %v2681, %v2665
      %v4698 = vpack.c.b16 %v2698, %v2682
      %v4699 = vpack.c.b16 %v2699, %v2683
      %v4700 = vpack.c.b16 %v2700, %v2684
      %v4701 = vpack.c.b16 %v2701, %v2685
      %v4702 = vpack.c.b16 %v2702, %v2686
      %v4703 = vpack.c.b16 %v2703, %v2687
      %v4704 = vpack.c.b16 %v2704, %v2688
      %v4705 = vpack.c.b16 %v2705, %v2689
      %v4706 = vpack.c.b16 %v2706, %v2690
      %v4707 = vpack.c.b16 %v2707, %v2691
      %v4708 = vpack.c.b16 %v2708, %v2692
      %v4709 = vpack.c.b16 %v2709, %v2693
      %v4710 = vpack.c.b16 %v2710, %v2694
      %v4711 = vpack.c.b16 %v2711, %v2695
      %v4712 = vpack.c.b16 %v2712, %v2696
      %v4713 = vpack.c.b16 %v2713, %v2697
      %v4714 = vpack.c.b16 %v2730, %v2714
      %v4715 = vpack.c.b16 %v2731, %v2715
      %v4716 = vpack.c.b16 %v2732, %v2716
      %v4717 = vpack.c.b16 %v2733, %v2717
      %v4718 = vpack.c.b16 %v2734, %v2718
      %v4719 = vpack.c.b16 %v2735, %v2719
      %v4720 = vpack.c.b16 %v2736, %v2720
      %v4721 = vpack.c.b16 %v2737, %v2721
      %v4722 = vpack.c.b16 %v2738, %v2722
      %v4723 = vpack.c.b16 %v2739, %v2723
      %v4724 = vpack.c.b16 %v2740, %v2724
      %v4725 = vpack.c.b16 %v2741, %v2725
      %v4726 = vpack.c.b16 %v2742, %v2726
      %v4727 = vpack.c.b16 %v2743, %v2727
      %v4728 = vpack.c.b16 %v2744, %v2728
      %v4729 = vpack.c.b16 %v2745, %v2729
      %v4730 = vpack.c.b16 %v2762, %v2746
      %v4731 = vpack.c.b16 %v2763, %v2747
      %v4732 = vpack.c.b16 %v2764, %v2748
      %v4733 = vpack.c.b16 %v2765, %v2749
      %v4734 = vpack.c.b16 %v2766, %v2750
      %v4735 = vpack.c.b16 %v2767, %v2751
      %v4736 = vpack.c.b16 %v2768, %v2752
      %v4737 = vpack.c.b16 %v2769, %v2753
      %v4738 = vpack.c.b16 %v2770, %v2754
      %v4739 = vpack.c.b16 %v2771, %v2755
      %v4740 = vpack.c.b16 %v2772, %v2756
      %v4741 = vpack.c.b16 %v2773, %v2757
      %v4742 = vpack.c.b16 %v2774, %v2758
      %v4743 = vpack.c.b16 %v2775, %v2759
      %v4744 = vpack.c.b16 %v2776, %v2760
      %v4745 = vpack.c.b16 %v2777, %v2761
      %v4746 = vpack.c.b16 %v2794, %v2778
      %v4747 = vpack.c.b16 %v2795, %v2779
      %v4748 = vpack.c.b16 %v2796, %v2780
      %v4749 = vpack.c.b16 %v2797, %v2781
      %v4750 = vpack.c.b16 %v2798, %v2782
      %v4751 = vpack.c.b16 %v2799, %v2783
      %v4752 = vpack.c.b16 %v2800, %v2784
      %v4753 = vpack.c.b16 %v2801, %v2785
      %v4754 = vpack.c.b16 %v2802, %v2786
      %v4755 = vpack.c.b16 %v2803, %v2787
      %v4756 = vpack.c.b16 %v2804, %v2788
      %v4757 = vpack.c.b16 %v2805, %v2789
      %v4758 = vpack.c.b16 %v2806, %v2790
      %v4759 = vpack.c.b16 %v2807, %v2791
      %v4760 = vpack.c.b16 %v2808, %v2792
      %v4761 = vpack.c.b16 %v2809, %v2793
      %v4762 = vpack.c.b16 %v2826, %v2810
      %v4763 = vpack.c.b16 %v2827, %v2811
      %v4764 = vpack.c.b16 %v2828, %v2812
      %v4765 = vpack.c.b16 %v2829, %v2813
      %v4766 = vpack.c.b16 %v2830, %v2814
      %v4767 = vpack.c.b16 %v2831, %v2815
      %v4768 = vpack.c.b16 %v2832, %v2816
      %v4769 = vpack.c.b16 %v2833, %v2817
      %v4770 = vpack.c.b16 %v2834, %v2818
      %v4771 = vpack.c.b16 %v2835, %v2819
      %v4772 = vpack.c.b16 %v2836, %v2820
      %v4773 = vpack.c.b16 %v2837, %v2821
      %v4774 = vpack.c.b16 %v2838, %v2822
      %v4775 = vpack.c.b16 %v2839, %v2823
      %v4776 = vpack.c.b16 %v2840, %v2824
      %v4777 = vpack.c.b16 %v2841, %v2825
      %v4778 = vpack.c.b16 %v2858, %v2842
      %v4779 = vpack.c.b16 %v2859, %v2843
      %v4780 = vpack.c.b16 %v2860, %v2844
      %v4781 = vpack.c.b16 %v2861, %v2845
      %v4782 = vpack.c.b16 %v2862, %v2846
      %v4783 = vpack.c.b16 %v2863, %v2847
      %v4784 = vpack.c.b16 %v2864, %v2848
      %v4785 = vpack.c.b16 %v2865, %v2849
      %v4786 = vpack.c.b16 %v2866, %v2850
      %v4787 = vpack.c.b16 %v2867, %v2851
      %v4788 = vpack.c.b16 %v2868, %v2852
      %v4789 = vpack.c.b16 %v2869, %v2853
      %v4790 = vpack.c.b16 %v2870, %v2854
      %v4791 = vpack.c.b16 %v2871, %v2855
      %v4792 = vpack.c.b16 %v2872, %v2856
      %v4793 = vpack.c.b16 %v2873, %v2857
      %v4794 = vpack.c.b16 %v2890, %v2874
      %v4795 = vpack.c.b16 %v2891, %v2875
      %v4796 = vpack.c.b16 %v2892, %v2876
      %v4797 = vpack.c.b16 %v2893, %v2877
      %v4798 = vpack.c.b16 %v2894, %v2878
      %v4799 = vpack.c.b16 %v2895, %v2879
      %v4800 = vpack.c.b16 %v2896, %v2880
      %v4801 = vpack.c.b16 %v2897, %v2881
      %v4802 = vpack.c.b16 %v2898, %v2882
      %v4803 = vpack.c.b16 %v2899, %v2883
      %v4804 = vpack.c.b16 %v2900, %v2884
      %v4805 = vpack.c.b16 %v2901, %v2885
      %v4806 = vpack.c.b16 %v2902, %v2886
      %v4807 = vpack.c.b16 %v2903, %v2887
      %v4808 = vpack.c.b16 %v2904, %v2888
      %v4809 = vpack.c.b16 %v2905, %v2889
      %v4810 = vpack.c.b16 %v2922, %v2906
      %v4811 = vpack.c.b16 %v2923, %v2907
      %v4812 = vpack.c.b16 %v2924, %v2908
      %v4813 = vpack.c.b16 %v2925, %v2909
      %v4814 = vpack.c.b16 %v2926, %v2910
      %v4815 = vpack.c.b16 %v2927, %v2911
      %v4816 = vpack.c.b16 %v2928, %v2912
      %v4817 = vpack.c.b16 %v2929, %v2913
      %v4818 = vpack.c.b16 %v2930, %v2914
      %v4819 = vpack.c.b16 %v2931, %v2915
      %v4820 = vpack.c.b16 %v2932, %v2916
      %v4821 = vpack.c.b16 %v2933, %v2917
      %v4822 = vpack.c.b16 %v2934, %v2918
      %v4823 = vpack.c.b16 %v2935, %v2919
      %v4824 = vpack.c.b16 %v2936, %v2920
      %v4825 = vpack.c.b16 %v2937, %v2921
      %v4826 = vpack.c.b16 %v2954, %v2938
      %v4827 = vpack.c.b16 %v2955, %v2939
      %v4828 = vpack.c.b16 %v2956, %v2940
      %v4829 = vpack.c.b16 %v2957, %v2941
      %v4830 = vpack.c.b16 %v2958, %v2942
      %v4831 = vpack.c.b16 %v2959, %v2943
      %v4832 = vpack.c.b16 %v2960, %v2944
      %v4833 = vpack.c.b16 %v2961, %v2945
      %v4834 = vpack.c.b16 %v2962, %v2946
      %v4835 = vpack.c.b16 %v2963, %v2947
      %v4836 = vpack.c.b16 %v2964, %v2948
      %v4837 = vpack.c.b16 %v2965, %v2949
      %v4838 = vpack.c.b16 %v2966, %v2950
      %v4839 = vpack.c.b16 %v2967, %v2951
      %v4840 = vpack.c.b16 %v2968, %v2952
      %v4841 = vpack.c.b16 %v2969, %v2953
      %v4842 = vpack.c.b16 %v2986, %v2970
      %v4843 = vpack.c.b16 %v2987, %v2971
      %v4844 = vpack.c.b16 %v2988, %v2972
      %v4845 = vpack.c.b16 %v2989, %v2973
      %v4846 = vpack.c.b16 %v2990, %v2974
      %v4847 = vpack.c.b16 %v2991, %v2975
      %v4848 = vpack.c.b16 %v2992, %v2976
      %v4849 = vpack.c.b16 %v2993, %v2977
      %v4850 = vpack.c.b16 %v2994, %v2978
      %v4851 = vpack.c.b16 %v2995, %v2979
      %v4852 = vpack.c.b16 %v2996, %v2980
      %v4853 = vpack.c.b16 %v2997, %v2981
      %v4854 = vpack.c.b16 %v2998, %v2982
      %v4855 = vpack.c.b16 %v2999, %v2983
      %v4856 = vpack.c.b16 %v3000, %v2984
      %v4857 = vpack.c.b16 %v3001, %v2985
      %v4858 = vpack.c.b16 %v3018, %v3002
      %v4859 = vpack.c.b16 %v3019, %v3003
      %v4860 = vpack.c.b16 %v3020, %v3004
      %v4861 = vpack.c.b16 %v3021, %v3005
      %v4862 = vpack.c.b16 %v3022, %v3006
      %v4863 = vpack.c.b16 %v3023, %v3007
      %v4864 = vpack.c.b16 %v3024, %v3008
      %v4865 = vpack.c.b16 %v3025, %v3009
      %v4866 = vpack.c.b16 %v3026, %v3010
      %v4867 = vpack.c.b16 %v3027, %v3011
      %v4868 = vpack.c.b16 %v3028, %v3012
      %v4869 = vpack.c.b16 %v3029, %v3013
      %v4870 = vpack.c.b16 %v3030, %v3014
      %v4871 = vpack.c.b16 %v3031, %v3015
      %v4872 = vpack.c.b16 %v3032, %v3016
      %v4873 = vpack.c.b16 %v3033, %v3017
      %v4874 = vpack.c.b16 %v3050, %v3034
      %v4875 = vpack.c.b16 %v3051, %v3035
      %v4876 = vpack.c.b16 %v3052, %v3036
      %v4877 = vpack.c.b16 %v3053, %v3037
      %v4878 = vpack.c.b16 %v3054, %v3038
      %v4879 = vpack.c.b16 %v3055, %v3039
      %v4880 = vpack.c.b16 %v3056, %v3040
      %v4881 = vpack.c.b16 %v3057, %v3041
      %v4882 = vpack.c.b16 %v3058, %v3042
      %v4883 = vpack.c.b16 %v3059, %v3043
      %v4884 = vpack.c.b16 %v3060, %v3044
      %v4885 = vpack.c.b16 %v3061, %v3045
      %v4886 = vpack.c.b16 %v3062, %v3046
      %v4887 = vpack.c.b16 %v3063, %v3047
      %v4888 = vpack.c.b16 %v3064, %v3048
      %v4889 = vpack.c.b16 %v3065, %v3049
      %v4890 = vpack.c.b16 %v3082, %v3066
      %v4891 = vpack.c.b16 %v3083, %v3067
      %v4892 = vpack.c.b16 %v3084, %v3068
      %v4893 = vpack.c.b16 %v3085, %v3069
      %v4894 = vpack.c.b16 %v3086, %v3070
      %v4895 = vpack.c.b16 %v3087, %v3071
      %v4896 = vpack.c.b16 %v3088, %v3072
      %v4897 = vpack.c.b16 %v3089, %v3073
      %v4898 = vpack.c.b16 %v3090, %v3074
      %v4899 = vpack.c.b16 %v3091, %v3075
      %v4900 = vpack.c.b16 %v3092, %v3076
      %v4901 = vpack.c.b16 %v3093, %v3077
      %v4902 = vpack.c.b16 %v3094, %v3078
      %v4903 = vpack.c.b16 %v3095, %v3079
      %v4904 = vpack.c.b16 %v3096, %v3080
      %v4905 = vpack.c.b16 %v3097, %v3081
      %v4906 = vpack.c.b16 %v3114, %v3098
      %v4907 = vpack.c.b16 %v3115, %v3099
      %v4908 = vpack.c.b16 %v3116, %v3100
      %v4909 = vpack.c.b16 %v3117, %v3101
      %v4910 = vpack.c.b16 %v3118, %v3102
      %v4911 = vpack.c.b16 %v3119, %v3103
      %v4912 = vpack.c.b16 %v3120, %v3104
      %v4913 = vpack.c.b16 %v3121, %v3105
      %v4914 = vpack.c.b16 %v3122, %v3106
      %v4915 = vpack.c.b16 %v3123, %v3107
      %v4916 = vpack.c.b16 %v3124, %v3108
      %v4917 = vpack.c.b16 %v3125, %v3109
      %v4918 = vpack.c.b16 %v3126, %v3110
      %v4919 = vpack.c.b16 %v3127, %v3111
      %v4920 = vpack.c.b16 %v3128, %v3112
      %v4921 = vpack.c.b16 %v3129, %v3113
      %v4922 = vpack.c.b16 %v3146, %v3130
      %v4923 = vpack.c.b16 %v3147, %v3131
      %v4924 = vpack.c.b16 %v3148, %v3132
      %v4925 = vpack.c.b16 %v3149, %v3133
      %v4926 = vpack.c.b16 %v3150, %v3134
      %v4927 = vpack.c.b16 %v3151, %v3135
      %v4928 = vpack.c.b16 %v3152, %v3136
      %v4929 = vpack.c.b16 %v3153, %v3137
      %v4930 = vpack.c.b16 %v3154, %v3138
      %v4931 = vpack.c.b16 %v3155, %v3139
      %v4932 = vpack.c.b16 %v3156, %v3140
      %v4933 = vpack.c.b16 %v3157, %v3141
      %v4934 = vpack.c.b16 %v3158, %v3142
      %v4935 = vpack.c.b16 %v3159, %v3143
      %v4936 = vpack.c.b16 %v3160, %v3144
      %v4937 = vpack.c.b16 %v3161, %v3145
      %v4938 = vpack.c.b16 %v3178, %v3162
      %v4939 = vpack.c.b16 %v3179, %v3163
      %v4940 = vpack.c.b16 %v3180, %v3164
      %v4941 = vpack.c.b16 %v3181, %v3165
      %v4942 = vpack.c.b16 %v3182, %v3166
      %v4943 = vpack.c.b16 %v3183, %v3167
      %v4944 = vpack.c.b16 %v3184, %v3168
      %v4945 = vpack.c.b16 %v3185, %v3169
      %v4946 = vpack.c.b16 %v3186, %v3170
      %v4947 = vpack.c.b16 %v3187, %v3171
      %v4948 = vpack.c.b16 %v3188, %v3172
      %v4949 = vpack.c.b16 %v3189, %v3173
      %v4950 = vpack.c.b16 %v3190, %v3174
      %v4951 = vpack.c.b16 %v3191, %v3175
      %v4952 = vpack.c.b16 %v3192, %v3176
      %v4953 = vpack.c.b16 %v3193, %v3177
      %v4954 = vpack.c.b16 %v3210, %v3194
      %v4955 = vpack.c.b16 %v3211, %v3195
      %v4956 = vpack.c.b16 %v3212, %v3196
      %v4957 = vpack.c.b16 %v3213, %v3197
      %v4958 = vpack.c.b16 %v3214, %v3198
      %v4959 = vpack.c.b16 %v3215, %v3199
      %v4960 = vpack.c.b16 %v3216, %v3200
      %v4961 = vpack.c.b16 %v3217, %v3201
      %v4962 = vpack.c.b16 %v3218, %v3202
      %v4963 = vpack.c.b16 %v3219, %v3203
      %v4964 = vpack.c.b16 %v3220, %v3204
      %v4965 = vpack.c.b16 %v3221, %v3205
      %v4966 = vpack.c.b16 %v3222, %v3206
      %v4967 = vpack.c.b16 %v3223, %v3207
      %v4968 = vpack.c.b16 %v3224, %v3208
      %v4969 = vpack.c.b16 %v3225, %v3209
      %v4970 = vpack.c.b16 %v3242, %v3226
      %v4971 = vpack.c.b16 %v3243, %v3227
      %v4972 = vpack.c.b16 %v3244, %v3228
      %v4973 = vpack.c.b16 %v3245, %v3229
      %v4974 = vpack.c.b16 %v3246, %v3230
      %v4975 = vpack.c.b16 %v3247, %v3231
      %v4976 = vpack.c.b16 %v3248, %v3232
      %v4977 = vpack.c.b16 %v3249, %v3233
      %v4978 = vpack.c.b16 %v3250, %v3234
      %v4979 = vpack.c.b16 %v3251, %v3235
      %v4980 = vpack.c.b16 %v3252, %v3236
      %v4981 = vpack.c.b16 %v3253, %v3237
      %v4982 = vpack.c.b16 %v3254, %v3238
      %v4983 = vpack.c.b16 %v3255, %v3239
      %v4984 = vpack.c.b16 %v3256, %v3240
      %v4985 = vpack.c.b16 %v3257, %v3241
      %v4986 = vpack.c.b16 %v3274, %v3258
      %v4987 = vpack.c.b16 %v3275, %v3259
      %v4988 = vpack.c.b16 %v3276, %v3260
      %v4989 = vpack.c.b16 %v3277, %v3261
      %v4990 = vpack.c.b16 %v3278, %v3262
      %v4991 = vpack.c.b16 %v3279, %v3263
      %v4992 = vpack.c.b16 %v3280, %v3264
      %v4993 = vpack.c.b16 %v3281, %v3265
      %v4994 = vpack.c.b16 %v3282, %v3266
      %v4995 = vpack.c.b16 %v3283, %v3267
      %v4996 = vpack.c.b16 %v3284, %v3268
      %v4997 = vpack.c.b16 %v3285, %v3269
      %v4998 = vpack.c.b16 %v3286, %v3270
      %v4999 = vpack.c.b16 %v3287, %v3271
      %v5000 = vpack.c.b16 %v3288, %v3272
      %v5001 = vpack.c.b16 %v3289, %v3273
      %v5002 = vpack.c.b16 %v3306, %v3290
      %v5003 = vpack.c.b16 %v3307, %v3291
      %v5004 = vpack.c.b16 %v3308, %v3292
      %v5005 = vpack.c.b16 %v3309, %v3293
      %v5006 = vpack.c.b16 %v3310, %v3294
      %v5007 = vpack.c.b16 %v3311, %v3295
      %v5008 = vpack.c.b16 %v3312, %v3296
      %v5009 = vpack.c.b16 %v3313, %v3297
      %v5010 = vpack.c.b16 %v3314, %v3298
      %v5011 = vpack.c.b16 %v3315, %v3299
      %v5012 = vpack.c.b16 %v3316, %v3300
      %v5013 = vpack.c.b16 %v3317, %v3301
      %v5014 = vpack.c.b16 %v3318, %v3302
      %v5015 = vpack.c.b16 %v3319, %v3303
      %v5016 = vpack.c.b16 %v3320, %v3304
      %v5017 = vpack.c.b16 %v3321, %v3305
      %v5018 = vpack.c.b16 %v3338, %v3322
      %v5019 = vpack.c.b16 %v3339, %v3323
      %v5020 = vpack.c.b16 %v3340, %v3324
      %v5021 = vpack.c.b16 %v3341, %v3325
      %v5022 = vpack.c.b16 %v3342, %v3326
      %v5023 = vpack.c.b16 %v3343, %v3327
      %v5024 = vpack.c.b16 %v3344, %v3328
      %v5025 = vpack.c.b16 %v3345, %v3329
      %v5026 = vpack.c.b16 %v3346, %v3330
      %v5027 = vpack.c.b16 %v3347, %v3331
      %v5028 = vpack.c.b16 %v3348, %v3332
      %v5029 = vpack.c.b16 %v3349, %v3333
      %v5030 = vpack.c.b16 %v3350, %v3334
      %v5031 = vpack.c.b16 %v3351, %v3335
      %v5032 = vpack.c.b16 %v3352, %v3336
      %v5033 = vpack.c.b16 %v3353, %v3337
      %v5034 = vpack.c.b16 %v3370, %v3354
      %v5035 = vpack.c.b16 %v3371, %v3355
      %v5036 = vpack.c.b16 %v3372, %v3356
      %v5037 = vpack.c.b16 %v3373, %v3357
      %v5038 = vpack.c.b16 %v3374, %v3358
      %v5039 = vpack.c.b16 %v3375, %v3359
      %v5040 = vpack.c.b16 %v3376, %v3360
      %v5041 = vpack.c.b16 %v3377, %v3361
      %v5042 = vpack.c.b16 %v3378, %v3362
      %v5043 = vpack.c.b16 %v3379, %v3363
      %v5044 = vpack.c.b16 %v3380, %v3364
      %v5045 = vpack.c.b16 %v3381, %v3365
      %v5046 = vpack.c.b16 %v3382, %v3366
      %v5047 = vpack.c.b16 %v3383, %v3367
      %v5048 = vpack.c.b16 %v3384, %v3368
      %v5049 = vpack.c.b16 %v3385, %v3369
      %v5050 = vpack.c.b16 %v3402, %v3386
      %v5051 = vpack.c.b16 %v3403, %v3387
      %v5052 = vpack.c.b16 %v3404, %v3388
      %v5053 = vpack.c.b16 %v3405, %v3389
      %v5054 = vpack.c.b16 %v3406, %v3390
      %v5055 = vpack.c.b16 %v3407, %v3391
      %v5056 = vpack.c.b16 %v3408, %v3392
      %v5057 = vpack.c.b16 %v3409, %v3393
      %v5058 = vpack.c.b16 %v3410, %v3394
      %v5059 = vpack.c.b16 %v3411, %v3395
      %v5060 = vpack.c.b16 %v3412, %v3396
      %v5061 = vpack.c.b16 %v3413, %v3397
      %v5062 = vpack.c.b16 %v3414, %v3398
      %v5063 = vpack.c.b16 %v3415, %v3399
      %v5064 = vpack.c.b16 %v3416, %v3400
      %v5065 = vpack.c.b16 %v3417, %v3401
      %v5066 = vpack.c.b16 %v3434, %v3418
      %v5067 = vpack.c.b16 %v3435, %v3419
      %v5068 = vpack.c.b16 %v3436, %v3420
      %v5069 = vpack.c.b16 %v3437, %v3421
      %v5070 = vpack.c.b16 %v3438, %v3422
      %v5071 = vpack.c.b16 %v3439, %v3423
      %v5072 = vpack.c.b16 %v3440, %v3424
      %v5073 = vpack.c.b16 %v3441, %v3425
      %v5074 = vpack.c.b16 %v3442, %v3426
      %v5075 = vpack.c.b16 %v3443, %v3427
      %v5076 = vpack.c.b16 %v3444, %v3428
      %v5077 = vpack.c.b16 %v3445, %v3429
      %v5078 = vpack.c.b16 %v3446, %v3430
      %v5079 = vpack.c.b16 %v3447, %v3431
      %v5080 = vpack.c.b16 %v3448, %v3432
      %v5081 = vpack.c.b16 %v3449, %v3433
      %v5082 = vpack.c.b16 %v3466, %v3450
      %v5083 = vpack.c.b16 %v3467, %v3451
      %v5084 = vpack.c.b16 %v3468, %v3452
      %v5085 = vpack.c.b16 %v3469, %v3453
      %v5086 = vpack.c.b16 %v3470, %v3454
      %v5087 = vpack.c.b16 %v3471, %v3455
      %v5088 = vpack.c.b16 %v3472, %v3456
      %v5089 = vpack.c.b16 %v3473, %v3457
      %v5090 = vpack.c.b16 %v3474, %v3458
      %v5091 = vpack.c.b16 %v3475, %v3459
      %v5092 = vpack.c.b16 %v3476, %v3460
      %v5093 = vpack.c.b16 %v3477, %v3461
      %v5094 = vpack.c.b16 %v3478, %v3462
      %v5095 = vpack.c.b16 %v3479, %v3463
      %v5096 = vpack.c.b16 %v3480, %v3464
      %v5097 = vpack.c.b16 %v3481, %v3465
      %v5098 = vpack.c.b16 %v3498, %v3482
      %v5099 = vpack.c.b16 %v3499, %v3483
      %v5100 = vpack.c.b16 %v3500, %v3484
      %v5101 = vpack.c.b16 %v3501, %v3485
      %v5102 = vpack.c.b16 %v3502, %v3486
      %v5103 = vpack.c.b16 %v3503, %v3487
      %v5104 = vpack.c.b16 %v3504, %v3488
      %v5105 = vpack.c.b16 %v3505, %v3489
      %v5106 = vpack.c.b16 %v3506, %v3490
      %v5107 = vpack.c.b16 %v3507, %v3491
      %v5108 = vpack.c.b16 %v3508, %v3492
      %v5109 = vpack.c.b16 %v3509, %v3493
      %v5110 = vpack.c.b16 %v3510, %v3494
      %v5111 = vpack.c.b16 %v3511, %v3495
      %v5112 = vpack.c.b16 %v3512, %v3496
      %v5113 = vpack.c.b16 %v3513, %v3497
      %v5114 = vpack.c.b16 %v3530, %v3514
      %v5115 = vpack.c.b16 %v3531, %v3515
      %v5116 = vpack.c.b16 %v3532, %v3516
      %v5117 = vpack.c.b16 %v3533, %v3517
      %v5118 = vpack.c.b16 %v3534, %v3518
      %v5119 = vpack.c.b16 %v3535, %v3519
      %v5120 = vpack.c.b16 %v3536, %v3520
      %v5121 = vpack.c.b16 %v3537, %v3521
      %v5122 = vpack.c.b16 %v3538, %v3522
      %v5123 = vpack.c.b16 %v3539, %v3523
      %v5124 = vpack.c.b16 %v3540, %v3524
      %v5125 = vpack.c.b16 %v3541, %v3525
      %v5126 = vpack.c.b16 %v3542, %v3526
      %v5127 = vpack.c.b16 %v3543, %v3527
      %v5128 = vpack.c.b16 %v3544, %v3528
      %v5129 = vpack.c.b16 %v3545, %v3529
      %v5130 = vpack.c.b16 %v3562, %v3546
      %v5131 = vpack.c.b16 %v3563, %v3547
      %v5132 = vpack.c.b16 %v3564, %v3548
      %v5133 = vpack.c.b16 %v3565, %v3549
      %v5134 = vpack.c.b16 %v3566, %v3550
      %v5135 = vpack.c.b16 %v3567, %v3551
      %v5136 = vpack.c.b16 %v3568, %v3552
      %v5137 = vpack.c.b16 %v3569, %v3553
      %v5138 = vpack.c.b16 %v3570, %v3554
      %v5139 = vpack.c.b16 %v3571, %v3555
      %v5140 = vpack.c.b16 %v3572, %v3556
      %v5141 = vpack.c.b16 %v3573, %v3557
      %v5142 = vpack.c.b16 %v3574, %v3558
      %v5143 = vpack.c.b16 %v3575, %v3559
      %v5144 = vpack.c.b16 %v3576, %v3560
      %v5145 = vpack.c.b16 %v3577, %v3561
      %v5146 = vpack.c.b16 %v3594, %v3578
      %v5147 = vpack.c.b16 %v3595, %v3579
      %v5148 = vpack.c.b16 %v3596, %v3580
      %v5149 = vpack.c.b16 %v3597, %v3581
      %v5150 = vpack.c.b16 %v3598, %v3582
      %v5151 = vpack.c.b16 %v3599, %v3583
      %v5152 = vpack.c.b16 %v3600, %v3584
      %v5153 = vpack.c.b16 %v3601, %v3585
      %v5154 = vpack.c.b16 %v3602, %v3586
      %v5155 = vpack.c.b16 %v3603, %v3587
      %v5156 = vpack.c.b16 %v3604, %v3588
      %v5157 = vpack.c.b16 %v3605, %v3589
      %v5158 = vpack.c.b16 %v3606, %v3590
      %v5159 = vpack.c.b16 %v3607, %v3591
      %v5160 = vpack.c.b16 %v3608, %v3592
      %v5161 = vpack.c.b16 %v3609, %v3593
      %v5162 = vpack.c.b16 %v3626, %v3610
      %v5163 = vpack.c.b16 %v3627, %v3611
      %v5164 = vpack.c.b16 %v3628, %v3612
      %v5165 = vpack.c.b16 %v3629, %v3613
      %v5166 = vpack.c.b16 %v3630, %v3614
      %v5167 = vpack.c.b16 %v3631, %v3615
      %v5168 = vpack.c.b16 %v3632, %v3616
      %v5169 = vpack.c.b16 %v3633, %v3617
      %v5170 = vpack.c.b16 %v3634, %v3618
      %v5171 = vpack.c.b16 %v3635, %v3619
      %v5172 = vpack.c.b16 %v3636, %v3620
      %v5173 = vpack.c.b16 %v3637, %v3621
      %v5174 = vpack.c.b16 %v3638, %v3622
      %v5175 = vpack.c.b16 %v3639, %v3623
      %v5176 = vpack.c.b16 %v3640, %v3624
      %v5177 = vpack.c.b16 %v3641, %v3625
      %v5178 = vpack.c.b16 %v3658, %v3642
      %v5179 = vpack.c.b16 %v3659, %v3643
      %v5180 = vpack.c.b16 %v3660, %v3644
      %v5181 = vpack.c.b16 %v3661, %v3645
      %v5182 = vpack.c.b16 %v3662, %v3646
      %v5183 = vpack.c.b16 %v3663, %v3647
      %v5184 = vpack.c.b16 %v3664, %v3648
      %v5185 = vpack.c.b16 %v3665, %v3649
      %v5186 = vpack.c.b16 %v3666, %v3650
      %v5187 = vpack.c.b16 %v3667, %v3651
      %v5188 = vpack.c.b16 %v3668, %v3652
      %v5189 = vpack.c.b16 %v3669, %v3653
      %v5190 = vpack.c.b16 %v3670, %v3654
      %v5191 = vpack.c.b16 %v3671, %v3655
      %v5192 = vpack.c.b16 %v3672, %v3656
      %v5193 = vpack.c.b16 %v3673, %v3657
      %v5194 = vpack.c.b16 %v3690, %v3674
      %v5195 = vpack.c.b16 %v3691, %v3675
      %v5196 = vpack.c.b16 %v3692, %v3676
      %v5197 = vpack.c.b16 %v3693, %v3677
      %v5198 = vpack.c.b16 %v3694, %v3678
      %v5199 = vpack.c.b16 %v3695, %v3679
      %v5200 = vpack.c.b16 %v3696, %v3680
      %v5201 = vpack.c.b16 %v3697, %v3681
      %v5202 = vpack.c.b16 %v3698, %v3682
      %v5203 = vpack.c.b16 %v3699, %v3683
      %v5204 = vpack.c.b16 %v3700, %v3684
      %v5205 = vpack.c.b16 %v3701, %v3685
      %v5206 = vpack.c.b16 %v3702, %v3686
      %v5207 = vpack.c.b16 %v3703, %v3687
      %v5208 = vpack.c.b16 %v3704, %v3688
      %v5209 = vpack.c.b16 %v3705, %v3689
      %v5210 = vpack.c.b16 %v3722, %v3706
      %v5211 = vpack.c.b16 %v3723, %v3707
      %v5212 = vpack.c.b16 %v3724, %v3708
      %v5213 = vpack.c.b16 %v3725, %v3709
      %v5214 = vpack.c.b16 %v3726, %v3710
      %v5215 = vpack.c.b16 %v3727, %v3711
      %v5216 = vpack.c.b16 %v3728, %v3712
      %v5217 = vpack.c.b16 %v3729, %v3713
      %v5218 = vpack.c.b16 %v3730, %v3714
      %v5219 = vpack.c.b16 %v3731, %v3715
      %v5220 = vpack.c.b16 %v3732, %v3716
      %v5221 = vpack.c.b16 %v3733, %v3717
      %v5222 = vpack.c.b16 %v3734, %v3718
      %v5223 = vpack.c.b16 %v3735, %v3719
      %v5224 = vpack.c.b16 %v3736, %v3720
      %v5225 = vpack.c.b16 %v3737, %v3721
      %v5226 = vpack.c.b16 %v3754, %v3738
      %v5227 = vpack.c.b16 %v3755, %v3739
      %v5228 = vpack.c.b16 %v3756, %v3740
      %v5229 = vpack.c.b16 %v3757, %v3741
      %v5230 = vpack.c.b16 %v3758, %v3742
      %v5231 = vpack.c.b16 %v3759, %v3743
      %v5232 = vpack.c.b16 %v3760, %v3744
      %v5233 = vpack.c.b16 %v3761, %v3745
      %v5234 = vpack.c.b16 %v3762, %v3746
      %v5235 = vpack.c.b16 %v3763, %v3747
      %v5236 = vpack.c.b16 %v3764, %v3748
      %v5237 = vpack.c.b16 %v3765, %v3749
      %v5238 = vpack.c.b16 %v3766, %v3750
      %v5239 = vpack.c.b16 %v3767, %v3751
      %v5240 = vpack.c.b16 %v3768, %v3752
      %v5241 = vpack.c.b16 %v3769, %v3753
      %v5242 = vpack.c.b16 %v3786, %v3770
      %v5243 = vpack.c.b16 %v3787, %v3771
      %v5244 = vpack.c.b16 %v3788, %v3772
      %v5245 = vpack.c.b16 %v3789, %v3773
      %v5246 = vpack.c.b16 %v3790, %v3774
      %v5247 = vpack.c.b16 %v3791, %v3775
      %v5248 = vpack.c.b16 %v3792, %v3776
      %v5249 = vpack.c.b16 %v3793, %v3777
      %v5250 = vpack.c.b16 %v3794, %v3778
      %v5251 = vpack.c.b16 %v3795, %v3779
      %v5252 = vpack.c.b16 %v3796, %v3780
      %v5253 = vpack.c.b16 %v3797, %v3781
      %v5254 = vpack.c.b16 %v3798, %v3782
      %v5255 = vpack.c.b16 %v3799, %v3783
      %v5256 = vpack.c.b16 %v3800, %v3784
      %v5257 = vpack.c.b16 %v3801, %v3785
      %v5258 = vpack.c.b16 %v3818, %v3802
      %v5259 = vpack.c.b16 %v3819, %v3803
      %v5260 = vpack.c.b16 %v3820, %v3804
      %v5261 = vpack.c.b16 %v3821, %v3805
      %v5262 = vpack.c.b16 %v3822, %v3806
      %v5263 = vpack.c.b16 %v3823, %v3807
      %v5264 = vpack.c.b16 %v3824, %v3808
      %v5265 = vpack.c.b16 %v3825, %v3809
      %v5266 = vpack.c.b16 %v3826, %v3810
      %v5267 = vpack.c.b16 %v3827, %v3811
      %v5268 = vpack.c.b16 %v3828, %v3812
      %v5269 = vpack.c.b16 %v3829, %v3813
      %v5270 = vpack.c.b16 %v3830, %v3814
      %v5271 = vpack.c.b16 %v3831, %v3815
      %v5272 = vpack.c.b16 %v3832, %v3816
      %v5273 = vpack.c.b16 %v3833, %v3817
      %v5274 = vpack.c.b16 %v3850, %v3834
      %v5275 = vpack.c.b16 %v3851, %v3835
      %v5276 = vpack.c.b16 %v3852, %v3836
      %v5277 = vpack.c.b16 %v3853, %v3837
      %v5278 = vpack.c.b16 %v3854, %v3838
      %v5279 = vpack.c.b16 %v3855, %v3839
      %v5280 = vpack.c.b16 %v3856, %v3840
      %v5281 = vpack.c.b16 %v3857, %v3841
      %v5282 = vpack.c.b16 %v3858, %v3842
      %v5283 = vpack.c.b16 %v3859, %v3843
      %v5284 = vpack.c.b16 %v3860, %v3844
      %v5285 = vpack.c.b16 %v3861, %v3845
      %v5286 = vpack.c.b16 %v3862, %v3846
      %v5287 = vpack.c.b16 %v3863, %v3847
      %v5288 = vpack.c.b16 %v3864, %v3848
      %v5289 = vpack.c.b16 %v3865, %v3849
      %v5290 = vpack.c.b16 %v3882, %v3866
      %v5291 = vpack.c.b16 %v3883, %v3867
      %v5292 = vpack.c.b16 %v3884, %v3868
      %v5293 = vpack.c.b16 %v3885, %v3869
      %v5294 = vpack.c.b16 %v3886, %v3870
      %v5295 = vpack.c.b16 %v3887, %v3871
      %v5296 = vpack.c.b16 %v3888, %v3872
      %v5297 = vpack.c.b16 %v3889, %v3873
      %v5298 = vpack.c.b16 %v3890, %v3874
      %v5299 = vpack.c.b16 %v3891, %v3875
      %v5300 = vpack.c.b16 %v3892, %v3876
      %v5301 = vpack.c.b16 %v3893, %v3877
      %v5302 = vpack.c.b16 %v3894, %v3878
      %v5303 = vpack.c.b16 %v3895, %v3879
      %v5304 = vpack.c.b16 %v3896, %v3880
      %v5305 = vpack.c.b16 %v3897, %v3881
      %v5306 = vpack.c.b16 %v3914, %v3898
      %v5307 = vpack.c.b16 %v3915, %v3899
      %v5308 = vpack.c.b16 %v3916, %v3900
      %v5309 = vpack.c.b16 %v3917, %v3901
      %v5310 = vpack.c.b16 %v3918, %v3902
      %v5311 = vpack.c.b16 %v3919, %v3903
      %v5312 = vpack.c.b16 %v3920, %v3904
      %v5313 = vpack.c.b16 %v3921, %v3905
      %v5314 = vpack.c.b16 %v3922, %v3906
      %v5315 = vpack.c.b16 %v3923, %v3907
      %v5316 = vpack.c.b16 %v3924, %v3908
      %v5317 = vpack.c.b16 %v3925, %v3909
      %v5318 = vpack.c.b16 %v3926, %v3910
      %v5319 = vpack.c.b16 %v3927, %v3911
      %v5320 = vpack.c.b16 %v3928, %v3912
      %v5321 = vpack.c.b16 %v3929, %v3913
      %v5322 = vpack.c.b16 %v3946, %v3930
      %v5323 = vpack.c.b16 %v3947, %v3931
      %v5324 = vpack.c.b16 %v3948, %v3932
      %v5325 = vpack.c.b16 %v3949, %v3933
      %v5326 = vpack.c.b16 %v3950, %v3934
      %v5327 = vpack.c.b16 %v3951, %v3935
      %v5328 = vpack.c.b16 %v3952, %v3936
      %v5329 = vpack.c.b16 %v3953, %v3937
      %v5330 = vpack.c.b16 %v3954, %v3938
      %v5331 = vpack.c.b16 %v3955, %v3939
      %v5332 = vpack.c.b16 %v3956, %v3940
      %v5333 = vpack.c.b16 %v3957, %v3941
      %v5334 = vpack.c.b16 %v3958, %v3942
      %v5335 = vpack.c.b16 %v3959, %v3943
      %v5336 = vpack.c.b16 %v3960, %v3944
      %v5337 = vpack.c.b16 %v3961, %v3945
      %v5338 = vpack.c.b16 %v3978, %v3962
      %v5339 = vpack.c.b16 %v3979, %v3963
      %v5340 = vpack.c.b16 %v3980, %v3964
      %v5341 = vpack.c.b16 %v3981, %v3965
      %v5342 = vpack.c.b16 %v3982, %v3966
      %v5343 = vpack.c.b16 %v3983, %v3967
      %v5344 = vpack.c.b16 %v3984, %v3968
      %v5345 = vpack.c.b16 %v3985, %v3969
      %v5346 = vpack.c.b16 %v3986, %v3970
      %v5347 = vpack.c.b16 %v3987, %v3971
      %v5348 = vpack.c.b16 %v3988, %v3972
      %v5349 = vpack.c.b16 %v3989, %v3973
      %v5350 = vpack.c.b16 %v3990, %v3974
      %v5351 = vpack.c.b16 %v3991, %v3975
      %v5352 = vpack.c.b16 %v3992, %v3976
      %v5353 = vpack.c.b16 %v3993, %v3977
      %v5354 = vpack.c.b16 %v4010, %v3994
      %v5355 = vpack.c.b16 %v4011, %v3995
      %v5356 = vpack.c.b16 %v4012, %v3996
      %v5357 = vpack.c.b16 %v4013, %v3997
      %v5358 = vpack.c.b16 %v4014, %v3998
      %v5359 = vpack.c.b16 %v4015, %v3999
      %v5360 = vpack.c.b16 %v4016, %v4000
      %v5361 = vpack.c.b16 %v4017, %v4001
      %v5362 = vpack.c.b16 %v4018, %v4002
      %v5363 = vpack.c.b16 %v4019, %v4003
      %v5364 = vpack.c.b16 %v4020, %v4004
      %v5365 = vpack.c.b16 %v4021, %v4005
      %v5366 = vpack.c.b16 %v4022, %v4006
      %v5367 = vpack.c.b16 %v4023, %v4007
      %v5368 = vpack.c.b16 %v4024, %v4008
      %v5369 = vpack.c.b16 %v4025, %v4009
      %v5370 = vpack.c.b16 %v4042, %v4026
      %v5371 = vpack.c.b16 %v4043, %v4027
      %v5372 = vpack.c.b16 %v4044, %v4028
      %v5373 = vpack.c.b16 %v4045, %v4029
      %v5374 = vpack.c.b16 %v4046, %v4030
      %v5375 = vpack.c.b16 %v4047, %v4031
      %v5376 = vpack.c.b16 %v4048, %v4032
      %v5377 = vpack.c.b16 %v4049, %v4033
      %v5378 = vpack.c.b16 %v4050, %v4034
      %v5379 = vpack.c.b16 %v4051, %v4035
      %v5380 = vpack.c.b16 %v4052, %v4036
      %v5381 = vpack.c.b16 %v4053, %v4037
      %v5382 = vpack.c.b16 %v4054, %v4038
      %v5383 = vpack.c.b16 %v4055, %v4039
      %v5384 = vpack.c.b16 %v4056, %v4040
      %v5385 = vpack.c.b16 %v4057, %v4041
      %v5386 = vpack.c.b16 %v4074, %v4058
      %v5387 = vpack.c.b16 %v4075, %v4059
      %v5388 = vpack.c.b16 %v4076, %v4060
      %v5389 = vpack.c.b16 %v4077, %v4061
      %v5390 = vpack.c.b16 %v4078, %v4062
      %v5391 = vpack.c.b16 %v4079, %v4063
      %v5392 = vpack.c.b16 %v4080, %v4064
      %v5393 = vpack.c.b16 %v4081, %v4065
      %v5394 = vpack.c.b16 %v4082, %v4066
      %v5395 = vpack.c.b16 %v4083, %v4067
      %v5396 = vpack.c.b16 %v4084, %v4068
      %v5397 = vpack.c.b16 %v4085, %v4069
      %v5398 = vpack.c.b16 %v4086, %v4070
      %v5399 = vpack.c.b16 %v4087, %v4071
      %v5400 = vpack.c.b16 %v4088, %v4072
      %v5401 = vpack.c.b16 %v4089, %v4073
      %v5402 = vpack.c.b16 %v4106, %v4090
      %v5403 = vpack.c.b16 %v4107, %v4091
      %v5404 = vpack.c.b16 %v4108, %v4092
      %v5405 = vpack.c.b16 %v4109, %v4093
      %v5406 = vpack.c.b16 %v4110, %v4094
      %v5407 = vpack.c.b16 %v4111, %v4095
      %v5408 = vpack.c.b16 %v4112, %v4096
      %v5409 = vpack.c.b16 %v4113, %v4097
      %v5410 = vpack.c.b16 %v4114, %v4098
      %v5411 = vpack.c.b16 %v4115, %v4099
      %v5412 = vpack.c.b16 %v4116, %v4100
      %v5413 = vpack.c.b16 %v4117, %v4101
      %v5414 = vpack.c.b16 %v4118, %v4102
      %v5415 = vpack.c.b16 %v4119, %v4103
      %v5416 = vpack.c.b16 %v4120, %v4104
      %v5417 = vpack.c.b16 %v4121, %v4105
      %v5418 = vpack.c.b16 %v4138, %v4122
      %v5419 = vpack.c.b16 %v4139, %v4123
      %v5420 = vpack.c.b16 %v4140, %v4124
      %v5421 = vpack.c.b16 %v4141, %v4125
      %v5422 = vpack.c.b16 %v4142, %v4126
      %v5423 = vpack.c.b16 %v4143, %v4127
      %v5424 = vpack.c.b16 %v4144, %v4128
      %v5425 = vpack.c.b16 %v4145, %v4129
      %v5426 = vpack.c.b16 %v4146, %v4130
      %v5427 = vpack.c.b16 %v4147, %v4131
      %v5428 = vpack.c.b16 %v4148, %v4132
      %v5429 = vpack.c.b16 %v4149, %v4133
      %v5430 = vpack.c.b16 %v4150, %v4134
      %v5431 = vpack.c.b16 %v4151, %v4135
      %v5432 = vpack.c.b16 %v4152, %v4136
      %v5433 = vpack.c.b16 %v4153, %v4137
      %v5434 = vpack.c.b16 %v4170, %v4154
      %v5435 = vpack.c.b16 %v4171, %v4155
      %v5436 = vpack.c.b16 %v4172, %v4156
      %v5437 = vpack.c.b16 %v4173, %v4157
      %v5438 = vpack.c.b16 %v4174, %v4158
      %v5439 = vpack.c.b16 %v4175, %v4159
      %v5440 = vpack.c.b16 %v4176, %v4160
      %v5441 = vpack.c.b16 %v4177, %v4161
      %v5442 = vpack.c.b16 %v4178, %v4162
      %v5443 = vpack.c.b16 %v4179, %v4163
      %v5444 = vpack.c.b16 %v4180, %v4164
      %v5445 = vpack.c.b16 %v4181, %v4165
      %v5446 = vpack.c.b16 %v4182, %v4166
      %v5447 = vpack.c.b16 %v4183, %v4167
      %v5448 = vpack.c.b16 %v4184, %v4168
      %v5449 = vpack.c.b16 %v4185, %v4169
      %v5450 = vpack.c.b16 %v4202, %v4186
      %v5451 = vpack.c.b16 %v4203, %v4187
      %v5452 = vpack.c.b16 %v4204, %v4188
      %v5453 = vpack.c.b16 %v4205, %v4189
      %v5454 = vpack.c.b16 %v4206, %v4190
      %v5455 = vpack.c.b16 %v4207, %v4191
      %v5456 = vpack.c.b16 %v4208, %v4192
      %v5457 = vpack.c.b16 %v4209, %v4193
      %v5458 = vpack.c.b16 %v4210, %v4194
      %v5459 = vpack.c.b16 %v4211, %v4195
      %v5460 = vpack.c.b16 %v4212, %v4196
      %v5461 = vpack.c.b16 %v4213, %v4197
      %v5462 = vpack.c.b16 %v4214, %v4198
      %v5463 = vpack.c.b16 %v4215, %v4199
      %v5464 = vpack.c.b16 %v4216, %v4200
      %v5465 = vpack.c.b16 %v4217, %v4201
      %v5466 = vpack.c.b16 %v4234, %v4218
      %v5467 = vpack.c.b16 %v4235, %v4219
      %v5468 = vpack.c.b16 %v4236, %v4220
      %v5469 = vpack.c.b16 %v4237, %v4221
      %v5470 = vpack.c.b16 %v4238, %v4222
      %v5471 = vpack.c.b16 %v4239, %v4223
      %v5472 = vpack.c.b16 %v4240, %v4224
      %v5473 = vpack.c.b16 %v4241, %v4225
      %v5474 = vpack.c.b16 %v4242, %v4226
      %v5475 = vpack.c.b16 %v4243, %v4227
      %v5476 = vpack.c.b16 %v4244, %v4228
      %v5477 = vpack.c.b16 %v4245, %v4229
      %v5478 = vpack.c.b16 %v4246, %v4230
      %v5479 = vpack.c.b16 %v4247, %v4231
      %v5480 = vpack.c.b16 %v4248, %v4232
      %v5481 = vpack.c.b16 %v4249, %v4233
      %v5482 = vpack.c.b16 %v4266, %v4250
      %v5483 = vpack.c.b16 %v4267, %v4251
      %v5484 = vpack.c.b16 %v4268, %v4252
      %v5485 = vpack.c.b16 %v4269, %v4253
      %v5486 = vpack.c.b16 %v4270, %v4254
      %v5487 = vpack.c.b16 %v4271, %v4255
      %v5488 = vpack.c.b16 %v4272, %v4256
      %v5489 = vpack.c.b16 %v4273, %v4257
      %v5490 = vpack.c.b16 %v4274, %v4258
      %v5491 = vpack.c.b16 %v4275, %v4259
      %v5492 = vpack.c.b16 %v4276, %v4260
      %v5493 = vpack.c.b16 %v4277, %v4261
      %v5494 = vpack.c.b16 %v4278, %v4262
      %v5495 = vpack.c.b16 %v4279, %v4263
      %v5496 = vpack.c.b16 %v4280, %v4264
      %v5497 = vpack.c.b16 %v4281, %v4265
      %v5498 = vpack.c.b16 %v4298, %v4282
      %v5499 = vpack.c.b16 %v4299, %v4283
      %v5500 = vpack.c.b16 %v4300, %v4284
      %v5501 = vpack.c.b16 %v4301, %v4285
      %v5502 = vpack.c.b16 %v4302, %v4286
      %v5503 = vpack.c.b16 %v4303, %v4287
      %v5504 = vpack.c.b16 %v4304, %v4288
      %v5505 = vpack.c.b16 %v4305, %v4289
      %v5506 = vpack.c.b16 %v4306, %v4290
      %v5507 = vpack.c.b16 %v4307, %v4291
      %v5508 = vpack.c.b16 %v4308, %v4292
      %v5509 = vpack.c.b16 %v4309, %v4293
      %v5510 = vpack.c.b16 %v4310, %v4294
      %v5511 = vpack.c.b16 %v4311, %v4295
      %v5512 = vpack.c.b16 %v4312, %v4296
      %v5513 = vpack.c.b16 %v4313, %v4297
      %v5514 = vpack.c.b16 %v4330, %v4314
      %v5515 = vpack.c.b16 %v4331, %v4315
      %v5516 = vpack.c.b16 %v4332, %v4316
      %v5517 = vpack.c.b16 %v4333, %v4317
      %v5518 = vpack.c.b16 %v4334, %v4318
      %v5519 = vpack.c.b16 %v4335, %v4319
      %v5520 = vpack.c.b16 %v4336, %v4320
      %v5521 = vpack.c.b16 %v4337, %v4321
      %v5522 = vpack.c.b16 %v4338, %v4322
      %v5523 = vpack.c.b16 %v4339, %v4323
      %v5524 = vpack.c.b16 %v4340, %v4324
      %v5525 = vpack.c.b16 %v4341, %v4325
      %v5526 = vpack.c.b16 %v4342, %v4326
      %v5527 = vpack.c.b16 %v4343, %v4327
      %v5528 = vpack.c.b16 %v4344, %v4328
      %v5529 = vpack.c.b16 %v4345, %v4329
      %v5530 = vpack.c.b16 %v4362, %v4346
      %v5531 = vpack.c.b16 %v4363, %v4347
      %v5532 = vpack.c.b16 %v4364, %v4348
      %v5533 = vpack.c.b16 %v4365, %v4349
      %v5534 = vpack.c.b16 %v4366, %v4350
      %v5535 = vpack.c.b16 %v4367, %v4351
      %v5536 = vpack.c.b16 %v4368, %v4352
      %v5537 = vpack.c.b16 %v4369, %v4353
      %v5538 = vpack.c.b16 %v4370, %v4354
      %v5539 = vpack.c.b16 %v4371, %v4355
      %v5540 = vpack.c.b16 %v4372, %v4356
      %v5541 = vpack.c.b16 %v4373, %v4357
      %v5542 = vpack.c.b16 %v4374, %v4358
      %v5543 = vpack.c.b16 %v4375, %v4359
      %v5544 = vpack.c.b16 %v4376, %v4360
      %v5545 = vpack.c.b16 %v4377, %v4361
      %v5546 = vpack.c.b16 %v4394, %v4378
      %v5547 = vpack.c.b16 %v4395, %v4379
      %v5548 = vpack.c.b16 %v4396, %v4380
      %v5549 = vpack.c.b16 %v4397, %v4381
      %v5550 = vpack.c.b16 %v4398, %v4382
      %v5551 = vpack.c.b16 %v4399, %v4383
      %v5552 = vpack.c.b16 %v4400, %v4384
      %v5553 = vpack.c.b16 %v4401, %v4385
      %v5554 = vpack.c.b16 %v4402, %v4386
      %v5555 = vpack.c.b16 %v4403, %v4387
      %v5556 = vpack.c.b16 %v4404, %v4388
      %v5557 = vpack.c.b16 %v4405, %v4389
      %v5558 = vpack.c.b16 %v4406, %v4390
      %v5559 = vpack.c.b16 %v4407, %v4391
      %v5560 = vpack.c.b16 %v4408, %v4392
      %v5561 = vpack.c.b16 %v4409, %v4393
      %v5562 = vpack.c.b16 %v4426, %v4410
      %v5563 = vpack.c.b16 %v4427, %v4411
      %v5564 = vpack.c.b16 %v4428, %v4412
      %v5565 = vpack.c.b16 %v4429, %v4413
      %v5566 = vpack.c.b16 %v4430, %v4414
      %v5567 = vpack.c.b16 %v4431, %v4415
      %v5568 = vpack.c.b16 %v4432, %v4416
      %v5569 = vpack.c.b16 %v4433, %v4417
      %v5570 = vpack.c.b16 %v4434, %v4418
      %v5571 = vpack.c.b16 %v4435, %v4419
      %v5572 = vpack.c.b16 %v4436, %v4420
      %v5573 = vpack.c.b16 %v4437, %v4421
      %v5574 = vpack.c.b16 %v4438, %v4422
      %v5575 = vpack.c.b16 %v4439, %v4423
      %v5576 = vpack.c.b16 %v4440, %v4424
      %v5577 = vpack.c.b16 %v4441, %v4425
      %v5578 = vpack.c.b16 %v4458, %v4442
      %v5579 = vpack.c.b16 %v4459, %v4443
      %v5580 = vpack.c.b16 %v4460, %v4444
      %v5581 = vpack.c.b16 %v4461, %v4445
      %v5582 = vpack.c.b16 %v4462, %v4446
      %v5583 = vpack.c.b16 %v4463, %v4447
      %v5584 = vpack.c.b16 %v4464, %v4448
      %v5585 = vpack.c.b16 %v4465, %v4449
      %v5586 = vpack.c.b16 %v4466, %v4450
      %v5587 = vpack.c.b16 %v4467, %v4451
      %v5588 = vpack.c.b16 %v4468, %v4452
      %v5589 = vpack.c.b16 %v4469, %v4453
      %v5590 = vpack.c.b16 %v4470, %v4454
      %v5591 = vpack.c.b16 %v4471, %v4455
      %v5592 = vpack.c.b16 %v4472, %v4456
      %v5593 = vpack.c.b16 %v4473, %v4457
      %v5594 = vpack.c.b16 %v4490, %v4474
      %v5595 = vpack.c.b16 %v4491, %v4475
      %v5596 = vpack.c.b16 %v4492, %v4476
      %v5597 = vpack.c.b16 %v4493, %v4477
      %v5598 = vpack.c.b16 %v4494, %v4478
      %v5599 = vpack.c.b16 %v4495, %v4479
      %v5600 = vpack.c.b16 %v4496, %v4480
      %v5601 = vpack.c.b16 %v4497, %v4481
      %v5602 = vpack.c.b16 %v4498, %v4482
      %v5603 = vpack.c.b16 %v4499, %v4483
      %v5604 = vpack.c.b16 %v4500, %v4484
      %v5605 = vpack.c.b16 %v4501, %v4485
      %v5606 = vpack.c.b16 %v4502, %v4486
      %v5607 = vpack.c.b16 %v4503, %v4487
      %v5608 = vpack.c.b16 %v4504, %v4488
      %v5609 = vpack.c.b16 %v4505, %v4489
      %v5610 = vpack.c.b16 %v4522, %v4506
      %v5611 = vpack.c.b16 %v4523, %v4507
      %v5612 = vpack.c.b16 %v4524, %v4508
      %v5613 = vpack.c.b16 %v4525, %v4509
      %v5614 = vpack.c.b16 %v4526, %v4510
      %v5615 = vpack.c.b16 %v4527, %v4511
      %v5616 = vpack.c.b16 %v4528, %v4512
      %v5617 = vpack.c.b16 %v4529, %v4513
      %v5618 = vpack.c.b16 %v4530, %v4514
      %v5619 = vpack.c.b16 %v4531, %v4515
      %v5620 = vpack.c.b16 %v4532, %v4516
      %v5621 = vpack.c.b16 %v4533, %v4517
      %v5622 = vpack.c.b16 %v4534, %v4518
      %v5623 = vpack.c.b16 %v4535, %v4519
      %v5624 = vpack.c.b16 %v4536, %v4520
      %v5625 = vpack.c.b16 %v4537, %v4521
      %v5626 = vpack.c.b16 %v4554, %v4538
      %v5627 = vpack.c.b16 %v4555, %v4539
      %v5628 = vpack.c.b16 %v4556, %v4540
      %v5629 = vpack.c.b16 %v4557, %v4541
      %v5630 = vpack.c.b16 %v4558, %v4542
      %v5631 = vpack.c.b16 %v4559, %v4543
      %v5632 = vpack.c.b16 %v4560, %v4544
      %v5633 = vpack.c.b16 %v4561, %v4545
      %v5634 = vpack.c.b16 %v4562, %v4546
      %v5635 = vpack.c.b16 %v4563, %v4547
      %v5636 = vpack.c.b16 %v4564, %v4548
      %v5637 = vpack.c.b16 %v4565, %v4549
      %v5638 = vpack.c.b16 %v4566, %v4550
      %v5639 = vpack.c.b16 %v4567, %v4551
      %v5640 = vpack.c.b16 %v4568, %v4552
      %v5641 = vpack.c.b16 %v4569, %v4553
      %v5642 = vpack.c.b16 %v4586, %v4570
      %v5643 = vpack.c.b16 %v4587, %v4571
      %v5644 = vpack.c.b16 %v4588, %v4572
      %v5645 = vpack.c.b16 %v4589, %v4573
      %v5646 = vpack.c.b16 %v4590, %v4574
      %v5647 = vpack.c.b16 %v4591, %v4575
      %v5648 = vpack.c.b16 %v4592, %v4576
      %v5649 = vpack.c.b16 %v4593, %v4577
      %v5650 = vpack.c.b16 %v4594, %v4578
      %v5651 = vpack.c.b16 %v4595, %v4579
      %v5652 = vpack.c.b16 %v4596, %v4580
      %v5653 = vpack.c.b16 %v4597, %v4581
      %v5654 = vpack.c.b16 %v4598, %v4582
      %v5655 = vpack.c.b16 %v4599, %v4583
      %v5656 = vpack.c.b16 %v4600, %v4584
      %v5657 = vpack.c.b16 %v4601, %v4585
      %v5658 = vpack.c.b16 %v4618, %v4602
      %v5659 = vpack.c.b16 %v4619, %v4603
      %v5660 = vpack.c.b16 %v4620, %v4604
      %v5661 = vpack.c.b16 %v4621, %v4605
      %v5662 = vpack.c.b16 %v4622, %v4606
      %v5663 = vpack.c.b16 %v4623, %v4607
      %v5664 = vpack.c.b16 %v4624, %v4608
      %v5665 = vpack.c.b16 %v4625, %v4609
      %v5666 = vpack.c.b16 %v4626, %v4610
      %v5667 = vpack.c.b16 %v4627, %v4611
      %v5668 = vpack.c.b16 %v4628, %v4612
      %v5669 = vpack.c.b16 %v4629, %v4613
      %v5670 = vpack.c.b16 %v4630, %v4614
      %v5671 = vpack.c.b16 %v4631, %v4615
      %v5672 = vpack.c.b16 %v4632, %v4616
      %v5673 = vpack.c.b16 %v4633, %v4617
      %v5674 = vpack.c.b16 %v4650, %v4634
      %v5675 = vpack.c.b16 %v4651, %v4635
      %v5676 = vpack.c.b16 %v4652, %v4636
      %v5677 = vpack.c.b16 %v4653, %v4637
      %v5678 = vpack.c.b16 %v4654, %v4638
      %v5679 = vpack.c.b16 %v4655, %v4639
      %v5680 = vpack.c.b16 %v4656, %v4640
      %v5681 = vpack.c.b16 %v4657, %v4641
      %v5682 = vpack.c.b16 %v4658, %v4642
      %v5683 = vpack.c.b16 %v4659, %v4643
      %v5684 = vpack.c.b16 %v4660, %v4644
      %v5685 = vpack.c.b16 %v4661, %v4645
      %v5686 = vpack.c.b16 %v4662, %v4646
      %v5687 = vpack.c.b16 %v4663, %v4647
      %v5688 = vpack.c.b16 %v4664, %v4648
      %v5689 = vpack.c.b16 %v4665, %v4649
      %6714 = vmatprep.subr.bf16.mxu0 %v4667
      %6715 = vmatpush1.bf16.msra.mxu0 %v4666
      %6716 = vmatprep.subr.bf16.mxu0 %v4683
      %6717 = vmatpush1.bf16.msra.mxu0 %v4682
      %6718 = vmatprep.subr.bf16.mxu0 %v4699
      %6719 = vmatpush1.bf16.msra.mxu0 %v4698
      %6720 = vmatprep.subr.bf16.mxu0 %v4715
      %6721 = vmatpush1.bf16.msra.mxu0 %v4714
      %6722 = vmatprep.subr.bf16.mxu0 %v4731
      %6723 = vmatpush1.bf16.msra.mxu0 %v4730
      %6724 = vmatprep.subr.bf16.mxu0 %v4747
      %6725 = vmatpush1.bf16.msra.mxu0 %v4746
      %6726 = vmatprep.subr.bf16.mxu0 %v4763
      %6727 = vmatpush1.bf16.msra.mxu0 %v4762
      %6728 = vmatprep.subr.bf16.mxu0 %v4779
      %6729 = vmatpush1.bf16.msra.mxu0 %v4778
      %6730 = vmatprep.subr.bf16.mxu0 %v4795
      %6731 = vmatpush1.bf16.msra.mxu0 %v4794
      %6732 = vmatprep.subr.bf16.mxu0 %v4811
      %6733 = vmatpush1.bf16.msra.mxu0 %v4810
      %6734 = vmatprep.subr.bf16.mxu0 %v4827
      %6735 = vmatpush1.bf16.msra.mxu0 %v4826
      %6736 = vmatprep.subr.bf16.mxu0 %v4843
      %6737 = vmatpush1.bf16.msra.mxu0 %v4842
      %6738 = vmatprep.subr.bf16.mxu0 %v4859
      %6739 = vmatpush1.bf16.msra.mxu0 %v4858
      %6740 = vmatprep.subr.bf16.mxu0 %v4875
      %6741 = vmatpush1.bf16.msra.mxu0 %v4874
      %6742 = vmatprep.subr.bf16.mxu0 %v4891
      %6743 = vmatpush1.bf16.msra.mxu0 %v4890
      %6744 = vmatprep.subr.bf16.mxu0 %v4907
      %6745 = vmatpush1.bf16.msra.mxu0 %v4906
      %6746 = vmatprep.mubr.bf16.mxu0 %v479
      %6747 = vmatmul.mubr.bf16.gmra.mrb[0].mxu0 %v478
      %v6748 = vpop.f32.mrb[0].mxu0
      %v6749 = vadd.f32 %v1517, %v6748
      %v6750 = vpop.f32.mrb[0].mxu0
      %v6751 = vadd.f32 %v1521, %v6750
      %v6752 = vpop.f32.mrb[0].mxu0
      %v6753 = vpop.f32.mrb[0].mxu0
      %6754 = vdwg.mxu0
      %6755 = vmatprep.subr.bf16.mxu0 %v4923
      %6756 = vmatpush1.bf16.msra.mxu0 %v4922
      %6757 = vmatprep.subr.bf16.mxu0 %v4939
      %6758 = vmatpush1.bf16.msra.mxu0 %v4938
      %6759 = vmatprep.subr.bf16.mxu0 %v4955
      %6760 = vmatpush1.bf16.msra.mxu0 %v4954
      %6761 = vmatprep.subr.bf16.mxu0 %v4971
      %6762 = vmatpush1.bf16.msra.mxu0 %v4970
      %6763 = vmatprep.subr.bf16.mxu0 %v4987
      %6764 = vmatpush1.bf16.msra.mxu0 %v4986
      %6765 = vmatprep.subr.bf16.mxu0 %v5003
      %6766 = vmatpush1.bf16.msra.mxu0 %v5002
      %6767 = vmatprep.subr.bf16.mxu0 %v5019
      %6768 = vmatpush1.bf16.msra.mxu0 %v5018
      %6769 = vmatprep.subr.bf16.mxu0 %v5035
      %6770 = vmatpush1.bf16.msra.mxu0 %v5034
      %6771 = vmatprep.subr.bf16.mxu0 %v5051
      %6772 = vmatpush1.bf16.msra.mxu0 %v5050
      %6773 = vmatprep.subr.bf16.mxu0 %v5067
      %6774 = vmatpush1.bf16.msra.mxu0 %v5066
      %6775 = vmatprep.subr.bf16.mxu0 %v5083
      %6776 = vmatpush1.bf16.msra.mxu0 %v5082
      %6777 = vmatprep.subr.bf16.mxu0 %v5099
      %6778 = vmatpush1.bf16.msra.mxu0 %v5098
      %6779 = vmatprep.subr.bf16.mxu0 %v5115
      %6780 = vmatpush1.bf16.msra.mxu0 %v5114
      %6781 = vmatprep.subr.bf16.mxu0 %v5131
      %6782 = vmatpush1.bf16.msra.mxu0 %v5130
      %6783 = vmatprep.subr.bf16.mxu0 %v5147
      %6784 = vmatpush1.bf16.msra.mxu0 %v5146
      %6785 = vmatprep.subr.bf16.mxu0 %v5163
      %6786 = vmatpush1.bf16.msra.mxu0 %v5162
      %6787 = vmatprep.mubr.bf16.mxu0 %v481
      %6788 = vmatmul.mubr.bf16.gmra.mrb[0].mxu0 %v480
      %v6789 = vpop.f32.mrb[0].mxu0
      %v6790 = vadd.f32 %v6749, %v6789
      %v6791 = vpop.f32.mrb[0].mxu0
      %v6792 = vadd.f32 %v6751, %v6791
      %v6793 = vpop.f32.mrb[0].mxu0
      %v6794 = vpop.f32.mrb[0].mxu0
      %6795 = vdwg.mxu0
      %6796 = vmatprep.subr.bf16.mxu0 %v5179
      %6797 = vmatpush1.bf16.msra.mxu0 %v5178
      %6798 = vmatprep.subr.bf16.mxu0 %v5195
      %6799 = vmatpush1.bf16.msra.mxu0 %v5194
      %6800 = vmatprep.subr.bf16.mxu0 %v5211
      %6801 = vmatpush1.bf16.msra.mxu0 %v5210
      %6802 = vmatprep.subr.bf16.mxu0 %v5227
      %6803 = vmatpush1.bf16.msra.mxu0 %v5226
      %6804 = vmatprep.subr.bf16.mxu0 %v5243
      %6805 = vmatpush1.bf16.msra.mxu0 %v5242
      %6806 = vmatprep.subr.bf16.mxu0 %v5259
      %6807 = vmatpush1.bf16.msra.mxu0 %v5258
      %6808 = vmatprep.subr.bf16.mxu0 %v5275
      %6809 = vmatpush1.bf16.msra.mxu0 %v5274
      %6810 = vmatprep.subr.bf16.mxu0 %v5291
      %6811 = vmatpush1.bf16.msra.mxu0 %v5290
      %6812 = vmatprep.subr.bf16.mxu0 %v5307
      %6813 = vmatpush1.bf16.msra.mxu0 %v5306
      %6814 = vmatprep.subr.bf16.mxu0 %v5323
      %6815 = vmatpush1.bf16.msra.mxu0 %v5322
      %6816 = vmatprep.subr.bf16.mxu0 %v5339
      %6817 = vmatpush1.bf16.msra.mxu0 %v5338
      %6818 = vmatprep.subr.bf16.mxu0 %v5355
      %6819 = vmatpush1.bf16.msra.mxu0 %v5354
      %6820 = vmatprep.subr.bf16.mxu0 %v5371
      %6821 = vmatpush1.bf16.msra.mxu0 %v5370
      %6822 = vmatprep.subr.bf16.mxu0 %v5387
      %6823 = vmatpush1.bf16.msra.mxu0 %v5386
      %6824 = vmatprep.subr.bf16.mxu0 %v5403
      %6825 = vmatpush1.bf16.msra.mxu0 %v5402
      %6826 = vmatprep.subr.bf16.mxu0 %v5419
      %6827 = vmatpush1.bf16.msra.mxu0 %v5418
      %6828 = vmatprep.mubr.bf16.mxu0 %v483
      %6829 = vmatmul.mubr.bf16.gmra.mrb[0].mxu0 %v482
      %v6830 = vpop.f32.mrb[0].mxu0
      %v6831 = vadd.f32 %v6790, %v6830
      %v6832 = vpop.f32.mrb[0].mxu0
      %v6833 = vadd.f32 %v6792, %v6832
      %v6834 = vpop.f32.mrb[0].mxu0
      %v6835 = vpop.f32.mrb[0].mxu0
      %6836 = vdwg.mxu0
      %6837 = vmatprep.subr.bf16.mxu0 %v5435
      %6838 = vmatpush1.bf16.msra.mxu0 %v5434
      %6839 = vmatprep.subr.bf16.mxu0 %v5451
      %6840 = vmatpush1.bf16.msra.mxu0 %v5450
      %6841 = vmatprep.subr.bf16.mxu0 %v5467
      %6842 = vmatpush1.bf16.msra.mxu0 %v5466
      %6843 = vmatprep.subr.bf16.mxu0 %v5483
      %6844 = vmatpush1.bf16.msra.mxu0 %v5482
      %6845 = vmatprep.subr.bf16.mxu0 %v5499
      %6846 = vmatpush1.bf16.msra.mxu0 %v5498
      %6847 = vmatprep.subr.bf16.mxu0 %v5515
      %6848 = vmatpush1.bf16.msra.mxu0 %v5514
      %6849 = vmatprep.subr.bf16.mxu0 %v5531
      %6850 = vmatpush1.bf16.msra.mxu0 %v5530
      %6851 = vmatprep.subr.bf16.mxu0 %v5547
      %6852 = vmatpush1.bf16.msra.mxu0 %v5546
      %6853 = vmatprep.subr.bf16.mxu0 %v5563
      %6854 = vmatpush1.bf16.msra.mxu0 %v5562
      %6855 = vmatprep.subr.bf16.mxu0 %v5579
      %6856 = vmatpush1.bf16.msra.mxu0 %v5578
      %6857 = vmatprep.subr.bf16.mxu0 %v5595
      %6858 = vmatpush1.bf16.msra.mxu0 %v5594
      %6859 = vmatprep.subr.bf16.mxu0 %v5611
      %6860 = vmatpush1.bf16.msra.mxu0 %v5610
      %6861 = vmatprep.subr.bf16.mxu0 %v5627
      %6862 = vmatpush1.bf16.msra.mxu0 %v5626
      %6863 = vmatprep.subr.bf16.mxu0 %v5643
      %6864 = vmatpush1.bf16.msra.mxu0 %v5642
      %6865 = vmatprep.subr.bf16.mxu0 %v5659
      %6866 = vmatpush1.bf16.msra.mxu0 %v5658
      %6867 = vmatprep.subr.bf16.mxu0 %v5675
      %6868 = vmatpush1.bf16.msra.mxu0 %v5674
      %6869 = vmatprep.mubr.bf16.mxu0 %v485
      %6870 = vmatmul.mubr.bf16.gmra.mrb[0].mxu0 %v484
      %v6871 = vpop.f32.mrb[0].mxu0
      %v6872 = vadd.f32 %v6831, %v6871
      %v6873 = vpop.f32.mrb[0].mxu0
      %v6874 = vadd.f32 %v6833, %v6873
      %v6875 = vpop.f32.mrb[0].mxu0
      %v6876 = vpop.f32.mrb[0].mxu0
      %6877 = vdwg.mxu0
      %6878 = vmatprep.subr.bf16.mxu0 %v4669
      %6879 = vmatpush1.bf16.msra.mxu0 %v4668
      %6880 = vmatprep.subr.bf16.mxu0 %v4685
      %6881 = vmatpush1.bf16.msra.mxu0 %v4684
      %6882 = vmatprep.subr.bf16.mxu0 %v4701
      %6883 = vmatpush1.bf16.msra.mxu0 %v4700
      %6884 = vmatprep.subr.bf16.mxu0 %v4717
      %6885 = vmatpush1.bf16.msra.mxu0 %v4716
      %6886 = vmatprep.subr.bf16.mxu0 %v4733
      %6887 = vmatpush1.bf16.msra.mxu0 %v4732
      %6888 = vmatprep.subr.bf16.mxu0 %v4749
      %6889 = vmatpush1.bf16.msra.mxu0 %v4748
      %6890 = vmatprep.subr.bf16.mxu0 %v4765
      %6891 = vmatpush1.bf16.msra.mxu0 %v4764
      %6892 = vmatprep.subr.bf16.mxu0 %v4781
      %6893 = vmatpush1.bf16.msra.mxu0 %v4780
      %6894 = vmatprep.subr.bf16.mxu0 %v4797
      %6895 = vmatpush1.bf16.msra.mxu0 %v4796
      %6896 = vmatprep.subr.bf16.mxu0 %v4813
      %6897 = vmatpush1.bf16.msra.mxu0 %v4812
      %6898 = vmatprep.subr.bf16.mxu0 %v4829
      %6899 = vmatpush1.bf16.msra.mxu0 %v4828
      %6900 = vmatprep.subr.bf16.mxu0 %v4845
      %6901 = vmatpush1.bf16.msra.mxu0 %v4844
      %6902 = vmatprep.subr.bf16.mxu0 %v4861
      %6903 = vmatpush1.bf16.msra.mxu0 %v4860
      %6904 = vmatprep.subr.bf16.mxu0 %v4877
      %6905 = vmatpush1.bf16.msra.mxu0 %v4876
      %6906 = vmatprep.subr.bf16.mxu0 %v4893
      %6907 = vmatpush1.bf16.msra.mxu0 %v4892
      %6908 = vmatprep.subr.bf16.mxu0 %v4909
      %6909 = vmatpush1.bf16.msra.mxu0 %v4908
      %6910 = vmatprep.mubr.bf16.mxu0 %v479
      %6911 = vmatmul.mubr.bf16.gmra.mrb[0].mxu0 %v478
      %v6912 = vpop.f32.mrb[0].mxu0
      %v6913 = vadd.f32 %v1525, %v6912
      %v6914 = vpop.f32.mrb[0].mxu0
      %v6915 = vadd.f32 %v1529, %v6914
      %v6916 = vpop.f32.mrb[0].mxu0
      %v6917 = vpop.f32.mrb[0].mxu0
      %6918 = vdwg.mxu0
      %6919 = vmatprep.subr.bf16.mxu0 %v4925
      %6920 = vmatpush1.bf16.msra.mxu0 %v4924
      %6921 = vmatprep.subr.bf16.mxu0 %v4941
      %6922 = vmatpush1.bf16.msra.mxu0 %v4940
      %6923 = vmatprep.subr.bf16.mxu0 %v4957
      %6924 = vmatpush1.bf16.msra.mxu0 %v4956
      %6925 = vmatprep.subr.bf16.mxu0 %v4973
      %6926 = vmatpush1.bf16.msra.mxu0 %v4972
      %6927 = vmatprep.subr.bf16.mxu0 %v4989
      %6928 = vmatpush1.bf16.msra.mxu0 %v4988
      %6929 = vmatprep.subr.bf16.mxu0 %v5005
      %6930 = vmatpush1.bf16.msra.mxu0 %v5004
      %6931 = vmatprep.subr.bf16.mxu0 %v5021
      %6932 = vmatpush1.bf16.msra.mxu0 %v5020
      %6933 = vmatprep.subr.bf16.mxu0 %v5037
      %6934 = vmatpush1.bf16.msra.mxu0 %v5036
      %6935 = vmatprep.subr.bf16.mxu0 %v5053
      %6936 = vmatpush1.bf16.msra.mxu0 %v5052
      %6937 = vmatprep.subr.bf16.mxu0 %v5069
      %6938 = vmatpush1.bf16.msra.mxu0 %v5068
      %6939 = vmatprep.subr.bf16.mxu0 %v5085
      %6940 = vmatpush1.bf16.msra.mxu0 %v5084
      %6941 = vmatprep.subr.bf16.mxu0 %v5101
      %6942 = vmatpush1.bf16.msra.mxu0 %v5100
      %6943 = vmatprep.subr.bf16.mxu0 %v5117
      %6944 = vmatpush1.bf16.msra.mxu0 %v5116
      %6945 = vmatprep.subr.bf16.mxu0 %v5133
      %6946 = vmatpush1.bf16.msra.mxu0 %v5132
      %6947 = vmatprep.subr.bf16.mxu0 %v5149
      %6948 = vmatpush1.bf16.msra.mxu0 %v5148
      %6949 = vmatprep.subr.bf16.mxu0 %v5165
      %6950 = vmatpush1.bf16.msra.mxu0 %v5164
      %6951 = vmatprep.mubr.bf16.mxu0 %v481
      %6952 = vmatmul.mubr.bf16.gmra.mrb[0].mxu0 %v480
      %v6953 = vpop.f32.mrb[0].mxu0
      %v6954 = vadd.f32 %v6913, %v6953
      %v6955 = vpop.f32.mrb[0].mxu0
      %v6956 = vadd.f32 %v6915, %v6955
      %v6957 = vpop.f32.mrb[0].mxu0
      %v6958 = vpop.f32.mrb[0].mxu0
      %6959 = vdwg.mxu0
      %6960 = vmatprep.subr.bf16.mxu0 %v5181
      %6961 = vmatpush1.bf16.msra.mxu0 %v5180
      %6962 = vmatprep.subr.bf16.mxu0 %v5197
      %6963 = vmatpush1.bf16.msra.mxu0 %v5196
      %6964 = vmatprep.subr.bf16.mxu0 %v5213
      %6965 = vmatpush1.bf16.msra.mxu0 %v5212
      %6966 = vmatprep.subr.bf16.mxu0 %v5229
      %6967 = vmatpush1.bf16.msra.mxu0 %v5228
      %6968 = vmatprep.subr.bf16.mxu0 %v5245
      %6969 = vmatpush1.bf16.msra.mxu0 %v5244
      %6970 = vmatprep.subr.bf16.mxu0 %v5261
      %6971 = vmatpush1.bf16.msra.mxu0 %v5260
      %6972 = vmatprep.subr.bf16.mxu0 %v5277
      %6973 = vmatpush1.bf16.msra.mxu0 %v5276
      %6974 = vmatprep.subr.bf16.mxu0 %v5293
      %6975 = vmatpush1.bf16.msra.mxu0 %v5292
      %6976 = vmatprep.subr.bf16.mxu0 %v5309
      %6977 = vmatpush1.bf16.msra.mxu0 %v5308
      %6978 = vmatprep.subr.bf16.mxu0 %v5325
      %6979 = vmatpush1.bf16.msra.mxu0 %v5324
      %6980 = vmatprep.subr.bf16.mxu0 %v5341
      %6981 = vmatpush1.bf16.msra.mxu0 %v5340
      %6982 = vmatprep.subr.bf16.mxu0 %v5357
      %6983 = vmatpush1.bf16.msra.mxu0 %v5356
      %6984 = vmatprep.subr.bf16.mxu0 %v5373
      %6985 = vmatpush1.bf16.msra.mxu0 %v5372
      %6986 = vmatprep.subr.bf16.mxu0 %v5389
      %6987 = vmatpush1.bf16.msra.mxu0 %v5388
      %6988 = vmatprep.subr.bf16.mxu0 %v5405
      %6989 = vmatpush1.bf16.msra.mxu0 %v5404
      %6990 = vmatprep.subr.bf16.mxu0 %v5421
      %6991 = vmatpush1.bf16.msra.mxu0 %v5420
      %6992 = vmatprep.mubr.bf16.mxu0 %v483
      %6993 = vmatmul.mubr.bf16.gmra.mrb[0].mxu0 %v482
      %v6994 = vpop.f32.mrb[0].mxu0
      %v6995 = vadd.f32 %v6954, %v6994
      %v6996 = vpop.f32.mrb[0].mxu0
      %v6997 = vadd.f32 %v6956, %v6996
      %v6998 = vpop.f32.mrb[0].mxu0
      %v6999 = vpop.f32.mrb[0].mxu0
      %7000 = vdwg.mxu0
      %7001 = vmatprep.subr.bf16.mxu0 %v5437
      %7002 = vmatpush1.bf16.msra.mxu0 %v5436
      %7003 = vmatprep.subr.bf16.mxu0 %v5453
      %7004 = vmatpush1.bf16.msra.mxu0 %v5452
      %7005 = vmatprep.subr.bf16.mxu0 %v5469
      %7006 = vmatpush1.bf16.msra.mxu0 %v5468
      %7007 = vmatprep.subr.bf16.mxu0 %v5485
      %7008 = vmatpush1.bf16.msra.mxu0 %v5484
      %7009 = vmatprep.subr.bf16.mxu0 %v5501
      %7010 = vmatpush1.bf16.msra.mxu0 %v5500
      %7011 = vmatprep.subr.bf16.mxu0 %v5517
      %7012 = vmatpush1.bf16.msra.mxu0 %v5516
      %7013 = vmatprep.subr.bf16.mxu0 %v5533
      %7014 = vmatpush1.bf16.msra.mxu0 %v5532
      %7015 = vmatprep.subr.bf16.mxu0 %v5549
      %7016 = vmatpush1.bf16.msra.mxu0 %v5548
      %7017 = vmatprep.subr.bf16.mxu0 %v5565
      %7018 = vmatpush1.bf16.msra.mxu0 %v5564
      %7019 = vmatprep.subr.bf16.mxu0 %v5581
      %7020 = vmatpush1.bf16.msra.mxu0 %v5580
      %7021 = vmatprep.subr.bf16.mxu0 %v5597
      %7022 = vmatpush1.bf16.msra.mxu0 %v5596
      %7023 = vmatprep.subr.bf16.mxu0 %v5613
      %7024 = vmatpush1.bf16.msra.mxu0 %v5612
      %7025 = vmatprep.subr.bf16.mxu0 %v5629
      %7026 = vmatpush1.bf16.msra.mxu0 %v5628
      %7027 = vmatprep.subr.bf16.mxu0 %v5645
      %7028 = vmatpush1.bf16.msra.mxu0 %v5644
      %7029 = vmatprep.subr.bf16.mxu0 %v5661
      %7030 = vmatpush1.bf16.msra.mxu0 %v5660
      %7031 = vmatprep.subr.bf16.mxu0 %v5677
      %7032 = vmatpush1.bf16.msra.mxu0 %v5676
      %7033 = vmatprep.mubr.bf16.mxu0 %v485
      %7034 = vmatmul.mubr.bf16.gmra.mrb[0].mxu0 %v484
      %v7035 = vpop.f32.mrb[0].mxu0
      %v7036 = vadd.f32 %v6995, %v7035
      %v7037 = vpop.f32.mrb[0].mxu0
      %v7038 = vadd.f32 %v6997, %v7037
      %v7039 = vpop.f32.mrb[0].mxu0
      %v7040 = vpop.f32.mrb[0].mxu0
      %7041 = vdwg.mxu0
      %7042 = vmatprep.subr.bf16.mxu0 %v4671
      %7043 = vmatpush1.bf16.msra.mxu0 %v4670
      %7044 = vmatprep.subr.bf16.mxu0 %v4687
      %7045 = vmatpush1.bf16.msra.mxu0 %v4686
      %7046 = vmatprep.subr.bf16.mxu0 %v4703
      %7047 = vmatpush1.bf16.msra.mxu0 %v4702
      %7048 = vmatprep.subr.bf16.mxu0 %v4719
      %7049 = vmatpush1.bf16.msra.mxu0 %v4718
      %7050 = vmatprep.subr.bf16.mxu0 %v4735
      %7051 = vmatpush1.bf16.msra.mxu0 %v4734
      %7052 = vmatprep.subr.bf16.mxu0 %v4751
      %7053 = vmatpush1.bf16.msra.mxu0 %v4750
      %7054 = vmatprep.subr.bf16.mxu0 %v4767
      %7055 = vmatpush1.bf16.msra.mxu0 %v4766
      %7056 = vmatprep.subr.bf16.mxu0 %v4783
      %7057 = vmatpush1.bf16.msra.mxu0 %v4782
      %7058 = vmatprep.subr.bf16.mxu0 %v4799
      %7059 = vmatpush1.bf16.msra.mxu0 %v4798
      %7060 = vmatprep.subr.bf16.mxu0 %v4815
      %7061 = vmatpush1.bf16.msra.mxu0 %v4814
      %7062 = vmatprep.subr.bf16.mxu0 %v4831
      %7063 = vmatpush1.bf16.msra.mxu0 %v4830
      %7064 = vmatprep.subr.bf16.mxu0 %v4847
      %7065 = vmatpush1.bf16.msra.mxu0 %v4846
      %7066 = vmatprep.subr.bf16.mxu0 %v4863
      %7067 = vmatpush1.bf16.msra.mxu0 %v4862
      %7068 = vmatprep.subr.bf16.mxu0 %v4879
      %7069 = vmatpush1.bf16.msra.mxu0 %v4878
      %7070 = vmatprep.subr.bf16.mxu0 %v4895
      %7071 = vmatpush1.bf16.msra.mxu0 %v4894
      %7072 = vmatprep.subr.bf16.mxu0 %v4911
      %7073 = vmatpush1.bf16.msra.mxu0 %v4910
      %7074 = vmatprep.mubr.bf16.mxu0 %v479
      %7075 = vmatmul.mubr.bf16.gmra.mrb[0].mxu0 %v478
      %v7076 = vpop.f32.mrb[0].mxu0
      %v7077 = vadd.f32 %v1533, %v7076
      %v7078 = vpop.f32.mrb[0].mxu0
      %v7079 = vadd.f32 %v1537, %v7078
      %v7080 = vpop.f32.mrb[0].mxu0
      %v7081 = vpop.f32.mrb[0].mxu0
      %7082 = vdwg.mxu0
      %7083 = vmatprep.subr.bf16.mxu0 %v4927
      %7084 = vmatpush1.bf16.msra.mxu0 %v4926
      %7085 = vmatprep.subr.bf16.mxu0 %v4943
      %7086 = vmatpush1.bf16.msra.mxu0 %v4942
      %7087 = vmatprep.subr.bf16.mxu0 %v4959
      %7088 = vmatpush1.bf16.msra.mxu0 %v4958
      %7089 = vmatprep.subr.bf16.mxu0 %v4975
      %7090 = vmatpush1.bf16.msra.mxu0 %v4974
      %7091 = vmatprep.subr.bf16.mxu0 %v4991
      %7092 = vmatpush1.bf16.msra.mxu0 %v4990
      %7093 = vmatprep.subr.bf16.mxu0 %v5007
      %7094 = vmatpush1.bf16.msra.mxu0 %v5006
      %7095 = vmatprep.subr.bf16.mxu0 %v5023
      %7096 = vmatpush1.bf16.msra.mxu0 %v5022
      %7097 = vmatprep.subr.bf16.mxu0 %v5039
      %7098 = vmatpush1.bf16.msra.mxu0 %v5038
      %7099 = vmatprep.subr.bf16.mxu0 %v5055
      %7100 = vmatpush1.bf16.msra.mxu0 %v5054
      %7101 = vmatprep.subr.bf16.mxu0 %v5071
      %7102 = vmatpush1.bf16.msra.mxu0 %v5070
      %7103 = vmatprep.subr.bf16.mxu0 %v5087
      %7104 = vmatpush1.bf16.msra.mxu0 %v5086
      %7105 = vmatprep.subr.bf16.mxu0 %v5103
      %7106 = vmatpush1.bf16.msra.mxu0 %v5102
      %7107 = vmatprep.subr.bf16.mxu0 %v5119
      %7108 = vmatpush1.bf16.msra.mxu0 %v5118
      %7109 = vmatprep.subr.bf16.mxu0 %v5135
      %7110 = vmatpush1.bf16.msra.mxu0 %v5134
      %7111 = vmatprep.subr.bf16.mxu0 %v5151
      %7112 = vmatpush1.bf16.msra.mxu0 %v5150
      %7113 = vmatprep.subr.bf16.mxu0 %v5167
      %7114 = vmatpush1.bf16.msra.mxu0 %v5166
      %7115 = vmatprep.mubr.bf16.mxu0 %v481
      %7116 = vmatmul.mubr.bf16.gmra.mrb[0].mxu0 %v480
      %v7117 = vpop.f32.mrb[0].mxu0
      %v7118 = vadd.f32 %v7077, %v7117
      %v7119 = vpop.f32.mrb[0].mxu0
      %v7120 = vadd.f32 %v7079, %v7119
      %v7121 = vpop.f32.mrb[0].mxu0
      %v7122 = vpop.f32.mrb[0].mxu0
      %7123 = vdwg.mxu0
      %7124 = vmatprep.subr.bf16.mxu0 %v5183
      %7125 = vmatpush1.bf16.msra.mxu0 %v5182
      %7126 = vmatprep.subr.bf16.mxu0 %v5199
      %7127 = vmatpush1.bf16.msra.mxu0 %v5198
      %7128 = vmatprep.subr.bf16.mxu0 %v5215
      %7129 = vmatpush1.bf16.msra.mxu0 %v5214
      %7130 = vmatprep.subr.bf16.mxu0 %v5231
      %7131 = vmatpush1.bf16.msra.mxu0 %v5230
      %7132 = vmatprep.subr.bf16.mxu0 %v5247
      %7133 = vmatpush1.bf16.msra.mxu0 %v5246
      %7134 = vmatprep.subr.bf16.mxu0 %v5263
      %7135 = vmatpush1.bf16.msra.mxu0 %v5262
      %7136 = vmatprep.subr.bf16.mxu0 %v5279
      %7137 = vmatpush1.bf16.msra.mxu0 %v5278
      %7138 = vmatprep.subr.bf16.mxu0 %v5295
      %7139 = vmatpush1.bf16.msra.mxu0 %v5294
      %7140 = vmatprep.subr.bf16.mxu0 %v5311
      %7141 = vmatpush1.bf16.msra.mxu0 %v5310
      %7142 = vmatprep.subr.bf16.mxu0 %v5327
      %7143 = vmatpush1.bf16.msra.mxu0 %v5326
      %7144 = vmatprep.subr.bf16.mxu0 %v5343
      %7145 = vmatpush1.bf16.msra.mxu0 %v5342
      %7146 = vmatprep.subr.bf16.mxu0 %v5359
      %7147 = vmatpush1.bf16.msra.mxu0 %v5358
      %7148 = vmatprep.subr.bf16.mxu0 %v5375
      %7149 = vmatpush1.bf16.msra.mxu0 %v5374
      %7150 = vmatprep.subr.bf16.mxu0 %v5391
      %7151 = vmatpush1.bf16.msra.mxu0 %v5390
      %7152 = vmatprep.subr.bf16.mxu0 %v5407
      %7153 = vmatpush1.bf16.msra.mxu0 %v5406
      %7154 = vmatprep.subr.bf16.mxu0 %v5423
      %7155 = vmatpush1.bf16.msra.mxu0 %v5422
      %7156 = vmatprep.mubr.bf16.mxu0 %v483
      %7157 = vmatmul.mubr.bf16.gmra.mrb[0].mxu0 %v482
      %v7158 = vpop.f32.mrb[0].mxu0
      %v7159 = vadd.f32 %v7118, %v7158
      %v7160 = vpop.f32.mrb[0].mxu0
      %v7161 = vadd.f32 %v7120, %v7160
      %v7162 = vpop.f32.mrb[0].mxu0
      %v7163 = vpop.f32.mrb[0].mxu0
      %7164 = vdwg.mxu0
      %7165 = vmatprep.subr.bf16.mxu0 %v5439
      %7166 = vmatpush1.bf16.msra.mxu0 %v5438
      %7167 = vmatprep.subr.bf16.mxu0 %v5455
      %7168 = vmatpush1.bf16.msra.mxu0 %v5454
      %7169 = vmatprep.subr.bf16.mxu0 %v5471
      %7170 = vmatpush1.bf16.msra.mxu0 %v5470
      %7171 = vmatprep.subr.bf16.mxu0 %v5487
      %7172 = vmatpush1.bf16.msra.mxu0 %v5486
      %7173 = vmatprep.subr.bf16.mxu0 %v5503
      %7174 = vmatpush1.bf16.msra.mxu0 %v5502
      %7175 = vmatprep.subr.bf16.mxu0 %v5519
      %7176 = vmatpush1.bf16.msra.mxu0 %v5518
      %7177 = vmatprep.subr.bf16.mxu0 %v5535
      %7178 = vmatpush1.bf16.msra.mxu0 %v5534
      %7179 = vmatprep.subr.bf16.mxu0 %v5551
      %7180 = vmatpush1.bf16.msra.mxu0 %v5550
      %7181 = vmatprep.subr.bf16.mxu0 %v5567
      %7182 = vmatpush1.bf16.msra.mxu0 %v5566
      %7183 = vmatprep.subr.bf16.mxu0 %v5583
      %7184 = vmatpush1.bf16.msra.mxu0 %v5582
      %7185 = vmatprep.subr.bf16.mxu0 %v5599
      %7186 = vmatpush1.bf16.msra.mxu0 %v5598
      %7187 = vmatprep.subr.bf16.mxu0 %v5615
      %7188 = vmatpush1.bf16.msra.mxu0 %v5614
      %7189 = vmatprep.subr.bf16.mxu0 %v5631
      %7190 = vmatpush1.bf16.msra.mxu0 %v5630
      %7191 = vmatprep.subr.bf16.mxu0 %v5647
      %7192 = vmatpush1.bf16.msra.mxu0 %v5646
      %7193 = vmatprep.subr.bf16.mxu0 %v5663
      %7194 = vmatpush1.bf16.msra.mxu0 %v5662
      %7195 = vmatprep.subr.bf16.mxu0 %v5679
      %7196 = vmatpush1.bf16.msra.mxu0 %v5678
      %7197 = vmatprep.mubr.bf16.mxu0 %v485
      %7198 = vmatmul.mubr.bf16.gmra.mrb[0].mxu0 %v484
      %v7199 = vpop.f32.mrb[0].mxu0
      %v7200 = vadd.f32 %v7159, %v7199
      %v7201 = vpop.f32.mrb[0].mxu0
      %v7202 = vadd.f32 %v7161, %v7201
      %v7203 = vpop.f32.mrb[0].mxu0
      %v7204 = vpop.f32.mrb[0].mxu0
      %7205 = vdwg.mxu0
      %7206 = vmatprep.subr.bf16.mxu0 %v4673
      %7207 = vmatpush1.bf16.msra.mxu0 %v4672
      %7208 = vmatprep.subr.bf16.mxu0 %v4689
      %7209 = vmatpush1.bf16.msra.mxu0 %v4688
      %7210 = vmatprep.subr.bf16.mxu0 %v4705
      %7211 = vmatpush1.bf16.msra.mxu0 %v4704
      %7212 = vmatprep.subr.bf16.mxu0 %v4721
      %7213 = vmatpush1.bf16.msra.mxu0 %v4720
      %7214 = vmatprep.subr.bf16.mxu0 %v4737
      %7215 = vmatpush1.bf16.msra.mxu0 %v4736
      %7216 = vmatprep.subr.bf16.mxu0 %v4753
      %7217 = vmatpush1.bf16.msra.mxu0 %v4752
      %7218 = vmatprep.subr.bf16.mxu0 %v4769
      %7219 = vmatpush1.bf16.msra.mxu0 %v4768
      %7220 = vmatprep.subr.bf16.mxu0 %v4785
      %7221 = vmatpush1.bf16.msra.mxu0 %v4784
      %7222 = vmatprep.subr.bf16.mxu0 %v4801
      %7223 = vmatpush1.bf16.msra.mxu0 %v4800
      %7224 = vmatprep.subr.bf16.mxu0 %v4817
      %7225 = vmatpush1.bf16.msra.mxu0 %v4816
      %7226 = vmatprep.subr.bf16.mxu0 %v4833
      %7227 = vmatpush1.bf16.msra.mxu0 %v4832
      %7228 = vmatprep.subr.bf16.mxu0 %v4849
      %7229 = vmatpush1.bf16.msra.mxu0 %v4848
      %7230 = vmatprep.subr.bf16.mxu0 %v4865
      %7231 = vmatpush1.bf16.msra.mxu0 %v4864
      %7232 = vmatprep.subr.bf16.mxu0 %v4881
      %7233 = vmatpush1.bf16.msra.mxu0 %v4880
      %7234 = vmatprep.subr.bf16.mxu0 %v4897
      %7235 = vmatpush1.bf16.msra.mxu0 %v4896
      %7236 = vmatprep.subr.bf16.mxu0 %v4913
      %7237 = vmatpush1.bf16.msra.mxu0 %v4912
      %7238 = vmatprep.mubr.bf16.mxu0 %v479
      %7239 = vmatmul.mubr.bf16.gmra.mrb[0].mxu0 %v478
      %v7240 = vpop.f32.mrb[0].mxu0
      %v7241 = vadd.f32 %v1541, %v7240
      %v7242 = vpop.f32.mrb[0].mxu0
      %v7243 = vadd.f32 %v1545, %v7242
      %v7244 = vpop.f32.mrb[0].mxu0
      %v7245 = vpop.f32.mrb[0].mxu0
      %7246 = vdwg.mxu0
      %7247 = vmatprep.subr.bf16.mxu0 %v4929
      %7248 = vmatpush1.bf16.msra.mxu0 %v4928
      %7249 = vmatprep.subr.bf16.mxu0 %v4945
      %7250 = vmatpush1.bf16.msra.mxu0 %v4944
      %7251 = vmatprep.subr.bf16.mxu0 %v4961
      %7252 = vmatpush1.bf16.msra.mxu0 %v4960
      %7253 = vmatprep.subr.bf16.mxu0 %v4977
      %7254 = vmatpush1.bf16.msra.mxu0 %v4976
      %7255 = vmatprep.subr.bf16.mxu0 %v4993
      %7256 = vmatpush1.bf16.msra.mxu0 %v4992
      %7257 = vmatprep.subr.bf16.mxu0 %v5009
      %7258 = vmatpush1.bf16.msra.mxu0 %v5008
      %7259 = vmatprep.subr.bf16.mxu0 %v5025
      %7260 = vmatpush1.bf16.msra.mxu0 %v5024
      %7261 = vmatprep.subr.bf16.mxu0 %v5041
      %7262 = vmatpush1.bf16.msra.mxu0 %v5040
      %7263 = vmatprep.subr.bf16.mxu0 %v5057
      %7264 = vmatpush1.bf16.msra.mxu0 %v5056
      %7265 = vmatprep.subr.bf16.mxu0 %v5073
      %7266 = vmatpush1.bf16.msra.mxu0 %v5072
      %7267 = vmatprep.subr.bf16.mxu0 %v5089
      %7268 = vmatpush1.bf16.msra.mxu0 %v5088
      %7269 = vmatprep.subr.bf16.mxu0 %v5105
      %7270 = vmatpush1.bf16.msra.mxu0 %v5104
      %7271 = vmatprep.subr.bf16.mxu0 %v5121
      %7272 = vmatpush1.bf16.msra.mxu0 %v5120
      %7273 = vmatprep.subr.bf16.mxu0 %v5137
      %7274 = vmatpush1.bf16.msra.mxu0 %v5136
      %7275 = vmatprep.subr.bf16.mxu0 %v5153
      %7276 = vmatpush1.bf16.msra.mxu0 %v5152
      %7277 = vmatprep.subr.bf16.mxu0 %v5169
      %7278 = vmatpush1.bf16.msra.mxu0 %v5168
      %7279 = vmatprep.mubr.bf16.mxu0 %v481
      %7280 = vmatmul.mubr.bf16.gmra.mrb[0].mxu0 %v480
      %v7281 = vpop.f32.mrb[0].mxu0
      %v7282 = vadd.f32 %v7241, %v7281
      %v7283 = vpop.f32.mrb[0].mxu0
      %v7284 = vadd.f32 %v7243, %v7283
      %v7285 = vpop.f32.mrb[0].mxu0
      %v7286 = vpop.f32.mrb[0].mxu0
      %7287 = vdwg.mxu0
      %7288 = vmatprep.subr.bf16.mxu0 %v5185
      %7289 = vmatpush1.bf16.msra.mxu0 %v5184
      %7290 = vmatprep.subr.bf16.mxu0 %v5201
      %7291 = vmatpush1.bf16.msra.mxu0 %v5200
      %7292 = vmatprep.subr.bf16.mxu0 %v5217
      %7293 = vmatpush1.bf16.msra.mxu0 %v5216
      %7294 = vmatprep.subr.bf16.mxu0 %v5233
      %7295 = vmatpush1.bf16.msra.mxu0 %v5232
      %7296 = vmatprep.subr.bf16.mxu0 %v5249
      %7297 = vmatpush1.bf16.msra.mxu0 %v5248
      %7298 = vmatprep.subr.bf16.mxu0 %v5265
      %7299 = vmatpush1.bf16.msra.mxu0 %v5264
      %7300 = vmatprep.subr.bf16.mxu0 %v5281
      %7301 = vmatpush1.bf16.msra.mxu0 %v5280
      %7302 = vmatprep.subr.bf16.mxu0 %v5297
      %7303 = vmatpush1.bf16.msra.mxu0 %v5296
      %7304 = vmatprep.subr.bf16.mxu0 %v5313
      %7305 = vmatpush1.bf16.msra.mxu0 %v5312
      %7306 = vmatprep.subr.bf16.mxu0 %v5329
      %7307 = vmatpush1.bf16.msra.mxu0 %v5328
      %7308 = vmatprep.subr.bf16.mxu0 %v5345
      %7309 = vmatpush1.bf16.msra.mxu0 %v5344
      %7310 = vmatprep.subr.bf16.mxu0 %v5361
      %7311 = vmatpush1.bf16.msra.mxu0 %v5360
      %7312 = vmatprep.subr.bf16.mxu0 %v5377
      %7313 = vmatpush1.bf16.msra.mxu0 %v5376
      %7314 = vmatprep.subr.bf16.mxu0 %v5393
      %7315 = vmatpush1.bf16.msra.mxu0 %v5392
      %7316 = vmatprep.subr.bf16.mxu0 %v5409
      %7317 = vmatpush1.bf16.msra.mxu0 %v5408
      %7318 = vmatprep.subr.bf16.mxu0 %v5425
      %7319 = vmatpush1.bf16.msra.mxu0 %v5424
      %7320 = vmatprep.mubr.bf16.mxu0 %v483
      %7321 = vmatmul.mubr.bf16.gmra.mrb[0].mxu0 %v482
      %v7322 = vpop.f32.mrb[0].mxu0
      %v7323 = vadd.f32 %v7282, %v7322
      %v7324 = vpop.f32.mrb[0].mxu0
      %v7325 = vadd.f32 %v7284, %v7324
      %v7326 = vpop.f32.mrb[0].mxu0
      %v7327 = vpop.f32.mrb[0].mxu0
      %7328 = vdwg.mxu0
      %7329 = vmatprep.subr.bf16.mxu0 %v5441
      %7330 = vmatpush1.bf16.msra.mxu0 %v5440
      %7331 = vmatprep.subr.bf16.mxu0 %v5457
      %7332 = vmatpush1.bf16.msra.mxu0 %v5456
      %7333 = vmatprep.subr.bf16.mxu0 %v5473
      %7334 = vmatpush1.bf16.msra.mxu0 %v5472
      %7335 = vmatprep.subr.bf16.mxu0 %v5489
      %7336 = vmatpush1.bf16.msra.mxu0 %v5488
      %7337 = vmatprep.subr.bf16.mxu0 %v5505
      %7338 = vmatpush1.bf16.msra.mxu0 %v5504
      %7339 = vmatprep.subr.bf16.mxu0 %v5521
      %7340 = vmatpush1.bf16.msra.mxu0 %v5520
      %7341 = vmatprep.subr.bf16.mxu0 %v5537
      %7342 = vmatpush1.bf16.msra.mxu0 %v5536
      %7343 = vmatprep.subr.bf16.mxu0 %v5553
      %7344 = vmatpush1.bf16.msra.mxu0 %v5552
      %7345 = vmatprep.subr.bf16.mxu0 %v5569
      %7346 = vmatpush1.bf16.msra.mxu0 %v5568
      %7347 = vmatprep.subr.bf16.mxu0 %v5585
      %7348 = vmatpush1.bf16.msra.mxu0 %v5584
      %7349 = vmatprep.subr.bf16.mxu0 %v5601
      %7350 = vmatpush1.bf16.msra.mxu0 %v5600
      %7351 = vmatprep.subr.bf16.mxu0 %v5617
      %7352 = vmatpush1.bf16.msra.mxu0 %v5616
      %7353 = vmatprep.subr.bf16.mxu0 %v5633
      %7354 = vmatpush1.bf16.msra.mxu0 %v5632
      %7355 = vmatprep.subr.bf16.mxu0 %v5649
      %7356 = vmatpush1.bf16.msra.mxu0 %v5648
      %7357 = vmatprep.subr.bf16.mxu0 %v5665
      %7358 = vmatpush1.bf16.msra.mxu0 %v5664
      %7359 = vmatprep.subr.bf16.mxu0 %v5681
      %7360 = vmatpush1.bf16.msra.mxu0 %v5680
      %7361 = vmatprep.mubr.bf16.mxu0 %v485
      %7362 = vmatmul.mubr.bf16.gmra.mrb[0].mxu0 %v484
      %v7363 = vpop.f32.mrb[0].mxu0
      %v7364 = vadd.f32 %v7323, %v7363
      %v7365 = vpop.f32.mrb[0].mxu0
      %v7366 = vadd.f32 %v7325, %v7365
      %v7367 = vpop.f32.mrb[0].mxu0
      %v7368 = vpop.f32.mrb[0].mxu0
      %7369 = vdwg.mxu0
      %7370 = vmatprep.subr.bf16.mxu0 %v4675
      %7371 = vmatpush1.bf16.msra.mxu0 %v4674
      %7372 = vmatprep.subr.bf16.mxu0 %v4691
      %7373 = vmatpush1.bf16.msra.mxu0 %v4690
      %7374 = vmatprep.subr.bf16.mxu0 %v4707
      %7375 = vmatpush1.bf16.msra.mxu0 %v4706
      %7376 = vmatprep.subr.bf16.mxu0 %v4723
      %7377 = vmatpush1.bf16.msra.mxu0 %v4722
      %7378 = vmatprep.subr.bf16.mxu0 %v4739
      %7379 = vmatpush1.bf16.msra.mxu0 %v4738
      %7380 = vmatprep.subr.bf16.mxu0 %v4755
      %7381 = vmatpush1.bf16.msra.mxu0 %v4754
      %7382 = vmatprep.subr.bf16.mxu0 %v4771
      %7383 = vmatpush1.bf16.msra.mxu0 %v4770
      %7384 = vmatprep.subr.bf16.mxu0 %v4787
      %7385 = vmatpush1.bf16.msra.mxu0 %v4786
      %7386 = vmatprep.subr.bf16.mxu0 %v4803
      %7387 = vmatpush1.bf16.msra.mxu0 %v4802
      %7388 = vmatprep.subr.bf16.mxu0 %v4819
      %7389 = vmatpush1.bf16.msra.mxu0 %v4818
      %7390 = vmatprep.subr.bf16.mxu0 %v4835
      %7391 = vmatpush1.bf16.msra.mxu0 %v4834
      %7392 = vmatprep.subr.bf16.mxu0 %v4851
      %7393 = vmatpush1.bf16.msra.mxu0 %v4850
      %7394 = vmatprep.subr.bf16.mxu0 %v4867
      %7395 = vmatpush1.bf16.msra.mxu0 %v4866
      %7396 = vmatprep.subr.bf16.mxu0 %v4883
      %7397 = vmatpush1.bf16.msra.mxu0 %v4882
      %7398 = vmatprep.subr.bf16.mxu0 %v4899
      %7399 = vmatpush1.bf16.msra.mxu0 %v4898
      %7400 = vmatprep.subr.bf16.mxu0 %v4915
      %7401 = vmatpush1.bf16.msra.mxu0 %v4914
      %7402 = vmatprep.mubr.bf16.mxu0 %v479
      %7403 = vmatmul.mubr.bf16.gmra.mrb[0].mxu0 %v478
      %v7404 = vpop.f32.mrb[0].mxu0
      %v7405 = vadd.f32 %v1549, %v7404
      %v7406 = vpop.f32.mrb[0].mxu0
      %v7407 = vadd.f32 %v1553, %v7406
      %v7408 = vpop.f32.mrb[0].mxu0
      %v7409 = vpop.f32.mrb[0].mxu0
      %7410 = vdwg.mxu0
      %7411 = vmatprep.subr.bf16.mxu0 %v4931
      %7412 = vmatpush1.bf16.msra.mxu0 %v4930
      %7413 = vmatprep.subr.bf16.mxu0 %v4947
      %7414 = vmatpush1.bf16.msra.mxu0 %v4946
      %7415 = vmatprep.subr.bf16.mxu0 %v4963
      %7416 = vmatpush1.bf16.msra.mxu0 %v4962
      %7417 = vmatprep.subr.bf16.mxu0 %v4979
      %7418 = vmatpush1.bf16.msra.mxu0 %v4978
      %7419 = vmatprep.subr.bf16.mxu0 %v4995
      %7420 = vmatpush1.bf16.msra.mxu0 %v4994
      %7421 = vmatprep.subr.bf16.mxu0 %v5011
      %7422 = vmatpush1.bf16.msra.mxu0 %v5010
      %7423 = vmatprep.subr.bf16.mxu0 %v5027
      %7424 = vmatpush1.bf16.msra.mxu0 %v5026
      %7425 = vmatprep.subr.bf16.mxu0 %v5043
      %7426 = vmatpush1.bf16.msra.mxu0 %v5042
      %7427 = vmatprep.subr.bf16.mxu0 %v5059
      %7428 = vmatpush1.bf16.msra.mxu0 %v5058
      %7429 = vmatprep.subr.bf16.mxu0 %v5075
      %7430 = vmatpush1.bf16.msra.mxu0 %v5074
      %7431 = vmatprep.subr.bf16.mxu0 %v5091
      %7432 = vmatpush1.bf16.msra.mxu0 %v5090
      %7433 = vmatprep.subr.bf16.mxu0 %v5107
      %7434 = vmatpush1.bf16.msra.mxu0 %v5106
      %7435 = vmatprep.subr.bf16.mxu0 %v5123
      %7436 = vmatpush1.bf16.msra.mxu0 %v5122
      %7437 = vmatprep.subr.bf16.mxu0 %v5139
      %7438 = vmatpush1.bf16.msra.mxu0 %v5138
      %7439 = vmatprep.subr.bf16.mxu0 %v5155
      %7440 = vmatpush1.bf16.msra.mxu0 %v5154
      %7441 = vmatprep.subr.bf16.mxu0 %v5171
      %7442 = vmatpush1.bf16.msra.mxu0 %v5170
      %7443 = vmatprep.mubr.bf16.mxu0 %v481
      %7444 = vmatmul.mubr.bf16.gmra.mrb[0].mxu0 %v480
      %v7445 = vpop.f32.mrb[0].mxu0
      %v7446 = vadd.f32 %v7405, %v7445
      %v7447 = vpop.f32.mrb[0].mxu0
      %v7448 = vadd.f32 %v7407, %v7447
      %v7449 = vpop.f32.mrb[0].mxu0
      %v7450 = vpop.f32.mrb[0].mxu0
      %7451 = vdwg.mxu0
      %7452 = vmatprep.subr.bf16.mxu0 %v5187
      %7453 = vmatpush1.bf16.msra.mxu0 %v5186
      %7454 = vmatprep.subr.bf16.mxu0 %v5203
      %7455 = vmatpush1.bf16.msra.mxu0 %v5202
      %7456 = vmatprep.subr.bf16.mxu0 %v5219
      %7457 = vmatpush1.bf16.msra.mxu0 %v5218
      %7458 = vmatprep.subr.bf16.mxu0 %v5235
      %7459 = vmatpush1.bf16.msra.mxu0 %v5234
      %7460 = vmatprep.subr.bf16.mxu0 %v5251
      %7461 = vmatpush1.bf16.msra.mxu0 %v5250
      %7462 = vmatprep.subr.bf16.mxu0 %v5267
      %7463 = vmatpush1.bf16.msra.mxu0 %v5266
      %7464 = vmatprep.subr.bf16.mxu0 %v5283
      %7465 = vmatpush1.bf16.msra.mxu0 %v5282
      %7466 = vmatprep.subr.bf16.mxu0 %v5299
      %7467 = vmatpush1.bf16.msra.mxu0 %v5298
      %7468 = vmatprep.subr.bf16.mxu0 %v5315
      %7469 = vmatpush1.bf16.msra.mxu0 %v5314
      %7470 = vmatprep.subr.bf16.mxu0 %v5331
      %7471 = vmatpush1.bf16.msra.mxu0 %v5330
      %7472 = vmatprep.subr.bf16.mxu0 %v5347
      %7473 = vmatpush1.bf16.msra.mxu0 %v5346
      %7474 = vmatprep.subr.bf16.mxu0 %v5363
      %7475 = vmatpush1.bf16.msra.mxu0 %v5362
      %7476 = vmatprep.subr.bf16.mxu0 %v5379
      %7477 = vmatpush1.bf16.msra.mxu0 %v5378
      %7478 = vmatprep.subr.bf16.mxu0 %v5395
      %7479 = vmatpush1.bf16.msra.mxu0 %v5394
      %7480 = vmatprep.subr.bf16.mxu0 %v5411
      %7481 = vmatpush1.bf16.msra.mxu0 %v5410
      %7482 = vmatprep.subr.bf16.mxu0 %v5427
      %7483 = vmatpush1.bf16.msra.mxu0 %v5426
      %7484 = vmatprep.mubr.bf16.mxu0 %v483
      %7485 = vmatmul.mubr.bf16.gmra.mrb[0].mxu0 %v482
      %v7486 = vpop.f32.mrb[0].mxu0
      %v7487 = vadd.f32 %v7446, %v7486
      %v7488 = vpop.f32.mrb[0].mxu0
      %v7489 = vadd.f32 %v7448, %v7488
      %v7490 = vpop.f32.mrb[0].mxu0
      %v7491 = vpop.f32.mrb[0].mxu0
      %7492 = vdwg.mxu0
      %7493 = vmatprep.subr.bf16.mxu0 %v5443
      %7494 = vmatpush1.bf16.msra.mxu0 %v5442
      %7495 = vmatprep.subr.bf16.mxu0 %v5459
      %7496 = vmatpush1.bf16.msra.mxu0 %v5458
      %7497 = vmatprep.subr.bf16.mxu0 %v5475
      %7498 = vmatpush1.bf16.msra.mxu0 %v5474
      %7499 = vmatprep.subr.bf16.mxu0 %v5491
      %7500 = vmatpush1.bf16.msra.mxu0 %v5490
      %7501 = vmatprep.subr.bf16.mxu0 %v5507
      %7502 = vmatpush1.bf16.msra.mxu0 %v5506
      %7503 = vmatprep.subr.bf16.mxu0 %v5523
      %7504 = vmatpush1.bf16.msra.mxu0 %v5522
      %7505 = vmatprep.subr.bf16.mxu0 %v5539
      %7506 = vmatpush1.bf16.msra.mxu0 %v5538
      %7507 = vmatprep.subr.bf16.mxu0 %v5555
      %7508 = vmatpush1.bf16.msra.mxu0 %v5554
      %7509 = vmatprep.subr.bf16.mxu0 %v5571
      %7510 = vmatpush1.bf16.msra.mxu0 %v5570
      %7511 = vmatprep.subr.bf16.mxu0 %v5587
      %7512 = vmatpush1.bf16.msra.mxu0 %v5586
      %7513 = vmatprep.subr.bf16.mxu0 %v5603
      %7514 = vmatpush1.bf16.msra.mxu0 %v5602
      %7515 = vmatprep.subr.bf16.mxu0 %v5619
      %7516 = vmatpush1.bf16.msra.mxu0 %v5618
      %7517 = vmatprep.subr.bf16.mxu0 %v5635
      %7518 = vmatpush1.bf16.msra.mxu0 %v5634
      %7519 = vmatprep.subr.bf16.mxu0 %v5651
      %7520 = vmatpush1.bf16.msra.mxu0 %v5650
      %7521 = vmatprep.subr.bf16.mxu0 %v5667
      %7522 = vmatpush1.bf16.msra.mxu0 %v5666
      %7523 = vmatprep.subr.bf16.mxu0 %v5683
      %7524 = vmatpush1.bf16.msra.mxu0 %v5682
      %7525 = vmatprep.mubr.bf16.mxu0 %v485
      %7526 = vmatmul.mubr.bf16.gmra.mrb[0].mxu0 %v484
      %v7527 = vpop.f32.mrb[0].mxu0
      %v7528 = vadd.f32 %v7487, %v7527
      %v7529 = vpop.f32.mrb[0].mxu0
      %v7530 = vadd.f32 %v7489, %v7529
      %v7531 = vpop.f32.mrb[0].mxu0
      %v7532 = vpop.f32.mrb[0].mxu0
      %7533 = vdwg.mxu0
      %7534 = vmatprep.subr.bf16.mxu0 %v4677
      %7535 = vmatpush1.bf16.msra.mxu0 %v4676
      %7536 = vmatprep.subr.bf16.mxu0 %v4693
      %7537 = vmatpush1.bf16.msra.mxu0 %v4692
      %7538 = vmatprep.subr.bf16.mxu0 %v4709
      %7539 = vmatpush1.bf16.msra.mxu0 %v4708
      %7540 = vmatprep.subr.bf16.mxu0 %v4725
      %7541 = vmatpush1.bf16.msra.mxu0 %v4724
      %7542 = vmatprep.subr.bf16.mxu0 %v4741
      %7543 = vmatpush1.bf16.msra.mxu0 %v4740
      %7544 = vmatprep.subr.bf16.mxu0 %v4757
      %7545 = vmatpush1.bf16.msra.mxu0 %v4756
      %7546 = vmatprep.subr.bf16.mxu0 %v4773
      %7547 = vmatpush1.bf16.msra.mxu0 %v4772
      %7548 = vmatprep.subr.bf16.mxu0 %v4789
      %7549 = vmatpush1.bf16.msra.mxu0 %v4788
      %7550 = vmatprep.subr.bf16.mxu0 %v4805
      %7551 = vmatpush1.bf16.msra.mxu0 %v4804
      %7552 = vmatprep.subr.bf16.mxu0 %v4821
      %7553 = vmatpush1.bf16.msra.mxu0 %v4820
      %7554 = vmatprep.subr.bf16.mxu0 %v4837
      %7555 = vmatpush1.bf16.msra.mxu0 %v4836
      %7556 = vmatprep.subr.bf16.mxu0 %v4853
      %7557 = vmatpush1.bf16.msra.mxu0 %v4852
      %7558 = vmatprep.subr.bf16.mxu0 %v4869
      %7559 = vmatpush1.bf16.msra.mxu0 %v4868
      %7560 = vmatprep.subr.bf16.mxu0 %v4885
      %7561 = vmatpush1.bf16.msra.mxu0 %v4884
      %7562 = vmatprep.subr.bf16.mxu0 %v4901
      %7563 = vmatpush1.bf16.msra.mxu0 %v4900
      %7564 = vmatprep.subr.bf16.mxu0 %v4917
      %7565 = vmatpush1.bf16.msra.mxu0 %v4916
      %7566 = vmatprep.mubr.bf16.mxu0 %v479
      %7567 = vmatmul.mubr.bf16.gmra.mrb[0].mxu0 %v478
      %v7568 = vpop.f32.mrb[0].mxu0
      %v7569 = vadd.f32 %v1557, %v7568
      %v7570 = vpop.f32.mrb[0].mxu0
      %v7571 = vadd.f32 %v1561, %v7570
      %v7572 = vpop.f32.mrb[0].mxu0
      %v7573 = vpop.f32.mrb[0].mxu0
      %7574 = vdwg.mxu0
      %7575 = vmatprep.subr.bf16.mxu0 %v4933
      %7576 = vmatpush1.bf16.msra.mxu0 %v4932
      %7577 = vmatprep.subr.bf16.mxu0 %v4949
      %7578 = vmatpush1.bf16.msra.mxu0 %v4948
      %7579 = vmatprep.subr.bf16.mxu0 %v4965
      %7580 = vmatpush1.bf16.msra.mxu0 %v4964
      %7581 = vmatprep.subr.bf16.mxu0 %v4981
      %7582 = vmatpush1.bf16.msra.mxu0 %v4980
      %7583 = vmatprep.subr.bf16.mxu0 %v4997
      %7584 = vmatpush1.bf16.msra.mxu0 %v4996
      %7585 = vmatprep.subr.bf16.mxu0 %v5013
      %7586 = vmatpush1.bf16.msra.mxu0 %v5012
      %7587 = vmatprep.subr.bf16.mxu0 %v5029
      %7588 = vmatpush1.bf16.msra.mxu0 %v5028
      %7589 = vmatprep.subr.bf16.mxu0 %v5045
      %7590 = vmatpush1.bf16.msra.mxu0 %v5044
      %7591 = vmatprep.subr.bf16.mxu0 %v5061
      %7592 = vmatpush1.bf16.msra.mxu0 %v5060
      %7593 = vmatprep.subr.bf16.mxu0 %v5077
      %7594 = vmatpush1.bf16.msra.mxu0 %v5076
      %7595 = vmatprep.subr.bf16.mxu0 %v5093
      %7596 = vmatpush1.bf16.msra.mxu0 %v5092
      %7597 = vmatprep.subr.bf16.mxu0 %v5109
      %7598 = vmatpush1.bf16.msra.mxu0 %v5108
      %7599 = vmatprep.subr.bf16.mxu0 %v5125
      %7600 = vmatpush1.bf16.msra.mxu0 %v5124
      %7601 = vmatprep.subr.bf16.mxu0 %v5141
      %7602 = vmatpush1.bf16.msra.mxu0 %v5140
      %7603 = vmatprep.subr.bf16.mxu0 %v5157
      %7604 = vmatpush1.bf16.msra.mxu0 %v5156
      %7605 = vmatprep.subr.bf16.mxu0 %v5173
      %7606 = vmatpush1.bf16.msra.mxu0 %v5172
      %7607 = vmatprep.mubr.bf16.mxu0 %v481
      %7608 = vmatmul.mubr.bf16.gmra.mrb[0].mxu0 %v480
      %v7609 = vpop.f32.mrb[0].mxu0
      %v7610 = vadd.f32 %v7569, %v7609
      %v7611 = vpop.f32.mrb[0].mxu0
      %v7612 = vadd.f32 %v7571, %v7611
      %v7613 = vpop.f32.mrb[0].mxu0
      %v7614 = vpop.f32.mrb[0].mxu0
      %7615 = vdwg.mxu0
      %7616 = vmatprep.subr.bf16.mxu0 %v5189
      %7617 = vmatpush1.bf16.msra.mxu0 %v5188
      %7618 = vmatprep.subr.bf16.mxu0 %v5205
      %7619 = vmatpush1.bf16.msra.mxu0 %v5204
      %7620 = vmatprep.subr.bf16.mxu0 %v5221
      %7621 = vmatpush1.bf16.msra.mxu0 %v5220
      %7622 = vmatprep.subr.bf16.mxu0 %v5237
      %7623 = vmatpush1.bf16.msra.mxu0 %v5236
      %7624 = vmatprep.subr.bf16.mxu0 %v5253
      %7625 = vmatpush1.bf16.msra.mxu0 %v5252
      %7626 = vmatprep.subr.bf16.mxu0 %v5269
      %7627 = vmatpush1.bf16.msra.mxu0 %v5268
      %7628 = vmatprep.subr.bf16.mxu0 %v5285
      %7629 = vmatpush1.bf16.msra.mxu0 %v5284
      %7630 = vmatprep.subr.bf16.mxu0 %v5301
      %7631 = vmatpush1.bf16.msra.mxu0 %v5300
      %7632 = vmatprep.subr.bf16.mxu0 %v5317
      %7633 = vmatpush1.bf16.msra.mxu0 %v5316
      %7634 = vmatprep.subr.bf16.mxu0 %v5333
      %7635 = vmatpush1.bf16.msra.mxu0 %v5332
      %7636 = vmatprep.subr.bf16.mxu0 %v5349
      %7637 = vmatpush1.bf16.msra.mxu0 %v5348
      %7638 = vmatprep.subr.bf16.mxu0 %v5365
      %7639 = vmatpush1.bf16.msra.mxu0 %v5364
      %7640 = vmatprep.subr.bf16.mxu0 %v5381
      %7641 = vmatpush1.bf16.msra.mxu0 %v5380
      %7642 = vmatprep.subr.bf16.mxu0 %v5397
      %7643 = vmatpush1.bf16.msra.mxu0 %v5396
      %7644 = vmatprep.subr.bf16.mxu0 %v5413
      %7645 = vmatpush1.bf16.msra.mxu0 %v5412
      %7646 = vmatprep.subr.bf16.mxu0 %v5429
      %7647 = vmatpush1.bf16.msra.mxu0 %v5428
      %7648 = vmatprep.mubr.bf16.mxu0 %v483
      %7649 = vmatmul.mubr.bf16.gmra.mrb[0].mxu0 %v482
      %v7650 = vpop.f32.mrb[0].mxu0
      %v7651 = vadd.f32 %v7610, %v7650
      %v7652 = vpop.f32.mrb[0].mxu0
      %v7653 = vadd.f32 %v7612, %v7652
      %v7654 = vpop.f32.mrb[0].mxu0
      %v7655 = vpop.f32.mrb[0].mxu0
      %7656 = vdwg.mxu0
      %7657 = vmatprep.subr.bf16.mxu0 %v5445
      %7658 = vmatpush1.bf16.msra.mxu0 %v5444
      %7659 = vmatprep.subr.bf16.mxu0 %v5461
      %7660 = vmatpush1.bf16.msra.mxu0 %v5460
      %7661 = vmatprep.subr.bf16.mxu0 %v5477
      %7662 = vmatpush1.bf16.msra.mxu0 %v5476
      %7663 = vmatprep.subr.bf16.mxu0 %v5493
      %7664 = vmatpush1.bf16.msra.mxu0 %v5492
      %7665 = vmatprep.subr.bf16.mxu0 %v5509
      %7666 = vmatpush1.bf16.msra.mxu0 %v5508
      %7667 = vmatprep.subr.bf16.mxu0 %v5525
      %7668 = vmatpush1.bf16.msra.mxu0 %v5524
      %7669 = vmatprep.subr.bf16.mxu0 %v5541
      %7670 = vmatpush1.bf16.msra.mxu0 %v5540
      %7671 = vmatprep.subr.bf16.mxu0 %v5557
      %7672 = vmatpush1.bf16.msra.mxu0 %v5556
      %7673 = vmatprep.subr.bf16.mxu0 %v5573
      %7674 = vmatpush1.bf16.msra.mxu0 %v5572
      %7675 = vmatprep.subr.bf16.mxu0 %v5589
      %7676 = vmatpush1.bf16.msra.mxu0 %v5588
      %7677 = vmatprep.subr.bf16.mxu0 %v5605
      %7678 = vmatpush1.bf16.msra.mxu0 %v5604
      %7679 = vmatprep.subr.bf16.mxu0 %v5621
      %7680 = vmatpush1.bf16.msra.mxu0 %v5620
      %7681 = vmatprep.subr.bf16.mxu0 %v5637
      %7682 = vmatpush1.bf16.msra.mxu0 %v5636
      %7683 = vmatprep.subr.bf16.mxu0 %v5653
      %7684 = vmatpush1.bf16.msra.mxu0 %v5652
      %7685 = vmatprep.subr.bf16.mxu0 %v5669
      %7686 = vmatpush1.bf16.msra.mxu0 %v5668
      %7687 = vmatprep.subr.bf16.mxu0 %v5685
      %7688 = vmatpush1.bf16.msra.mxu0 %v5684
      %7689 = vmatprep.mubr.bf16.mxu0 %v485
      %7690 = vmatmul.mubr.bf16.gmra.mrb[0].mxu0 %v484
      %v7691 = vpop.f32.mrb[0].mxu0
      %v7692 = vadd.f32 %v7651, %v7691
      %v7693 = vpop.f32.mrb[0].mxu0
      %v7694 = vadd.f32 %v7653, %v7693
      %v7695 = vpop.f32.mrb[0].mxu0
      %v7696 = vpop.f32.mrb[0].mxu0
      %7697 = vdwg.mxu0
      %7698 = vmatprep.subr.bf16.mxu0 %v4679
      %7699 = vmatpush1.bf16.msra.mxu0 %v4678
      %7700 = vmatprep.subr.bf16.mxu0 %v4695
      %7701 = vmatpush1.bf16.msra.mxu0 %v4694
      %7702 = vmatprep.subr.bf16.mxu0 %v4711
      %7703 = vmatpush1.bf16.msra.mxu0 %v4710
      %7704 = vmatprep.subr.bf16.mxu0 %v4727
      %7705 = vmatpush1.bf16.msra.mxu0 %v4726
      %7706 = vmatprep.subr.bf16.mxu0 %v4743
      %7707 = vmatpush1.bf16.msra.mxu0 %v4742
      %7708 = vmatprep.subr.bf16.mxu0 %v4759
      %7709 = vmatpush1.bf16.msra.mxu0 %v4758
      %7710 = vmatprep.subr.bf16.mxu0 %v4775
      %7711 = vmatpush1.bf16.msra.mxu0 %v4774
      %7712 = vmatprep.subr.bf16.mxu0 %v4791
      %7713 = vmatpush1.bf16.msra.mxu0 %v4790
      %7714 = vmatprep.subr.bf16.mxu0 %v4807
      %7715 = vmatpush1.bf16.msra.mxu0 %v4806
      %7716 = vmatprep.subr.bf16.mxu0 %v4823
      %7717 = vmatpush1.bf16.msra.mxu0 %v4822
      %7718 = vmatprep.subr.bf16.mxu0 %v4839
      %7719 = vmatpush1.bf16.msra.mxu0 %v4838
      %7720 = vmatprep.subr.bf16.mxu0 %v4855
      %7721 = vmatpush1.bf16.msra.mxu0 %v4854
      %7722 = vmatprep.subr.bf16.mxu0 %v4871
      %7723 = vmatpush1.bf16.msra.mxu0 %v4870
      %7724 = vmatprep.subr.bf16.mxu0 %v4887
      %7725 = vmatpush1.bf16.msra.mxu0 %v4886
      %7726 = vmatprep.subr.bf16.mxu0 %v4903
      %7727 = vmatpush1.bf16.msra.mxu0 %v4902
      %7728 = vmatprep.subr.bf16.mxu0 %v4919
      %7729 = vmatpush1.bf16.msra.mxu0 %v4918
      %7730 = vmatprep.mubr.bf16.mxu0 %v479
      %7731 = vmatmul.mubr.bf16.gmra.mrb[0].mxu0 %v478
      %v7732 = vpop.f32.mrb[0].mxu0
      %v7733 = vadd.f32 %v1565, %v7732
      %v7734 = vpop.f32.mrb[0].mxu0
      %v7735 = vadd.f32 %v1569, %v7734
      %v7736 = vpop.f32.mrb[0].mxu0
      %v7737 = vpop.f32.mrb[0].mxu0
      %7738 = vdwg.mxu0
      %7739 = vmatprep.subr.bf16.mxu0 %v4935
      %7740 = vmatpush1.bf16.msra.mxu0 %v4934
      %7741 = vmatprep.subr.bf16.mxu0 %v4951
      %7742 = vmatpush1.bf16.msra.mxu0 %v4950
      %7743 = vmatprep.subr.bf16.mxu0 %v4967
      %7744 = vmatpush1.bf16.msra.mxu0 %v4966
      %7745 = vmatprep.subr.bf16.mxu0 %v4983
      %7746 = vmatpush1.bf16.msra.mxu0 %v4982
      %7747 = vmatprep.subr.bf16.mxu0 %v4999
      %7748 = vmatpush1.bf16.msra.mxu0 %v4998
      %7749 = vmatprep.subr.bf16.mxu0 %v5015
      %7750 = vmatpush1.bf16.msra.mxu0 %v5014
      %7751 = vmatprep.subr.bf16.mxu0 %v5031
      %7752 = vmatpush1.bf16.msra.mxu0 %v5030
      %7753 = vmatprep.subr.bf16.mxu0 %v5047
      %7754 = vmatpush1.bf16.msra.mxu0 %v5046
      %7755 = vmatprep.subr.bf16.mxu0 %v5063
      %7756 = vmatpush1.bf16.msra.mxu0 %v5062
      %7757 = vmatprep.subr.bf16.mxu0 %v5079
      %7758 = vmatpush1.bf16.msra.mxu0 %v5078
      %7759 = vmatprep.subr.bf16.mxu0 %v5095
      %7760 = vmatpush1.bf16.msra.mxu0 %v5094
      %7761 = vmatprep.subr.bf16.mxu0 %v5111
      %7762 = vmatpush1.bf16.msra.mxu0 %v5110
      %7763 = vmatprep.subr.bf16.mxu0 %v5127
      %7764 = vmatpush1.bf16.msra.mxu0 %v5126
      %7765 = vmatprep.subr.bf16.mxu0 %v5143
      %7766 = vmatpush1.bf16.msra.mxu0 %v5142
      %7767 = vmatprep.subr.bf16.mxu0 %v5159
      %7768 = vmatpush1.bf16.msra.mxu0 %v5158
      %7769 = vmatprep.subr.bf16.mxu0 %v5175
      %7770 = vmatpush1.bf16.msra.mxu0 %v5174
      %7771 = vmatprep.mubr.bf16.mxu0 %v481
      %7772 = vmatmul.mubr.bf16.gmra.mrb[0].mxu0 %v480
      %v7773 = vpop.f32.mrb[0].mxu0
      %v7774 = vadd.f32 %v7733, %v7773
      %v7775 = vpop.f32.mrb[0].mxu0
      %v7776 = vadd.f32 %v7735, %v7775
      %v7777 = vpop.f32.mrb[0].mxu0
      %v7778 = vpop.f32.mrb[0].mxu0
      %7779 = vdwg.mxu0
      %7780 = vmatprep.subr.bf16.mxu0 %v5191
      %7781 = vmatpush1.bf16.msra.mxu0 %v5190
      %7782 = vmatprep.subr.bf16.mxu0 %v5207
      %7783 = vmatpush1.bf16.msra.mxu0 %v5206
      %7784 = vmatprep.subr.bf16.mxu0 %v5223
      %7785 = vmatpush1.bf16.msra.mxu0 %v5222
      %7786 = vmatprep.subr.bf16.mxu0 %v5239
      %7787 = vmatpush1.bf16.msra.mxu0 %v5238
      %7788 = vmatprep.subr.bf16.mxu0 %v5255
      %7789 = vmatpush1.bf16.msra.mxu0 %v5254
      %7790 = vmatprep.subr.bf16.mxu0 %v5271
      %7791 = vmatpush1.bf16.msra.mxu0 %v5270
      %7792 = vmatprep.subr.bf16.mxu0 %v5287
      %7793 = vmatpush1.bf16.msra.mxu0 %v5286
      %7794 = vmatprep.subr.bf16.mxu0 %v5303
      %7795 = vmatpush1.bf16.msra.mxu0 %v5302
      %7796 = vmatprep.subr.bf16.mxu0 %v5319
      %7797 = vmatpush1.bf16.msra.mxu0 %v5318
      %7798 = vmatprep.subr.bf16.mxu0 %v5335
      %7799 = vmatpush1.bf16.msra.mxu0 %v5334
      %7800 = vmatprep.subr.bf16.mxu0 %v5351
      %7801 = vmatpush1.bf16.msra.mxu0 %v5350
      %7802 = vmatprep.subr.bf16.mxu0 %v5367
      %7803 = vmatpush1.bf16.msra.mxu0 %v5366
      %7804 = vmatprep.subr.bf16.mxu0 %v5383
      %7805 = vmatpush1.bf16.msra.mxu0 %v5382
      %7806 = vmatprep.subr.bf16.mxu0 %v5399
      %7807 = vmatpush1.bf16.msra.mxu0 %v5398
      %7808 = vmatprep.subr.bf16.mxu0 %v5415
      %7809 = vmatpush1.bf16.msra.mxu0 %v5414
      %7810 = vmatprep.subr.bf16.mxu0 %v5431
      %7811 = vmatpush1.bf16.msra.mxu0 %v5430
      %7812 = vmatprep.mubr.bf16.mxu0 %v483
      %7813 = vmatmul.mubr.bf16.gmra.mrb[0].mxu0 %v482
      %v7814 = vpop.f32.mrb[0].mxu0
      %v7815 = vadd.f32 %v7774, %v7814
      %v7816 = vpop.f32.mrb[0].mxu0
      %v7817 = vadd.f32 %v7776, %v7816
      %v7818 = vpop.f32.mrb[0].mxu0
      %v7819 = vpop.f32.mrb[0].mxu0
      %7820 = vdwg.mxu0
      %7821 = vmatprep.subr.bf16.mxu0 %v5447
      %7822 = vmatpush1.bf16.msra.mxu0 %v5446
      %7823 = vmatprep.subr.bf16.mxu0 %v5463
      %7824 = vmatpush1.bf16.msra.mxu0 %v5462
      %7825 = vmatprep.subr.bf16.mxu0 %v5479
      %7826 = vmatpush1.bf16.msra.mxu0 %v5478
      %7827 = vmatprep.subr.bf16.mxu0 %v5495
      %7828 = vmatpush1.bf16.msra.mxu0 %v5494
      %7829 = vmatprep.subr.bf16.mxu0 %v5511
      %7830 = vmatpush1.bf16.msra.mxu0 %v5510
      %7831 = vmatprep.subr.bf16.mxu0 %v5527
      %7832 = vmatpush1.bf16.msra.mxu0 %v5526
      %7833 = vmatprep.subr.bf16.mxu0 %v5543
      %7834 = vmatpush1.bf16.msra.mxu0 %v5542
      %7835 = vmatprep.subr.bf16.mxu0 %v5559
      %7836 = vmatpush1.bf16.msra.mxu0 %v5558
      %7837 = vmatprep.subr.bf16.mxu0 %v5575
      %7838 = vmatpush1.bf16.msra.mxu0 %v5574
      %7839 = vmatprep.subr.bf16.mxu0 %v5591
      %7840 = vmatpush1.bf16.msra.mxu0 %v5590
      %7841 = vmatprep.subr.bf16.mxu0 %v5607
      %7842 = vmatpush1.bf16.msra.mxu0 %v5606
      %7843 = vmatprep.subr.bf16.mxu0 %v5623
      %7844 = vmatpush1.bf16.msra.mxu0 %v5622
      %7845 = vmatprep.subr.bf16.mxu0 %v5639
      %7846 = vmatpush1.bf16.msra.mxu0 %v5638
      %7847 = vmatprep.subr.bf16.mxu0 %v5655
      %7848 = vmatpush1.bf16.msra.mxu0 %v5654
      %7849 = vmatprep.subr.bf16.mxu0 %v5671
      %7850 = vmatpush1.bf16.msra.mxu0 %v5670
      %7851 = vmatprep.subr.bf16.mxu0 %v5687
      %7852 = vmatpush1.bf16.msra.mxu0 %v5686
      %7853 = vmatprep.mubr.bf16.mxu0 %v485
      %7854 = vmatmul.mubr.bf16.gmra.mrb[0].mxu0 %v484
      %v7855 = vpop.f32.mrb[0].mxu0
      %v7856 = vadd.f32 %v7815, %v7855
      %v7857 = vpop.f32.mrb[0].mxu0
      %v7858 = vadd.f32 %v7817, %v7857
      %v7859 = vpop.f32.mrb[0].mxu0
      %v7860 = vpop.f32.mrb[0].mxu0
      %7861 = vdwg.mxu0
      %7862 = vmatprep.subr.bf16.mxu0 %v4681
      %7863 = vmatpush1.bf16.msra.mxu0 %v4680
      %7864 = vmatprep.subr.bf16.mxu0 %v4697
      %7865 = vmatpush1.bf16.msra.mxu0 %v4696
      %7866 = vmatprep.subr.bf16.mxu0 %v4713
      %7867 = vmatpush1.bf16.msra.mxu0 %v4712
      %7868 = vmatprep.subr.bf16.mxu0 %v4729
      %7869 = vmatpush1.bf16.msra.mxu0 %v4728
      %7870 = vmatprep.subr.bf16.mxu0 %v4745
      %7871 = vmatpush1.bf16.msra.mxu0 %v4744
      %7872 = vmatprep.subr.bf16.mxu0 %v4761
      %7873 = vmatpush1.bf16.msra.mxu0 %v4760
      %7874 = vmatprep.subr.bf16.mxu0 %v4777
      %7875 = vmatpush1.bf16.msra.mxu0 %v4776
      %7876 = vmatprep.subr.bf16.mxu0 %v4793
      %7877 = vmatpush1.bf16.msra.mxu0 %v4792
      %7878 = vmatprep.subr.bf16.mxu0 %v4809
      %7879 = vmatpush1.bf16.msra.mxu0 %v4808
      %7880 = vmatprep.subr.bf16.mxu0 %v4825
      %7881 = vmatpush1.bf16.msra.mxu0 %v4824
      %7882 = vmatprep.subr.bf16.mxu0 %v4841
      %7883 = vmatpush1.bf16.msra.mxu0 %v4840
      %7884 = vmatprep.subr.bf16.mxu0 %v4857
      %7885 = vmatpush1.bf16.msra.mxu0 %v4856
      %7886 = vmatprep.subr.bf16.mxu0 %v4873
      %7887 = vmatpush1.bf16.msra.mxu0 %v4872
      %7888 = vmatprep.subr.bf16.mxu0 %v4889
      %7889 = vmatpush1.bf16.msra.mxu0 %v4888
      %7890 = vmatprep.subr.bf16.mxu0 %v4905
      %7891 = vmatpush1.bf16.msra.mxu0 %v4904
      %7892 = vmatprep.subr.bf16.mxu0 %v4921
      %7893 = vmatpush1.bf16.msra.mxu0 %v4920
      %7894 = vmatprep.mubr.bf16.mxu0 %v479
      %7895 = vmatmul.mubr.bf16.gmra.mrb[0].mxu0 %v478
      %v7896 = vpop.f32.mrb[0].mxu0
      %v7897 = vadd.f32 %v1573, %v7896
      %v7898 = vpop.f32.mrb[0].mxu0
      %v7899 = vadd.f32 %v1577, %v7898
      %v7900 = vpop.f32.mrb[0].mxu0
      %v7901 = vpop.f32.mrb[0].mxu0
      %7902 = vdwg.mxu0
      %7903 = vmatprep.subr.bf16.mxu0 %v4937
      %7904 = vmatpush1.bf16.msra.mxu0 %v4936
      %7905 = vmatprep.subr.bf16.mxu0 %v4953
      %7906 = vmatpush1.bf16.msra.mxu0 %v4952
      %7907 = vmatprep.subr.bf16.mxu0 %v4969
      %7908 = vmatpush1.bf16.msra.mxu0 %v4968
      %7909 = vmatprep.subr.bf16.mxu0 %v4985
      %7910 = vmatpush1.bf16.msra.mxu0 %v4984
      %7911 = vmatprep.subr.bf16.mxu0 %v5001
      %7912 = vmatpush1.bf16.msra.mxu0 %v5000
      %7913 = vmatprep.subr.bf16.mxu0 %v5017
      %7914 = vmatpush1.bf16.msra.mxu0 %v5016
      %7915 = vmatprep.subr.bf16.mxu0 %v5033
      %7916 = vmatpush1.bf16.msra.mxu0 %v5032
      %7917 = vmatprep.subr.bf16.mxu0 %v5049
      %7918 = vmatpush1.bf16.msra.mxu0 %v5048
      %7919 = vmatprep.subr.bf16.mxu0 %v5065
      %7920 = vmatpush1.bf16.msra.mxu0 %v5064
      %7921 = vmatprep.subr.bf16.mxu0 %v5081
      %7922 = vmatpush1.bf16.msra.mxu0 %v5080
      %7923 = vmatprep.subr.bf16.mxu0 %v5097
      %7924 = vmatpush1.bf16.msra.mxu0 %v5096
      %7925 = vmatprep.subr.bf16.mxu0 %v5113
      %7926 = vmatpush1.bf16.msra.mxu0 %v5112
      %7927 = vmatprep.subr.bf16.mxu0 %v5129
      %7928 = vmatpush1.bf16.msra.mxu0 %v5128
      %7929 = vmatprep.subr.bf16.mxu0 %v5145
      %7930 = vmatpush1.bf16.msra.mxu0 %v5144
      %7931 = vmatprep.subr.bf16.mxu0 %v5161
      %7932 = vmatpush1.bf16.msra.mxu0 %v5160
      %7933 = vmatprep.subr.bf16.mxu0 %v5177
      %7934 = vmatpush1.bf16.msra.mxu0 %v5176
      %7935 = vmatprep.mubr.bf16.mxu0 %v481
      %7936 = vmatmul.mubr.bf16.gmra.mrb[0].mxu0 %v480
      %v7937 = vpop.f32.mrb[0].mxu0
      %v7938 = vadd.f32 %v7897, %v7937
      %v7939 = vpop.f32.mrb[0].mxu0
      %v7940 = vadd.f32 %v7899, %v7939
      %v7941 = vpop.f32.mrb[0].mxu0
      %v7942 = vpop.f32.mrb[0].mxu0
      %7943 = vdwg.mxu0
      %7944 = vmatprep.subr.bf16.mxu0 %v5193
      %7945 = vmatpush1.bf16.msra.mxu0 %v5192
      %7946 = vmatprep.subr.bf16.mxu0 %v5209
      %7947 = vmatpush1.bf16.msra.mxu0 %v5208
      %7948 = vmatprep.subr.bf16.mxu0 %v5225
      %7949 = vmatpush1.bf16.msra.mxu0 %v5224
      %7950 = vmatprep.subr.bf16.mxu0 %v5241
      %7951 = vmatpush1.bf16.msra.mxu0 %v5240
      %7952 = vmatprep.subr.bf16.mxu0 %v5257
      %7953 = vmatpush1.bf16.msra.mxu0 %v5256
      %7954 = vmatprep.subr.bf16.mxu0 %v5273
      %7955 = vmatpush1.bf16.msra.mxu0 %v5272
      %7956 = vmatprep.subr.bf16.mxu0 %v5289
      %7957 = vmatpush1.bf16.msra.mxu0 %v5288
      %7958 = vmatprep.subr.bf16.mxu0 %v5305
      %7959 = vmatpush1.bf16.msra.mxu0 %v5304
      %7960 = vmatprep.subr.bf16.mxu0 %v5321
      %7961 = vmatpush1.bf16.msra.mxu0 %v5320
      %7962 = vmatprep.subr.bf16.mxu0 %v5337
      %7963 = vmatpush1.bf16.msra.mxu0 %v5336
      %7964 = vmatprep.subr.bf16.mxu0 %v5353
      %7965 = vmatpush1.bf16.msra.mxu0 %v5352
      %7966 = vmatprep.subr.bf16.mxu0 %v5369
      %7967 = vmatpush1.bf16.msra.mxu0 %v5368
      %7968 = vmatprep.subr.bf16.mxu0 %v5385
      %7969 = vmatpush1.bf16.msra.mxu0 %v5384
      %7970 = vmatprep.subr.bf16.mxu0 %v5401
      %7971 = vmatpush1.bf16.msra.mxu0 %v5400
      %7972 = vmatprep.subr.bf16.mxu0 %v5417
      %7973 = vmatpush1.bf16.msra.mxu0 %v5416
      %7974 = vmatprep.subr.bf16.mxu0 %v5433
      %7975 = vmatpush1.bf16.msra.mxu0 %v5432
      %7976 = vmatprep.mubr.bf16.mxu0 %v483
      %7977 = vmatmul.mubr.bf16.gmra.mrb[0].mxu0 %v482
      %v7978 = vpop.f32.mrb[0].mxu0
      %v7979 = vadd.f32 %v7938, %v7978
      %v7980 = vpop.f32.mrb[0].mxu0
      %v7981 = vadd.f32 %v7940, %v7980
      %v7982 = vpop.f32.mrb[0].mxu0
      %v7983 = vpop.f32.mrb[0].mxu0
      %7984 = vdwg.mxu0
      %7985 = vmatprep.subr.bf16.mxu0 %v5449
      %7986 = vmatpush1.bf16.msra.mxu0 %v5448
      %7987 = vmatprep.subr.bf16.mxu0 %v5465
      %7988 = vmatpush1.bf16.msra.mxu0 %v5464
      %7989 = vmatprep.subr.bf16.mxu0 %v5481
      %7990 = vmatpush1.bf16.msra.mxu0 %v5480
      %7991 = vmatprep.subr.bf16.mxu0 %v5497
      %7992 = vmatpush1.bf16.msra.mxu0 %v5496
      %7993 = vmatprep.subr.bf16.mxu0 %v5513
      %7994 = vmatpush1.bf16.msra.mxu0 %v5512
      %7995 = vmatprep.subr.bf16.mxu0 %v5529
      %7996 = vmatpush1.bf16.msra.mxu0 %v5528
      %7997 = vmatprep.subr.bf16.mxu0 %v5545
      %7998 = vmatpush1.bf16.msra.mxu0 %v5544
      %7999 = vmatprep.subr.bf16.mxu0 %v5561
      %8000 = vmatpush1.bf16.msra.mxu0 %v5560
      %8001 = vmatprep.subr.bf16.mxu0 %v5577
      %8002 = vmatpush1.bf16.msra.mxu0 %v5576
      %8003 = vmatprep.subr.bf16.mxu0 %v5593
      %8004 = vmatpush1.bf16.msra.mxu0 %v5592
      %8005 = vmatprep.subr.bf16.mxu0 %v5609
      %8006 = vmatpush1.bf16.msra.mxu0 %v5608
      %8007 = vmatprep.subr.bf16.mxu0 %v5625
      %8008 = vmatpush1.bf16.msra.mxu0 %v5624
      %8009 = vmatprep.subr.bf16.mxu0 %v5641
      %8010 = vmatpush1.bf16.msra.mxu0 %v5640
      %8011 = vmatprep.subr.bf16.mxu0 %v5657
      %8012 = vmatpush1.bf16.msra.mxu0 %v5656
      %8013 = vmatprep.subr.bf16.mxu0 %v5673
      %8014 = vmatpush1.bf16.msra.mxu0 %v5672
      %8015 = vmatprep.subr.bf16.mxu0 %v5689
      %8016 = vmatpush1.bf16.msra.mxu0 %v5688
      %8017 = vmatprep.mubr.bf16.mxu0 %v485
      %8018 = vmatmul.mubr.bf16.gmra.mrb[0].mxu0 %v484
      %v8019 = vpop.f32.mrb[0].mxu0
      %v8020 = vadd.f32 %v7979, %v8019
      %v8021 = vpop.f32.mrb[0].mxu0
      %v8022 = vadd.f32 %v7981, %v8021
      %v8023 = vpop.f32.mrb[0].mxu0
      %v8024 = vpop.f32.mrb[0].mxu0
      %8025 = vdwg.mxu0
      %v8026 = vmax.f32 %v6872, 0.0
      %v8027 = vmax.f32 %v6874, 0.0
      %v8028 = vmax.f32 %v7036, 0.0
      %v8029 = vmax.f32 %v7038, 0.0
      %v8030 = vmax.f32 %v7200, 0.0
      %v8031 = vmax.f32 %v7202, 0.0
      %v8032 = vmax.f32 %v7364, 0.0
      %v8033 = vmax.f32 %v7366, 0.0
      %v8034 = vmax.f32 %v7528, 0.0
      %v8035 = vmax.f32 %v7530, 0.0
      %v8036 = vmax.f32 %v7692, 0.0
      %v8037 = vmax.f32 %v7694, 0.0
      %v8038 = vmax.f32 %v7856, 0.0
      %v8039 = vmax.f32 %v7858, 0.0
      %v8040 = vmax.f32 %v8020, 0.0
      %v8041 = vmax.f32 %v8022, 0.0
      %v8042 = vpack.c.bf16 %v8026, %v8026
      %v8043 = vpack.c.bf16 %v8027, %v8027
      %v8044 = vpack.c.bf16 %v8028, %v8028
      %v8045 = vpack.c.bf16 %v8029, %v8029
      %v8046 = vpack.c.bf16 %v8030, %v8030
      %v8047 = vpack.c.bf16 %v8031, %v8031
      %v8048 = vpack.c.bf16 %v8032, %v8032
      %v8049 = vpack.c.bf16 %v8033, %v8033
      %v8050 = vpack.c.bf16 %v8034, %v8034
      %v8051 = vpack.c.bf16 %v8035, %v8035
      %v8052 = vpack.c.bf16 %v8036, %v8036
      %v8053 = vpack.c.bf16 %v8037, %v8037
      %v8054 = vpack.c.bf16 %v8038, %v8038
      %v8055 = vpack.c.bf16 %v8039, %v8039
      %v8056 = vpack.c.bf16 %v8040, %v8040
      %v8057 = vpack.c.bf16 %v8041, %v8041
      %v8058 = vld [vmem:[#allocation11] sm:$0xf]
      %v8059 = vld [vmem:[#allocation11 + $0x4] sm:$0xf]
      %v8060 = vld [vmem:[#allocation11 + $0x8] sm:$0xf]
      %v8061 = vld [vmem:[#allocation11 + $0xc] sm:$0xf]
      %v8062 = vld [vmem:[#allocation11 + $0x10] sm:$0xf]
      %v8063 = vld [vmem:[#allocation11 + $0x14] sm:$0xf]
      %v8064 = vld [vmem:[#allocation11 + $0x18] sm:$0xf]
      %v8065 = vld [vmem:[#allocation11 + $0x1c] sm:$0xf]
      %v8066 = vld [vmem:[#allocation11 + $0x20] sm:$0xf]
      %v8067 = vld [vmem:[#allocation11 + $0x24] sm:$0xf]
      %v8068 = vld [vmem:[#allocation11 + $0x28] sm:$0xf]
      %v8069 = vld [vmem:[#allocation11 + $0x2c] sm:$0xf]
      %v8070 = vld [vmem:[#allocation11 + $0x30] sm:$0xf]
      %v8071 = vld [vmem:[#allocation11 + $0x34] sm:$0xf]
      %v8072 = vld [vmem:[#allocation11 + $0x38] sm:$0xf]
      %v8073 = vld [vmem:[#allocation11 + $0x3c] sm:$0xf]
      %v8074 = vld [vmem:[#allocation11 + $0x40] sm:$0xf]
      %v8075 = vld [vmem:[#allocation11 + $0x44] sm:$0xf]
      %v8076 = vld [vmem:[#allocation11 + $0x48] sm:$0xf]
      %v8077 = vld [vmem:[#allocation11 + $0x4c] sm:$0xf]
      %v8078 = vld [vmem:[#allocation11 + $0x50] sm:$0xf]
      %v8079 = vld [vmem:[#allocation11 + $0x54] sm:$0xf]
      %v8080 = vld [vmem:[#allocation11 + $0x58] sm:$0xf]
      %v8081 = vld [vmem:[#allocation11 + $0x5c] sm:$0xf]
      %v8082 = vld [vmem:[#allocation11 + $0x60] sm:$0xf]
      %v8083 = vld [vmem:[#allocation11 + $0x64] sm:$0xf]
      %v8084 = vld [vmem:[#allocation11 + $0x68] sm:$0xf]
      %v8085 = vld [vmem:[#allocation11 + $0x6c] sm:$0xf]
      %v8086 = vld [vmem:[#allocation11 + $0x70] sm:$0xf]
      %v8087 = vld [vmem:[#allocation11 + $0x74] sm:$0xf]
      %v8088 = vld [vmem:[#allocation11 + $0x78] sm:$0xf]
      %v8089 = vld [vmem:[#allocation11 + $0x7c] sm:$0xf]
      %v8090 = vld [vmem:[#allocation11 + $0x80] sm:$0xf]
      %v8091 = vld [vmem:[#allocation11 + $0x84] sm:$0xf]
      %v8092 = vld [vmem:[#allocation11 + $0x88] sm:$0xf]
      %v8093 = vld [vmem:[#allocation11 + $0x8c] sm:$0xf]
      %v8094 = vld [vmem:[#allocation11 + $0x90] sm:$0xf]
      %v8095 = vld [vmem:[#allocation11 + $0x94] sm:$0xf]
      %v8096 = vld [vmem:[#allocation11 + $0x98] sm:$0xf]
      %v8097 = vld [vmem:[#allocation11 + $0x9c] sm:$0xf]
      %v8098 = vld [vmem:[#allocation11 + $0xa0] sm:$0xf]
      %v8099 = vld [vmem:[#allocation11 + $0xa4] sm:$0xf]
      %v8100 = vld [vmem:[#allocation11 + $0xa8] sm:$0xf]
      %v8101 = vld [vmem:[#allocation11 + $0xac] sm:$0xf]
      %v8102 = vld [vmem:[#allocation11 + $0xb0] sm:$0xf]
      %v8103 = vld [vmem:[#allocation11 + $0xb4] sm:$0xf]
      %v8104 = vld [vmem:[#allocation11 + $0xb8] sm:$0xf]
      %v8105 = vld [vmem:[#allocation11 + $0xbc] sm:$0xf]
      %v8106 = vld [vmem:[#allocation11 + $0xc0] sm:$0xf]
      %v8107 = vld [vmem:[#allocation11 + $0xc4] sm:$0xf]
      %v8108 = vld [vmem:[#allocation11 + $0xc8] sm:$0xf]
      %v8109 = vld [vmem:[#allocation11 + $0xcc] sm:$0xf]
      %v8110 = vld [vmem:[#allocation11 + $0xd0] sm:$0xf]
      %v8111 = vld [vmem:[#allocation11 + $0xd4] sm:$0xf]
      %v8112 = vld [vmem:[#allocation11 + $0xd8] sm:$0xf]
      %v8113 = vld [vmem:[#allocation11 + $0xdc] sm:$0xf]
      %v8114 = vld [vmem:[#allocation11 + $0xe0] sm:$0xf]
      %v8115 = vld [vmem:[#allocation11 + $0xe4] sm:$0xf]
      %v8116 = vld [vmem:[#allocation11 + $0xe8] sm:$0xf]
      %v8117 = vld [vmem:[#allocation11 + $0xec] sm:$0xf]
      %v8118 = vld [vmem:[#allocation11 + $0xf0] sm:$0xf]
      %v8119 = vld [vmem:[#allocation11 + $0xf4] sm:$0xf]
      %v8120 = vld [vmem:[#allocation11 + $0xf8] sm:$0xf]
      %v8121 = vld [vmem:[#allocation11 + $0xfc] sm:$0xf]
      %v8122 = vld [vmem:[#allocation11 + $0x100] sm:$0xf]
      %v8123 = vld [vmem:[#allocation11 + $0x104] sm:$0xf]
      %v8124 = vld [vmem:[#allocation11 + $0x108] sm:$0xf]
      %v8125 = vld [vmem:[#allocation11 + $0x10c] sm:$0xf]
      %v8126 = vld [vmem:[#allocation11 + $0x110] sm:$0xf]
      %v8127 = vld [vmem:[#allocation11 + $0x114] sm:$0xf]
      %v8128 = vld [vmem:[#allocation11 + $0x118] sm:$0xf]
      %v8129 = vld [vmem:[#allocation11 + $0x11c] sm:$0xf]
      %v8130 = vld [vmem:[#allocation11 + $0x120] sm:$0xf]
      %v8131 = vld [vmem:[#allocation11 + $0x124] sm:$0xf]
      %v8132 = vld [vmem:[#allocation11 + $0x128] sm:$0xf]
      %v8133 = vld [vmem:[#allocation11 + $0x12c] sm:$0xf]
      %v8134 = vld [vmem:[#allocation11 + $0x130] sm:$0xf]
      %v8135 = vld [vmem:[#allocation11 + $0x134] sm:$0xf]
      %v8136 = vld [vmem:[#allocation11 + $0x138] sm:$0xf]
      %v8137 = vld [vmem:[#allocation11 + $0x13c] sm:$0xf]
      %v8138 = vld [vmem:[#allocation11 + $0x140] sm:$0xf]
      %v8139 = vld [vmem:[#allocation11 + $0x144] sm:$0xf]
      %v8140 = vld [vmem:[#allocation11 + $0x148] sm:$0xf]
      %v8141 = vld [vmem:[#allocation11 + $0x14c] sm:$0xf]
      %v8142 = vld [vmem:[#allocation11 + $0x150] sm:$0xf]
      %v8143 = vld [vmem:[#allocation11 + $0x154] sm:$0xf]
      %v8144 = vld [vmem:[#allocation11 + $0x158] sm:$0xf]
      %v8145 = vld [vmem:[#allocation11 + $0x15c] sm:$0xf]
      %v8146 = vld [vmem:[#allocation11 + $0x160] sm:$0xf]
      %v8147 = vld [vmem:[#allocation11 + $0x164] sm:$0xf]
      %v8148 = vld [vmem:[#allocation11 + $0x168] sm:$0xf]
      %v8149 = vld [vmem:[#allocation11 + $0x16c] sm:$0xf]
      %v8150 = vld [vmem:[#allocation11 + $0x170] sm:$0xf]
      %v8151 = vld [vmem:[#allocation11 + $0x174] sm:$0xf]
      %v8152 = vld [vmem:[#allocation11 + $0x178] sm:$0xf]
      %v8153 = vld [vmem:[#allocation11 + $0x17c] sm:$0xf]
      %v8154 = vld [vmem:[#allocation11 + $0x180] sm:$0xf]
      %v8155 = vld [vmem:[#allocation11 + $0x184] sm:$0xf]
      %v8156 = vld [vmem:[#allocation11 + $0x188] sm:$0xf]
      %v8157 = vld [vmem:[#allocation11 + $0x18c] sm:$0xf]
      %v8158 = vld [vmem:[#allocation11 + $0x190] sm:$0xf]
      %v8159 = vld [vmem:[#allocation11 + $0x194] sm:$0xf]
      %v8160 = vld [vmem:[#allocation11 + $0x198] sm:$0xf]
      %v8161 = vld [vmem:[#allocation11 + $0x19c] sm:$0xf]
      %v8162 = vld [vmem:[#allocation11 + $0x1a0] sm:$0xf]
      %v8163 = vld [vmem:[#allocation11 + $0x1a4] sm:$0xf]
      %v8164 = vld [vmem:[#allocation11 + $0x1a8] sm:$0xf]
      %v8165 = vld [vmem:[#allocation11 + $0x1ac] sm:$0xf]
      %v8166 = vld [vmem:[#allocation11 + $0x1b0] sm:$0xf]
      %v8167 = vld [vmem:[#allocation11 + $0x1b4] sm:$0xf]
      %v8168 = vld [vmem:[#allocation11 + $0x1b8] sm:$0xf]
      %v8169 = vld [vmem:[#allocation11 + $0x1bc] sm:$0xf]
      %v8170 = vld [vmem:[#allocation11 + $0x1c0] sm:$0xf]
      %v8171 = vld [vmem:[#allocation11 + $0x1c4] sm:$0xf]
      %v8172 = vld [vmem:[#allocation11 + $0x1c8] sm:$0xf]
      %v8173 = vld [vmem:[#allocation11 + $0x1cc] sm:$0xf]
      %v8174 = vld [vmem:[#allocation11 + $0x1d0] sm:$0xf]
      %v8175 = vld [vmem:[#allocation11 + $0x1d4] sm:$0xf]
      %v8176 = vld [vmem:[#allocation11 + $0x1d8] sm:$0xf]
      %v8177 = vld [vmem:[#allocation11 + $0x1dc] sm:$0xf]
      %v8178 = vld [vmem:[#allocation11 + $0x1e0] sm:$0xf]
      %v8179 = vld [vmem:[#allocation11 + $0x1e4] sm:$0xf]
      %v8180 = vld [vmem:[#allocation11 + $0x1e8] sm:$0xf]
      %v8181 = vld [vmem:[#allocation11 + $0x1ec] sm:$0xf]
      %v8182 = vld [vmem:[#allocation11 + $0x1f0] sm:$0xf]
      %v8183 = vld [vmem:[#allocation11 + $0x1f4] sm:$0xf]
      %v8184 = vld [vmem:[#allocation11 + $0x1f8] sm:$0xf]
      %v8185 = vld [vmem:[#allocation11 + $0x1fc] sm:$0xf]
      %v8186 = vld [vmem:[#allocation11 + $0x200] sm:$0xf]
      %v8187 = vld [vmem:[#allocation11 + $0x204] sm:$0xf]
      %v8188 = vld [vmem:[#allocation11 + $0x208] sm:$0xf]
      %v8189 = vld [vmem:[#allocation11 + $0x20c] sm:$0xf]
      %v8190 = vld [vmem:[#allocation11 + $0x210] sm:$0xf]
      %v8191 = vld [vmem:[#allocation11 + $0x214] sm:$0xf]
      %v8192 = vld [vmem:[#allocation11 + $0x218] sm:$0xf]
      %v8193 = vld [vmem:[#allocation11 + $0x21c] sm:$0xf]
      %v8194 = vld [vmem:[#allocation11 + $0x220] sm:$0xf]
      %v8195 = vld [vmem:[#allocation11 + $0x224] sm:$0xf]
      %v8196 = vld [vmem:[#allocation11 + $0x228] sm:$0xf]
      %v8197 = vld [vmem:[#allocation11 + $0x22c] sm:$0xf]
      %v8198 = vld [vmem:[#allocation11 + $0x230] sm:$0xf]
      %v8199 = vld [vmem:[#allocation11 + $0x234] sm:$0xf]
      %v8200 = vld [vmem:[#allocation11 + $0x238] sm:$0xf]
      %v8201 = vld [vmem:[#allocation11 + $0x23c] sm:$0xf]
      %v8202 = vld [vmem:[#allocation11 + $0x240] sm:$0xf]
      %v8203 = vld [vmem:[#allocation11 + $0x244] sm:$0xf]
      %v8204 = vld [vmem:[#allocation11 + $0x248] sm:$0xf]
      %v8205 = vld [vmem:[#allocation11 + $0x24c] sm:$0xf]
      %v8206 = vld [vmem:[#allocation11 + $0x250] sm:$0xf]
      %v8207 = vld [vmem:[#allocation11 + $0x254] sm:$0xf]
      %v8208 = vld [vmem:[#allocation11 + $0x258] sm:$0xf]
      %v8209 = vld [vmem:[#allocation11 + $0x25c] sm:$0xf]
      %v8210 = vld [vmem:[#allocation11 + $0x260] sm:$0xf]
      %v8211 = vld [vmem:[#allocation11 + $0x264] sm:$0xf]
      %v8212 = vld [vmem:[#allocation11 + $0x268] sm:$0xf]
      %v8213 = vld [vmem:[#allocation11 + $0x26c] sm:$0xf]
      %v8214 = vld [vmem:[#allocation11 + $0x270] sm:$0xf]
      %v8215 = vld [vmem:[#allocation11 + $0x274] sm:$0xf]
      %v8216 = vld [vmem:[#allocation11 + $0x278] sm:$0xf]
      %v8217 = vld [vmem:[#allocation11 + $0x27c] sm:$0xf]
      %v8218 = vld [vmem:[#allocation11 + $0x280] sm:$0xf]
      %v8219 = vld [vmem:[#allocation11 + $0x284] sm:$0xf]
      %v8220 = vld [vmem:[#allocation11 + $0x288] sm:$0xf]
      %v8221 = vld [vmem:[#allocation11 + $0x28c] sm:$0xf]
      %v8222 = vld [vmem:[#allocation11 + $0x290] sm:$0xf]
      %v8223 = vld [vmem:[#allocation11 + $0x294] sm:$0xf]
      %v8224 = vld [vmem:[#allocation11 + $0x298] sm:$0xf]
      %v8225 = vld [vmem:[#allocation11 + $0x29c] sm:$0xf]
      %v8226 = vld [vmem:[#allocation11 + $0x2a0] sm:$0xf]
      %v8227 = vld [vmem:[#allocation11 + $0x2a4] sm:$0xf]
      %v8228 = vld [vmem:[#allocation11 + $0x2a8] sm:$0xf]
      %v8229 = vld [vmem:[#allocation11 + $0x2ac] sm:$0xf]
      %v8230 = vld [vmem:[#allocation11 + $0x2b0] sm:$0xf]
      %v8231 = vld [vmem:[#allocation11 + $0x2b4] sm:$0xf]
      %v8232 = vld [vmem:[#allocation11 + $0x2b8] sm:$0xf]
      %v8233 = vld [vmem:[#allocation11 + $0x2bc] sm:$0xf]
      %v8234 = vld [vmem:[#allocation11 + $0x2c0] sm:$0xf]
      %v8235 = vld [vmem:[#allocation11 + $0x2c4] sm:$0xf]
      %v8236 = vld [vmem:[#allocation11 + $0x2c8] sm:$0xf]
      %v8237 = vld [vmem:[#allocation11 + $0x2cc] sm:$0xf]
      %v8238 = vld [vmem:[#allocation11 + $0x2d0] sm:$0xf]
      %v8239 = vld [vmem:[#allocation11 + $0x2d4] sm:$0xf]
      %v8240 = vld [vmem:[#allocation11 + $0x2d8] sm:$0xf]
      %v8241 = vld [vmem:[#allocation11 + $0x2dc] sm:$0xf]
      %v8242 = vld [vmem:[#allocation11 + $0x2e0] sm:$0xf]
      %v8243 = vld [vmem:[#allocation11 + $0x2e4] sm:$0xf]
      %v8244 = vld [vmem:[#allocation11 + $0x2e8] sm:$0xf]
      %v8245 = vld [vmem:[#allocation11 + $0x2ec] sm:$0xf]
      %v8246 = vld [vmem:[#allocation11 + $0x2f0] sm:$0xf]
      %v8247 = vld [vmem:[#allocation11 + $0x2f4] sm:$0xf]
      %v8248 = vld [vmem:[#allocation11 + $0x2f8] sm:$0xf]
      %v8249 = vld [vmem:[#allocation11 + $0x2fc] sm:$0xf]
      %v8250 = vld [vmem:[#allocation11 + $0x300] sm:$0xf]
      %v8251 = vld [vmem:[#allocation11 + $0x304] sm:$0xf]
      %v8252 = vld [vmem:[#allocation11 + $0x308] sm:$0xf]
      %v8253 = vld [vmem:[#allocation11 + $0x30c] sm:$0xf]
      %v8254 = vld [vmem:[#allocation11 + $0x310] sm:$0xf]
      %v8255 = vld [vmem:[#allocation11 + $0x314] sm:$0xf]
      %v8256 = vld [vmem:[#allocation11 + $0x318] sm:$0xf]
      %v8257 = vld [vmem:[#allocation11 + $0x31c] sm:$0xf]
      %v8258 = vld [vmem:[#allocation11 + $0x320] sm:$0xf]
      %v8259 = vld [vmem:[#allocation11 + $0x324] sm:$0xf]
      %v8260 = vld [vmem:[#allocation11 + $0x328] sm:$0xf]
      %v8261 = vld [vmem:[#allocation11 + $0x32c] sm:$0xf]
      %v8262 = vld [vmem:[#allocation11 + $0x330] sm:$0xf]
      %v8263 = vld [vmem:[#allocation11 + $0x334] sm:$0xf]
      %v8264 = vld [vmem:[#allocation11 + $0x338] sm:$0xf]
      %v8265 = vld [vmem:[#allocation11 + $0x33c] sm:$0xf]
      %v8266 = vld [vmem:[#allocation11 + $0x340] sm:$0xf]
      %v8267 = vld [vmem:[#allocation11 + $0x344] sm:$0xf]
      %v8268 = vld [vmem:[#allocation11 + $0x348] sm:$0xf]
      %v8269 = vld [vmem:[#allocation11 + $0x34c] sm:$0xf]
      %v8270 = vld [vmem:[#allocation11 + $0x350] sm:$0xf]
      %v8271 = vld [vmem:[#allocation11 + $0x354] sm:$0xf]
      %v8272 = vld [vmem:[#allocation11 + $0x358] sm:$0xf]
      %v8273 = vld [vmem:[#allocation11 + $0x35c] sm:$0xf]
      %v8274 = vld [vmem:[#allocation11 + $0x360] sm:$0xf]
      %v8275 = vld [vmem:[#allocation11 + $0x364] sm:$0xf]
      %v8276 = vld [vmem:[#allocation11 + $0x368] sm:$0xf]
      %v8277 = vld [vmem:[#allocation11 + $0x36c] sm:$0xf]
      %v8278 = vld [vmem:[#allocation11 + $0x370] sm:$0xf]
      %v8279 = vld [vmem:[#allocation11 + $0x374] sm:$0xf]
      %v8280 = vld [vmem:[#allocation11 + $0x378] sm:$0xf]
      %v8281 = vld [vmem:[#allocation11 + $0x37c] sm:$0xf]
      %v8282 = vld [vmem:[#allocation11 + $0x380] sm:$0xf]
      %v8283 = vld [vmem:[#allocation11 + $0x384] sm:$0xf]
      %v8284 = vld [vmem:[#allocation11 + $0x388] sm:$0xf]
      %v8285 = vld [vmem:[#allocation11 + $0x38c] sm:$0xf]
      %v8286 = vld [vmem:[#allocation11 + $0x390] sm:$0xf]
      %v8287 = vld [vmem:[#allocation11 + $0x394] sm:$0xf]
      %v8288 = vld [vmem:[#allocation11 + $0x398] sm:$0xf]
      %v8289 = vld [vmem:[#allocation11 + $0x39c] sm:$0xf]
      %v8290 = vld [vmem:[#allocation11 + $0x3a0] sm:$0xf]
      %v8291 = vld [vmem:[#allocation11 + $0x3a4] sm:$0xf]
      %v8292 = vld [vmem:[#allocation11 + $0x3a8] sm:$0xf]
      %v8293 = vld [vmem:[#allocation11 + $0x3ac] sm:$0xf]
      %v8294 = vld [vmem:[#allocation11 + $0x3b0] sm:$0xf]
      %v8295 = vld [vmem:[#allocation11 + $0x3b4] sm:$0xf]
      %v8296 = vld [vmem:[#allocation11 + $0x3b8] sm:$0xf]
      %v8297 = vld [vmem:[#allocation11 + $0x3bc] sm:$0xf]
      %v8298 = vld [vmem:[#allocation11 + $0x3c0] sm:$0xf]
      %v8299 = vld [vmem:[#allocation11 + $0x3c4] sm:$0xf]
      %v8300 = vld [vmem:[#allocation11 + $0x3c8] sm:$0xf]
      %v8301 = vld [vmem:[#allocation11 + $0x3cc] sm:$0xf]
      %v8302 = vld [vmem:[#allocation11 + $0x3d0] sm:$0xf]
      %v8303 = vld [vmem:[#allocation11 + $0x3d4] sm:$0xf]
      %v8304 = vld [vmem:[#allocation11 + $0x3d8] sm:$0xf]
      %v8305 = vld [vmem:[#allocation11 + $0x3dc] sm:$0xf]
      %v8306 = vld [vmem:[#allocation11 + $0x3e0] sm:$0xf]
      %v8307 = vld [vmem:[#allocation11 + $0x3e4] sm:$0xf]
      %v8308 = vld [vmem:[#allocation11 + $0x3e8] sm:$0xf]
      %v8309 = vld [vmem:[#allocation11 + $0x3ec] sm:$0xf]
      %v8310 = vld [vmem:[#allocation11 + $0x3f0] sm:$0xf]
      %v8311 = vld [vmem:[#allocation11 + $0x3f4] sm:$0xf]
      %v8312 = vld [vmem:[#allocation11 + $0x3f8] sm:$0xf]
      %v8313 = vld [vmem:[#allocation11 + $0x3fc] sm:$0xf]
      %v8314 = vld [vmem:[#allocation12] sm:$0x1]
      %v8316 = vlaneseq
      %v8317 = vshrl.u32 %v8316, 7
      %v8318 = vsub.s32 0, %v8317
      %v8319 = vrot.slane %v8314, %v8318
      %v8577 = vunpack.c.l.b16 %v8058
      %v8578 = vunpack.c.l.b16 %v8059
      %v8579 = vunpack.c.l.b16 %v8060
      %v8580 = vunpack.c.l.b16 %v8061
      %v8581 = vunpack.c.l.b16 %v8062
      %v8582 = vunpack.c.l.b16 %v8063
      %v8583 = vunpack.c.l.b16 %v8064
      %v8584 = vunpack.c.l.b16 %v8065
      %v8585 = vunpack.c.l.b16 %v8066
      %v8586 = vunpack.c.l.b16 %v8067
      %v8587 = vunpack.c.l.b16 %v8068
      %v8588 = vunpack.c.l.b16 %v8069
      %v8589 = vunpack.c.l.b16 %v8070
      %v8590 = vunpack.c.l.b16 %v8071
      %v8591 = vunpack.c.l.b16 %v8072
      %v8592 = vunpack.c.l.b16 %v8073
      %v8593 = vunpack.c.l.b16 %v8074
      %v8594 = vunpack.c.l.b16 %v8075
      %v8595 = vunpack.c.l.b16 %v8076
      %v8596 = vunpack.c.l.b16 %v8077
      %v8597 = vunpack.c.l.b16 %v8078
      %v8598 = vunpack.c.l.b16 %v8079
      %v8599 = vunpack.c.l.b16 %v8080
      %v8600 = vunpack.c.l.b16 %v8081
      %v8601 = vunpack.c.l.b16 %v8082
      %v8602 = vunpack.c.l.b16 %v8083
      %v8603 = vunpack.c.l.b16 %v8084
      %v8604 = vunpack.c.l.b16 %v8085
      %v8605 = vunpack.c.l.b16 %v8086
      %v8606 = vunpack.c.l.b16 %v8087
      %v8607 = vunpack.c.l.b16 %v8088
      %v8608 = vunpack.c.l.b16 %v8089
      %v8609 = vunpack.c.l.b16 %v8090
      %v8610 = vunpack.c.l.b16 %v8091
      %v8611 = vunpack.c.l.b16 %v8092
      %v8612 = vunpack.c.l.b16 %v8093
      %v8613 = vunpack.c.l.b16 %v8094
      %v8614 = vunpack.c.l.b16 %v8095
      %v8615 = vunpack.c.l.b16 %v8096
      %v8616 = vunpack.c.l.b16 %v8097
      %v8617 = vunpack.c.l.b16 %v8098
      %v8618 = vunpack.c.l.b16 %v8099
      %v8619 = vunpack.c.l.b16 %v8100
      %v8620 = vunpack.c.l.b16 %v8101
      %v8621 = vunpack.c.l.b16 %v8102
      %v8622 = vunpack.c.l.b16 %v8103
      %v8623 = vunpack.c.l.b16 %v8104
      %v8624 = vunpack.c.l.b16 %v8105
      %v8625 = vunpack.c.l.b16 %v8106
      %v8626 = vunpack.c.l.b16 %v8107
      %v8627 = vunpack.c.l.b16 %v8108
      %v8628 = vunpack.c.l.b16 %v8109
      %v8629 = vunpack.c.l.b16 %v8110
      %v8630 = vunpack.c.l.b16 %v8111
      %v8631 = vunpack.c.l.b16 %v8112
      %v8632 = vunpack.c.l.b16 %v8113
      %v8633 = vunpack.c.l.b16 %v8114
      %v8634 = vunpack.c.l.b16 %v8115
      %v8635 = vunpack.c.l.b16 %v8116
      %v8636 = vunpack.c.l.b16 %v8117
      %v8637 = vunpack.c.l.b16 %v8118
      %v8638 = vunpack.c.l.b16 %v8119
      %v8639 = vunpack.c.l.b16 %v8120
      %v8640 = vunpack.c.l.b16 %v8121
      %v8641 = vunpack.c.l.b16 %v8122
      %v8642 = vunpack.c.l.b16 %v8123
      %v8643 = vunpack.c.l.b16 %v8124
      %v8644 = vunpack.c.l.b16 %v8125
      %v8645 = vunpack.c.l.b16 %v8126
      %v8646 = vunpack.c.l.b16 %v8127
      %v8647 = vunpack.c.l.b16 %v8128
      %v8648 = vunpack.c.l.b16 %v8129
      %v8649 = vunpack.c.l.b16 %v8130
      %v8650 = vunpack.c.l.b16 %v8131
      %v8651 = vunpack.c.l.b16 %v8132
      %v8652 = vunpack.c.l.b16 %v8133
      %v8653 = vunpack.c.l.b16 %v8134
      %v8654 = vunpack.c.l.b16 %v8135
      %v8655 = vunpack.c.l.b16 %v8136
      %v8656 = vunpack.c.l.b16 %v8137
      %v8657 = vunpack.c.l.b16 %v8138
      %v8658 = vunpack.c.l.b16 %v8139
      %v8659 = vunpack.c.l.b16 %v8140
      %v8660 = vunpack.c.l.b16 %v8141
      %v8661 = vunpack.c.l.b16 %v8142
      %v8662 = vunpack.c.l.b16 %v8143
      %v8663 = vunpack.c.l.b16 %v8144
      %v8664 = vunpack.c.l.b16 %v8145
      %v8665 = vunpack.c.l.b16 %v8146
      %v8666 = vunpack.c.l.b16 %v8147
      %v8667 = vunpack.c.l.b16 %v8148
      %v8668 = vunpack.c.l.b16 %v8149
      %v8669 = vunpack.c.l.b16 %v8150
      %v8670 = vunpack.c.l.b16 %v8151
      %v8671 = vunpack.c.l.b16 %v8152
      %v8672 = vunpack.c.l.b16 %v8153
      %v8673 = vunpack.c.l.b16 %v8154
      %v8674 = vunpack.c.l.b16 %v8155
      %v8675 = vunpack.c.l.b16 %v8156
      %v8676 = vunpack.c.l.b16 %v8157
      %v8677 = vunpack.c.l.b16 %v8158
      %v8678 = vunpack.c.l.b16 %v8159
      %v8679 = vunpack.c.l.b16 %v8160
      %v8680 = vunpack.c.l.b16 %v8161
      %v8681 = vunpack.c.l.b16 %v8162
      %v8682 = vunpack.c.l.b16 %v8163
      %v8683 = vunpack.c.l.b16 %v8164
      %v8684 = vunpack.c.l.b16 %v8165
      %v8685 = vunpack.c.l.b16 %v8166
      %v8686 = vunpack.c.l.b16 %v8167
      %v8687 = vunpack.c.l.b16 %v8168
      %v8688 = vunpack.c.l.b16 %v8169
      %v8689 = vunpack.c.l.b16 %v8170
      %v8690 = vunpack.c.l.b16 %v8171
      %v8691 = vunpack.c.l.b16 %v8172
      %v8692 = vunpack.c.l.b16 %v8173
      %v8693 = vunpack.c.l.b16 %v8174
      %v8694 = vunpack.c.l.b16 %v8175
      %v8695 = vunpack.c.l.b16 %v8176
      %v8696 = vunpack.c.l.b16 %v8177
      %v8697 = vunpack.c.l.b16 %v8178
      %v8698 = vunpack.c.l.b16 %v8179
      %v8699 = vunpack.c.l.b16 %v8180
      %v8700 = vunpack.c.l.b16 %v8181
      %v8701 = vunpack.c.l.b16 %v8182
      %v8702 = vunpack.c.l.b16 %v8183
      %v8703 = vunpack.c.l.b16 %v8184
      %v8704 = vunpack.c.l.b16 %v8185
      %v8705 = vunpack.c.l.b16 %v8186
      %v8706 = vunpack.c.l.b16 %v8187
      %v8707 = vunpack.c.l.b16 %v8188
      %v8708 = vunpack.c.l.b16 %v8189
      %v8709 = vunpack.c.l.b16 %v8190
      %v8710 = vunpack.c.l.b16 %v8191
      %v8711 = vunpack.c.l.b16 %v8192
      %v8712 = vunpack.c.l.b16 %v8193
      %v8713 = vunpack.c.l.b16 %v8194
      %v8714 = vunpack.c.l.b16 %v8195
      %v8715 = vunpack.c.l.b16 %v8196
      %v8716 = vunpack.c.l.b16 %v8197
      %v8717 = vunpack.c.l.b16 %v8198
      %v8718 = vunpack.c.l.b16 %v8199
      %v8719 = vunpack.c.l.b16 %v8200
      %v8720 = vunpack.c.l.b16 %v8201
      %v8721 = vunpack.c.l.b16 %v8202
      %v8722 = vunpack.c.l.b16 %v8203
      %v8723 = vunpack.c.l.b16 %v8204
      %v8724 = vunpack.c.l.b16 %v8205
      %v8725 = vunpack.c.l.b16 %v8206
      %v8726 = vunpack.c.l.b16 %v8207
      %v8727 = vunpack.c.l.b16 %v8208
      %v8728 = vunpack.c.l.b16 %v8209
      %v8729 = vunpack.c.l.b16 %v8210
      %v8730 = vunpack.c.l.b16 %v8211
      %v8731 = vunpack.c.l.b16 %v8212
      %v8732 = vunpack.c.l.b16 %v8213
      %v8733 = vunpack.c.l.b16 %v8214
      %v8734 = vunpack.c.l.b16 %v8215
      %v8735 = vunpack.c.l.b16 %v8216
      %v8736 = vunpack.c.l.b16 %v8217
      %v8737 = vunpack.c.l.b16 %v8218
      %v8738 = vunpack.c.l.b16 %v8219
      %v8739 = vunpack.c.l.b16 %v8220
      %v8740 = vunpack.c.l.b16 %v8221
      %v8741 = vunpack.c.l.b16 %v8222
      %v8742 = vunpack.c.l.b16 %v8223
      %v8743 = vunpack.c.l.b16 %v8224
      %v8744 = vunpack.c.l.b16 %v8225
      %v8745 = vunpack.c.l.b16 %v8226
      %v8746 = vunpack.c.l.b16 %v8227
      %v8747 = vunpack.c.l.b16 %v8228
      %v8748 = vunpack.c.l.b16 %v8229
      %v8749 = vunpack.c.l.b16 %v8230
      %v8750 = vunpack.c.l.b16 %v8231
      %v8751 = vunpack.c.l.b16 %v8232
      %v8752 = vunpack.c.l.b16 %v8233
      %v8753 = vunpack.c.l.b16 %v8234
      %v8754 = vunpack.c.l.b16 %v8235
      %v8755 = vunpack.c.l.b16 %v8236
      %v8756 = vunpack.c.l.b16 %v8237
      %v8757 = vunpack.c.l.b16 %v8238
      %v8758 = vunpack.c.l.b16 %v8239
      %v8759 = vunpack.c.l.b16 %v8240
      %v8760 = vunpack.c.l.b16 %v8241
      %v8761 = vunpack.c.l.b16 %v8242
      %v8762 = vunpack.c.l.b16 %v8243
      %v8763 = vunpack.c.l.b16 %v8244
      %v8764 = vunpack.c.l.b16 %v8245
      %v8765 = vunpack.c.l.b16 %v8246
      %v8766 = vunpack.c.l.b16 %v8247
      %v8767 = vunpack.c.l.b16 %v8248
      %v8768 = vunpack.c.l.b16 %v8249
      %v8769 = vunpack.c.l.b16 %v8250
      %v8770 = vunpack.c.l.b16 %v8251
      %v8771 = vunpack.c.l.b16 %v8252
      %v8772 = vunpack.c.l.b16 %v8253
      %v8773 = vunpack.c.l.b16 %v8254
      %v8774 = vunpack.c.l.b16 %v8255
      %v8775 = vunpack.c.l.b16 %v8256
      %v8776 = vunpack.c.l.b16 %v8257
      %v8777 = vunpack.c.l.b16 %v8258
      %v8778 = vunpack.c.l.b16 %v8259
      %v8779 = vunpack.c.l.b16 %v8260
      %v8780 = vunpack.c.l.b16 %v8261
      %v8781 = vunpack.c.l.b16 %v8262
      %v8782 = vunpack.c.l.b16 %v8263
      %v8783 = vunpack.c.l.b16 %v8264
      %v8784 = vunpack.c.l.b16 %v8265
      %v8785 = vunpack.c.l.b16 %v8266
      %v8786 = vunpack.c.l.b16 %v8267
      %v8787 = vunpack.c.l.b16 %v8268
      %v8788 = vunpack.c.l.b16 %v8269
      %v8789 = vunpack.c.l.b16 %v8270
      %v8790 = vunpack.c.l.b16 %v8271
      %v8791 = vunpack.c.l.b16 %v8272
      %v8792 = vunpack.c.l.b16 %v8273
      %v8793 = vunpack.c.l.b16 %v8274
      %v8794 = vunpack.c.l.b16 %v8275
      %v8795 = vunpack.c.l.b16 %v8276
      %v8796 = vunpack.c.l.b16 %v8277
      %v8797 = vunpack.c.l.b16 %v8278
      %v8798 = vunpack.c.l.b16 %v8279
      %v8799 = vunpack.c.l.b16 %v8280
      %v8800 = vunpack.c.l.b16 %v8281
      %v8801 = vunpack.c.l.b16 %v8282
      %v8802 = vunpack.c.l.b16 %v8283
      %v8803 = vunpack.c.l.b16 %v8284
      %v8804 = vunpack.c.l.b16 %v8285
      %v8805 = vunpack.c.l.b16 %v8286
      %v8806 = vunpack.c.l.b16 %v8287
      %v8807 = vunpack.c.l.b16 %v8288
      %v8808 = vunpack.c.l.b16 %v8289
      %v8809 = vunpack.c.l.b16 %v8290
      %v8810 = vunpack.c.l.b16 %v8291
      %v8811 = vunpack.c.l.b16 %v8292
      %v8812 = vunpack.c.l.b16 %v8293
      %v8813 = vunpack.c.l.b16 %v8294
      %v8814 = vunpack.c.l.b16 %v8295
      %v8815 = vunpack.c.l.b16 %v8296
      %v8816 = vunpack.c.l.b16 %v8297
      %v8817 = vunpack.c.l.b16 %v8298
      %v8818 = vunpack.c.l.b16 %v8299
      %v8819 = vunpack.c.l.b16 %v8300
      %v8820 = vunpack.c.l.b16 %v8301
      %v8821 = vunpack.c.l.b16 %v8302
      %v8822 = vunpack.c.l.b16 %v8303
      %v8823 = vunpack.c.l.b16 %v8304
      %v8824 = vunpack.c.l.b16 %v8305
      %v8825 = vunpack.c.l.b16 %v8306
      %v8826 = vunpack.c.l.b16 %v8307
      %v8827 = vunpack.c.l.b16 %v8308
      %v8828 = vunpack.c.l.b16 %v8309
      %v8829 = vunpack.c.l.b16 %v8310
      %v8830 = vunpack.c.l.b16 %v8311
      %v8831 = vunpack.c.l.b16 %v8312
      %v8832 = vunpack.c.l.b16 %v8313
      %v8833 = vpack.c.b16 %v8578, %v8577
      %v8834 = vpack.c.b16 %v8580, %v8579
      %v8835 = vpack.c.b16 %v8582, %v8581
      %v8836 = vpack.c.b16 %v8584, %v8583
      %v8837 = vpack.c.b16 %v8586, %v8585
      %v8838 = vpack.c.b16 %v8588, %v8587
      %v8839 = vpack.c.b16 %v8590, %v8589
      %v8840 = vpack.c.b16 %v8592, %v8591
      %v8841 = vpack.c.b16 %v8594, %v8593
      %v8842 = vpack.c.b16 %v8596, %v8595
      %v8843 = vpack.c.b16 %v8598, %v8597
      %v8844 = vpack.c.b16 %v8600, %v8599
      %v8845 = vpack.c.b16 %v8602, %v8601
      %v8846 = vpack.c.b16 %v8604, %v8603
      %v8847 = vpack.c.b16 %v8606, %v8605
      %v8848 = vpack.c.b16 %v8608, %v8607
      %v8849 = vpack.c.b16 %v8610, %v8609
      %v8850 = vpack.c.b16 %v8612, %v8611
      %v8851 = vpack.c.b16 %v8614, %v8613
      %v8852 = vpack.c.b16 %v8616, %v8615
      %v8853 = vpack.c.b16 %v8618, %v8617
      %v8854 = vpack.c.b16 %v8620, %v8619
      %v8855 = vpack.c.b16 %v8622, %v8621
      %v8856 = vpack.c.b16 %v8624, %v8623
      %v8857 = vpack.c.b16 %v8626, %v8625
      %v8858 = vpack.c.b16 %v8628, %v8627
      %v8859 = vpack.c.b16 %v8630, %v8629
      %v8860 = vpack.c.b16 %v8632, %v8631
      %v8861 = vpack.c.b16 %v8634, %v8633
      %v8862 = vpack.c.b16 %v8636, %v8635
      %v8863 = vpack.c.b16 %v8638, %v8637
      %v8864 = vpack.c.b16 %v8640, %v8639
      %v8865 = vpack.c.b16 %v8642, %v8641
      %v8866 = vpack.c.b16 %v8644, %v8643
      %v8867 = vpack.c.b16 %v8646, %v8645
      %v8868 = vpack.c.b16 %v8648, %v8647
      %v8869 = vpack.c.b16 %v8650, %v8649
      %v8870 = vpack.c.b16 %v8652, %v8651
      %v8871 = vpack.c.b16 %v8654, %v8653
      %v8872 = vpack.c.b16 %v8656, %v8655
      %v8873 = vpack.c.b16 %v8658, %v8657
      %v8874 = vpack.c.b16 %v8660, %v8659
      %v8875 = vpack.c.b16 %v8662, %v8661
      %v8876 = vpack.c.b16 %v8664, %v8663
      %v8877 = vpack.c.b16 %v8666, %v8665
      %v8878 = vpack.c.b16 %v8668, %v8667
      %v8879 = vpack.c.b16 %v8670, %v8669
      %v8880 = vpack.c.b16 %v8672, %v8671
      %v8881 = vpack.c.b16 %v8674, %v8673
      %v8882 = vpack.c.b16 %v8676, %v8675
      %v8883 = vpack.c.b16 %v8678, %v8677
      %v8884 = vpack.c.b16 %v8680, %v8679
      %v8885 = vpack.c.b16 %v8682, %v8681
      %v8886 = vpack.c.b16 %v8684, %v8683
      %v8887 = vpack.c.b16 %v8686, %v8685
      %v8888 = vpack.c.b16 %v8688, %v8687
      %v8889 = vpack.c.b16 %v8690, %v8689
      %v8890 = vpack.c.b16 %v8692, %v8691
      %v8891 = vpack.c.b16 %v8694, %v8693
      %v8892 = vpack.c.b16 %v8696, %v8695
      %v8893 = vpack.c.b16 %v8698, %v8697
      %v8894 = vpack.c.b16 %v8700, %v8699
      %v8895 = vpack.c.b16 %v8702, %v8701
      %v8896 = vpack.c.b16 %v8704, %v8703
      %v8897 = vpack.c.b16 %v8706, %v8705
      %v8898 = vpack.c.b16 %v8708, %v8707
      %v8899 = vpack.c.b16 %v8710, %v8709
      %v8900 = vpack.c.b16 %v8712, %v8711
      %v8901 = vpack.c.b16 %v8714, %v8713
      %v8902 = vpack.c.b16 %v8716, %v8715
      %v8903 = vpack.c.b16 %v8718, %v8717
      %v8904 = vpack.c.b16 %v8720, %v8719
      %v8905 = vpack.c.b16 %v8722, %v8721
      %v8906 = vpack.c.b16 %v8724, %v8723
      %v8907 = vpack.c.b16 %v8726, %v8725
      %v8908 = vpack.c.b16 %v8728, %v8727
      %v8909 = vpack.c.b16 %v8730, %v8729
      %v8910 = vpack.c.b16 %v8732, %v8731
      %v8911 = vpack.c.b16 %v8734, %v8733
      %v8912 = vpack.c.b16 %v8736, %v8735
      %v8913 = vpack.c.b16 %v8738, %v8737
      %v8914 = vpack.c.b16 %v8740, %v8739
      %v8915 = vpack.c.b16 %v8742, %v8741
      %v8916 = vpack.c.b16 %v8744, %v8743
      %v8917 = vpack.c.b16 %v8746, %v8745
      %v8918 = vpack.c.b16 %v8748, %v8747
      %v8919 = vpack.c.b16 %v8750, %v8749
      %v8920 = vpack.c.b16 %v8752, %v8751
      %v8921 = vpack.c.b16 %v8754, %v8753
      %v8922 = vpack.c.b16 %v8756, %v8755
      %v8923 = vpack.c.b16 %v8758, %v8757
      %v8924 = vpack.c.b16 %v8760, %v8759
      %v8925 = vpack.c.b16 %v8762, %v8761
      %v8926 = vpack.c.b16 %v8764, %v8763
      %v8927 = vpack.c.b16 %v8766, %v8765
      %v8928 = vpack.c.b16 %v8768, %v8767
      %v8929 = vpack.c.b16 %v8770, %v8769
      %v8930 = vpack.c.b16 %v8772, %v8771
      %v8931 = vpack.c.b16 %v8774, %v8773
      %v8932 = vpack.c.b16 %v8776, %v8775
      %v8933 = vpack.c.b16 %v8778, %v8777
      %v8934 = vpack.c.b16 %v8780, %v8779
      %v8935 = vpack.c.b16 %v8782, %v8781
      %v8936 = vpack.c.b16 %v8784, %v8783
      %v8937 = vpack.c.b16 %v8786, %v8785
      %v8938 = vpack.c.b16 %v8788, %v8787
      %v8939 = vpack.c.b16 %v8790, %v8789
      %v8940 = vpack.c.b16 %v8792, %v8791
      %v8941 = vpack.c.b16 %v8794, %v8793
      %v8942 = vpack.c.b16 %v8796, %v8795
      %v8943 = vpack.c.b16 %v8798, %v8797
      %v8944 = vpack.c.b16 %v8800, %v8799
      %v8945 = vpack.c.b16 %v8802, %v8801
      %v8946 = vpack.c.b16 %v8804, %v8803
      %v8947 = vpack.c.b16 %v8806, %v8805
      %v8948 = vpack.c.b16 %v8808, %v8807
      %v8949 = vpack.c.b16 %v8810, %v8809
      %v8950 = vpack.c.b16 %v8812, %v8811
      %v8951 = vpack.c.b16 %v8814, %v8813
      %v8952 = vpack.c.b16 %v8816, %v8815
      %v8953 = vpack.c.b16 %v8818, %v8817
      %v8954 = vpack.c.b16 %v8820, %v8819
      %v8955 = vpack.c.b16 %v8822, %v8821
      %v8956 = vpack.c.b16 %v8824, %v8823
      %v8957 = vpack.c.b16 %v8826, %v8825
      %v8958 = vpack.c.b16 %v8828, %v8827
      %v8959 = vpack.c.b16 %v8830, %v8829
      %v8960 = vpack.c.b16 %v8832, %v8831
      %9089 = vmatprep.subr.bf16.mxu0 0
      %9090 = vmatpush1.bf16.msra.mxu0 %v8833
      %9091 = vmatprep.subr.bf16.mxu0 0
      %9092 = vmatpush1.bf16.msra.mxu0 %v8834
      %9093 = vmatprep.subr.bf16.mxu0 0
      %9094 = vmatpush1.bf16.msra.mxu0 %v8835
      %9095 = vmatprep.subr.bf16.mxu0 0
      %9096 = vmatpush1.bf16.msra.mxu0 %v8836
      %9097 = vmatprep.subr.bf16.mxu0 0
      %9098 = vmatpush1.bf16.msra.mxu0 %v8837
      %9099 = vmatprep.subr.bf16.mxu0 0
      %9100 = vmatpush1.bf16.msra.mxu0 %v8838
      %9101 = vmatprep.subr.bf16.mxu0 0
      %9102 = vmatpush1.bf16.msra.mxu0 %v8839
      %9103 = vmatprep.subr.bf16.mxu0 0
      %9104 = vmatpush1.bf16.msra.mxu0 %v8840
      %9105 = vmatprep.subr.bf16.mxu0 0
      %9106 = vmatpush1.bf16.msra.mxu0 %v8841
      %9107 = vmatprep.subr.bf16.mxu0 0
      %9108 = vmatpush1.bf16.msra.mxu0 %v8842
      %9109 = vmatprep.subr.bf16.mxu0 0
      %9110 = vmatpush1.bf16.msra.mxu0 %v8843
      %9111 = vmatprep.subr.bf16.mxu0 0
      %9112 = vmatpush1.bf16.msra.mxu0 %v8844
      %9113 = vmatprep.subr.bf16.mxu0 0
      %9114 = vmatpush1.bf16.msra.mxu0 %v8845
      %9115 = vmatprep.subr.bf16.mxu0 0
      %9116 = vmatpush1.bf16.msra.mxu0 %v8846
      %9117 = vmatprep.subr.bf16.mxu0 0
      %9118 = vmatpush1.bf16.msra.mxu0 %v8847
      %9119 = vmatprep.subr.bf16.mxu0 0
      %9120 = vmatpush1.bf16.msra.mxu0 %v8848
      %9121 = vmatprep.mubr.bf16.mxu0 %v8043
      %9122 = vmatmul.mubr.bf16.gmra.mrb[0].mxu0 %v8042
      %v9123 = vpop.f32.mrb[0].mxu0
      %v9124 = vadd.f32 %v8319, %v9123
      %v9125 = vpop.f32.mrb[0].mxu0
      %v9126 = vpop.f32.mrb[0].mxu0
      %v9127 = vpop.f32.mrb[0].mxu0
      %9128 = vdwg.mxu0
      %9129 = vmatprep.subr.bf16.mxu0 0
      %9130 = vmatpush1.bf16.msra.mxu0 %v8849
      %9131 = vmatprep.subr.bf16.mxu0 0
      %9132 = vmatpush1.bf16.msra.mxu0 %v8850
      %9133 = vmatprep.subr.bf16.mxu0 0
      %9134 = vmatpush1.bf16.msra.mxu0 %v8851
      %9135 = vmatprep.subr.bf16.mxu0 0
      %9136 = vmatpush1.bf16.msra.mxu0 %v8852
      %9137 = vmatprep.subr.bf16.mxu0 0
      %9138 = vmatpush1.bf16.msra.mxu0 %v8853
      %9139 = vmatprep.subr.bf16.mxu0 0
      %9140 = vmatpush1.bf16.msra.mxu0 %v8854
      %9141 = vmatprep.subr.bf16.mxu0 0
      %9142 = vmatpush1.bf16.msra.mxu0 %v8855
      %9143 = vmatprep.subr.bf16.mxu0 0
      %9144 = vmatpush1.bf16.msra.mxu0 %v8856
      %9145 = vmatprep.subr.bf16.mxu0 0
      %9146 = vmatpush1.bf16.msra.mxu0 %v8857
      %9147 = vmatprep.subr.bf16.mxu0 0
      %9148 = vmatpush1.bf16.msra.mxu0 %v8858
      %9149 = vmatprep.subr.bf16.mxu0 0
      %9150 = vmatpush1.bf16.msra.mxu0 %v8859
      %9151 = vmatprep.subr.bf16.mxu0 0
      %9152 = vmatpush1.bf16.msra.mxu0 %v8860
      %9153 = vmatprep.subr.bf16.mxu0 0
      %9154 = vmatpush1.bf16.msra.mxu0 %v8861
      %9155 = vmatprep.subr.bf16.mxu0 0
      %9156 = vmatpush1.bf16.msra.mxu0 %v8862
      %9157 = vmatprep.subr.bf16.mxu0 0
      %9158 = vmatpush1.bf16.msra.mxu0 %v8863
      %9159 = vmatprep.subr.bf16.mxu0 0
      %9160 = vmatpush1.bf16.msra.mxu0 %v8864
      %9161 = vmatprep.mubr.bf16.mxu0 %v8045
      %9162 = vmatmul.mubr.bf16.gmra.mrb[0].mxu0 %v8044
      %v9163 = vpop.f32.mrb[0].mxu0
      %v9164 = vadd.f32 %v9124, %v9163
      %v9165 = vpop.f32.mrb[0].mxu0
      %v9166 = vpop.f32.mrb[0].mxu0
      %v9167 = vpop.f32.mrb[0].mxu0
      %9168 = vdwg.mxu0
      %9169 = vmatprep.subr.bf16.mxu0 0
      %9170 = vmatpush1.bf16.msra.mxu0 %v8865
      %9171 = vmatprep.subr.bf16.mxu0 0
      %9172 = vmatpush1.bf16.msra.mxu0 %v8866
      %9173 = vmatprep.subr.bf16.mxu0 0
      %9174 = vmatpush1.bf16.msra.mxu0 %v8867
      %9175 = vmatprep.subr.bf16.mxu0 0
      %9176 = vmatpush1.bf16.msra.mxu0 %v8868
      %9177 = vmatprep.subr.bf16.mxu0 0
      %9178 = vmatpush1.bf16.msra.mxu0 %v8869
      %9179 = vmatprep.subr.bf16.mxu0 0
      %9180 = vmatpush1.bf16.msra.mxu0 %v8870
      %9181 = vmatprep.subr.bf16.mxu0 0
      %9182 = vmatpush1.bf16.msra.mxu0 %v8871
      %9183 = vmatprep.subr.bf16.mxu0 0
      %9184 = vmatpush1.bf16.msra.mxu0 %v8872
      %9185 = vmatprep.subr.bf16.mxu0 0
      %9186 = vmatpush1.bf16.msra.mxu0 %v8873
      %9187 = vmatprep.subr.bf16.mxu0 0
      %9188 = vmatpush1.bf16.msra.mxu0 %v8874
      %9189 = vmatprep.subr.bf16.mxu0 0
      %9190 = vmatpush1.bf16.msra.mxu0 %v8875
      %9191 = vmatprep.subr.bf16.mxu0 0
      %9192 = vmatpush1.bf16.msra.mxu0 %v8876
      %9193 = vmatprep.subr.bf16.mxu0 0
      %9194 = vmatpush1.bf16.msra.mxu0 %v8877
      %9195 = vmatprep.subr.bf16.mxu0 0
      %9196 = vmatpush1.bf16.msra.mxu0 %v8878
      %9197 = vmatprep.subr.bf16.mxu0 0
      %9198 = vmatpush1.bf16.msra.mxu0 %v8879
      %9199 = vmatprep.subr.bf16.mxu0 0
      %9200 = vmatpush1.bf16.msra.mxu0 %v8880
      %9201 = vmatprep.mubr.bf16.mxu0 %v8047
      %9202 = vmatmul.mubr.bf16.gmra.mrb[0].mxu0 %v8046
      %v9203 = vpop.f32.mrb[0].mxu0
      %v9204 = vadd.f32 %v9164, %v9203
      %v9205 = vpop.f32.mrb[0].mxu0
      %v9206 = vpop.f32.mrb[0].mxu0
      %v9207 = vpop.f32.mrb[0].mxu0
      %9208 = vdwg.mxu0
      %9209 = vmatprep.subr.bf16.mxu0 0
      %9210 = vmatpush1.bf16.msra.mxu0 %v8881
      %9211 = vmatprep.subr.bf16.mxu0 0
      %9212 = vmatpush1.bf16.msra.mxu0 %v8882
      %9213 = vmatprep.subr.bf16.mxu0 0
      %9214 = vmatpush1.bf16.msra.mxu0 %v8883
      %9215 = vmatprep.subr.bf16.mxu0 0
      %9216 = vmatpush1.bf16.msra.mxu0 %v8884
      %9217 = vmatprep.subr.bf16.mxu0 0
      %9218 = vmatpush1.bf16.msra.mxu0 %v8885
      %9219 = vmatprep.subr.bf16.mxu0 0
      %9220 = vmatpush1.bf16.msra.mxu0 %v8886
      %9221 = vmatprep.subr.bf16.mxu0 0
      %9222 = vmatpush1.bf16.msra.mxu0 %v8887
      %9223 = vmatprep.subr.bf16.mxu0 0
      %9224 = vmatpush1.bf16.msra.mxu0 %v8888
      %9225 = vmatprep.subr.bf16.mxu0 0
      %9226 = vmatpush1.bf16.msra.mxu0 %v8889
      %9227 = vmatprep.subr.bf16.mxu0 0
      %9228 = vmatpush1.bf16.msra.mxu0 %v8890
      %9229 = vmatprep.subr.bf16.mxu0 0
      %9230 = vmatpush1.bf16.msra.mxu0 %v8891
      %9231 = vmatprep.subr.bf16.mxu0 0
      %9232 = vmatpush1.bf16.msra.mxu0 %v8892
      %9233 = vmatprep.subr.bf16.mxu0 0
      %9234 = vmatpush1.bf16.msra.mxu0 %v8893
      %9235 = vmatprep.subr.bf16.mxu0 0
      %9236 = vmatpush1.bf16.msra.mxu0 %v8894
      %9237 = vmatprep.subr.bf16.mxu0 0
      %9238 = vmatpush1.bf16.msra.mxu0 %v8895
      %9239 = vmatprep.subr.bf16.mxu0 0
      %9240 = vmatpush1.bf16.msra.mxu0 %v8896
      %9241 = vmatprep.mubr.bf16.mxu0 %v8049
      %9242 = vmatmul.mubr.bf16.gmra.mrb[0].mxu0 %v8048
      %v9243 = vpop.f32.mrb[0].mxu0
      %v9244 = vadd.f32 %v9204, %v9243
      %v9245 = vpop.f32.mrb[0].mxu0
      %v9246 = vpop.f32.mrb[0].mxu0
      %v9247 = vpop.f32.mrb[0].mxu0
      %9248 = vdwg.mxu0
      %9249 = vmatprep.subr.bf16.mxu0 0
      %9250 = vmatpush1.bf16.msra.mxu0 %v8897
      %9251 = vmatprep.subr.bf16.mxu0 0
      %9252 = vmatpush1.bf16.msra.mxu0 %v8898
      %9253 = vmatprep.subr.bf16.mxu0 0
      %9254 = vmatpush1.bf16.msra.mxu0 %v8899
      %9255 = vmatprep.subr.bf16.mxu0 0
      %9256 = vmatpush1.bf16.msra.mxu0 %v8900
      %9257 = vmatprep.subr.bf16.mxu0 0
      %9258 = vmatpush1.bf16.msra.mxu0 %v8901
      %9259 = vmatprep.subr.bf16.mxu0 0
      %9260 = vmatpush1.bf16.msra.mxu0 %v8902
      %9261 = vmatprep.subr.bf16.mxu0 0
      %9262 = vmatpush1.bf16.msra.mxu0 %v8903
      %9263 = vmatprep.subr.bf16.mxu0 0
      %9264 = vmatpush1.bf16.msra.mxu0 %v8904
      %9265 = vmatprep.subr.bf16.mxu0 0
      %9266 = vmatpush1.bf16.msra.mxu0 %v8905
      %9267 = vmatprep.subr.bf16.mxu0 0
      %9268 = vmatpush1.bf16.msra.mxu0 %v8906
      %9269 = vmatprep.subr.bf16.mxu0 0
      %9270 = vmatpush1.bf16.msra.mxu0 %v8907
      %9271 = vmatprep.subr.bf16.mxu0 0
      %9272 = vmatpush1.bf16.msra.mxu0 %v8908
      %9273 = vmatprep.subr.bf16.mxu0 0
      %9274 = vmatpush1.bf16.msra.mxu0 %v8909
      %9275 = vmatprep.subr.bf16.mxu0 0
      %9276 = vmatpush1.bf16.msra.mxu0 %v8910
      %9277 = vmatprep.subr.bf16.mxu0 0
      %9278 = vmatpush1.bf16.msra.mxu0 %v8911
      %9279 = vmatprep.subr.bf16.mxu0 0
      %9280 = vmatpush1.bf16.msra.mxu0 %v8912
      %9281 = vmatprep.mubr.bf16.mxu0 %v8051
      %9282 = vmatmul.mubr.bf16.gmra.mrb[0].mxu0 %v8050
      %v9283 = vpop.f32.mrb[0].mxu0
      %v9284 = vadd.f32 %v9244, %v9283
      %v9285 = vpop.f32.mrb[0].mxu0
      %v9286 = vpop.f32.mrb[0].mxu0
      %v9287 = vpop.f32.mrb[0].mxu0
      %9288 = vdwg.mxu0
      %9289 = vmatprep.subr.bf16.mxu0 0
      %9290 = vmatpush1.bf16.msra.mxu0 %v8913
      %9291 = vmatprep.subr.bf16.mxu0 0
      %9292 = vmatpush1.bf16.msra.mxu0 %v8914
      %9293 = vmatprep.subr.bf16.mxu0 0
      %9294 = vmatpush1.bf16.msra.mxu0 %v8915
      %9295 = vmatprep.subr.bf16.mxu0 0
      %9296 = vmatpush1.bf16.msra.mxu0 %v8916
      %9297 = vmatprep.subr.bf16.mxu0 0
      %9298 = vmatpush1.bf16.msra.mxu0 %v8917
      %9299 = vmatprep.subr.bf16.mxu0 0
      %9300 = vmatpush1.bf16.msra.mxu0 %v8918
      %9301 = vmatprep.subr.bf16.mxu0 0
      %9302 = vmatpush1.bf16.msra.mxu0 %v8919
      %9303 = vmatprep.subr.bf16.mxu0 0
      %9304 = vmatpush1.bf16.msra.mxu0 %v8920
      %9305 = vmatprep.subr.bf16.mxu0 0
      %9306 = vmatpush1.bf16.msra.mxu0 %v8921
      %9307 = vmatprep.subr.bf16.mxu0 0
      %9308 = vmatpush1.bf16.msra.mxu0 %v8922
      %9309 = vmatprep.subr.bf16.mxu0 0
      %9310 = vmatpush1.bf16.msra.mxu0 %v8923
      %9311 = vmatprep.subr.bf16.mxu0 0
      %9312 = vmatpush1.bf16.msra.mxu0 %v8924
      %9313 = vmatprep.subr.bf16.mxu0 0
      %9314 = vmatpush1.bf16.msra.mxu0 %v8925
      %9315 = vmatprep.subr.bf16.mxu0 0
      %9316 = vmatpush1.bf16.msra.mxu0 %v8926
      %9317 = vmatprep.subr.bf16.mxu0 0
      %9318 = vmatpush1.bf16.msra.mxu0 %v8927
      %9319 = vmatprep.subr.bf16.mxu0 0
      %9320 = vmatpush1.bf16.msra.mxu0 %v8928
      %9321 = vmatprep.mubr.bf16.mxu0 %v8053
      %9322 = vmatmul.mubr.bf16.gmra.mrb[0].mxu0 %v8052
      %v9323 = vpop.f32.mrb[0].mxu0
      %v9324 = vadd.f32 %v9284, %v9323
      %v9325 = vpop.f32.mrb[0].mxu0
      %v9326 = vpop.f32.mrb[0].mxu0
      %v9327 = vpop.f32.mrb[0].mxu0
      %9328 = vdwg.mxu0
      %9329 = vmatprep.subr.bf16.mxu0 0
      %9330 = vmatpush1.bf16.msra.mxu0 %v8929
      %9331 = vmatprep.subr.bf16.mxu0 0
      %9332 = vmatpush1.bf16.msra.mxu0 %v8930
      %9333 = vmatprep.subr.bf16.mxu0 0
      %9334 = vmatpush1.bf16.msra.mxu0 %v8931
      %9335 = vmatprep.subr.bf16.mxu0 0
      %9336 = vmatpush1.bf16.msra.mxu0 %v8932
      %9337 = vmatprep.subr.bf16.mxu0 0
      %9338 = vmatpush1.bf16.msra.mxu0 %v8933
      %9339 = vmatprep.subr.bf16.mxu0 0
      %9340 = vmatpush1.bf16.msra.mxu0 %v8934
      %9341 = vmatprep.subr.bf16.mxu0 0
      %9342 = vmatpush1.bf16.msra.mxu0 %v8935
      %9343 = vmatprep.subr.bf16.mxu0 0
      %9344 = vmatpush1.bf16.msra.mxu0 %v8936
      %9345 = vmatprep.subr.bf16.mxu0 0
      %9346 = vmatpush1.bf16.msra.mxu0 %v8937
      %9347 = vmatprep.subr.bf16.mxu0 0
      %9348 = vmatpush1.bf16.msra.mxu0 %v8938
      %9349 = vmatprep.subr.bf16.mxu0 0
      %9350 = vmatpush1.bf16.msra.mxu0 %v8939
      %9351 = vmatprep.subr.bf16.mxu0 0
      %9352 = vmatpush1.bf16.msra.mxu0 %v8940
      %9353 = vmatprep.subr.bf16.mxu0 0
      %9354 = vmatpush1.bf16.msra.mxu0 %v8941
      %9355 = vmatprep.subr.bf16.mxu0 0
      %9356 = vmatpush1.bf16.msra.mxu0 %v8942
      %9357 = vmatprep.subr.bf16.mxu0 0
      %9358 = vmatpush1.bf16.msra.mxu0 %v8943
      %9359 = vmatprep.subr.bf16.mxu0 0
      %9360 = vmatpush1.bf16.msra.mxu0 %v8944
      %9361 = vmatprep.mubr.bf16.mxu0 %v8055
      %9362 = vmatmul.mubr.bf16.gmra.mrb[0].mxu0 %v8054
      %v9363 = vpop.f32.mrb[0].mxu0
      %v9364 = vadd.f32 %v9324, %v9363
      %v9365 = vpop.f32.mrb[0].mxu0
      %v9366 = vpop.f32.mrb[0].mxu0
      %v9367 = vpop.f32.mrb[0].mxu0
      %9368 = vdwg.mxu0
      %9369 = vmatprep.subr.bf16.mxu0 0
      %9370 = vmatpush1.bf16.msra.mxu0 %v8945
      %9371 = vmatprep.subr.bf16.mxu0 0
      %9372 = vmatpush1.bf16.msra.mxu0 %v8946
      %9373 = vmatprep.subr.bf16.mxu0 0
      %9374 = vmatpush1.bf16.msra.mxu0 %v8947
      %9375 = vmatprep.subr.bf16.mxu0 0
      %9376 = vmatpush1.bf16.msra.mxu0 %v8948
      %9377 = vmatprep.subr.bf16.mxu0 0
      %9378 = vmatpush1.bf16.msra.mxu0 %v8949
      %9379 = vmatprep.subr.bf16.mxu0 0
      %9380 = vmatpush1.bf16.msra.mxu0 %v8950
      %9381 = vmatprep.subr.bf16.mxu0 0
      %9382 = vmatpush1.bf16.msra.mxu0 %v8951
      %9383 = vmatprep.subr.bf16.mxu0 0
      %9384 = vmatpush1.bf16.msra.mxu0 %v8952
      %9385 = vmatprep.subr.bf16.mxu0 0
      %9386 = vmatpush1.bf16.msra.mxu0 %v8953
      %9387 = vmatprep.subr.bf16.mxu0 0
      %9388 = vmatpush1.bf16.msra.mxu0 %v8954
      %9389 = vmatprep.subr.bf16.mxu0 0
      %9390 = vmatpush1.bf16.msra.mxu0 %v8955
      %9391 = vmatprep.subr.bf16.mxu0 0
      %9392 = vmatpush1.bf16.msra.mxu0 %v8956
      %9393 = vmatprep.subr.bf16.mxu0 0
      %9394 = vmatpush1.bf16.msra.mxu0 %v8957
      %9395 = vmatprep.subr.bf16.mxu0 0
      %9396 = vmatpush1.bf16.msra.mxu0 %v8958
      %9397 = vmatprep.subr.bf16.mxu0 0
      %9398 = vmatpush1.bf16.msra.mxu0 %v8959
      %9399 = vmatprep.subr.bf16.mxu0 0
      %9400 = vmatpush1.bf16.msra.mxu0 %v8960
      %9401 = vmatprep.mubr.bf16.mxu0 %v8057
      %9402 = vmatmul.mubr.bf16.gmra.mrb[0].mxu0 %v8056
      %v9403 = vpop.f32.mrb[0].mxu0
      %v9404 = vadd.f32 %v9364, %v9403
      %v9405 = vpop.f32.mrb[0].mxu0
      %v9406 = vpop.f32.mrb[0].mxu0
      %v9407 = vpop.f32.mrb[0].mxu0
      %9408 = vdwg.mxu0
      %9409 = vst [vmem:[#allocation14] sm:$0x3] %v9404
    $region61: #{rgb_cls_forward.1} parent=1 // pred_fallthru
      _
    // Predicated region
    $region62: #{rgb_cls_forward.1} parent=1 // pred_check
      _
    $region63: #{rgb_cls_forward.1} parent=1 // pred_check_branch
      %9411 = sbr.rel (0) target = $region65
    $region64: #{rgb_cls_forward.1} parent=1 // pred_region
      %s9413 = ssub.s32 32, 32
      %9414 = vsyncadd [#allocation5], %s9413
      %s9416 = sshll.u32 [#allocation14], 4
      %s9417 = int_to_ptr.vmem [resolvable:$true] %s9416
      %9419 = dma.vmem_to_hbm [thread:$0]  %s9417, 32, %s7, [#allocation5]
    $region65: #{rgb_cls_forward.1} parent=1 // pred_fallthru
      _
    // Predicated region
    $region66: #{rgb_cls_forward.1} parent=1 // pred_check
      _
    $region67: #{rgb_cls_forward.1} parent=1 // pred_check_branch
      %9421 = sbr.rel (0) target = $region69
    $region68: #{rgb_cls_forward.1} parent=1 // pred_region
      %9422 = dma.done [#allocation5], 32
    $region69: #{rgb_cls_forward.1} parent=1 // pred_fallthru
      _
    %9423 = vsyncpa [#allocation4], 1
    %9424 = vsyncpa [#allocation7], 1
    %9425 = vsyncpa [#allocation10], 1
    %9426 = vsyncpa [#allocation13], 1
    %9427 = vsyncpa [#allocation5], 1

</llo_original>
